<compile_context>
chip_gen: v6e
topology: v6e:2x2x1
jax: 0.10.0
libtpu: 0.0.40
codegen_flags: <defaults>
</compile_context>

<pallas_src>
import functools

import jax
import jax.numpy as jnp
from jax.experimental import pallas as pl
from jax.experimental.pallas import tpu as pltpu


def _gru_embedding_gather_kernel(ids_ref, w_ref, emb_hbm, out_ref, buf, sems,
                                 *, node_block, n_tok):
    """One node tile: gather node_block*n_tok table rows, weighted-sum per node."""
    i = pl.program_id(0)
    base = i * node_block * n_tok
    d = out_ref.shape[1]

    # Issue one row DMA per (node, subtoken) of this tile.  All scalar (SMEM)
    # id reads happen before any .wait() (keeps sst->sld forwarding intact).
    # Rows of subtoken group t land contiguously at buf[t*node_block : (t+1)*node_block].
    for t in range(n_tok):
        for n in range(node_block):
            row = ids_ref[base + n * n_tok + t]        # clipped to [0, V) in wrapper
            pltpu.make_async_copy(
                emb_hbm.at[pl.ds(row, 1), :],
                buf.at[pl.ds(t * node_block + n, 1), :],
                sems.at[t],
            ).start()

    w = w_ref[...]                                     # (node_block, n_tok) f32
    acc = jnp.zeros((node_block, d), dtype=jnp.float32)
    for t in range(n_tok):
        # Wait only for subtoken group t (its own semaphore), then fold it in
        # while later groups' DMAs are still in flight.
        for n in range(node_block):
            pltpu.make_async_copy(
                emb_hbm.at[pl.ds(0, 1), :],
                buf.at[pl.ds(t * node_block + n, 1), :],
                sems.at[t],
            ).wait()
        rows = buf[pl.ds(t * node_block, node_block), :]          # (node_block, d)
        acc = acc + rows * w[:, t:t + 1]               # weight already holds 1/node_len
    out_ref[...] = acc


def gru_embedding_forward(token_ids, embedding_table, *, node_block=8):
    """token_ids: (N, T) int32 (-1 padding); embedding_table: (V, D) float32."""
    N, T = token_ids.shape
    V, D = embedding_table.shape
    NB = node_block

    n_pad = ((N + NB - 1) // NB) * NB
    num_tiles = n_pad // NB

    ids = token_ids.astype(jnp.int32)
    valid = (ids >= 0) & (ids < V)                     # out-of-range ids silently dropped
    ids_safe = jnp.where(valid, ids, 0)                # safe gather row for padding
    w = jnp.where(valid, 1.0 / float(N), 0.0).astype(jnp.float32)  # fold 1/node_len here

    ids_p = jnp.zeros((n_pad, T), jnp.int32).at[:N].set(ids_safe)
    w_p = jnp.zeros((n_pad, T), jnp.float32).at[:N].set(w)
    ids_flat = ids_p.reshape(-1)                       # node-major (n_pad * T,)

    emb = embedding_table
    if emb.dtype != jnp.float32:                       # no per-call pad/copy of the table
        emb = emb.astype(jnp.float32)

    # VMEM: gather buffer (single-buffered scratch) + double-buffered weight
    # and output blocks; generous headroom, capped well below v7x's 64 MiB.
    tile_bytes = NB * T * D * 4 + 2 * (NB * T * 4) + 2 * (NB * D * 4)
    vmem_limit = int(min(40 * 2**20, max(8 * 2**20, 4 * tile_bytes)))

    kernel = functools.partial(_gru_embedding_gather_kernel,
                               node_block=NB, n_tok=T)

    out_p = pl.pallas_call(
        kernel,
        out_shape=jax.ShapeDtypeStruct((n_pad, D), jnp.float32),
        grid_spec=pltpu.PrefetchScalarGridSpec(
            num_scalar_prefetch=1,                     # ids -> SMEM before the grid
            grid=(num_tiles,),
            in_specs=[
                pl.BlockSpec((NB, T), lambda i, ids: (i, 0)),   # per-tile weights
                pl.BlockSpec(memory_space=pl.ANY),              # table stays in HBM
            ],
            out_specs=pl.BlockSpec((NB, D), lambda i, ids: (i, 0)),
            scratch_shapes=[
                pltpu.VMEM((NB * T, D), jnp.float32),           # gathered rows
                pltpu.SemaphoreType.DMA((T,)),                  # one sem per subtoken group
            ],
        ),
        compiler_params=pltpu.CompilerParams(
            dimension_semantics=("parallel",),         # independent node tiles (v7x 2 TCs)
            vmem_limit_bytes=vmem_limit,
        ),
    )(ids_flat, w_p, emb)

    return out_p[:N, :D]


if __name__ == "__main__":
    # Small shapes consistent with the module: vocab_size=64, embedding_dim=32,
    # node_len=8 nodes, up to 8 subtokens per node.
    VOCAB = 64
    EMB_DIM = 32
    N_NODES = 8
    MAX_SUBTOK = 8

    key = jax.random.PRNGKey(0)
    k_emb, k_ids, k_len = jax.random.split(key, 3)

    # Deterministic parameter init (synthetic; no checkpoint load).
    embedding_table = (
        jax.random.normal(k_emb, (VOCAB, EMB_DIM), dtype=jnp.float32) * 0.02
    )

    # Variable-length nodes, padded with -1.
    raw_ids = jax.random.randint(k_ids, (N_NODES, MAX_SUBTOK), 0, VOCAB, dtype=jnp.int32)
    lengths = jax.random.randint(k_len, (N_NODES,), 1, MAX_SUBTOK + 1, dtype=jnp.int32)
    pos = jnp.arange(MAX_SUBTOK, dtype=jnp.int32)[None, :]
    token_ids = jnp.where(pos < lengths[:, None], raw_ids, -1)

    out = gru_embedding_forward(token_ids, embedding_table)
    out = jax.block_until_ready(out)

    # Pure-JAX reference of the PyTorch forward().
    mask = (token_ids >= 0).astype(jnp.float32)[:, :, None]             # (N, T, 1)
    gathered = embedding_table[jnp.clip(token_ids, 0, VOCAB - 1)]       # (N, T, D)
    ref = jnp.sum(gathered * mask, axis=1) / N_NODES                    # (N, D)

    assert out.shape == (N_NODES, EMB_DIM) and out.dtype == jnp.float32
    assert jnp.allclose(out, ref, atol=1e-5, rtol=1e-5)
    print("KERNEL_OK")
</pallas_src>

<mosaic_0001>
module attributes {stable_mosaic.version = 11 : i64} {
  func.func @_gru_embedding_gather_kernel(%arg0: i32, %arg1: memref<64xi32, #tpu.memory_space<smem>>, %arg2: memref<8x8xf32, #tpu.memory_space<vmem>>, %arg3: memref<64x32xf32, #tpu.memory_space<any>>, %arg4: memref<8x32xf32, #tpu.memory_space<vmem>>, %arg5: memref<64x32xf32, #tpu.memory_space<vmem>>, %arg6: memref<8x!tpu.dma_semaphore, #tpu.memory_space<semaphore_mem>>) attributes {dimension_semantics = [#tpu.dimension_semantics<parallel>], iteration_bounds = array<i64: 1>, scalar_prefetch = 1 : i64, scratch_operands = 2 : i64, tpu.core_type = #tpu.core_type<tc>, window_params = [{transform_indices = @transform_0, window_bounds = array<i64: 8, 8>}, {}, {transform_indices = @transform_2, window_bounds = array<i64: 8, 32>}]} {
    %c8_i32 = arith.constant 8 : i32
    %0 = arith.muli %arg0, %c8_i32 : i32
    %c8_i32_0 = arith.constant 8 : i32
    %1 = arith.muli %0, %c8_i32_0 : i32
    %c0_i32 = arith.constant 0 : i32
    %2 = arith.addi %1, %c0_i32 : i32
    %c0_i32_1 = arith.constant 0 : i32
    %3 = arith.addi %2, %c0_i32_1 : i32
    %4 = arith.index_cast %3 : i32 to index
    %5 = memref.load %arg1[%4] : memref<64xi32, #tpu.memory_space<smem>>
    %c0_i32_2 = arith.constant 0 : i32
    %c0_i32_3 = arith.constant 0 : i32
    %6 = tpu.memref_slice %arg3[%5, %c0_i32_3] : memref<64x32xf32, #tpu.memory_space<any>> -> memref<1x32xf32, #tpu.memory_space<any>>
    %c0_i32_4 = arith.constant 0 : i32
    %c0_i32_5 = arith.constant 0 : i32
    %7 = tpu.memref_slice %arg5[%c0_i32_4, %c0_i32_5] : memref<64x32xf32, #tpu.memory_space<vmem>> -> memref<1x32xf32, #tpu.memory_space<vmem>>
    %8 = tpu.memref_slice %arg6[%c0_i32_2] : memref<8x!tpu.dma_semaphore, #tpu.memory_space<semaphore_mem>> -> memref<1x!tpu.dma_semaphore, #tpu.memory_space<semaphore_mem>>
    %9 = tpu.memref_squeeze %8 : memref<1x!tpu.dma_semaphore, #tpu.memory_space<semaphore_mem>> -> memref<!tpu.dma_semaphore, #tpu.memory_space<semaphore_mem>>
    tpu.enqueue_dma source(%6 : memref<1x32xf32, #tpu.memory_space<any>>) target(%7 : memref<1x32xf32, #tpu.memory_space<vmem>>) target_semaphore(%9 : memref<!tpu.dma_semaphore, #tpu.memory_space<semaphore_mem>>)
    %c8_i32_6 = arith.constant 8 : i32
    %10 = arith.addi %1, %c8_i32_6 : i32
    %c0_i32_7 = arith.constant 0 : i32
    %11 = arith.addi %10, %c0_i32_7 : i32
    %12 = arith.index_cast %11 : i32 to index
    %13 = memref.load %arg1[%12] : memref<64xi32, #tpu.memory_space<smem>>
    %c0_i32_8 = arith.constant 0 : i32
    %c0_i32_9 = arith.constant 0 : i32
    %14 = tpu.memref_slice %arg3[%13, %c0_i32_9] : memref<64x32xf32, #tpu.memory_space<any>> -> memref<1x32xf32, #tpu.memory_space<any>>
    %c1_i32 = arith.constant 1 : i32
    %c0_i32_10 = arith.constant 0 : i32
    %15 = tpu.memref_slice %arg5[%c1_i32, %c0_i32_10] : memref<64x32xf32, #tpu.memory_space<vmem>> -> memref<1x32xf32, #tpu.memory_space<vmem>>
    %16 = tpu.memref_slice %arg6[%c0_i32_8] : memref<8x!tpu.dma_semaphore, #tpu.memory_space<semaphore_mem>> -> memref<1x!tpu.dma_semaphore, #tpu.memory_space<semaphore_mem>>
    %17 = tpu.memref_squeeze %16 : memref<1x!tpu.dma_semaphore, #tpu.memory_space<semaphore_mem>> -> memref<!tpu.dma_semaphore, #tpu.memory_space<semaphore_mem>>
    tpu.enqueue_dma source(%14 : memref<1x32xf32, #tpu.memory_space<any>>) target(%15 : memref<1x32xf32, #tpu.memory_space<vmem>>) target_semaphore(%17 : memref<!tpu.dma_semaphore, #tpu.memory_space<semaphore_mem>>)
    %c16_i32 = arith.constant 16 : i32
    %18 = arith.addi %1, %c16_i32 : i32
    %c0_i32_11 = arith.constant 0 : i32
    %19 = arith.addi %18, %c0_i32_11 : i32
    %20 = arith.index_cast %19 : i32 to index
    %21 = memref.load %arg1[%20] : memref<64xi32, #tpu.memory_space<smem>>
    %c0_i32_12 = arith.constant 0 : i32
    %c0_i32_13 = arith.constant 0 : i32
    %22 = tpu.memref_slice %arg3[%21, %c0_i32_13] : memref<64x32xf32, #tpu.memory_space<any>> -> memref<1x32xf32, #tpu.memory_space<any>>
    %c2_i32 = arith.constant 2 : i32
    %c0_i32_14 = arith.constant 0 : i32
    %23 = tpu.memref_slice %arg5[%c2_i32, %c0_i32_14] : memref<64x32xf32, #tpu.memory_space<vmem>> -> memref<1x32xf32, #tpu.memory_space<vmem>>
    %24 = tpu.memref_slice %arg6[%c0_i32_12] : memref<8x!tpu.dma_semaphore, #tpu.memory_space<semaphore_mem>> -> memref<1x!tpu.dma_semaphore, #tpu.memory_space<semaphore_mem>>
    %25 = tpu.memref_squeeze %24 : memref<1x!tpu.dma_semaphore, #tpu.memory_space<semaphore_mem>> -> memref<!tpu.dma_semaphore, #tpu.memory_space<semaphore_mem>>
    tpu.enqueue_dma source(%22 : memref<1x32xf32, #tpu.memory_space<any>>) target(%23 : memref<1x32xf32, #tpu.memory_space<vmem>>) target_semaphore(%25 : memref<!tpu.dma_semaphore, #tpu.memory_space<semaphore_mem>>)
    %c24_i32 = arith.constant 24 : i32
    %26 = arith.addi %1, %c24_i32 : i32
    %c0_i32_15 = arith.constant 0 : i32
    %27 = arith.addi %26, %c0_i32_15 : i32
    %28 = arith.index_cast %27 : i32 to index
    %29 = memref.load %arg1[%28] : memref<64xi32, #tpu.memory_space<smem>>
    %c0_i32_16 = arith.constant 0 : i32
    %c0_i32_17 = arith.constant 0 : i32
    %30 = tpu.memref_slice %arg3[%29, %c0_i32_17] : memref<64x32xf32, #tpu.memory_space<any>> -> memref<1x32xf32, #tpu.memory_space<any>>
    %c3_i32 = arith.constant 3 : i32
    %c0_i32_18 = arith.constant 0 : i32
    %31 = tpu.memref_slice %arg5[%c3_i32, %c0_i32_18] : memref<64x32xf32, #tpu.memory_space<vmem>> -> memref<1x32xf32, #tpu.memory_space<vmem>>
    %32 = tpu.memref_slice %arg6[%c0_i32_16] : memref<8x!tpu.dma_semaphore, #tpu.memory_space<semaphore_mem>> -> memref<1x!tpu.dma_semaphore, #tpu.memory_space<semaphore_mem>>
    %33 = tpu.memref_squeeze %32 : memref<1x!tpu.dma_semaphore, #tpu.memory_space<semaphore_mem>> -> memref<!tpu.dma_semaphore, #tpu.memory_space<semaphore_mem>>
    tpu.enqueue_dma source(%30 : memref<1x32xf32, #tpu.memory_space<any>>) target(%31 : memref<1x32xf32, #tpu.memory_space<vmem>>) target_semaphore(%33 : memref<!tpu.dma_semaphore, #tpu.memory_space<semaphore_mem>>)
    %c32_i32 = arith.constant 32 : i32
    %34 = arith.addi %1, %c32_i32 : i32
    %c0_i32_19 = arith.constant 0 : i32
    %35 = arith.addi %34, %c0_i32_19 : i32
    %36 = arith.index_cast %35 : i32 to index
    %37 = memref.load %arg1[%36] : memref<64xi32, #tpu.memory_space<smem>>
    %c0_i32_20 = arith.constant 0 : i32
    %c0_i32_21 = arith.constant 0 : i32
    %38 = tpu.memref_slice %arg3[%37, %c0_i32_21] : memref<64x32xf32, #tpu.memory_space<any>> -> memref<1x32xf32, #tpu.memory_space<any>>
    %c4_i32 = arith.constant 4 : i32
    %c0_i32_22 = arith.constant 0 : i32
    %39 = tpu.memref_slice %arg5[%c4_i32, %c0_i32_22] : memref<64x32xf32, #tpu.memory_space<vmem>> -> memref<1x32xf32, #tpu.memory_space<vmem>>
    %40 = tpu.memref_slice %arg6[%c0_i32_20] : memref<8x!tpu.dma_semaphore, #tpu.memory_space<semaphore_mem>> -> memref<1x!tpu.dma_semaphore, #tpu.memory_space<semaphore_mem>>
    %41 = tpu.memref_squeeze %40 : memref<1x!tpu.dma_semaphore, #tpu.memory_space<semaphore_mem>> -> memref<!tpu.dma_semaphore, #tpu.memory_space<semaphore_mem>>
    tpu.enqueue_dma source(%38 : memref<1x32xf32, #tpu.memory_space<any>>) target(%39 : memref<1x32xf32, #tpu.memory_space<vmem>>) target_semaphore(%41 : memref<!tpu.dma_semaphore, #tpu.memory_space<semaphore_mem>>)
    %c40_i32 = arith.constant 40 : i32
    %42 = arith.addi %1, %c40_i32 : i32
    %c0_i32_23 = arith.constant 0 : i32
    %43 = arith.addi %42, %c0_i32_23 : i32
    %44 = arith.index_cast %43 : i32 to index
    %45 = memref.load %arg1[%44] : memref<64xi32, #tpu.memory_space<smem>>
    %c0_i32_24 = arith.constant 0 : i32
    %c0_i32_25 = arith.constant 0 : i32
    %46 = tpu.memref_slice %arg3[%45, %c0_i32_25] : memref<64x32xf32, #tpu.memory_space<any>> -> memref<1x32xf32, #tpu.memory_space<any>>
    %c5_i32 = arith.constant 5 : i32
    %c0_i32_26 = arith.constant 0 : i32
    %47 = tpu.memref_slice %arg5[%c5_i32, %c0_i32_26] : memref<64x32xf32, #tpu.memory_space<vmem>> -> memref<1x32xf32, #tpu.memory_space<vmem>>
    %48 = tpu.memref_slice %arg6[%c0_i32_24] : memref<8x!tpu.dma_semaphore, #tpu.memory_space<semaphore_mem>> -> memref<1x!tpu.dma_semaphore, #tpu.memory_space<semaphore_mem>>
    %49 = tpu.memref_squeeze %48 : memref<1x!tpu.dma_semaphore, #tpu.memory_space<semaphore_mem>> -> memref<!tpu.dma_semaphore, #tpu.memory_space<semaphore_mem>>
    tpu.enqueue_dma source(%46 : memref<1x32xf32, #tpu.memory_space<any>>) target(%47 : memref<1x32xf32, #tpu.memory_space<vmem>>) target_semaphore(%49 : memref<!tpu.dma_semaphore, #tpu.memory_space<semaphore_mem>>)
    %c48_i32 = arith.constant 48 : i32
    %50 = arith.addi %1, %c48_i32 : i32
    %c0_i32_27 = arith.constant 0 : i32
    %51 = arith.addi %50, %c0_i32_27 : i32
    %52 = arith.index_cast %51 : i32 to index
    %53 = memref.load %arg1[%52] : memref<64xi32, #tpu.memory_space<smem>>
    %c0_i32_28 = arith.constant 0 : i32
    %c0_i32_29 = arith.constant 0 : i32
    %54 = tpu.memref_slice %arg3[%53, %c0_i32_29] : memref<64x32xf32, #tpu.memory_space<any>> -> memref<1x32xf32, #tpu.memory_space<any>>
    %c6_i32 = arith.constant 6 : i32
    %c0_i32_30 = arith.constant 0 : i32
    %55 = tpu.memref_slice %arg5[%c6_i32, %c0_i32_30] : memref<64x32xf32, #tpu.memory_space<vmem>> -> memref<1x32xf32, #tpu.memory_space<vmem>>
    %56 = tpu.memref_slice %arg6[%c0_i32_28] : memref<8x!tpu.dma_semaphore, #tpu.memory_space<semaphore_mem>> -> memref<1x!tpu.dma_semaphore, #tpu.memory_space<semaphore_mem>>
    %57 = tpu.memref_squeeze %56 : memref<1x!tpu.dma_semaphore, #tpu.memory_space<semaphore_mem>> -> memref<!tpu.dma_semaphore, #tpu.memory_space<semaphore_mem>>
    tpu.enqueue_dma source(%54 : memref<1x32xf32, #tpu.memory_space<any>>) target(%55 : memref<1x32xf32, #tpu.memory_space<vmem>>) target_semaphore(%57 : memref<!tpu.dma_semaphore, #tpu.memory_space<semaphore_mem>>)
    %c56_i32 = arith.constant 56 : i32
    %58 = arith.addi %1, %c56_i32 : i32
    %c0_i32_31 = arith.constant 0 : i32
    %59 = arith.addi %58, %c0_i32_31 : i32
    %60 = arith.index_cast %59 : i32 to index
    %61 = memref.load %arg1[%60] : memref<64xi32, #tpu.memory_space<smem>>
    %c0_i32_32 = arith.constant 0 : i32
    %c0_i32_33 = arith.constant 0 : i32
    %62 = tpu.memref_slice %arg3[%61, %c0_i32_33] : memref<64x32xf32, #tpu.memory_space<any>> -> memref<1x32xf32, #tpu.memory_space<any>>
    %c7_i32 = arith.constant 7 : i32
    %c0_i32_34 = arith.constant 0 : i32
    %63 = tpu.memref_slice %arg5[%c7_i32, %c0_i32_34] : memref<64x32xf32, #tpu.memory_space<vmem>> -> memref<1x32xf32, #tpu.memory_space<vmem>>
    %64 = tpu.memref_slice %arg6[%c0_i32_32] : memref<8x!tpu.dma_semaphore, #tpu.memory_space<semaphore_mem>> -> memref<1x!tpu.dma_semaphore, #tpu.memory_space<semaphore_mem>>
    %65 = tpu.memref_squeeze %64 : memref<1x!tpu.dma_semaphore, #tpu.memory_space<semaphore_mem>> -> memref<!tpu.dma_semaphore, #tpu.memory_space<semaphore_mem>>
    tpu.enqueue_dma source(%62 : memref<1x32xf32, #tpu.memory_space<any>>) target(%63 : memref<1x32xf32, #tpu.memory_space<vmem>>) target_semaphore(%65 : memref<!tpu.dma_semaphore, #tpu.memory_space<semaphore_mem>>)
    %c0_i32_35 = arith.constant 0 : i32
    %66 = arith.addi %1, %c0_i32_35 : i32
    %c1_i32_36 = arith.constant 1 : i32
    %67 = arith.addi %66, %c1_i32_36 : i32
    %68 = arith.index_cast %67 : i32 to index
    %69 = memref.load %arg1[%68] : memref<64xi32, #tpu.memory_space<smem>>
    %c1_i32_37 = arith.constant 1 : i32
    %c0_i32_38 = arith.constant 0 : i32
    %70 = tpu.memref_slice %arg3[%69, %c0_i32_38] : memref<64x32xf32, #tpu.memory_space<any>> -> memref<1x32xf32, #tpu.memory_space<any>>
    %c8_i32_39 = arith.constant 8 : i32
    %c0_i32_40 = arith.constant 0 : i32
    %71 = tpu.memref_slice %arg5[%c8_i32_39, %c0_i32_40] : memref<64x32xf32, #tpu.memory_space<vmem>> -> memref<1x32xf32, #tpu.memory_space<vmem>>
    %72 = tpu.memref_slice %arg6[%c1_i32_37] : memref<8x!tpu.dma_semaphore, #tpu.memory_space<semaphore_mem>> -> memref<1x!tpu.dma_semaphore, #tpu.memory_space<semaphore_mem>>
    %73 = tpu.memref_squeeze %72 : memref<1x!tpu.dma_semaphore, #tpu.memory_space<semaphore_mem>> -> memref<!tpu.dma_semaphore, #tpu.memory_space<semaphore_mem>>
    tpu.enqueue_dma source(%70 : memref<1x32xf32, #tpu.memory_space<any>>) target(%71 : memref<1x32xf32, #tpu.memory_space<vmem>>) target_semaphore(%73 : memref<!tpu.dma_semaphore, #tpu.memory_space<semaphore_mem>>)
    %c8_i32_41 = arith.constant 8 : i32
    %74 = arith.addi %1, %c8_i32_41 : i32
    %c1_i32_42 = arith.constant 1 : i32
    %75 = arith.addi %74, %c1_i32_42 : i32
    %76 = arith.index_cast %75 : i32 to index
    %77 = memref.load %arg1[%76] : memref<64xi32, #tpu.memory_space<smem>>
    %c1_i32_43 = arith.constant 1 : i32
    %c0_i32_44 = arith.constant 0 : i32
    %78 = tpu.memref_slice %arg3[%77, %c0_i32_44] : memref<64x32xf32, #tpu.memory_space<any>> -> memref<1x32xf32, #tpu.memory_space<any>>
    %c9_i32 = arith.constant 9 : i32
    %c0_i32_45 = arith.constant 0 : i32
    %79 = tpu.memref_slice %arg5[%c9_i32, %c0_i32_45] : memref<64x32xf32, #tpu.memory_space<vmem>> -> memref<1x32xf32, #tpu.memory_space<vmem>>
    %80 = tpu.memref_slice %arg6[%c1_i32_43] : memref<8x!tpu.dma_semaphore, #tpu.memory_space<semaphore_mem>> -> memref<1x!tpu.dma_semaphore, #tpu.memory_space<semaphore_mem>>
    %81 = tpu.memref_squeeze %80 : memref<1x!tpu.dma_semaphore, #tpu.memory_space<semaphore_mem>> -> memref<!tpu.dma_semaphore, #tpu.memory_space<semaphore_mem>>
    tpu.enqueue_dma source(%78 : memref<1x32xf32, #tpu.memory_space<any>>) target(%79 : memref<1x32xf32, #tpu.memory_space<vmem>>) target_semaphore(%81 : memref<!tpu.dma_semaphore, #tpu.memory_space<semaphore_mem>>)
    %c16_i32_46 = arith.constant 16 : i32
    %82 = arith.addi %1, %c16_i32_46 : i32
    %c1_i32_47 = arith.constant 1 : i32
    %83 = arith.addi %82, %c1_i32_47 : i32
    %84 = arith.index_cast %83 : i32 to index
    %85 = memref.load %arg1[%84] : memref<64xi32, #tpu.memory_space<smem>>
    %c1_i32_48 = arith.constant 1 : i32
    %c0_i32_49 = arith.constant 0 : i32
    %86 = tpu.memref_slice %arg3[%85, %c0_i32_49] : memref<64x32xf32, #tpu.memory_space<any>> -> memref<1x32xf32, #tpu.memory_space<any>>
    %c10_i32 = arith.constant 10 : i32
    %c0_i32_50 = arith.constant 0 : i32
    %87 = tpu.memref_slice %arg5[%c10_i32, %c0_i32_50] : memref<64x32xf32, #tpu.memory_space<vmem>> -> memref<1x32xf32, #tpu.memory_space<vmem>>
    %88 = tpu.memref_slice %arg6[%c1_i32_48] : memref<8x!tpu.dma_semaphore, #tpu.memory_space<semaphore_mem>> -> memref<1x!tpu.dma_semaphore, #tpu.memory_space<semaphore_mem>>
    %89 = tpu.memref_squeeze %88 : memref<1x!tpu.dma_semaphore, #tpu.memory_space<semaphore_mem>> -> memref<!tpu.dma_semaphore, #tpu.memory_space<semaphore_mem>>
    tpu.enqueue_dma source(%86 : memref<1x32xf32, #tpu.memory_space<any>>) target(%87 : memref<1x32xf32, #tpu.memory_space<vmem>>) target_semaphore(%89 : memref<!tpu.dma_semaphore, #tpu.memory_space<semaphore_mem>>)
    %c24_i32_51 = arith.constant 24 : i32
    %90 = arith.addi %1, %c24_i32_51 : i32
    %c1_i32_52 = arith.constant 1 : i32
    %91 = arith.addi %90, %c1_i32_52 : i32
    %92 = arith.index_cast %91 : i32 to index
    %93 = memref.load %arg1[%92] : memref<64xi32, #tpu.memory_space<smem>>
    %c1_i32_53 = arith.constant 1 : i32
    %c0_i32_54 = arith.constant 0 : i32
    %94 = tpu.memref_slice %arg3[%93, %c0_i32_54] : memref<64x32xf32, #tpu.memory_space<any>> -> memref<1x32xf32, #tpu.memory_space<any>>
    %c11_i32 = arith.constant 11 : i32
    %c0_i32_55 = arith.constant 0 : i32
    %95 = tpu.memref_slice %arg5[%c11_i32, %c0_i32_55] : memref<64x32xf32, #tpu.memory_space<vmem>> -> memref<1x32xf32, #tpu.memory_space<vmem>>
    %96 = tpu.memref_slice %arg6[%c1_i32_53] : memref<8x!tpu.dma_semaphore, #tpu.memory_space<semaphore_mem>> -> memref<1x!tpu.dma_semaphore, #tpu.memory_space<semaphore_mem>>
    %97 = tpu.memref_squeeze %96 : memref<1x!tpu.dma_semaphore, #tpu.memory_space<semaphore_mem>> -> memref<!tpu.dma_semaphore, #tpu.memory_space<semaphore_mem>>
    tpu.enqueue_dma source(%94 : memref<1x32xf32, #tpu.memory_space<any>>) target(%95 : memref<1x32xf32, #tpu.memory_space<vmem>>) target_semaphore(%97 : memref<!tpu.dma_semaphore, #tpu.memory_space<semaphore_mem>>)
    %c32_i32_56 = arith.constant 32 : i32
    %98 = arith.addi %1, %c32_i32_56 : i32
    %c1_i32_57 = arith.constant 1 : i32
    %99 = arith.addi %98, %c1_i32_57 : i32
    %100 = arith.index_cast %99 : i32 to index
    %101 = memref.load %arg1[%100] : memref<64xi32, #tpu.memory_space<smem>>
    %c1_i32_58 = arith.constant 1 : i32
    %c0_i32_59 = arith.constant 0 : i32
    %102 = tpu.memref_slice %arg3[%101, %c0_i32_59] : memref<64x32xf32, #tpu.memory_space<any>> -> memref<1x32xf32, #tpu.memory_space<any>>
    %c12_i32 = arith.constant 12 : i32
    %c0_i32_60 = arith.constant 0 : i32
    %103 = tpu.memref_slice %arg5[%c12_i32, %c0_i32_60] : memref<64x32xf32, #tpu.memory_space<vmem>> -> memref<1x32xf32, #tpu.memory_space<vmem>>
    %104 = tpu.memref_slice %arg6[%c1_i32_58] : memref<8x!tpu.dma_semaphore, #tpu.memory_space<semaphore_mem>> -> memref<1x!tpu.dma_semaphore, #tpu.memory_space<semaphore_mem>>
    %105 = tpu.memref_squeeze %104 : memref<1x!tpu.dma_semaphore, #tpu.memory_space<semaphore_mem>> -> memref<!tpu.dma_semaphore, #tpu.memory_space<semaphore_mem>>
    tpu.enqueue_dma source(%102 : memref<1x32xf32, #tpu.memory_space<any>>) target(%103 : memref<1x32xf32, #tpu.memory_space<vmem>>) target_semaphore(%105 : memref<!tpu.dma_semaphore, #tpu.memory_space<semaphore_mem>>)
    %c40_i32_61 = arith.constant 40 : i32
    %106 = arith.addi %1, %c40_i32_61 : i32
    %c1_i32_62 = arith.constant 1 : i32
    %107 = arith.addi %106, %c1_i32_62 : i32
    %108 = arith.index_cast %107 : i32 to index
    %109 = memref.load %arg1[%108] : memref<64xi32, #tpu.memory_space<smem>>
    %c1_i32_63 = arith.constant 1 : i32
    %c0_i32_64 = arith.constant 0 : i32
    %110 = tpu.memref_slice %arg3[%109, %c0_i32_64] : memref<64x32xf32, #tpu.memory_space<any>> -> memref<1x32xf32, #tpu.memory_space<any>>
    %c13_i32 = arith.constant 13 : i32
    %c0_i32_65 = arith.constant 0 : i32
    %111 = tpu.memref_slice %arg5[%c13_i32, %c0_i32_65] : memref<64x32xf32, #tpu.memory_space<vmem>> -> memref<1x32xf32, #tpu.memory_space<vmem>>
    %112 = tpu.memref_slice %arg6[%c1_i32_63] : memref<8x!tpu.dma_semaphore, #tpu.memory_space<semaphore_mem>> -> memref<1x!tpu.dma_semaphore, #tpu.memory_space<semaphore_mem>>
    %113 = tpu.memref_squeeze %112 : memref<1x!tpu.dma_semaphore, #tpu.memory_space<semaphore_mem>> -> memref<!tpu.dma_semaphore, #tpu.memory_space<semaphore_mem>>
    tpu.enqueue_dma source(%110 : memref<1x32xf32, #tpu.memory_space<any>>) target(%111 : memref<1x32xf32, #tpu.memory_space<vmem>>) target_semaphore(%113 : memref<!tpu.dma_semaphore, #tpu.memory_space<semaphore_mem>>)
    %c48_i32_66 = arith.constant 48 : i32
    %114 = arith.addi %1, %c48_i32_66 : i32
    %c1_i32_67 = arith.constant 1 : i32
    %115 = arith.addi %114, %c1_i32_67 : i32
    %116 = arith.index_cast %115 : i32 to index
    %117 = memref.load %arg1[%116] : memref<64xi32, #tpu.memory_space<smem>>
    %c1_i32_68 = arith.constant 1 : i32
    %c0_i32_69 = arith.constant 0 : i32
    %118 = tpu.memref_slice %arg3[%117, %c0_i32_69] : memref<64x32xf32, #tpu.memory_space<any>> -> memref<1x32xf32, #tpu.memory_space<any>>
    %c14_i32 = arith.constant 14 : i32
    %c0_i32_70 = arith.constant 0 : i32
    %119 = tpu.memref_slice %arg5[%c14_i32, %c0_i32_70] : memref<64x32xf32, #tpu.memory_space<vmem>> -> memref<1x32xf32, #tpu.memory_space<vmem>>
    %120 = tpu.memref_slice %arg6[%c1_i32_68] : memref<8x!tpu.dma_semaphore, #tpu.memory_space<semaphore_mem>> -> memref<1x!tpu.dma_semaphore, #tpu.memory_space<semaphore_mem>>
    %121 = tpu.memref_squeeze %120 : memref<1x!tpu.dma_semaphore, #tpu.memory_space<semaphore_mem>> -> memref<!tpu.dma_semaphore, #tpu.memory_space<semaphore_mem>>
    tpu.enqueue_dma source(%118 : memref<1x32xf32, #tpu.memory_space<any>>) target(%119 : memref<1x32xf32, #tpu.memory_space<vmem>>) target_semaphore(%121 : memref<!tpu.dma_semaphore, #tpu.memory_space<semaphore_mem>>)
    %c56_i32_71 = arith.constant 56 : i32
    %122 = arith.addi %1, %c56_i32_71 : i32
    %c1_i32_72 = arith.constant 1 : i32
    %123 = arith.addi %122, %c1_i32_72 : i32
    %124 = arith.index_cast %123 : i32 to index
    %125 = memref.load %arg1[%124] : memref<64xi32, #tpu.memory_space<smem>>
    %c1_i32_73 = arith.constant 1 : i32
    %c0_i32_74 = arith.constant 0 : i32
    %126 = tpu.memref_slice %arg3[%125, %c0_i32_74] : memref<64x32xf32, #tpu.memory_space<any>> -> memref<1x32xf32, #tpu.memory_space<any>>
    %c15_i32 = arith.constant 15 : i32
    %c0_i32_75 = arith.constant 0 : i32
    %127 = tpu.memref_slice %arg5[%c15_i32, %c0_i32_75] : memref<64x32xf32, #tpu.memory_space<vmem>> -> memref<1x32xf32, #tpu.memory_space<vmem>>
    %128 = tpu.memref_slice %arg6[%c1_i32_73] : memref<8x!tpu.dma_semaphore, #tpu.memory_space<semaphore_mem>> -> memref<1x!tpu.dma_semaphore, #tpu.memory_space<semaphore_mem>>
    %129 = tpu.memref_squeeze %128 : memref<1x!tpu.dma_semaphore, #tpu.memory_space<semaphore_mem>> -> memref<!tpu.dma_semaphore, #tpu.memory_space<semaphore_mem>>
    tpu.enqueue_dma source(%126 : memref<1x32xf32, #tpu.memory_space<any>>) target(%127 : memref<1x32xf32, #tpu.memory_space<vmem>>) target_semaphore(%129 : memref<!tpu.dma_semaphore, #tpu.memory_space<semaphore_mem>>)
    %c0_i32_76 = arith.constant 0 : i32
    %130 = arith.addi %1, %c0_i32_76 : i32
    %c2_i32_77 = arith.constant 2 : i32
    %131 = arith.addi %130, %c2_i32_77 : i32
    %132 = arith.index_cast %131 : i32 to index
    %133 = memref.load %arg1[%132] : memref<64xi32, #tpu.memory_space<smem>>
    %c2_i32_78 = arith.constant 2 : i32
    %c0_i32_79 = arith.constant 0 : i32
    %134 = tpu.memref_slice %arg3[%133, %c0_i32_79] : memref<64x32xf32, #tpu.memory_space<any>> -> memref<1x32xf32, #tpu.memory_space<any>>
    %c16_i32_80 = arith.constant 16 : i32
    %c0_i32_81 = arith.constant 0 : i32
    %135 = tpu.memref_slice %arg5[%c16_i32_80, %c0_i32_81] : memref<64x32xf32, #tpu.memory_space<vmem>> -> memref<1x32xf32, #tpu.memory_space<vmem>>
    %136 = tpu.memref_slice %arg6[%c2_i32_78] : memref<8x!tpu.dma_semaphore, #tpu.memory_space<semaphore_mem>> -> memref<1x!tpu.dma_semaphore, #tpu.memory_space<semaphore_mem>>
    %137 = tpu.memref_squeeze %136 : memref<1x!tpu.dma_semaphore, #tpu.memory_space<semaphore_mem>> -> memref<!tpu.dma_semaphore, #tpu.memory_space<semaphore_mem>>
    tpu.enqueue_dma source(%134 : memref<1x32xf32, #tpu.memory_space<any>>) target(%135 : memref<1x32xf32, #tpu.memory_space<vmem>>) target_semaphore(%137 : memref<!tpu.dma_semaphore, #tpu.memory_space<semaphore_mem>>)
    %c8_i32_82 = arith.constant 8 : i32
    %138 = arith.addi %1, %c8_i32_82 : i32
    %c2_i32_83 = arith.constant 2 : i32
    %139 = arith.addi %138, %c2_i32_83 : i32
    %140 = arith.index_cast %139 : i32 to index
    %141 = memref.load %arg1[%140] : memref<64xi32, #tpu.memory_space<smem>>
    %c2_i32_84 = arith.constant 2 : i32
    %c0_i32_85 = arith.constant 0 : i32
    %142 = tpu.memref_slice %arg3[%141, %c0_i32_85] : memref<64x32xf32, #tpu.memory_space<any>> -> memref<1x32xf32, #tpu.memory_space<any>>
    %c17_i32 = arith.constant 17 : i32
    %c0_i32_86 = arith.constant 0 : i32
    %143 = tpu.memref_slice %arg5[%c17_i32, %c0_i32_86] : memref<64x32xf32, #tpu.memory_space<vmem>> -> memref<1x32xf32, #tpu.memory_space<vmem>>
    %144 = tpu.memref_slice %arg6[%c2_i32_84] : memref<8x!tpu.dma_semaphore, #tpu.memory_space<semaphore_mem>> -> memref<1x!tpu.dma_semaphore, #tpu.memory_space<semaphore_mem>>
    %145 = tpu.memref_squeeze %144 : memref<1x!tpu.dma_semaphore, #tpu.memory_space<semaphore_mem>> -> memref<!tpu.dma_semaphore, #tpu.memory_space<semaphore_mem>>
    tpu.enqueue_dma source(%142 : memref<1x32xf32, #tpu.memory_space<any>>) target(%143 : memref<1x32xf32, #tpu.memory_space<vmem>>) target_semaphore(%145 : memref<!tpu.dma_semaphore, #tpu.memory_space<semaphore_mem>>)
    %c16_i32_87 = arith.constant 16 : i32
    %146 = arith.addi %1, %c16_i32_87 : i32
    %c2_i32_88 = arith.constant 2 : i32
    %147 = arith.addi %146, %c2_i32_88 : i32
    %148 = arith.index_cast %147 : i32 to index
    %149 = memref.load %arg1[%148] : memref<64xi32, #tpu.memory_space<smem>>
    %c2_i32_89 = arith.constant 2 : i32
    %c0_i32_90 = arith.constant 0 : i32
    %150 = tpu.memref_slice %arg3[%149, %c0_i32_90] : memref<64x32xf32, #tpu.memory_space<any>> -> memref<1x32xf32, #tpu.memory_space<any>>
    %c18_i32 = arith.constant 18 : i32
    %c0_i32_91 = arith.constant 0 : i32
    %151 = tpu.memref_slice %arg5[%c18_i32, %c0_i32_91] : memref<64x32xf32, #tpu.memory_space<vmem>> -> memref<1x32xf32, #tpu.memory_space<vmem>>
    %152 = tpu.memref_slice %arg6[%c2_i32_89] : memref<8x!tpu.dma_semaphore, #tpu.memory_space<semaphore_mem>> -> memref<1x!tpu.dma_semaphore, #tpu.memory_space<semaphore_mem>>
    %153 = tpu.memref_squeeze %152 : memref<1x!tpu.dma_semaphore, #tpu.memory_space<semaphore_mem>> -> memref<!tpu.dma_semaphore, #tpu.memory_space<semaphore_mem>>
    tpu.enqueue_dma source(%150 : memref<1x32xf32, #tpu.memory_space<any>>) target(%151 : memref<1x32xf32, #tpu.memory_space<vmem>>) target_semaphore(%153 : memref<!tpu.dma_semaphore, #tpu.memory_space<semaphore_mem>>)
    %c24_i32_92 = arith.constant 24 : i32
    %154 = arith.addi %1, %c24_i32_92 : i32
    %c2_i32_93 = arith.constant 2 : i32
    %155 = arith.addi %154, %c2_i32_93 : i32
    %156 = arith.index_cast %155 : i32 to index
    %157 = memref.load %arg1[%156] : memref<64xi32, #tpu.memory_space<smem>>
    %c2_i32_94 = arith.constant 2 : i32
    %c0_i32_95 = arith.constant 0 : i32
    %158 = tpu.memref_slice %arg3[%157, %c0_i32_95] : memref<64x32xf32, #tpu.memory_space<any>> -> memref<1x32xf32, #tpu.memory_space<any>>
    %c19_i32 = arith.constant 19 : i32
    %c0_i32_96 = arith.constant 0 : i32
    %159 = tpu.memref_slice %arg5[%c19_i32, %c0_i32_96] : memref<64x32xf32, #tpu.memory_space<vmem>> -> memref<1x32xf32, #tpu.memory_space<vmem>>
    %160 = tpu.memref_slice %arg6[%c2_i32_94] : memref<8x!tpu.dma_semaphore, #tpu.memory_space<semaphore_mem>> -> memref<1x!tpu.dma_semaphore, #tpu.memory_space<semaphore_mem>>
    %161 = tpu.memref_squeeze %160 : memref<1x!tpu.dma_semaphore, #tpu.memory_space<semaphore_mem>> -> memref<!tpu.dma_semaphore, #tpu.memory_space<semaphore_mem>>
    tpu.enqueue_dma source(%158 : memref<1x32xf32, #tpu.memory_space<any>>) target(%159 : memref<1x32xf32, #tpu.memory_space<vmem>>) target_semaphore(%161 : memref<!tpu.dma_semaphore, #tpu.memory_space<semaphore_mem>>)
    %c32_i32_97 = arith.constant 32 : i32
    %162 = arith.addi %1, %c32_i32_97 : i32
    %c2_i32_98 = arith.constant 2 : i32
    %163 = arith.addi %162, %c2_i32_98 : i32
    %164 = arith.index_cast %163 : i32 to index
    %165 = memref.load %arg1[%164] : memref<64xi32, #tpu.memory_space<smem>>
    %c2_i32_99 = arith.constant 2 : i32
    %c0_i32_100 = arith.constant 0 : i32
    %166 = tpu.memref_slice %arg3[%165, %c0_i32_100] : memref<64x32xf32, #tpu.memory_space<any>> -> memref<1x32xf32, #tpu.memory_space<any>>
    %c20_i32 = arith.constant 20 : i32
    %c0_i32_101 = arith.constant 0 : i32
    %167 = tpu.memref_slice %arg5[%c20_i32, %c0_i32_101] : memref<64x32xf32, #tpu.memory_space<vmem>> -> memref<1x32xf32, #tpu.memory_space<vmem>>
    %168 = tpu.memref_slice %arg6[%c2_i32_99] : memref<8x!tpu.dma_semaphore, #tpu.memory_space<semaphore_mem>> -> memref<1x!tpu.dma_semaphore, #tpu.memory_space<semaphore_mem>>
    %169 = tpu.memref_squeeze %168 : memref<1x!tpu.dma_semaphore, #tpu.memory_space<semaphore_mem>> -> memref<!tpu.dma_semaphore, #tpu.memory_space<semaphore_mem>>
    tpu.enqueue_dma source(%166 : memref<1x32xf32, #tpu.memory_space<any>>) target(%167 : memref<1x32xf32, #tpu.memory_space<vmem>>) target_semaphore(%169 : memref<!tpu.dma_semaphore, #tpu.memory_space<semaphore_mem>>)
    %c40_i32_102 = arith.constant 40 : i32
    %170 = arith.addi %1, %c40_i32_102 : i32
    %c2_i32_103 = arith.constant 2 : i32
    %171 = arith.addi %170, %c2_i32_103 : i32
    %172 = arith.index_cast %171 : i32 to index
    %173 = memref.load %arg1[%172] : memref<64xi32, #tpu.memory_space<smem>>
    %c2_i32_104 = arith.constant 2 : i32
    %c0_i32_105 = arith.constant 0 : i32
    %174 = tpu.memref_slice %arg3[%173, %c0_i32_105] : memref<64x32xf32, #tpu.memory_space<any>> -> memref<1x32xf32, #tpu.memory_space<any>>
    %c21_i32 = arith.constant 21 : i32
    %c0_i32_106 = arith.constant 0 : i32
    %175 = tpu.memref_slice %arg5[%c21_i32, %c0_i32_106] : memref<64x32xf32, #tpu.memory_space<vmem>> -> memref<1x32xf32, #tpu.memory_space<vmem>>
    %176 = tpu.memref_slice %arg6[%c2_i32_104] : memref<8x!tpu.dma_semaphore, #tpu.memory_space<semaphore_mem>> -> memref<1x!tpu.dma_semaphore, #tpu.memory_space<semaphore_mem>>
    %177 = tpu.memref_squeeze %176 : memref<1x!tpu.dma_semaphore, #tpu.memory_space<semaphore_mem>> -> memref<!tpu.dma_semaphore, #tpu.memory_space<semaphore_mem>>
    tpu.enqueue_dma source(%174 : memref<1x32xf32, #tpu.memory_space<any>>) target(%175 : memref<1x32xf32, #tpu.memory_space<vmem>>) target_semaphore(%177 : memref<!tpu.dma_semaphore, #tpu.memory_space<semaphore_mem>>)
    %c48_i32_107 = arith.constant 48 : i32
    %178 = arith.addi %1, %c48_i32_107 : i32
    %c2_i32_108 = arith.constant 2 : i32
    %179 = arith.addi %178, %c2_i32_108 : i32
    %180 = arith.index_cast %179 : i32 to index
    %181 = memref.load %arg1[%180] : memref<64xi32, #tpu.memory_space<smem>>
    %c2_i32_109 = arith.constant 2 : i32
    %c0_i32_110 = arith.constant 0 : i32
    %182 = tpu.memref_slice %arg3[%181, %c0_i32_110] : memref<64x32xf32, #tpu.memory_space<any>> -> memref<1x32xf32, #tpu.memory_space<any>>
    %c22_i32 = arith.constant 22 : i32
    %c0_i32_111 = arith.constant 0 : i32
    %183 = tpu.memref_slice %arg5[%c22_i32, %c0_i32_111] : memref<64x32xf32, #tpu.memory_space<vmem>> -> memref<1x32xf32, #tpu.memory_space<vmem>>
    %184 = tpu.memref_slice %arg6[%c2_i32_109] : memref<8x!tpu.dma_semaphore, #tpu.memory_space<semaphore_mem>> -> memref<1x!tpu.dma_semaphore, #tpu.memory_space<semaphore_mem>>
    %185 = tpu.memref_squeeze %184 : memref<1x!tpu.dma_semaphore, #tpu.memory_space<semaphore_mem>> -> memref<!tpu.dma_semaphore, #tpu.memory_space<semaphore_mem>>
    tpu.enqueue_dma source(%182 : memref<1x32xf32, #tpu.memory_space<any>>) target(%183 : memref<1x32xf32, #tpu.memory_space<vmem>>) target_semaphore(%185 : memref<!tpu.dma_semaphore, #tpu.memory_space<semaphore_mem>>)
    %c56_i32_112 = arith.constant 56 : i32
    %186 = arith.addi %1, %c56_i32_112 : i32
    %c2_i32_113 = arith.constant 2 : i32
    %187 = arith.addi %186, %c2_i32_113 : i32
    %188 = arith.index_cast %187 : i32 to index
    %189 = memref.load %arg1[%188] : memref<64xi32, #tpu.memory_space<smem>>
    %c2_i32_114 = arith.constant 2 : i32
    %c0_i32_115 = arith.constant 0 : i32
    %190 = tpu.memref_slice %arg3[%189, %c0_i32_115] : memref<64x32xf32, #tpu.memory_space<any>> -> memref<1x32xf32, #tpu.memory_space<any>>
    %c23_i32 = arith.constant 23 : i32
    %c0_i32_116 = arith.constant 0 : i32
    %191 = tpu.memref_slice %arg5[%c23_i32, %c0_i32_116] : memref<64x32xf32, #tpu.memory_space<vmem>> -> memref<1x32xf32, #tpu.memory_space<vmem>>
    %192 = tpu.memref_slice %arg6[%c2_i32_114] : memref<8x!tpu.dma_semaphore, #tpu.memory_space<semaphore_mem>> -> memref<1x!tpu.dma_semaphore, #tpu.memory_space<semaphore_mem>>
    %193 = tpu.memref_squeeze %192 : memref<1x!tpu.dma_semaphore, #tpu.memory_space<semaphore_mem>> -> memref<!tpu.dma_semaphore, #tpu.memory_space<semaphore_mem>>
    tpu.enqueue_dma source(%190 : memref<1x32xf32, #tpu.memory_space<any>>) target(%191 : memref<1x32xf32, #tpu.memory_space<vmem>>) target_semaphore(%193 : memref<!tpu.dma_semaphore, #tpu.memory_space<semaphore_mem>>)
    %c0_i32_117 = arith.constant 0 : i32
    %194 = arith.addi %1, %c0_i32_117 : i32
    %c3_i32_118 = arith.constant 3 : i32
    %195 = arith.addi %194, %c3_i32_118 : i32
    %196 = arith.index_cast %195 : i32 to index
    %197 = memref.load %arg1[%196] : memref<64xi32, #tpu.memory_space<smem>>
    %c3_i32_119 = arith.constant 3 : i32
    %c0_i32_120 = arith.constant 0 : i32
    %198 = tpu.memref_slice %arg3[%197, %c0_i32_120] : memref<64x32xf32, #tpu.memory_space<any>> -> memref<1x32xf32, #tpu.memory_space<any>>
    %c24_i32_121 = arith.constant 24 : i32
    %c0_i32_122 = arith.constant 0 : i32
    %199 = tpu.memref_slice %arg5[%c24_i32_121, %c0_i32_122] : memref<64x32xf32, #tpu.memory_space<vmem>> -> memref<1x32xf32, #tpu.memory_space<vmem>>
    %200 = tpu.memref_slice %arg6[%c3_i32_119] : memref<8x!tpu.dma_semaphore, #tpu.memory_space<semaphore_mem>> -> memref<1x!tpu.dma_semaphore, #tpu.memory_space<semaphore_mem>>
    %201 = tpu.memref_squeeze %200 : memref<1x!tpu.dma_semaphore, #tpu.memory_space<semaphore_mem>> -> memref<!tpu.dma_semaphore, #tpu.memory_space<semaphore_mem>>
    tpu.enqueue_dma source(%198 : memref<1x32xf32, #tpu.memory_space<any>>) target(%199 : memref<1x32xf32, #tpu.memory_space<vmem>>) target_semaphore(%201 : memref<!tpu.dma_semaphore, #tpu.memory_space<semaphore_mem>>)
    %c8_i32_123 = arith.constant 8 : i32
    %202 = arith.addi %1, %c8_i32_123 : i32
    %c3_i32_124 = arith.constant 3 : i32
    %203 = arith.addi %202, %c3_i32_124 : i32
    %204 = arith.index_cast %203 : i32 to index
    %205 = memref.load %arg1[%204] : memref<64xi32, #tpu.memory_space<smem>>
    %c3_i32_125 = arith.constant 3 : i32
    %c0_i32_126 = arith.constant 0 : i32
    %206 = tpu.memref_slice %arg3[%205, %c0_i32_126] : memref<64x32xf32, #tpu.memory_space<any>> -> memref<1x32xf32, #tpu.memory_space<any>>
    %c25_i32 = arith.constant 25 : i32
    %c0_i32_127 = arith.constant 0 : i32
    %207 = tpu.memref_slice %arg5[%c25_i32, %c0_i32_127] : memref<64x32xf32, #tpu.memory_space<vmem>> -> memref<1x32xf32, #tpu.memory_space<vmem>>
    %208 = tpu.memref_slice %arg6[%c3_i32_125] : memref<8x!tpu.dma_semaphore, #tpu.memory_space<semaphore_mem>> -> memref<1x!tpu.dma_semaphore, #tpu.memory_space<semaphore_mem>>
    %209 = tpu.memref_squeeze %208 : memref<1x!tpu.dma_semaphore, #tpu.memory_space<semaphore_mem>> -> memref<!tpu.dma_semaphore, #tpu.memory_space<semaphore_mem>>
    tpu.enqueue_dma source(%206 : memref<1x32xf32, #tpu.memory_space<any>>) target(%207 : memref<1x32xf32, #tpu.memory_space<vmem>>) target_semaphore(%209 : memref<!tpu.dma_semaphore, #tpu.memory_space<semaphore_mem>>)
    %c16_i32_128 = arith.constant 16 : i32
    %210 = arith.addi %1, %c16_i32_128 : i32
    %c3_i32_129 = arith.constant 3 : i32
    %211 = arith.addi %210, %c3_i32_129 : i32
    %212 = arith.index_cast %211 : i32 to index
    %213 = memref.load %arg1[%212] : memref<64xi32, #tpu.memory_space<smem>>
    %c3_i32_130 = arith.constant 3 : i32
    %c0_i32_131 = arith.constant 0 : i32
    %214 = tpu.memref_slice %arg3[%213, %c0_i32_131] : memref<64x32xf32, #tpu.memory_space<any>> -> memref<1x32xf32, #tpu.memory_space<any>>
    %c26_i32 = arith.constant 26 : i32
    %c0_i32_132 = arith.constant 0 : i32
    %215 = tpu.memref_slice %arg5[%c26_i32, %c0_i32_132] : memref<64x32xf32, #tpu.memory_space<vmem>> -> memref<1x32xf32, #tpu.memory_space<vmem>>
    %216 = tpu.memref_slice %arg6[%c3_i32_130] : memref<8x!tpu.dma_semaphore, #tpu.memory_space<semaphore_mem>> -> memref<1x!tpu.dma_semaphore, #tpu.memory_space<semaphore_mem>>
    %217 = tpu.memref_squeeze %216 : memref<1x!tpu.dma_semaphore, #tpu.memory_space<semaphore_mem>> -> memref<!tpu.dma_semaphore, #tpu.memory_space<semaphore_mem>>
    tpu.enqueue_dma source(%214 : memref<1x32xf32, #tpu.memory_space<any>>) target(%215 : memref<1x32xf32, #tpu.memory_space<vmem>>) target_semaphore(%217 : memref<!tpu.dma_semaphore, #tpu.memory_space<semaphore_mem>>)
    %c24_i32_133 = arith.constant 24 : i32
    %218 = arith.addi %1, %c24_i32_133 : i32
    %c3_i32_134 = arith.constant 3 : i32
    %219 = arith.addi %218, %c3_i32_134 : i32
    %220 = arith.index_cast %219 : i32 to index
    %221 = memref.load %arg1[%220] : memref<64xi32, #tpu.memory_space<smem>>
    %c3_i32_135 = arith.constant 3 : i32
    %c0_i32_136 = arith.constant 0 : i32
    %222 = tpu.memref_slice %arg3[%221, %c0_i32_136] : memref<64x32xf32, #tpu.memory_space<any>> -> memref<1x32xf32, #tpu.memory_space<any>>
    %c27_i32 = arith.constant 27 : i32
    %c0_i32_137 = arith.constant 0 : i32
    %223 = tpu.memref_slice %arg5[%c27_i32, %c0_i32_137] : memref<64x32xf32, #tpu.memory_space<vmem>> -> memref<1x32xf32, #tpu.memory_space<vmem>>
    %224 = tpu.memref_slice %arg6[%c3_i32_135] : memref<8x!tpu.dma_semaphore, #tpu.memory_space<semaphore_mem>> -> memref<1x!tpu.dma_semaphore, #tpu.memory_space<semaphore_mem>>
    %225 = tpu.memref_squeeze %224 : memref<1x!tpu.dma_semaphore, #tpu.memory_space<semaphore_mem>> -> memref<!tpu.dma_semaphore, #tpu.memory_space<semaphore_mem>>
    tpu.enqueue_dma source(%222 : memref<1x32xf32, #tpu.memory_space<any>>) target(%223 : memref<1x32xf32, #tpu.memory_space<vmem>>) target_semaphore(%225 : memref<!tpu.dma_semaphore, #tpu.memory_space<semaphore_mem>>)
    %c32_i32_138 = arith.constant 32 : i32
    %226 = arith.addi %1, %c32_i32_138 : i32
    %c3_i32_139 = arith.constant 3 : i32
    %227 = arith.addi %226, %c3_i32_139 : i32
    %228 = arith.index_cast %227 : i32 to index
    %229 = memref.load %arg1[%228] : memref<64xi32, #tpu.memory_space<smem>>
    %c3_i32_140 = arith.constant 3 : i32
    %c0_i32_141 = arith.constant 0 : i32
    %230 = tpu.memref_slice %arg3[%229, %c0_i32_141] : memref<64x32xf32, #tpu.memory_space<any>> -> memref<1x32xf32, #tpu.memory_space<any>>
    %c28_i32 = arith.constant 28 : i32
    %c0_i32_142 = arith.constant 0 : i32
    %231 = tpu.memref_slice %arg5[%c28_i32, %c0_i32_142] : memref<64x32xf32, #tpu.memory_space<vmem>> -> memref<1x32xf32, #tpu.memory_space<vmem>>
    %232 = tpu.memref_slice %arg6[%c3_i32_140] : memref<8x!tpu.dma_semaphore, #tpu.memory_space<semaphore_mem>> -> memref<1x!tpu.dma_semaphore, #tpu.memory_space<semaphore_mem>>
    %233 = tpu.memref_squeeze %232 : memref<1x!tpu.dma_semaphore, #tpu.memory_space<semaphore_mem>> -> memref<!tpu.dma_semaphore, #tpu.memory_space<semaphore_mem>>
    tpu.enqueue_dma source(%230 : memref<1x32xf32, #tpu.memory_space<any>>) target(%231 : memref<1x32xf32, #tpu.memory_space<vmem>>) target_semaphore(%233 : memref<!tpu.dma_semaphore, #tpu.memory_space<semaphore_mem>>)
    %c40_i32_143 = arith.constant 40 : i32
    %234 = arith.addi %1, %c40_i32_143 : i32
    %c3_i32_144 = arith.constant 3 : i32
    %235 = arith.addi %234, %c3_i32_144 : i32
    %236 = arith.index_cast %235 : i32 to index
    %237 = memref.load %arg1[%236] : memref<64xi32, #tpu.memory_space<smem>>
    %c3_i32_145 = arith.constant 3 : i32
    %c0_i32_146 = arith.constant 0 : i32
    %238 = tpu.memref_slice %arg3[%237, %c0_i32_146] : memref<64x32xf32, #tpu.memory_space<any>> -> memref<1x32xf32, #tpu.memory_space<any>>
    %c29_i32 = arith.constant 29 : i32
    %c0_i32_147 = arith.constant 0 : i32
    %239 = tpu.memref_slice %arg5[%c29_i32, %c0_i32_147] : memref<64x32xf32, #tpu.memory_space<vmem>> -> memref<1x32xf32, #tpu.memory_space<vmem>>
    %240 = tpu.memref_slice %arg6[%c3_i32_145] : memref<8x!tpu.dma_semaphore, #tpu.memory_space<semaphore_mem>> -> memref<1x!tpu.dma_semaphore, #tpu.memory_space<semaphore_mem>>
    %241 = tpu.memref_squeeze %240 : memref<1x!tpu.dma_semaphore, #tpu.memory_space<semaphore_mem>> -> memref<!tpu.dma_semaphore, #tpu.memory_space<semaphore_mem>>
    tpu.enqueue_dma source(%238 : memref<1x32xf32, #tpu.memory_space<any>>) target(%239 : memref<1x32xf32, #tpu.memory_space<vmem>>) target_semaphore(%241 : memref<!tpu.dma_semaphore, #tpu.memory_space<semaphore_mem>>)
    %c48_i32_148 = arith.constant 48 : i32
    %242 = arith.addi %1, %c48_i32_148 : i32
    %c3_i32_149 = arith.constant 3 : i32
    %243 = arith.addi %242, %c3_i32_149 : i32
    %244 = arith.index_cast %243 : i32 to index
    %245 = memref.load %arg1[%244] : memref<64xi32, #tpu.memory_space<smem>>
    %c3_i32_150 = arith.constant 3 : i32
    %c0_i32_151 = arith.constant 0 : i32
    %246 = tpu.memref_slice %arg3[%245, %c0_i32_151] : memref<64x32xf32, #tpu.memory_space<any>> -> memref<1x32xf32, #tpu.memory_space<any>>
    %c30_i32 = arith.constant 30 : i32
    %c0_i32_152 = arith.constant 0 : i32
    %247 = tpu.memref_slice %arg5[%c30_i32, %c0_i32_152] : memref<64x32xf32, #tpu.memory_space<vmem>> -> memref<1x32xf32, #tpu.memory_space<vmem>>
    %248 = tpu.memref_slice %arg6[%c3_i32_150] : memref<8x!tpu.dma_semaphore, #tpu.memory_space<semaphore_mem>> -> memref<1x!tpu.dma_semaphore, #tpu.memory_space<semaphore_mem>>
    %249 = tpu.memref_squeeze %248 : memref<1x!tpu.dma_semaphore, #tpu.memory_space<semaphore_mem>> -> memref<!tpu.dma_semaphore, #tpu.memory_space<semaphore_mem>>
    tpu.enqueue_dma source(%246 : memref<1x32xf32, #tpu.memory_space<any>>) target(%247 : memref<1x32xf32, #tpu.memory_space<vmem>>) target_semaphore(%249 : memref<!tpu.dma_semaphore, #tpu.memory_space<semaphore_mem>>)
    %c56_i32_153 = arith.constant 56 : i32
    %250 = arith.addi %1, %c56_i32_153 : i32
    %c3_i32_154 = arith.constant 3 : i32
    %251 = arith.addi %250, %c3_i32_154 : i32
    %252 = arith.index_cast %251 : i32 to index
    %253 = memref.load %arg1[%252] : memref<64xi32, #tpu.memory_space<smem>>
    %c3_i32_155 = arith.constant 3 : i32
    %c0_i32_156 = arith.constant 0 : i32
    %254 = tpu.memref_slice %arg3[%253, %c0_i32_156] : memref<64x32xf32, #tpu.memory_space<any>> -> memref<1x32xf32, #tpu.memory_space<any>>
    %c31_i32 = arith.constant 31 : i32
    %c0_i32_157 = arith.constant 0 : i32
    %255 = tpu.memref_slice %arg5[%c31_i32, %c0_i32_157] : memref<64x32xf32, #tpu.memory_space<vmem>> -> memref<1x32xf32, #tpu.memory_space<vmem>>
    %256 = tpu.memref_slice %arg6[%c3_i32_155] : memref<8x!tpu.dma_semaphore, #tpu.memory_space<semaphore_mem>> -> memref<1x!tpu.dma_semaphore, #tpu.memory_space<semaphore_mem>>
    %257 = tpu.memref_squeeze %256 : memref<1x!tpu.dma_semaphore, #tpu.memory_space<semaphore_mem>> -> memref<!tpu.dma_semaphore, #tpu.memory_space<semaphore_mem>>
    tpu.enqueue_dma source(%254 : memref<1x32xf32, #tpu.memory_space<any>>) target(%255 : memref<1x32xf32, #tpu.memory_space<vmem>>) target_semaphore(%257 : memref<!tpu.dma_semaphore, #tpu.memory_space<semaphore_mem>>)
    %c0_i32_158 = arith.constant 0 : i32
    %258 = arith.addi %1, %c0_i32_158 : i32
    %c4_i32_159 = arith.constant 4 : i32
    %259 = arith.addi %258, %c4_i32_159 : i32
    %260 = arith.index_cast %259 : i32 to index
    %261 = memref.load %arg1[%260] : memref<64xi32, #tpu.memory_space<smem>>
    %c4_i32_160 = arith.constant 4 : i32
    %c0_i32_161 = arith.constant 0 : i32
    %262 = tpu.memref_slice %arg3[%261, %c0_i32_161] : memref<64x32xf32, #tpu.memory_space<any>> -> memref<1x32xf32, #tpu.memory_space<any>>
    %c32_i32_162 = arith.constant 32 : i32
    %c0_i32_163 = arith.constant 0 : i32
    %263 = tpu.memref_slice %arg5[%c32_i32_162, %c0_i32_163] : memref<64x32xf32, #tpu.memory_space<vmem>> -> memref<1x32xf32, #tpu.memory_space<vmem>>
    %264 = tpu.memref_slice %arg6[%c4_i32_160] : memref<8x!tpu.dma_semaphore, #tpu.memory_space<semaphore_mem>> -> memref<1x!tpu.dma_semaphore, #tpu.memory_space<semaphore_mem>>
    %265 = tpu.memref_squeeze %264 : memref<1x!tpu.dma_semaphore, #tpu.memory_space<semaphore_mem>> -> memref<!tpu.dma_semaphore, #tpu.memory_space<semaphore_mem>>
    tpu.enqueue_dma source(%262 : memref<1x32xf32, #tpu.memory_space<any>>) target(%263 : memref<1x32xf32, #tpu.memory_space<vmem>>) target_semaphore(%265 : memref<!tpu.dma_semaphore, #tpu.memory_space<semaphore_mem>>)
    %c8_i32_164 = arith.constant 8 : i32
    %266 = arith.addi %1, %c8_i32_164 : i32
    %c4_i32_165 = arith.constant 4 : i32
    %267 = arith.addi %266, %c4_i32_165 : i32
    %268 = arith.index_cast %267 : i32 to index
    %269 = memref.load %arg1[%268] : memref<64xi32, #tpu.memory_space<smem>>
    %c4_i32_166 = arith.constant 4 : i32
    %c0_i32_167 = arith.constant 0 : i32
    %270 = tpu.memref_slice %arg3[%269, %c0_i32_167] : memref<64x32xf32, #tpu.memory_space<any>> -> memref<1x32xf32, #tpu.memory_space<any>>
    %c33_i32 = arith.constant 33 : i32
    %c0_i32_168 = arith.constant 0 : i32
    %271 = tpu.memref_slice %arg5[%c33_i32, %c0_i32_168] : memref<64x32xf32, #tpu.memory_space<vmem>> -> memref<1x32xf32, #tpu.memory_space<vmem>>
    %272 = tpu.memref_slice %arg6[%c4_i32_166] : memref<8x!tpu.dma_semaphore, #tpu.memory_space<semaphore_mem>> -> memref<1x!tpu.dma_semaphore, #tpu.memory_space<semaphore_mem>>
    %273 = tpu.memref_squeeze %272 : memref<1x!tpu.dma_semaphore, #tpu.memory_space<semaphore_mem>> -> memref<!tpu.dma_semaphore, #tpu.memory_space<semaphore_mem>>
    tpu.enqueue_dma source(%270 : memref<1x32xf32, #tpu.memory_space<any>>) target(%271 : memref<1x32xf32, #tpu.memory_space<vmem>>) target_semaphore(%273 : memref<!tpu.dma_semaphore, #tpu.memory_space<semaphore_mem>>)
    %c16_i32_169 = arith.constant 16 : i32
    %274 = arith.addi %1, %c16_i32_169 : i32
    %c4_i32_170 = arith.constant 4 : i32
    %275 = arith.addi %274, %c4_i32_170 : i32
    %276 = arith.index_cast %275 : i32 to index
    %277 = memref.load %arg1[%276] : memref<64xi32, #tpu.memory_space<smem>>
    %c4_i32_171 = arith.constant 4 : i32
    %c0_i32_172 = arith.constant 0 : i32
    %278 = tpu.memref_slice %arg3[%277, %c0_i32_172] : memref<64x32xf32, #tpu.memory_space<any>> -> memref<1x32xf32, #tpu.memory_space<any>>
    %c34_i32 = arith.constant 34 : i32
    %c0_i32_173 = arith.constant 0 : i32
    %279 = tpu.memref_slice %arg5[%c34_i32, %c0_i32_173] : memref<64x32xf32, #tpu.memory_space<vmem>> -> memref<1x32xf32, #tpu.memory_space<vmem>>
    %280 = tpu.memref_slice %arg6[%c4_i32_171] : memref<8x!tpu.dma_semaphore, #tpu.memory_space<semaphore_mem>> -> memref<1x!tpu.dma_semaphore, #tpu.memory_space<semaphore_mem>>
    %281 = tpu.memref_squeeze %280 : memref<1x!tpu.dma_semaphore, #tpu.memory_space<semaphore_mem>> -> memref<!tpu.dma_semaphore, #tpu.memory_space<semaphore_mem>>
    tpu.enqueue_dma source(%278 : memref<1x32xf32, #tpu.memory_space<any>>) target(%279 : memref<1x32xf32, #tpu.memory_space<vmem>>) target_semaphore(%281 : memref<!tpu.dma_semaphore, #tpu.memory_space<semaphore_mem>>)
    %c24_i32_174 = arith.constant 24 : i32
    %282 = arith.addi %1, %c24_i32_174 : i32
    %c4_i32_175 = arith.constant 4 : i32
    %283 = arith.addi %282, %c4_i32_175 : i32
    %284 = arith.index_cast %283 : i32 to index
    %285 = memref.load %arg1[%284] : memref<64xi32, #tpu.memory_space<smem>>
    %c4_i32_176 = arith.constant 4 : i32
    %c0_i32_177 = arith.constant 0 : i32
    %286 = tpu.memref_slice %arg3[%285, %c0_i32_177] : memref<64x32xf32, #tpu.memory_space<any>> -> memref<1x32xf32, #tpu.memory_space<any>>
    %c35_i32 = arith.constant 35 : i32
    %c0_i32_178 = arith.constant 0 : i32
    %287 = tpu.memref_slice %arg5[%c35_i32, %c0_i32_178] : memref<64x32xf32, #tpu.memory_space<vmem>> -> memref<1x32xf32, #tpu.memory_space<vmem>>
    %288 = tpu.memref_slice %arg6[%c4_i32_176] : memref<8x!tpu.dma_semaphore, #tpu.memory_space<semaphore_mem>> -> memref<1x!tpu.dma_semaphore, #tpu.memory_space<semaphore_mem>>
    %289 = tpu.memref_squeeze %288 : memref<1x!tpu.dma_semaphore, #tpu.memory_space<semaphore_mem>> -> memref<!tpu.dma_semaphore, #tpu.memory_space<semaphore_mem>>
    tpu.enqueue_dma source(%286 : memref<1x32xf32, #tpu.memory_space<any>>) target(%287 : memref<1x32xf32, #tpu.memory_space<vmem>>) target_semaphore(%289 : memref<!tpu.dma_semaphore, #tpu.memory_space<semaphore_mem>>)
    %c32_i32_179 = arith.constant 32 : i32
    %290 = arith.addi %1, %c32_i32_179 : i32
    %c4_i32_180 = arith.constant 4 : i32
    %291 = arith.addi %290, %c4_i32_180 : i32
    %292 = arith.index_cast %291 : i32 to index
    %293 = memref.load %arg1[%292] : memref<64xi32, #tpu.memory_space<smem>>
    %c4_i32_181 = arith.constant 4 : i32
    %c0_i32_182 = arith.constant 0 : i32
    %294 = tpu.memref_slice %arg3[%293, %c0_i32_182] : memref<64x32xf32, #tpu.memory_space<any>> -> memref<1x32xf32, #tpu.memory_space<any>>
    %c36_i32 = arith.constant 36 : i32
    %c0_i32_183 = arith.constant 0 : i32
    %295 = tpu.memref_slice %arg5[%c36_i32, %c0_i32_183] : memref<64x32xf32, #tpu.memory_space<vmem>> -> memref<1x32xf32, #tpu.memory_space<vmem>>
    %296 = tpu.memref_slice %arg6[%c4_i32_181] : memref<8x!tpu.dma_semaphore, #tpu.memory_space<semaphore_mem>> -> memref<1x!tpu.dma_semaphore, #tpu.memory_space<semaphore_mem>>
    %297 = tpu.memref_squeeze %296 : memref<1x!tpu.dma_semaphore, #tpu.memory_space<semaphore_mem>> -> memref<!tpu.dma_semaphore, #tpu.memory_space<semaphore_mem>>
    tpu.enqueue_dma source(%294 : memref<1x32xf32, #tpu.memory_space<any>>) target(%295 : memref<1x32xf32, #tpu.memory_space<vmem>>) target_semaphore(%297 : memref<!tpu.dma_semaphore, #tpu.memory_space<semaphore_mem>>)
    %c40_i32_184 = arith.constant 40 : i32
    %298 = arith.addi %1, %c40_i32_184 : i32
    %c4_i32_185 = arith.constant 4 : i32
    %299 = arith.addi %298, %c4_i32_185 : i32
    %300 = arith.index_cast %299 : i32 to index
    %301 = memref.load %arg1[%300] : memref<64xi32, #tpu.memory_space<smem>>
    %c4_i32_186 = arith.constant 4 : i32
    %c0_i32_187 = arith.constant 0 : i32
    %302 = tpu.memref_slice %arg3[%301, %c0_i32_187] : memref<64x32xf32, #tpu.memory_space<any>> -> memref<1x32xf32, #tpu.memory_space<any>>
    %c37_i32 = arith.constant 37 : i32
    %c0_i32_188 = arith.constant 0 : i32
    %303 = tpu.memref_slice %arg5[%c37_i32, %c0_i32_188] : memref<64x32xf32, #tpu.memory_space<vmem>> -> memref<1x32xf32, #tpu.memory_space<vmem>>
    %304 = tpu.memref_slice %arg6[%c4_i32_186] : memref<8x!tpu.dma_semaphore, #tpu.memory_space<semaphore_mem>> -> memref<1x!tpu.dma_semaphore, #tpu.memory_space<semaphore_mem>>
    %305 = tpu.memref_squeeze %304 : memref<1x!tpu.dma_semaphore, #tpu.memory_space<semaphore_mem>> -> memref<!tpu.dma_semaphore, #tpu.memory_space<semaphore_mem>>
    tpu.enqueue_dma source(%302 : memref<1x32xf32, #tpu.memory_space<any>>) target(%303 : memref<1x32xf32, #tpu.memory_space<vmem>>) target_semaphore(%305 : memref<!tpu.dma_semaphore, #tpu.memory_space<semaphore_mem>>)
    %c48_i32_189 = arith.constant 48 : i32
    %306 = arith.addi %1, %c48_i32_189 : i32
    %c4_i32_190 = arith.constant 4 : i32
    %307 = arith.addi %306, %c4_i32_190 : i32
    %308 = arith.index_cast %307 : i32 to index
    %309 = memref.load %arg1[%308] : memref<64xi32, #tpu.memory_space<smem>>
    %c4_i32_191 = arith.constant 4 : i32
    %c0_i32_192 = arith.constant 0 : i32
    %310 = tpu.memref_slice %arg3[%309, %c0_i32_192] : memref<64x32xf32, #tpu.memory_space<any>> -> memref<1x32xf32, #tpu.memory_space<any>>
    %c38_i32 = arith.constant 38 : i32
    %c0_i32_193 = arith.constant 0 : i32
    %311 = tpu.memref_slice %arg5[%c38_i32, %c0_i32_193] : memref<64x32xf32, #tpu.memory_space<vmem>> -> memref<1x32xf32, #tpu.memory_space<vmem>>
    %312 = tpu.memref_slice %arg6[%c4_i32_191] : memref<8x!tpu.dma_semaphore, #tpu.memory_space<semaphore_mem>> -> memref<1x!tpu.dma_semaphore, #tpu.memory_space<semaphore_mem>>
    %313 = tpu.memref_squeeze %312 : memref<1x!tpu.dma_semaphore, #tpu.memory_space<semaphore_mem>> -> memref<!tpu.dma_semaphore, #tpu.memory_space<semaphore_mem>>
    tpu.enqueue_dma source(%310 : memref<1x32xf32, #tpu.memory_space<any>>) target(%311 : memref<1x32xf32, #tpu.memory_space<vmem>>) target_semaphore(%313 : memref<!tpu.dma_semaphore, #tpu.memory_space<semaphore_mem>>)
    %c56_i32_194 = arith.constant 56 : i32
    %314 = arith.addi %1, %c56_i32_194 : i32
    %c4_i32_195 = arith.constant 4 : i32
    %315 = arith.addi %314, %c4_i32_195 : i32
    %316 = arith.index_cast %315 : i32 to index
    %317 = memref.load %arg1[%316] : memref<64xi32, #tpu.memory_space<smem>>
    %c4_i32_196 = arith.constant 4 : i32
    %c0_i32_197 = arith.constant 0 : i32
    %318 = tpu.memref_slice %arg3[%317, %c0_i32_197] : memref<64x32xf32, #tpu.memory_space<any>> -> memref<1x32xf32, #tpu.memory_space<any>>
    %c39_i32 = arith.constant 39 : i32
    %c0_i32_198 = arith.constant 0 : i32
    %319 = tpu.memref_slice %arg5[%c39_i32, %c0_i32_198] : memref<64x32xf32, #tpu.memory_space<vmem>> -> memref<1x32xf32, #tpu.memory_space<vmem>>
    %320 = tpu.memref_slice %arg6[%c4_i32_196] : memref<8x!tpu.dma_semaphore, #tpu.memory_space<semaphore_mem>> -> memref<1x!tpu.dma_semaphore, #tpu.memory_space<semaphore_mem>>
    %321 = tpu.memref_squeeze %320 : memref<1x!tpu.dma_semaphore, #tpu.memory_space<semaphore_mem>> -> memref<!tpu.dma_semaphore, #tpu.memory_space<semaphore_mem>>
    tpu.enqueue_dma source(%318 : memref<1x32xf32, #tpu.memory_space<any>>) target(%319 : memref<1x32xf32, #tpu.memory_space<vmem>>) target_semaphore(%321 : memref<!tpu.dma_semaphore, #tpu.memory_space<semaphore_mem>>)
    %c0_i32_199 = arith.constant 0 : i32
    %322 = arith.addi %1, %c0_i32_199 : i32
    %c5_i32_200 = arith.constant 5 : i32
    %323 = arith.addi %322, %c5_i32_200 : i32
    %324 = arith.index_cast %323 : i32 to index
    %325 = memref.load %arg1[%324] : memref<64xi32, #tpu.memory_space<smem>>
    %c5_i32_201 = arith.constant 5 : i32
    %c0_i32_202 = arith.constant 0 : i32
    %326 = tpu.memref_slice %arg3[%325, %c0_i32_202] : memref<64x32xf32, #tpu.memory_space<any>> -> memref<1x32xf32, #tpu.memory_space<any>>
    %c40_i32_203 = arith.constant 40 : i32
    %c0_i32_204 = arith.constant 0 : i32
    %327 = tpu.memref_slice %arg5[%c40_i32_203, %c0_i32_204] : memref<64x32xf32, #tpu.memory_space<vmem>> -> memref<1x32xf32, #tpu.memory_space<vmem>>
    %328 = tpu.memref_slice %arg6[%c5_i32_201] : memref<8x!tpu.dma_semaphore, #tpu.memory_space<semaphore_mem>> -> memref<1x!tpu.dma_semaphore, #tpu.memory_space<semaphore_mem>>
    %329 = tpu.memref_squeeze %328 : memref<1x!tpu.dma_semaphore, #tpu.memory_space<semaphore_mem>> -> memref<!tpu.dma_semaphore, #tpu.memory_space<semaphore_mem>>
    tpu.enqueue_dma source(%326 : memref<1x32xf32, #tpu.memory_space<any>>) target(%327 : memref<1x32xf32, #tpu.memory_space<vmem>>) target_semaphore(%329 : memref<!tpu.dma_semaphore, #tpu.memory_space<semaphore_mem>>)
    %c8_i32_205 = arith.constant 8 : i32
    %330 = arith.addi %1, %c8_i32_205 : i32
    %c5_i32_206 = arith.constant 5 : i32
    %331 = arith.addi %330, %c5_i32_206 : i32
    %332 = arith.index_cast %331 : i32 to index
    %333 = memref.load %arg1[%332] : memref<64xi32, #tpu.memory_space<smem>>
    %c5_i32_207 = arith.constant 5 : i32
    %c0_i32_208 = arith.constant 0 : i32
    %334 = tpu.memref_slice %arg3[%333, %c0_i32_208] : memref<64x32xf32, #tpu.memory_space<any>> -> memref<1x32xf32, #tpu.memory_space<any>>
    %c41_i32 = arith.constant 41 : i32
    %c0_i32_209 = arith.constant 0 : i32
    %335 = tpu.memref_slice %arg5[%c41_i32, %c0_i32_209] : memref<64x32xf32, #tpu.memory_space<vmem>> -> memref<1x32xf32, #tpu.memory_space<vmem>>
    %336 = tpu.memref_slice %arg6[%c5_i32_207] : memref<8x!tpu.dma_semaphore, #tpu.memory_space<semaphore_mem>> -> memref<1x!tpu.dma_semaphore, #tpu.memory_space<semaphore_mem>>
    %337 = tpu.memref_squeeze %336 : memref<1x!tpu.dma_semaphore, #tpu.memory_space<semaphore_mem>> -> memref<!tpu.dma_semaphore, #tpu.memory_space<semaphore_mem>>
    tpu.enqueue_dma source(%334 : memref<1x32xf32, #tpu.memory_space<any>>) target(%335 : memref<1x32xf32, #tpu.memory_space<vmem>>) target_semaphore(%337 : memref<!tpu.dma_semaphore, #tpu.memory_space<semaphore_mem>>)
    %c16_i32_210 = arith.constant 16 : i32
    %338 = arith.addi %1, %c16_i32_210 : i32
    %c5_i32_211 = arith.constant 5 : i32
    %339 = arith.addi %338, %c5_i32_211 : i32
    %340 = arith.index_cast %339 : i32 to index
    %341 = memref.load %arg1[%340] : memref<64xi32, #tpu.memory_space<smem>>
    %c5_i32_212 = arith.constant 5 : i32
    %c0_i32_213 = arith.constant 0 : i32
    %342 = tpu.memref_slice %arg3[%341, %c0_i32_213] : memref<64x32xf32, #tpu.memory_space<any>> -> memref<1x32xf32, #tpu.memory_space<any>>
    %c42_i32 = arith.constant 42 : i32
    %c0_i32_214 = arith.constant 0 : i32
    %343 = tpu.memref_slice %arg5[%c42_i32, %c0_i32_214] : memref<64x32xf32, #tpu.memory_space<vmem>> -> memref<1x32xf32, #tpu.memory_space<vmem>>
    %344 = tpu.memref_slice %arg6[%c5_i32_212] : memref<8x!tpu.dma_semaphore, #tpu.memory_space<semaphore_mem>> -> memref<1x!tpu.dma_semaphore, #tpu.memory_space<semaphore_mem>>
    %345 = tpu.memref_squeeze %344 : memref<1x!tpu.dma_semaphore, #tpu.memory_space<semaphore_mem>> -> memref<!tpu.dma_semaphore, #tpu.memory_space<semaphore_mem>>
    tpu.enqueue_dma source(%342 : memref<1x32xf32, #tpu.memory_space<any>>) target(%343 : memref<1x32xf32, #tpu.memory_space<vmem>>) target_semaphore(%345 : memref<!tpu.dma_semaphore, #tpu.memory_space<semaphore_mem>>)
    %c24_i32_215 = arith.constant 24 : i32
    %346 = arith.addi %1, %c24_i32_215 : i32
    %c5_i32_216 = arith.constant 5 : i32
    %347 = arith.addi %346, %c5_i32_216 : i32
    %348 = arith.index_cast %347 : i32 to index
    %349 = memref.load %arg1[%348] : memref<64xi32, #tpu.memory_space<smem>>
    %c5_i32_217 = arith.constant 5 : i32
    %c0_i32_218 = arith.constant 0 : i32
    %350 = tpu.memref_slice %arg3[%349, %c0_i32_218] : memref<64x32xf32, #tpu.memory_space<any>> -> memref<1x32xf32, #tpu.memory_space<any>>
    %c43_i32 = arith.constant 43 : i32
    %c0_i32_219 = arith.constant 0 : i32
    %351 = tpu.memref_slice %arg5[%c43_i32, %c0_i32_219] : memref<64x32xf32, #tpu.memory_space<vmem>> -> memref<1x32xf32, #tpu.memory_space<vmem>>
    %352 = tpu.memref_slice %arg6[%c5_i32_217] : memref<8x!tpu.dma_semaphore, #tpu.memory_space<semaphore_mem>> -> memref<1x!tpu.dma_semaphore, #tpu.memory_space<semaphore_mem>>
    %353 = tpu.memref_squeeze %352 : memref<1x!tpu.dma_semaphore, #tpu.memory_space<semaphore_mem>> -> memref<!tpu.dma_semaphore, #tpu.memory_space<semaphore_mem>>
    tpu.enqueue_dma source(%350 : memref<1x32xf32, #tpu.memory_space<any>>) target(%351 : memref<1x32xf32, #tpu.memory_space<vmem>>) target_semaphore(%353 : memref<!tpu.dma_semaphore, #tpu.memory_space<semaphore_mem>>)
    %c32_i32_220 = arith.constant 32 : i32
    %354 = arith.addi %1, %c32_i32_220 : i32
    %c5_i32_221 = arith.constant 5 : i32
    %355 = arith.addi %354, %c5_i32_221 : i32
    %356 = arith.index_cast %355 : i32 to index
    %357 = memref.load %arg1[%356] : memref<64xi32, #tpu.memory_space<smem>>
    %c5_i32_222 = arith.constant 5 : i32
    %c0_i32_223 = arith.constant 0 : i32
    %358 = tpu.memref_slice %arg3[%357, %c0_i32_223] : memref<64x32xf32, #tpu.memory_space<any>> -> memref<1x32xf32, #tpu.memory_space<any>>
    %c44_i32 = arith.constant 44 : i32
    %c0_i32_224 = arith.constant 0 : i32
    %359 = tpu.memref_slice %arg5[%c44_i32, %c0_i32_224] : memref<64x32xf32, #tpu.memory_space<vmem>> -> memref<1x32xf32, #tpu.memory_space<vmem>>
    %360 = tpu.memref_slice %arg6[%c5_i32_222] : memref<8x!tpu.dma_semaphore, #tpu.memory_space<semaphore_mem>> -> memref<1x!tpu.dma_semaphore, #tpu.memory_space<semaphore_mem>>
    %361 = tpu.memref_squeeze %360 : memref<1x!tpu.dma_semaphore, #tpu.memory_space<semaphore_mem>> -> memref<!tpu.dma_semaphore, #tpu.memory_space<semaphore_mem>>
    tpu.enqueue_dma source(%358 : memref<1x32xf32, #tpu.memory_space<any>>) target(%359 : memref<1x32xf32, #tpu.memory_space<vmem>>) target_semaphore(%361 : memref<!tpu.dma_semaphore, #tpu.memory_space<semaphore_mem>>)
    %c40_i32_225 = arith.constant 40 : i32
    %362 = arith.addi %1, %c40_i32_225 : i32
    %c5_i32_226 = arith.constant 5 : i32
    %363 = arith.addi %362, %c5_i32_226 : i32
    %364 = arith.index_cast %363 : i32 to index
    %365 = memref.load %arg1[%364] : memref<64xi32, #tpu.memory_space<smem>>
    %c5_i32_227 = arith.constant 5 : i32
    %c0_i32_228 = arith.constant 0 : i32
    %366 = tpu.memref_slice %arg3[%365, %c0_i32_228] : memref<64x32xf32, #tpu.memory_space<any>> -> memref<1x32xf32, #tpu.memory_space<any>>
    %c45_i32 = arith.constant 45 : i32
    %c0_i32_229 = arith.constant 0 : i32
    %367 = tpu.memref_slice %arg5[%c45_i32, %c0_i32_229] : memref<64x32xf32, #tpu.memory_space<vmem>> -> memref<1x32xf32, #tpu.memory_space<vmem>>
    %368 = tpu.memref_slice %arg6[%c5_i32_227] : memref<8x!tpu.dma_semaphore, #tpu.memory_space<semaphore_mem>> -> memref<1x!tpu.dma_semaphore, #tpu.memory_space<semaphore_mem>>
    %369 = tpu.memref_squeeze %368 : memref<1x!tpu.dma_semaphore, #tpu.memory_space<semaphore_mem>> -> memref<!tpu.dma_semaphore, #tpu.memory_space<semaphore_mem>>
    tpu.enqueue_dma source(%366 : memref<1x32xf32, #tpu.memory_space<any>>) target(%367 : memref<1x32xf32, #tpu.memory_space<vmem>>) target_semaphore(%369 : memref<!tpu.dma_semaphore, #tpu.memory_space<semaphore_mem>>)
    %c48_i32_230 = arith.constant 48 : i32
    %370 = arith.addi %1, %c48_i32_230 : i32
    %c5_i32_231 = arith.constant 5 : i32
    %371 = arith.addi %370, %c5_i32_231 : i32
    %372 = arith.index_cast %371 : i32 to index
    %373 = memref.load %arg1[%372] : memref<64xi32, #tpu.memory_space<smem>>
    %c5_i32_232 = arith.constant 5 : i32
    %c0_i32_233 = arith.constant 0 : i32
    %374 = tpu.memref_slice %arg3[%373, %c0_i32_233] : memref<64x32xf32, #tpu.memory_space<any>> -> memref<1x32xf32, #tpu.memory_space<any>>
    %c46_i32 = arith.constant 46 : i32
    %c0_i32_234 = arith.constant 0 : i32
    %375 = tpu.memref_slice %arg5[%c46_i32, %c0_i32_234] : memref<64x32xf32, #tpu.memory_space<vmem>> -> memref<1x32xf32, #tpu.memory_space<vmem>>
    %376 = tpu.memref_slice %arg6[%c5_i32_232] : memref<8x!tpu.dma_semaphore, #tpu.memory_space<semaphore_mem>> -> memref<1x!tpu.dma_semaphore, #tpu.memory_space<semaphore_mem>>
    %377 = tpu.memref_squeeze %376 : memref<1x!tpu.dma_semaphore, #tpu.memory_space<semaphore_mem>> -> memref<!tpu.dma_semaphore, #tpu.memory_space<semaphore_mem>>
    tpu.enqueue_dma source(%374 : memref<1x32xf32, #tpu.memory_space<any>>) target(%375 : memref<1x32xf32, #tpu.memory_space<vmem>>) target_semaphore(%377 : memref<!tpu.dma_semaphore, #tpu.memory_space<semaphore_mem>>)
    %c56_i32_235 = arith.constant 56 : i32
    %378 = arith.addi %1, %c56_i32_235 : i32
    %c5_i32_236 = arith.constant 5 : i32
    %379 = arith.addi %378, %c5_i32_236 : i32
    %380 = arith.index_cast %379 : i32 to index
    %381 = memref.load %arg1[%380] : memref<64xi32, #tpu.memory_space<smem>>
    %c5_i32_237 = arith.constant 5 : i32
    %c0_i32_238 = arith.constant 0 : i32
    %382 = tpu.memref_slice %arg3[%381, %c0_i32_238] : memref<64x32xf32, #tpu.memory_space<any>> -> memref<1x32xf32, #tpu.memory_space<any>>
    %c47_i32 = arith.constant 47 : i32
    %c0_i32_239 = arith.constant 0 : i32
    %383 = tpu.memref_slice %arg5[%c47_i32, %c0_i32_239] : memref<64x32xf32, #tpu.memory_space<vmem>> -> memref<1x32xf32, #tpu.memory_space<vmem>>
    %384 = tpu.memref_slice %arg6[%c5_i32_237] : memref<8x!tpu.dma_semaphore, #tpu.memory_space<semaphore_mem>> -> memref<1x!tpu.dma_semaphore, #tpu.memory_space<semaphore_mem>>
    %385 = tpu.memref_squeeze %384 : memref<1x!tpu.dma_semaphore, #tpu.memory_space<semaphore_mem>> -> memref<!tpu.dma_semaphore, #tpu.memory_space<semaphore_mem>>
    tpu.enqueue_dma source(%382 : memref<1x32xf32, #tpu.memory_space<any>>) target(%383 : memref<1x32xf32, #tpu.memory_space<vmem>>) target_semaphore(%385 : memref<!tpu.dma_semaphore, #tpu.memory_space<semaphore_mem>>)
    %c0_i32_240 = arith.constant 0 : i32
    %386 = arith.addi %1, %c0_i32_240 : i32
    %c6_i32_241 = arith.constant 6 : i32
    %387 = arith.addi %386, %c6_i32_241 : i32
    %388 = arith.index_cast %387 : i32 to index
    %389 = memref.load %arg1[%388] : memref<64xi32, #tpu.memory_space<smem>>
    %c6_i32_242 = arith.constant 6 : i32
    %c0_i32_243 = arith.constant 0 : i32
    %390 = tpu.memref_slice %arg3[%389, %c0_i32_243] : memref<64x32xf32, #tpu.memory_space<any>> -> memref<1x32xf32, #tpu.memory_space<any>>
    %c48_i32_244 = arith.constant 48 : i32
    %c0_i32_245 = arith.constant 0 : i32
    %391 = tpu.memref_slice %arg5[%c48_i32_244, %c0_i32_245] : memref<64x32xf32, #tpu.memory_space<vmem>> -> memref<1x32xf32, #tpu.memory_space<vmem>>
    %392 = tpu.memref_slice %arg6[%c6_i32_242] : memref<8x!tpu.dma_semaphore, #tpu.memory_space<semaphore_mem>> -> memref<1x!tpu.dma_semaphore, #tpu.memory_space<semaphore_mem>>
    %393 = tpu.memref_squeeze %392 : memref<1x!tpu.dma_semaphore, #tpu.memory_space<semaphore_mem>> -> memref<!tpu.dma_semaphore, #tpu.memory_space<semaphore_mem>>
    tpu.enqueue_dma source(%390 : memref<1x32xf32, #tpu.memory_space<any>>) target(%391 : memref<1x32xf32, #tpu.memory_space<vmem>>) target_semaphore(%393 : memref<!tpu.dma_semaphore, #tpu.memory_space<semaphore_mem>>)
    %c8_i32_246 = arith.constant 8 : i32
    %394 = arith.addi %1, %c8_i32_246 : i32
    %c6_i32_247 = arith.constant 6 : i32
    %395 = arith.addi %394, %c6_i32_247 : i32
    %396 = arith.index_cast %395 : i32 to index
    %397 = memref.load %arg1[%396] : memref<64xi32, #tpu.memory_space<smem>>
    %c6_i32_248 = arith.constant 6 : i32
    %c0_i32_249 = arith.constant 0 : i32
    %398 = tpu.memref_slice %arg3[%397, %c0_i32_249] : memref<64x32xf32, #tpu.memory_space<any>> -> memref<1x32xf32, #tpu.memory_space<any>>
    %c49_i32 = arith.constant 49 : i32
    %c0_i32_250 = arith.constant 0 : i32
    %399 = tpu.memref_slice %arg5[%c49_i32, %c0_i32_250] : memref<64x32xf32, #tpu.memory_space<vmem>> -> memref<1x32xf32, #tpu.memory_space<vmem>>
    %400 = tpu.memref_slice %arg6[%c6_i32_248] : memref<8x!tpu.dma_semaphore, #tpu.memory_space<semaphore_mem>> -> memref<1x!tpu.dma_semaphore, #tpu.memory_space<semaphore_mem>>
    %401 = tpu.memref_squeeze %400 : memref<1x!tpu.dma_semaphore, #tpu.memory_space<semaphore_mem>> -> memref<!tpu.dma_semaphore, #tpu.memory_space<semaphore_mem>>
    tpu.enqueue_dma source(%398 : memref<1x32xf32, #tpu.memory_space<any>>) target(%399 : memref<1x32xf32, #tpu.memory_space<vmem>>) target_semaphore(%401 : memref<!tpu.dma_semaphore, #tpu.memory_space<semaphore_mem>>)
    %c16_i32_251 = arith.constant 16 : i32
    %402 = arith.addi %1, %c16_i32_251 : i32
    %c6_i32_252 = arith.constant 6 : i32
    %403 = arith.addi %402, %c6_i32_252 : i32
    %404 = arith.index_cast %403 : i32 to index
    %405 = memref.load %arg1[%404] : memref<64xi32, #tpu.memory_space<smem>>
    %c6_i32_253 = arith.constant 6 : i32
    %c0_i32_254 = arith.constant 0 : i32
    %406 = tpu.memref_slice %arg3[%405, %c0_i32_254] : memref<64x32xf32, #tpu.memory_space<any>> -> memref<1x32xf32, #tpu.memory_space<any>>
    %c50_i32 = arith.constant 50 : i32
    %c0_i32_255 = arith.constant 0 : i32
    %407 = tpu.memref_slice %arg5[%c50_i32, %c0_i32_255] : memref<64x32xf32, #tpu.memory_space<vmem>> -> memref<1x32xf32, #tpu.memory_space<vmem>>
    %408 = tpu.memref_slice %arg6[%c6_i32_253] : memref<8x!tpu.dma_semaphore, #tpu.memory_space<semaphore_mem>> -> memref<1x!tpu.dma_semaphore, #tpu.memory_space<semaphore_mem>>
    %409 = tpu.memref_squeeze %408 : memref<1x!tpu.dma_semaphore, #tpu.memory_space<semaphore_mem>> -> memref<!tpu.dma_semaphore, #tpu.memory_space<semaphore_mem>>
    tpu.enqueue_dma source(%406 : memref<1x32xf32, #tpu.memory_space<any>>) target(%407 : memref<1x32xf32, #tpu.memory_space<vmem>>) target_semaphore(%409 : memref<!tpu.dma_semaphore, #tpu.memory_space<semaphore_mem>>)
    %c24_i32_256 = arith.constant 24 : i32
    %410 = arith.addi %1, %c24_i32_256 : i32
    %c6_i32_257 = arith.constant 6 : i32
    %411 = arith.addi %410, %c6_i32_257 : i32
    %412 = arith.index_cast %411 : i32 to index
    %413 = memref.load %arg1[%412] : memref<64xi32, #tpu.memory_space<smem>>
    %c6_i32_258 = arith.constant 6 : i32
    %c0_i32_259 = arith.constant 0 : i32
    %414 = tpu.memref_slice %arg3[%413, %c0_i32_259] : memref<64x32xf32, #tpu.memory_space<any>> -> memref<1x32xf32, #tpu.memory_space<any>>
    %c51_i32 = arith.constant 51 : i32
    %c0_i32_260 = arith.constant 0 : i32
    %415 = tpu.memref_slice %arg5[%c51_i32, %c0_i32_260] : memref<64x32xf32, #tpu.memory_space<vmem>> -> memref<1x32xf32, #tpu.memory_space<vmem>>
    %416 = tpu.memref_slice %arg6[%c6_i32_258] : memref<8x!tpu.dma_semaphore, #tpu.memory_space<semaphore_mem>> -> memref<1x!tpu.dma_semaphore, #tpu.memory_space<semaphore_mem>>
    %417 = tpu.memref_squeeze %416 : memref<1x!tpu.dma_semaphore, #tpu.memory_space<semaphore_mem>> -> memref<!tpu.dma_semaphore, #tpu.memory_space<semaphore_mem>>
    tpu.enqueue_dma source(%414 : memref<1x32xf32, #tpu.memory_space<any>>) target(%415 : memref<1x32xf32, #tpu.memory_space<vmem>>) target_semaphore(%417 : memref<!tpu.dma_semaphore, #tpu.memory_space<semaphore_mem>>)
    %c32_i32_261 = arith.constant 32 : i32
    %418 = arith.addi %1, %c32_i32_261 : i32
    %c6_i32_262 = arith.constant 6 : i32
    %419 = arith.addi %418, %c6_i32_262 : i32
    %420 = arith.index_cast %419 : i32 to index
    %421 = memref.load %arg1[%420] : memref<64xi32, #tpu.memory_space<smem>>
    %c6_i32_263 = arith.constant 6 : i32
    %c0_i32_264 = arith.constant 0 : i32
    %422 = tpu.memref_slice %arg3[%421, %c0_i32_264] : memref<64x32xf32, #tpu.memory_space<any>> -> memref<1x32xf32, #tpu.memory_space<any>>
    %c52_i32 = arith.constant 52 : i32
    %c0_i32_265 = arith.constant 0 : i32
    %423 = tpu.memref_slice %arg5[%c52_i32, %c0_i32_265] : memref<64x32xf32, #tpu.memory_space<vmem>> -> memref<1x32xf32, #tpu.memory_space<vmem>>
    %424 = tpu.memref_slice %arg6[%c6_i32_263] : memref<8x!tpu.dma_semaphore, #tpu.memory_space<semaphore_mem>> -> memref<1x!tpu.dma_semaphore, #tpu.memory_space<semaphore_mem>>
    %425 = tpu.memref_squeeze %424 : memref<1x!tpu.dma_semaphore, #tpu.memory_space<semaphore_mem>> -> memref<!tpu.dma_semaphore, #tpu.memory_space<semaphore_mem>>
    tpu.enqueue_dma source(%422 : memref<1x32xf32, #tpu.memory_space<any>>) target(%423 : memref<1x32xf32, #tpu.memory_space<vmem>>) target_semaphore(%425 : memref<!tpu.dma_semaphore, #tpu.memory_space<semaphore_mem>>)
    %c40_i32_266 = arith.constant 40 : i32
    %426 = arith.addi %1, %c40_i32_266 : i32
    %c6_i32_267 = arith.constant 6 : i32
    %427 = arith.addi %426, %c6_i32_267 : i32
    %428 = arith.index_cast %427 : i32 to index
    %429 = memref.load %arg1[%428] : memref<64xi32, #tpu.memory_space<smem>>
    %c6_i32_268 = arith.constant 6 : i32
    %c0_i32_269 = arith.constant 0 : i32
    %430 = tpu.memref_slice %arg3[%429, %c0_i32_269] : memref<64x32xf32, #tpu.memory_space<any>> -> memref<1x32xf32, #tpu.memory_space<any>>
    %c53_i32 = arith.constant 53 : i32
    %c0_i32_270 = arith.constant 0 : i32
    %431 = tpu.memref_slice %arg5[%c53_i32, %c0_i32_270] : memref<64x32xf32, #tpu.memory_space<vmem>> -> memref<1x32xf32, #tpu.memory_space<vmem>>
    %432 = tpu.memref_slice %arg6[%c6_i32_268] : memref<8x!tpu.dma_semaphore, #tpu.memory_space<semaphore_mem>> -> memref<1x!tpu.dma_semaphore, #tpu.memory_space<semaphore_mem>>
    %433 = tpu.memref_squeeze %432 : memref<1x!tpu.dma_semaphore, #tpu.memory_space<semaphore_mem>> -> memref<!tpu.dma_semaphore, #tpu.memory_space<semaphore_mem>>
    tpu.enqueue_dma source(%430 : memref<1x32xf32, #tpu.memory_space<any>>) target(%431 : memref<1x32xf32, #tpu.memory_space<vmem>>) target_semaphore(%433 : memref<!tpu.dma_semaphore, #tpu.memory_space<semaphore_mem>>)
    %c48_i32_271 = arith.constant 48 : i32
    %434 = arith.addi %1, %c48_i32_271 : i32
    %c6_i32_272 = arith.constant 6 : i32
    %435 = arith.addi %434, %c6_i32_272 : i32
    %436 = arith.index_cast %435 : i32 to index
    %437 = memref.load %arg1[%436] : memref<64xi32, #tpu.memory_space<smem>>
    %c6_i32_273 = arith.constant 6 : i32
    %c0_i32_274 = arith.constant 0 : i32
    %438 = tpu.memref_slice %arg3[%437, %c0_i32_274] : memref<64x32xf32, #tpu.memory_space<any>> -> memref<1x32xf32, #tpu.memory_space<any>>
    %c54_i32 = arith.constant 54 : i32
    %c0_i32_275 = arith.constant 0 : i32
    %439 = tpu.memref_slice %arg5[%c54_i32, %c0_i32_275] : memref<64x32xf32, #tpu.memory_space<vmem>> -> memref<1x32xf32, #tpu.memory_space<vmem>>
    %440 = tpu.memref_slice %arg6[%c6_i32_273] : memref<8x!tpu.dma_semaphore, #tpu.memory_space<semaphore_mem>> -> memref<1x!tpu.dma_semaphore, #tpu.memory_space<semaphore_mem>>
    %441 = tpu.memref_squeeze %440 : memref<1x!tpu.dma_semaphore, #tpu.memory_space<semaphore_mem>> -> memref<!tpu.dma_semaphore, #tpu.memory_space<semaphore_mem>>
    tpu.enqueue_dma source(%438 : memref<1x32xf32, #tpu.memory_space<any>>) target(%439 : memref<1x32xf32, #tpu.memory_space<vmem>>) target_semaphore(%441 : memref<!tpu.dma_semaphore, #tpu.memory_space<semaphore_mem>>)
    %c56_i32_276 = arith.constant 56 : i32
    %442 = arith.addi %1, %c56_i32_276 : i32
    %c6_i32_277 = arith.constant 6 : i32
    %443 = arith.addi %442, %c6_i32_277 : i32
    %444 = arith.index_cast %443 : i32 to index
    %445 = memref.load %arg1[%444] : memref<64xi32, #tpu.memory_space<smem>>
    %c6_i32_278 = arith.constant 6 : i32
    %c0_i32_279 = arith.constant 0 : i32
    %446 = tpu.memref_slice %arg3[%445, %c0_i32_279] : memref<64x32xf32, #tpu.memory_space<any>> -> memref<1x32xf32, #tpu.memory_space<any>>
    %c55_i32 = arith.constant 55 : i32
    %c0_i32_280 = arith.constant 0 : i32
    %447 = tpu.memref_slice %arg5[%c55_i32, %c0_i32_280] : memref<64x32xf32, #tpu.memory_space<vmem>> -> memref<1x32xf32, #tpu.memory_space<vmem>>
    %448 = tpu.memref_slice %arg6[%c6_i32_278] : memref<8x!tpu.dma_semaphore, #tpu.memory_space<semaphore_mem>> -> memref<1x!tpu.dma_semaphore, #tpu.memory_space<semaphore_mem>>
    %449 = tpu.memref_squeeze %448 : memref<1x!tpu.dma_semaphore, #tpu.memory_space<semaphore_mem>> -> memref<!tpu.dma_semaphore, #tpu.memory_space<semaphore_mem>>
    tpu.enqueue_dma source(%446 : memref<1x32xf32, #tpu.memory_space<any>>) target(%447 : memref<1x32xf32, #tpu.memory_space<vmem>>) target_semaphore(%449 : memref<!tpu.dma_semaphore, #tpu.memory_space<semaphore_mem>>)
    %c0_i32_281 = arith.constant 0 : i32
    %450 = arith.addi %1, %c0_i32_281 : i32
    %c7_i32_282 = arith.constant 7 : i32
    %451 = arith.addi %450, %c7_i32_282 : i32
    %452 = arith.index_cast %451 : i32 to index
    %453 = memref.load %arg1[%452] : memref<64xi32, #tpu.memory_space<smem>>
    %c7_i32_283 = arith.constant 7 : i32
    %c0_i32_284 = arith.constant 0 : i32
    %454 = tpu.memref_slice %arg3[%453, %c0_i32_284] : memref<64x32xf32, #tpu.memory_space<any>> -> memref<1x32xf32, #tpu.memory_space<any>>
    %c56_i32_285 = arith.constant 56 : i32
    %c0_i32_286 = arith.constant 0 : i32
    %455 = tpu.memref_slice %arg5[%c56_i32_285, %c0_i32_286] : memref<64x32xf32, #tpu.memory_space<vmem>> -> memref<1x32xf32, #tpu.memory_space<vmem>>
    %456 = tpu.memref_slice %arg6[%c7_i32_283] : memref<8x!tpu.dma_semaphore, #tpu.memory_space<semaphore_mem>> -> memref<1x!tpu.dma_semaphore, #tpu.memory_space<semaphore_mem>>
    %457 = tpu.memref_squeeze %456 : memref<1x!tpu.dma_semaphore, #tpu.memory_space<semaphore_mem>> -> memref<!tpu.dma_semaphore, #tpu.memory_space<semaphore_mem>>
    tpu.enqueue_dma source(%454 : memref<1x32xf32, #tpu.memory_space<any>>) target(%455 : memref<1x32xf32, #tpu.memory_space<vmem>>) target_semaphore(%457 : memref<!tpu.dma_semaphore, #tpu.memory_space<semaphore_mem>>)
    %c8_i32_287 = arith.constant 8 : i32
    %458 = arith.addi %1, %c8_i32_287 : i32
    %c7_i32_288 = arith.constant 7 : i32
    %459 = arith.addi %458, %c7_i32_288 : i32
    %460 = arith.index_cast %459 : i32 to index
    %461 = memref.load %arg1[%460] : memref<64xi32, #tpu.memory_space<smem>>
    %c7_i32_289 = arith.constant 7 : i32
    %c0_i32_290 = arith.constant 0 : i32
    %462 = tpu.memref_slice %arg3[%461, %c0_i32_290] : memref<64x32xf32, #tpu.memory_space<any>> -> memref<1x32xf32, #tpu.memory_space<any>>
    %c57_i32 = arith.constant 57 : i32
    %c0_i32_291 = arith.constant 0 : i32
    %463 = tpu.memref_slice %arg5[%c57_i32, %c0_i32_291] : memref<64x32xf32, #tpu.memory_space<vmem>> -> memref<1x32xf32, #tpu.memory_space<vmem>>
    %464 = tpu.memref_slice %arg6[%c7_i32_289] : memref<8x!tpu.dma_semaphore, #tpu.memory_space<semaphore_mem>> -> memref<1x!tpu.dma_semaphore, #tpu.memory_space<semaphore_mem>>
    %465 = tpu.memref_squeeze %464 : memref<1x!tpu.dma_semaphore, #tpu.memory_space<semaphore_mem>> -> memref<!tpu.dma_semaphore, #tpu.memory_space<semaphore_mem>>
    tpu.enqueue_dma source(%462 : memref<1x32xf32, #tpu.memory_space<any>>) target(%463 : memref<1x32xf32, #tpu.memory_space<vmem>>) target_semaphore(%465 : memref<!tpu.dma_semaphore, #tpu.memory_space<semaphore_mem>>)
    %c16_i32_292 = arith.constant 16 : i32
    %466 = arith.addi %1, %c16_i32_292 : i32
    %c7_i32_293 = arith.constant 7 : i32
    %467 = arith.addi %466, %c7_i32_293 : i32
    %468 = arith.index_cast %467 : i32 to index
    %469 = memref.load %arg1[%468] : memref<64xi32, #tpu.memory_space<smem>>
    %c7_i32_294 = arith.constant 7 : i32
    %c0_i32_295 = arith.constant 0 : i32
    %470 = tpu.memref_slice %arg3[%469, %c0_i32_295] : memref<64x32xf32, #tpu.memory_space<any>> -> memref<1x32xf32, #tpu.memory_space<any>>
    %c58_i32 = arith.constant 58 : i32
    %c0_i32_296 = arith.constant 0 : i32
    %471 = tpu.memref_slice %arg5[%c58_i32, %c0_i32_296] : memref<64x32xf32, #tpu.memory_space<vmem>> -> memref<1x32xf32, #tpu.memory_space<vmem>>
    %472 = tpu.memref_slice %arg6[%c7_i32_294] : memref<8x!tpu.dma_semaphore, #tpu.memory_space<semaphore_mem>> -> memref<1x!tpu.dma_semaphore, #tpu.memory_space<semaphore_mem>>
    %473 = tpu.memref_squeeze %472 : memref<1x!tpu.dma_semaphore, #tpu.memory_space<semaphore_mem>> -> memref<!tpu.dma_semaphore, #tpu.memory_space<semaphore_mem>>
    tpu.enqueue_dma source(%470 : memref<1x32xf32, #tpu.memory_space<any>>) target(%471 : memref<1x32xf32, #tpu.memory_space<vmem>>) target_semaphore(%473 : memref<!tpu.dma_semaphore, #tpu.memory_space<semaphore_mem>>)
    %c24_i32_297 = arith.constant 24 : i32
    %474 = arith.addi %1, %c24_i32_297 : i32
    %c7_i32_298 = arith.constant 7 : i32
    %475 = arith.addi %474, %c7_i32_298 : i32
    %476 = arith.index_cast %475 : i32 to index
    %477 = memref.load %arg1[%476] : memref<64xi32, #tpu.memory_space<smem>>
    %c7_i32_299 = arith.constant 7 : i32
    %c0_i32_300 = arith.constant 0 : i32
    %478 = tpu.memref_slice %arg3[%477, %c0_i32_300] : memref<64x32xf32, #tpu.memory_space<any>> -> memref<1x32xf32, #tpu.memory_space<any>>
    %c59_i32 = arith.constant 59 : i32
    %c0_i32_301 = arith.constant 0 : i32
    %479 = tpu.memref_slice %arg5[%c59_i32, %c0_i32_301] : memref<64x32xf32, #tpu.memory_space<vmem>> -> memref<1x32xf32, #tpu.memory_space<vmem>>
    %480 = tpu.memref_slice %arg6[%c7_i32_299] : memref<8x!tpu.dma_semaphore, #tpu.memory_space<semaphore_mem>> -> memref<1x!tpu.dma_semaphore, #tpu.memory_space<semaphore_mem>>
    %481 = tpu.memref_squeeze %480 : memref<1x!tpu.dma_semaphore, #tpu.memory_space<semaphore_mem>> -> memref<!tpu.dma_semaphore, #tpu.memory_space<semaphore_mem>>
    tpu.enqueue_dma source(%478 : memref<1x32xf32, #tpu.memory_space<any>>) target(%479 : memref<1x32xf32, #tpu.memory_space<vmem>>) target_semaphore(%481 : memref<!tpu.dma_semaphore, #tpu.memory_space<semaphore_mem>>)
    %c32_i32_302 = arith.constant 32 : i32
    %482 = arith.addi %1, %c32_i32_302 : i32
    %c7_i32_303 = arith.constant 7 : i32
    %483 = arith.addi %482, %c7_i32_303 : i32
    %484 = arith.index_cast %483 : i32 to index
    %485 = memref.load %arg1[%484] : memref<64xi32, #tpu.memory_space<smem>>
    %c7_i32_304 = arith.constant 7 : i32
    %c0_i32_305 = arith.constant 0 : i32
    %486 = tpu.memref_slice %arg3[%485, %c0_i32_305] : memref<64x32xf32, #tpu.memory_space<any>> -> memref<1x32xf32, #tpu.memory_space<any>>
    %c60_i32 = arith.constant 60 : i32
    %c0_i32_306 = arith.constant 0 : i32
    %487 = tpu.memref_slice %arg5[%c60_i32, %c0_i32_306] : memref<64x32xf32, #tpu.memory_space<vmem>> -> memref<1x32xf32, #tpu.memory_space<vmem>>
    %488 = tpu.memref_slice %arg6[%c7_i32_304] : memref<8x!tpu.dma_semaphore, #tpu.memory_space<semaphore_mem>> -> memref<1x!tpu.dma_semaphore, #tpu.memory_space<semaphore_mem>>
    %489 = tpu.memref_squeeze %488 : memref<1x!tpu.dma_semaphore, #tpu.memory_space<semaphore_mem>> -> memref<!tpu.dma_semaphore, #tpu.memory_space<semaphore_mem>>
    tpu.enqueue_dma source(%486 : memref<1x32xf32, #tpu.memory_space<any>>) target(%487 : memref<1x32xf32, #tpu.memory_space<vmem>>) target_semaphore(%489 : memref<!tpu.dma_semaphore, #tpu.memory_space<semaphore_mem>>)
    %c40_i32_307 = arith.constant 40 : i32
    %490 = arith.addi %1, %c40_i32_307 : i32
    %c7_i32_308 = arith.constant 7 : i32
    %491 = arith.addi %490, %c7_i32_308 : i32
    %492 = arith.index_cast %491 : i32 to index
    %493 = memref.load %arg1[%492] : memref<64xi32, #tpu.memory_space<smem>>
    %c7_i32_309 = arith.constant 7 : i32
    %c0_i32_310 = arith.constant 0 : i32
    %494 = tpu.memref_slice %arg3[%493, %c0_i32_310] : memref<64x32xf32, #tpu.memory_space<any>> -> memref<1x32xf32, #tpu.memory_space<any>>
    %c61_i32 = arith.constant 61 : i32
    %c0_i32_311 = arith.constant 0 : i32
    %495 = tpu.memref_slice %arg5[%c61_i32, %c0_i32_311] : memref<64x32xf32, #tpu.memory_space<vmem>> -> memref<1x32xf32, #tpu.memory_space<vmem>>
    %496 = tpu.memref_slice %arg6[%c7_i32_309] : memref<8x!tpu.dma_semaphore, #tpu.memory_space<semaphore_mem>> -> memref<1x!tpu.dma_semaphore, #tpu.memory_space<semaphore_mem>>
    %497 = tpu.memref_squeeze %496 : memref<1x!tpu.dma_semaphore, #tpu.memory_space<semaphore_mem>> -> memref<!tpu.dma_semaphore, #tpu.memory_space<semaphore_mem>>
    tpu.enqueue_dma source(%494 : memref<1x32xf32, #tpu.memory_space<any>>) target(%495 : memref<1x32xf32, #tpu.memory_space<vmem>>) target_semaphore(%497 : memref<!tpu.dma_semaphore, #tpu.memory_space<semaphore_mem>>)
    %c48_i32_312 = arith.constant 48 : i32
    %498 = arith.addi %1, %c48_i32_312 : i32
    %c7_i32_313 = arith.constant 7 : i32
    %499 = arith.addi %498, %c7_i32_313 : i32
    %500 = arith.index_cast %499 : i32 to index
    %501 = memref.load %arg1[%500] : memref<64xi32, #tpu.memory_space<smem>>
    %c7_i32_314 = arith.constant 7 : i32
    %c0_i32_315 = arith.constant 0 : i32
    %502 = tpu.memref_slice %arg3[%501, %c0_i32_315] : memref<64x32xf32, #tpu.memory_space<any>> -> memref<1x32xf32, #tpu.memory_space<any>>
    %c62_i32 = arith.constant 62 : i32
    %c0_i32_316 = arith.constant 0 : i32
    %503 = tpu.memref_slice %arg5[%c62_i32, %c0_i32_316] : memref<64x32xf32, #tpu.memory_space<vmem>> -> memref<1x32xf32, #tpu.memory_space<vmem>>
    %504 = tpu.memref_slice %arg6[%c7_i32_314] : memref<8x!tpu.dma_semaphore, #tpu.memory_space<semaphore_mem>> -> memref<1x!tpu.dma_semaphore, #tpu.memory_space<semaphore_mem>>
    %505 = tpu.memref_squeeze %504 : memref<1x!tpu.dma_semaphore, #tpu.memory_space<semaphore_mem>> -> memref<!tpu.dma_semaphore, #tpu.memory_space<semaphore_mem>>
    tpu.enqueue_dma source(%502 : memref<1x32xf32, #tpu.memory_space<any>>) target(%503 : memref<1x32xf32, #tpu.memory_space<vmem>>) target_semaphore(%505 : memref<!tpu.dma_semaphore, #tpu.memory_space<semaphore_mem>>)
    %c56_i32_317 = arith.constant 56 : i32
    %506 = arith.addi %1, %c56_i32_317 : i32
    %c7_i32_318 = arith.constant 7 : i32
    %507 = arith.addi %506, %c7_i32_318 : i32
    %508 = arith.index_cast %507 : i32 to index
    %509 = memref.load %arg1[%508] : memref<64xi32, #tpu.memory_space<smem>>
    %c7_i32_319 = arith.constant 7 : i32
    %c0_i32_320 = arith.constant 0 : i32
    %510 = tpu.memref_slice %arg3[%509, %c0_i32_320] : memref<64x32xf32, #tpu.memory_space<any>> -> memref<1x32xf32, #tpu.memory_space<any>>
    %c63_i32 = arith.constant 63 : i32
    %c0_i32_321 = arith.constant 0 : i32
    %511 = tpu.memref_slice %arg5[%c63_i32, %c0_i32_321] : memref<64x32xf32, #tpu.memory_space<vmem>> -> memref<1x32xf32, #tpu.memory_space<vmem>>
    %512 = tpu.memref_slice %arg6[%c7_i32_319] : memref<8x!tpu.dma_semaphore, #tpu.memory_space<semaphore_mem>> -> memref<1x!tpu.dma_semaphore, #tpu.memory_space<semaphore_mem>>
    %513 = tpu.memref_squeeze %512 : memref<1x!tpu.dma_semaphore, #tpu.memory_space<semaphore_mem>> -> memref<!tpu.dma_semaphore, #tpu.memory_space<semaphore_mem>>
    tpu.enqueue_dma source(%510 : memref<1x32xf32, #tpu.memory_space<any>>) target(%511 : memref<1x32xf32, #tpu.memory_space<vmem>>) target_semaphore(%513 : memref<!tpu.dma_semaphore, #tpu.memory_space<semaphore_mem>>)
    %c0 = arith.constant 0 : index
    %c0_322 = arith.constant 0 : index
    %514 = vector.load %arg2[%c0, %c0_322] : memref<8x8xf32, #tpu.memory_space<vmem>>, vector<8x8xf32>
    %cst = arith.constant 0.000000e+00 : f32
    %515 = vector.broadcast %cst : f32 to vector<8x32xf32>
    %c0_i32_323 = arith.constant 0 : i32
    %c0_i32_324 = arith.constant 0 : i32
    %c0_i32_325 = arith.constant 0 : i32
    %516 = tpu.memref_slice %arg3[%c0_i32_324, %c0_i32_325] : memref<64x32xf32, #tpu.memory_space<any>> -> memref<1x32xf32, #tpu.memory_space<any>>
    %c0_i32_326 = arith.constant 0 : i32
    %c0_i32_327 = arith.constant 0 : i32
    %517 = tpu.memref_slice %arg5[%c0_i32_326, %c0_i32_327] : memref<64x32xf32, #tpu.memory_space<vmem>> -> memref<1x32xf32, #tpu.memory_space<vmem>>
    %518 = tpu.memref_slice %arg6[%c0_i32_323] : memref<8x!tpu.dma_semaphore, #tpu.memory_space<semaphore_mem>> -> memref<1x!tpu.dma_semaphore, #tpu.memory_space<semaphore_mem>>
    %519 = tpu.memref_squeeze %518 : memref<1x!tpu.dma_semaphore, #tpu.memory_space<semaphore_mem>> -> memref<!tpu.dma_semaphore, #tpu.memory_space<semaphore_mem>>
    tpu.wait_dma2 semaphore(%519 : memref<!tpu.dma_semaphore, #tpu.memory_space<semaphore_mem>>) src(%516 : memref<1x32xf32, #tpu.memory_space<any>>) dst(%517 : memref<1x32xf32, #tpu.memory_space<vmem>>)
    %c0_i32_328 = arith.constant 0 : i32
    %c0_i32_329 = arith.constant 0 : i32
    %c0_i32_330 = arith.constant 0 : i32
    %520 = tpu.memref_slice %arg3[%c0_i32_329, %c0_i32_330] : memref<64x32xf32, #tpu.memory_space<any>> -> memref<1x32xf32, #tpu.memory_space<any>>
    %c1_i32_331 = arith.constant 1 : i32
    %c0_i32_332 = arith.constant 0 : i32
    %521 = tpu.memref_slice %arg5[%c1_i32_331, %c0_i32_332] : memref<64x32xf32, #tpu.memory_space<vmem>> -> memref<1x32xf32, #tpu.memory_space<vmem>>
    %522 = tpu.memref_slice %arg6[%c0_i32_328] : memref<8x!tpu.dma_semaphore, #tpu.memory_space<semaphore_mem>> -> memref<1x!tpu.dma_semaphore, #tpu.memory_space<semaphore_mem>>
    %523 = tpu.memref_squeeze %522 : memref<1x!tpu.dma_semaphore, #tpu.memory_space<semaphore_mem>> -> memref<!tpu.dma_semaphore, #tpu.memory_space<semaphore_mem>>
    tpu.wait_dma2 semaphore(%523 : memref<!tpu.dma_semaphore, #tpu.memory_space<semaphore_mem>>) src(%520 : memref<1x32xf32, #tpu.memory_space<any>>) dst(%521 : memref<1x32xf32, #tpu.memory_space<vmem>>)
    %c0_i32_333 = arith.constant 0 : i32
    %c0_i32_334 = arith.constant 0 : i32
    %c0_i32_335 = arith.constant 0 : i32
    %524 = tpu.memref_slice %arg3[%c0_i32_334, %c0_i32_335] : memref<64x32xf32, #tpu.memory_space<any>> -> memref<1x32xf32, #tpu.memory_space<any>>
    %c2_i32_336 = arith.constant 2 : i32
    %c0_i32_337 = arith.constant 0 : i32
    %525 = tpu.memref_slice %arg5[%c2_i32_336, %c0_i32_337] : memref<64x32xf32, #tpu.memory_space<vmem>> -> memref<1x32xf32, #tpu.memory_space<vmem>>
    %526 = tpu.memref_slice %arg6[%c0_i32_333] : memref<8x!tpu.dma_semaphore, #tpu.memory_space<semaphore_mem>> -> memref<1x!tpu.dma_semaphore, #tpu.memory_space<semaphore_mem>>
    %527 = tpu.memref_squeeze %526 : memref<1x!tpu.dma_semaphore, #tpu.memory_space<semaphore_mem>> -> memref<!tpu.dma_semaphore, #tpu.memory_space<semaphore_mem>>
    tpu.wait_dma2 semaphore(%527 : memref<!tpu.dma_semaphore, #tpu.memory_space<semaphore_mem>>) src(%524 : memref<1x32xf32, #tpu.memory_space<any>>) dst(%525 : memref<1x32xf32, #tpu.memory_space<vmem>>)
    %c0_i32_338 = arith.constant 0 : i32
    %c0_i32_339 = arith.constant 0 : i32
    %c0_i32_340 = arith.constant 0 : i32
    %528 = tpu.memref_slice %arg3[%c0_i32_339, %c0_i32_340] : memref<64x32xf32, #tpu.memory_space<any>> -> memref<1x32xf32, #tpu.memory_space<any>>
    %c3_i32_341 = arith.constant 3 : i32
    %c0_i32_342 = arith.constant 0 : i32
    %529 = tpu.memref_slice %arg5[%c3_i32_341, %c0_i32_342] : memref<64x32xf32, #tpu.memory_space<vmem>> -> memref<1x32xf32, #tpu.memory_space<vmem>>
    %530 = tpu.memref_slice %arg6[%c0_i32_338] : memref<8x!tpu.dma_semaphore, #tpu.memory_space<semaphore_mem>> -> memref<1x!tpu.dma_semaphore, #tpu.memory_space<semaphore_mem>>
    %531 = tpu.memref_squeeze %530 : memref<1x!tpu.dma_semaphore, #tpu.memory_space<semaphore_mem>> -> memref<!tpu.dma_semaphore, #tpu.memory_space<semaphore_mem>>
    tpu.wait_dma2 semaphore(%531 : memref<!tpu.dma_semaphore, #tpu.memory_space<semaphore_mem>>) src(%528 : memref<1x32xf32, #tpu.memory_space<any>>) dst(%529 : memref<1x32xf32, #tpu.memory_space<vmem>>)
    %c0_i32_343 = arith.constant 0 : i32
    %c0_i32_344 = arith.constant 0 : i32
    %c0_i32_345 = arith.constant 0 : i32
    %532 = tpu.memref_slice %arg3[%c0_i32_344, %c0_i32_345] : memref<64x32xf32, #tpu.memory_space<any>> -> memref<1x32xf32, #tpu.memory_space<any>>
    %c4_i32_346 = arith.constant 4 : i32
    %c0_i32_347 = arith.constant 0 : i32
    %533 = tpu.memref_slice %arg5[%c4_i32_346, %c0_i32_347] : memref<64x32xf32, #tpu.memory_space<vmem>> -> memref<1x32xf32, #tpu.memory_space<vmem>>
    %534 = tpu.memref_slice %arg6[%c0_i32_343] : memref<8x!tpu.dma_semaphore, #tpu.memory_space<semaphore_mem>> -> memref<1x!tpu.dma_semaphore, #tpu.memory_space<semaphore_mem>>
    %535 = tpu.memref_squeeze %534 : memref<1x!tpu.dma_semaphore, #tpu.memory_space<semaphore_mem>> -> memref<!tpu.dma_semaphore, #tpu.memory_space<semaphore_mem>>
    tpu.wait_dma2 semaphore(%535 : memref<!tpu.dma_semaphore, #tpu.memory_space<semaphore_mem>>) src(%532 : memref<1x32xf32, #tpu.memory_space<any>>) dst(%533 : memref<1x32xf32, #tpu.memory_space<vmem>>)
    %c0_i32_348 = arith.constant 0 : i32
    %c0_i32_349 = arith.constant 0 : i32
    %c0_i32_350 = arith.constant 0 : i32
    %536 = tpu.memref_slice %arg3[%c0_i32_349, %c0_i32_350] : memref<64x32xf32, #tpu.memory_space<any>> -> memref<1x32xf32, #tpu.memory_space<any>>
    %c5_i32_351 = arith.constant 5 : i32
    %c0_i32_352 = arith.constant 0 : i32
    %537 = tpu.memref_slice %arg5[%c5_i32_351, %c0_i32_352] : memref<64x32xf32, #tpu.memory_space<vmem>> -> memref<1x32xf32, #tpu.memory_space<vmem>>
    %538 = tpu.memref_slice %arg6[%c0_i32_348] : memref<8x!tpu.dma_semaphore, #tpu.memory_space<semaphore_mem>> -> memref<1x!tpu.dma_semaphore, #tpu.memory_space<semaphore_mem>>
    %539 = tpu.memref_squeeze %538 : memref<1x!tpu.dma_semaphore, #tpu.memory_space<semaphore_mem>> -> memref<!tpu.dma_semaphore, #tpu.memory_space<semaphore_mem>>
    tpu.wait_dma2 semaphore(%539 : memref<!tpu.dma_semaphore, #tpu.memory_space<semaphore_mem>>) src(%536 : memref<1x32xf32, #tpu.memory_space<any>>) dst(%537 : memref<1x32xf32, #tpu.memory_space<vmem>>)
    %c0_i32_353 = arith.constant 0 : i32
    %c0_i32_354 = arith.constant 0 : i32
    %c0_i32_355 = arith.constant 0 : i32
    %540 = tpu.memref_slice %arg3[%c0_i32_354, %c0_i32_355] : memref<64x32xf32, #tpu.memory_space<any>> -> memref<1x32xf32, #tpu.memory_space<any>>
    %c6_i32_356 = arith.constant 6 : i32
    %c0_i32_357 = arith.constant 0 : i32
    %541 = tpu.memref_slice %arg5[%c6_i32_356, %c0_i32_357] : memref<64x32xf32, #tpu.memory_space<vmem>> -> memref<1x32xf32, #tpu.memory_space<vmem>>
    %542 = tpu.memref_slice %arg6[%c0_i32_353] : memref<8x!tpu.dma_semaphore, #tpu.memory_space<semaphore_mem>> -> memref<1x!tpu.dma_semaphore, #tpu.memory_space<semaphore_mem>>
    %543 = tpu.memref_squeeze %542 : memref<1x!tpu.dma_semaphore, #tpu.memory_space<semaphore_mem>> -> memref<!tpu.dma_semaphore, #tpu.memory_space<semaphore_mem>>
    tpu.wait_dma2 semaphore(%543 : memref<!tpu.dma_semaphore, #tpu.memory_space<semaphore_mem>>) src(%540 : memref<1x32xf32, #tpu.memory_space<any>>) dst(%541 : memref<1x32xf32, #tpu.memory_space<vmem>>)
    %c0_i32_358 = arith.constant 0 : i32
    %c0_i32_359 = arith.constant 0 : i32
    %c0_i32_360 = arith.constant 0 : i32
    %544 = tpu.memref_slice %arg3[%c0_i32_359, %c0_i32_360] : memref<64x32xf32, #tpu.memory_space<any>> -> memref<1x32xf32, #tpu.memory_space<any>>
    %c7_i32_361 = arith.constant 7 : i32
    %c0_i32_362 = arith.constant 0 : i32
    %545 = tpu.memref_slice %arg5[%c7_i32_361, %c0_i32_362] : memref<64x32xf32, #tpu.memory_space<vmem>> -> memref<1x32xf32, #tpu.memory_space<vmem>>
    %546 = tpu.memref_slice %arg6[%c0_i32_358] : memref<8x!tpu.dma_semaphore, #tpu.memory_space<semaphore_mem>> -> memref<1x!tpu.dma_semaphore, #tpu.memory_space<semaphore_mem>>
    %547 = tpu.memref_squeeze %546 : memref<1x!tpu.dma_semaphore, #tpu.memory_space<semaphore_mem>> -> memref<!tpu.dma_semaphore, #tpu.memory_space<semaphore_mem>>
    tpu.wait_dma2 semaphore(%547 : memref<!tpu.dma_semaphore, #tpu.memory_space<semaphore_mem>>) src(%544 : memref<1x32xf32, #tpu.memory_space<any>>) dst(%545 : memref<1x32xf32, #tpu.memory_space<vmem>>)
    %c0_363 = arith.constant 0 : index
    %c0_364 = arith.constant 0 : index
    %548 = vector.load %arg5[%c0_363, %c0_364] : memref<64x32xf32, #tpu.memory_space<vmem>>, vector<8x32xf32>
    %549 = vector.extract_strided_slice %514 {offsets = [0, 0], sizes = [8, 1], strides = [1, 1]} : vector<8x8xf32> to vector<8x1xf32>
    %550 = vector.broadcast %549 : vector<8x1xf32> to vector<8x32xf32>
    %551 = arith.mulf %548, %550 : vector<8x32xf32>
    %552 = arith.addf %515, %551 : vector<8x32xf32>
    %c1_i32_365 = arith.constant 1 : i32
    %c0_i32_366 = arith.constant 0 : i32
    %c0_i32_367 = arith.constant 0 : i32
    %553 = tpu.memref_slice %arg3[%c0_i32_366, %c0_i32_367] : memref<64x32xf32, #tpu.memory_space<any>> -> memref<1x32xf32, #tpu.memory_space<any>>
    %c8_i32_368 = arith.constant 8 : i32
    %c0_i32_369 = arith.constant 0 : i32
    %554 = tpu.memref_slice %arg5[%c8_i32_368, %c0_i32_369] : memref<64x32xf32, #tpu.memory_space<vmem>> -> memref<1x32xf32, #tpu.memory_space<vmem>>
    %555 = tpu.memref_slice %arg6[%c1_i32_365] : memref<8x!tpu.dma_semaphore, #tpu.memory_space<semaphore_mem>> -> memref<1x!tpu.dma_semaphore, #tpu.memory_space<semaphore_mem>>
    %556 = tpu.memref_squeeze %555 : memref<1x!tpu.dma_semaphore, #tpu.memory_space<semaphore_mem>> -> memref<!tpu.dma_semaphore, #tpu.memory_space<semaphore_mem>>
    tpu.wait_dma2 semaphore(%556 : memref<!tpu.dma_semaphore, #tpu.memory_space<semaphore_mem>>) src(%553 : memref<1x32xf32, #tpu.memory_space<any>>) dst(%554 : memref<1x32xf32, #tpu.memory_space<vmem>>)
    %c1_i32_370 = arith.constant 1 : i32
    %c0_i32_371 = arith.constant 0 : i32
    %c0_i32_372 = arith.constant 0 : i32
    %557 = tpu.memref_slice %arg3[%c0_i32_371, %c0_i32_372] : memref<64x32xf32, #tpu.memory_space<any>> -> memref<1x32xf32, #tpu.memory_space<any>>
    %c9_i32_373 = arith.constant 9 : i32
    %c0_i32_374 = arith.constant 0 : i32
    %558 = tpu.memref_slice %arg5[%c9_i32_373, %c0_i32_374] : memref<64x32xf32, #tpu.memory_space<vmem>> -> memref<1x32xf32, #tpu.memory_space<vmem>>
    %559 = tpu.memref_slice %arg6[%c1_i32_370] : memref<8x!tpu.dma_semaphore, #tpu.memory_space<semaphore_mem>> -> memref<1x!tpu.dma_semaphore, #tpu.memory_space<semaphore_mem>>
    %560 = tpu.memref_squeeze %559 : memref<1x!tpu.dma_semaphore, #tpu.memory_space<semaphore_mem>> -> memref<!tpu.dma_semaphore, #tpu.memory_space<semaphore_mem>>
    tpu.wait_dma2 semaphore(%560 : memref<!tpu.dma_semaphore, #tpu.memory_space<semaphore_mem>>) src(%557 : memref<1x32xf32, #tpu.memory_space<any>>) dst(%558 : memref<1x32xf32, #tpu.memory_space<vmem>>)
    %c1_i32_375 = arith.constant 1 : i32
    %c0_i32_376 = arith.constant 0 : i32
    %c0_i32_377 = arith.constant 0 : i32
    %561 = tpu.memref_slice %arg3[%c0_i32_376, %c0_i32_377] : memref<64x32xf32, #tpu.memory_space<any>> -> memref<1x32xf32, #tpu.memory_space<any>>
    %c10_i32_378 = arith.constant 10 : i32
    %c0_i32_379 = arith.constant 0 : i32
    %562 = tpu.memref_slice %arg5[%c10_i32_378, %c0_i32_379] : memref<64x32xf32, #tpu.memory_space<vmem>> -> memref<1x32xf32, #tpu.memory_space<vmem>>
    %563 = tpu.memref_slice %arg6[%c1_i32_375] : memref<8x!tpu.dma_semaphore, #tpu.memory_space<semaphore_mem>> -> memref<1x!tpu.dma_semaphore, #tpu.memory_space<semaphore_mem>>
    %564 = tpu.memref_squeeze %563 : memref<1x!tpu.dma_semaphore, #tpu.memory_space<semaphore_mem>> -> memref<!tpu.dma_semaphore, #tpu.memory_space<semaphore_mem>>
    tpu.wait_dma2 semaphore(%564 : memref<!tpu.dma_semaphore, #tpu.memory_space<semaphore_mem>>) src(%561 : memref<1x32xf32, #tpu.memory_space<any>>) dst(%562 : memref<1x32xf32, #tpu.memory_space<vmem>>)
    %c1_i32_380 = arith.constant 1 : i32
    %c0_i32_381 = arith.constant 0 : i32
    %c0_i32_382 = arith.constant 0 : i32
    %565 = tpu.memref_slice %arg3[%c0_i32_381, %c0_i32_382] : memref<64x32xf32, #tpu.memory_space<any>> -> memref<1x32xf32, #tpu.memory_space<any>>
    %c11_i32_383 = arith.constant 11 : i32
    %c0_i32_384 = arith.constant 0 : i32
    %566 = tpu.memref_slice %arg5[%c11_i32_383, %c0_i32_384] : memref<64x32xf32, #tpu.memory_space<vmem>> -> memref<1x32xf32, #tpu.memory_space<vmem>>
    %567 = tpu.memref_slice %arg6[%c1_i32_380] : memref<8x!tpu.dma_semaphore, #tpu.memory_space<semaphore_mem>> -> memref<1x!tpu.dma_semaphore, #tpu.memory_space<semaphore_mem>>
    %568 = tpu.memref_squeeze %567 : memref<1x!tpu.dma_semaphore, #tpu.memory_space<semaphore_mem>> -> memref<!tpu.dma_semaphore, #tpu.memory_space<semaphore_mem>>
    tpu.wait_dma2 semaphore(%568 : memref<!tpu.dma_semaphore, #tpu.memory_space<semaphore_mem>>) src(%565 : memref<1x32xf32, #tpu.memory_space<any>>) dst(%566 : memref<1x32xf32, #tpu.memory_space<vmem>>)
    %c1_i32_385 = arith.constant 1 : i32
    %c0_i32_386 = arith.constant 0 : i32
    %c0_i32_387 = arith.constant 0 : i32
    %569 = tpu.memref_slice %arg3[%c0_i32_386, %c0_i32_387] : memref<64x32xf32, #tpu.memory_space<any>> -> memref<1x32xf32, #tpu.memory_space<any>>
    %c12_i32_388 = arith.constant 12 : i32
    %c0_i32_389 = arith.constant 0 : i32
    %570 = tpu.memref_slice %arg5[%c12_i32_388, %c0_i32_389] : memref<64x32xf32, #tpu.memory_space<vmem>> -> memref<1x32xf32, #tpu.memory_space<vmem>>
    %571 = tpu.memref_slice %arg6[%c1_i32_385] : memref<8x!tpu.dma_semaphore, #tpu.memory_space<semaphore_mem>> -> memref<1x!tpu.dma_semaphore, #tpu.memory_space<semaphore_mem>>
    %572 = tpu.memref_squeeze %571 : memref<1x!tpu.dma_semaphore, #tpu.memory_space<semaphore_mem>> -> memref<!tpu.dma_semaphore, #tpu.memory_space<semaphore_mem>>
    tpu.wait_dma2 semaphore(%572 : memref<!tpu.dma_semaphore, #tpu.memory_space<semaphore_mem>>) src(%569 : memref<1x32xf32, #tpu.memory_space<any>>) dst(%570 : memref<1x32xf32, #tpu.memory_space<vmem>>)
    %c1_i32_390 = arith.constant 1 : i32
    %c0_i32_391 = arith.constant 0 : i32
    %c0_i32_392 = arith.constant 0 : i32
    %573 = tpu.memref_slice %arg3[%c0_i32_391, %c0_i32_392] : memref<64x32xf32, #tpu.memory_space<any>> -> memref<1x32xf32, #tpu.memory_space<any>>
    %c13_i32_393 = arith.constant 13 : i32
    %c0_i32_394 = arith.constant 0 : i32
    %574 = tpu.memref_slice %arg5[%c13_i32_393, %c0_i32_394] : memref<64x32xf32, #tpu.memory_space<vmem>> -> memref<1x32xf32, #tpu.memory_space<vmem>>
    %575 = tpu.memref_slice %arg6[%c1_i32_390] : memref<8x!tpu.dma_semaphore, #tpu.memory_space<semaphore_mem>> -> memref<1x!tpu.dma_semaphore, #tpu.memory_space<semaphore_mem>>
    %576 = tpu.memref_squeeze %575 : memref<1x!tpu.dma_semaphore, #tpu.memory_space<semaphore_mem>> -> memref<!tpu.dma_semaphore, #tpu.memory_space<semaphore_mem>>
    tpu.wait_dma2 semaphore(%576 : memref<!tpu.dma_semaphore, #tpu.memory_space<semaphore_mem>>) src(%573 : memref<1x32xf32, #tpu.memory_space<any>>) dst(%574 : memref<1x32xf32, #tpu.memory_space<vmem>>)
    %c1_i32_395 = arith.constant 1 : i32
    %c0_i32_396 = arith.constant 0 : i32
    %c0_i32_397 = arith.constant 0 : i32
    %577 = tpu.memref_slice %arg3[%c0_i32_396, %c0_i32_397] : memref<64x32xf32, #tpu.memory_space<any>> -> memref<1x32xf32, #tpu.memory_space<any>>
    %c14_i32_398 = arith.constant 14 : i32
    %c0_i32_399 = arith.constant 0 : i32
    %578 = tpu.memref_slice %arg5[%c14_i32_398, %c0_i32_399] : memref<64x32xf32, #tpu.memory_space<vmem>> -> memref<1x32xf32, #tpu.memory_space<vmem>>
    %579 = tpu.memref_slice %arg6[%c1_i32_395] : memref<8x!tpu.dma_semaphore, #tpu.memory_space<semaphore_mem>> -> memref<1x!tpu.dma_semaphore, #tpu.memory_space<semaphore_mem>>
    %580 = tpu.memref_squeeze %579 : memref<1x!tpu.dma_semaphore, #tpu.memory_space<semaphore_mem>> -> memref<!tpu.dma_semaphore, #tpu.memory_space<semaphore_mem>>
    tpu.wait_dma2 semaphore(%580 : memref<!tpu.dma_semaphore, #tpu.memory_space<semaphore_mem>>) src(%577 : memref<1x32xf32, #tpu.memory_space<any>>) dst(%578 : memref<1x32xf32, #tpu.memory_space<vmem>>)
    %c1_i32_400 = arith.constant 1 : i32
    %c0_i32_401 = arith.constant 0 : i32
    %c0_i32_402 = arith.constant 0 : i32
    %581 = tpu.memref_slice %arg3[%c0_i32_401, %c0_i32_402] : memref<64x32xf32, #tpu.memory_space<any>> -> memref<1x32xf32, #tpu.memory_space<any>>
    %c15_i32_403 = arith.constant 15 : i32
    %c0_i32_404 = arith.constant 0 : i32
    %582 = tpu.memref_slice %arg5[%c15_i32_403, %c0_i32_404] : memref<64x32xf32, #tpu.memory_space<vmem>> -> memref<1x32xf32, #tpu.memory_space<vmem>>
    %583 = tpu.memref_slice %arg6[%c1_i32_400] : memref<8x!tpu.dma_semaphore, #tpu.memory_space<semaphore_mem>> -> memref<1x!tpu.dma_semaphore, #tpu.memory_space<semaphore_mem>>
    %584 = tpu.memref_squeeze %583 : memref<1x!tpu.dma_semaphore, #tpu.memory_space<semaphore_mem>> -> memref<!tpu.dma_semaphore, #tpu.memory_space<semaphore_mem>>
    tpu.wait_dma2 semaphore(%584 : memref<!tpu.dma_semaphore, #tpu.memory_space<semaphore_mem>>) src(%581 : memref<1x32xf32, #tpu.memory_space<any>>) dst(%582 : memref<1x32xf32, #tpu.memory_space<vmem>>)
    %c8 = arith.constant 8 : index
    %c0_405 = arith.constant 0 : index
    %585 = vector.load %arg5[%c8, %c0_405] : memref<64x32xf32, #tpu.memory_space<vmem>>, vector<8x32xf32>
    %586 = vector.extract_strided_slice %514 {offsets = [0, 1], sizes = [8, 1], strides = [1, 1]} : vector<8x8xf32> to vector<8x1xf32>
    %587 = vector.broadcast %586 : vector<8x1xf32> to vector<8x32xf32>
    %588 = arith.mulf %585, %587 : vector<8x32xf32>
    %589 = arith.addf %552, %588 : vector<8x32xf32>
    %c2_i32_406 = arith.constant 2 : i32
    %c0_i32_407 = arith.constant 0 : i32
    %c0_i32_408 = arith.constant 0 : i32
    %590 = tpu.memref_slice %arg3[%c0_i32_407, %c0_i32_408] : memref<64x32xf32, #tpu.memory_space<any>> -> memref<1x32xf32, #tpu.memory_space<any>>
    %c16_i32_409 = arith.constant 16 : i32
    %c0_i32_410 = arith.constant 0 : i32
    %591 = tpu.memref_slice %arg5[%c16_i32_409, %c0_i32_410] : memref<64x32xf32, #tpu.memory_space<vmem>> -> memref<1x32xf32, #tpu.memory_space<vmem>>
    %592 = tpu.memref_slice %arg6[%c2_i32_406] : memref<8x!tpu.dma_semaphore, #tpu.memory_space<semaphore_mem>> -> memref<1x!tpu.dma_semaphore, #tpu.memory_space<semaphore_mem>>
    %593 = tpu.memref_squeeze %592 : memref<1x!tpu.dma_semaphore, #tpu.memory_space<semaphore_mem>> -> memref<!tpu.dma_semaphore, #tpu.memory_space<semaphore_mem>>
    tpu.wait_dma2 semaphore(%593 : memref<!tpu.dma_semaphore, #tpu.memory_space<semaphore_mem>>) src(%590 : memref<1x32xf32, #tpu.memory_space<any>>) dst(%591 : memref<1x32xf32, #tpu.memory_space<vmem>>)
    %c2_i32_411 = arith.constant 2 : i32
    %c0_i32_412 = arith.constant 0 : i32
    %c0_i32_413 = arith.constant 0 : i32
    %594 = tpu.memref_slice %arg3[%c0_i32_412, %c0_i32_413] : memref<64x32xf32, #tpu.memory_space<any>> -> memref<1x32xf32, #tpu.memory_space<any>>
    %c17_i32_414 = arith.constant 17 : i32
    %c0_i32_415 = arith.constant 0 : i32
    %595 = tpu.memref_slice %arg5[%c17_i32_414, %c0_i32_415] : memref<64x32xf32, #tpu.memory_space<vmem>> -> memref<1x32xf32, #tpu.memory_space<vmem>>
    %596 = tpu.memref_slice %arg6[%c2_i32_411] : memref<8x!tpu.dma_semaphore, #tpu.memory_space<semaphore_mem>> -> memref<1x!tpu.dma_semaphore, #tpu.memory_space<semaphore_mem>>
    %597 = tpu.memref_squeeze %596 : memref<1x!tpu.dma_semaphore, #tpu.memory_space<semaphore_mem>> -> memref<!tpu.dma_semaphore, #tpu.memory_space<semaphore_mem>>
    tpu.wait_dma2 semaphore(%597 : memref<!tpu.dma_semaphore, #tpu.memory_space<semaphore_mem>>) src(%594 : memref<1x32xf32, #tpu.memory_space<any>>) dst(%595 : memref<1x32xf32, #tpu.memory_space<vmem>>)
    %c2_i32_416 = arith.constant 2 : i32
    %c0_i32_417 = arith.constant 0 : i32
    %c0_i32_418 = arith.constant 0 : i32
    %598 = tpu.memref_slice %arg3[%c0_i32_417, %c0_i32_418] : memref<64x32xf32, #tpu.memory_space<any>> -> memref<1x32xf32, #tpu.memory_space<any>>
    %c18_i32_419 = arith.constant 18 : i32
    %c0_i32_420 = arith.constant 0 : i32
    %599 = tpu.memref_slice %arg5[%c18_i32_419, %c0_i32_420] : memref<64x32xf32, #tpu.memory_space<vmem>> -> memref<1x32xf32, #tpu.memory_space<vmem>>
    %600 = tpu.memref_slice %arg6[%c2_i32_416] : memref<8x!tpu.dma_semaphore, #tpu.memory_space<semaphore_mem>> -> memref<1x!tpu.dma_semaphore, #tpu.memory_space<semaphore_mem>>
    %601 = tpu.memref_squeeze %600 : memref<1x!tpu.dma_semaphore, #tpu.memory_space<semaphore_mem>> -> memref<!tpu.dma_semaphore, #tpu.memory_space<semaphore_mem>>
    tpu.wait_dma2 semaphore(%601 : memref<!tpu.dma_semaphore, #tpu.memory_space<semaphore_mem>>) src(%598 : memref<1x32xf32, #tpu.memory_space<any>>) dst(%599 : memref<1x32xf32, #tpu.memory_space<vmem>>)
    %c2_i32_421 = arith.constant 2 : i32
    %c0_i32_422 = arith.constant 0 : i32
    %c0_i32_423 = arith.constant 0 : i32
    %602 = tpu.memref_slice %arg3[%c0_i32_422, %c0_i32_423] : memref<64x32xf32, #tpu.memory_space<any>> -> memref<1x32xf32, #tpu.memory_space<any>>
    %c19_i32_424 = arith.constant 19 : i32
    %c0_i32_425 = arith.constant 0 : i32
    %603 = tpu.memref_slice %arg5[%c19_i32_424, %c0_i32_425] : memref<64x32xf32, #tpu.memory_space<vmem>> -> memref<1x32xf32, #tpu.memory_space<vmem>>
    %604 = tpu.memref_slice %arg6[%c2_i32_421] : memref<8x!tpu.dma_semaphore, #tpu.memory_space<semaphore_mem>> -> memref<1x!tpu.dma_semaphore, #tpu.memory_space<semaphore_mem>>
    %605 = tpu.memref_squeeze %604 : memref<1x!tpu.dma_semaphore, #tpu.memory_space<semaphore_mem>> -> memref<!tpu.dma_semaphore, #tpu.memory_space<semaphore_mem>>
    tpu.wait_dma2 semaphore(%605 : memref<!tpu.dma_semaphore, #tpu.memory_space<semaphore_mem>>) src(%602 : memref<1x32xf32, #tpu.memory_space<any>>) dst(%603 : memref<1x32xf32, #tpu.memory_space<vmem>>)
    %c2_i32_426 = arith.constant 2 : i32
    %c0_i32_427 = arith.constant 0 : i32
    %c0_i32_428 = arith.constant 0 : i32
    %606 = tpu.memref_slice %arg3[%c0_i32_427, %c0_i32_428] : memref<64x32xf32, #tpu.memory_space<any>> -> memref<1x32xf32, #tpu.memory_space<any>>
    %c20_i32_429 = arith.constant 20 : i32
    %c0_i32_430 = arith.constant 0 : i32
    %607 = tpu.memref_slice %arg5[%c20_i32_429, %c0_i32_430] : memref<64x32xf32, #tpu.memory_space<vmem>> -> memref<1x32xf32, #tpu.memory_space<vmem>>
    %608 = tpu.memref_slice %arg6[%c2_i32_426] : memref<8x!tpu.dma_semaphore, #tpu.memory_space<semaphore_mem>> -> memref<1x!tpu.dma_semaphore, #tpu.memory_space<semaphore_mem>>
    %609 = tpu.memref_squeeze %608 : memref<1x!tpu.dma_semaphore, #tpu.memory_space<semaphore_mem>> -> memref<!tpu.dma_semaphore, #tpu.memory_space<semaphore_mem>>
    tpu.wait_dma2 semaphore(%609 : memref<!tpu.dma_semaphore, #tpu.memory_space<semaphore_mem>>) src(%606 : memref<1x32xf32, #tpu.memory_space<any>>) dst(%607 : memref<1x32xf32, #tpu.memory_space<vmem>>)
    %c2_i32_431 = arith.constant 2 : i32
    %c0_i32_432 = arith.constant 0 : i32
    %c0_i32_433 = arith.constant 0 : i32
    %610 = tpu.memref_slice %arg3[%c0_i32_432, %c0_i32_433] : memref<64x32xf32, #tpu.memory_space<any>> -> memref<1x32xf32, #tpu.memory_space<any>>
    %c21_i32_434 = arith.constant 21 : i32
    %c0_i32_435 = arith.constant 0 : i32
    %611 = tpu.memref_slice %arg5[%c21_i32_434, %c0_i32_435] : memref<64x32xf32, #tpu.memory_space<vmem>> -> memref<1x32xf32, #tpu.memory_space<vmem>>
    %612 = tpu.memref_slice %arg6[%c2_i32_431] : memref<8x!tpu.dma_semaphore, #tpu.memory_space<semaphore_mem>> -> memref<1x!tpu.dma_semaphore, #tpu.memory_space<semaphore_mem>>
    %613 = tpu.memref_squeeze %612 : memref<1x!tpu.dma_semaphore, #tpu.memory_space<semaphore_mem>> -> memref<!tpu.dma_semaphore, #tpu.memory_space<semaphore_mem>>
    tpu.wait_dma2 semaphore(%613 : memref<!tpu.dma_semaphore, #tpu.memory_space<semaphore_mem>>) src(%610 : memref<1x32xf32, #tpu.memory_space<any>>) dst(%611 : memref<1x32xf32, #tpu.memory_space<vmem>>)
    %c2_i32_436 = arith.constant 2 : i32
    %c0_i32_437 = arith.constant 0 : i32
    %c0_i32_438 = arith.constant 0 : i32
    %614 = tpu.memref_slice %arg3[%c0_i32_437, %c0_i32_438] : memref<64x32xf32, #tpu.memory_space<any>> -> memref<1x32xf32, #tpu.memory_space<any>>
    %c22_i32_439 = arith.constant 22 : i32
    %c0_i32_440 = arith.constant 0 : i32
    %615 = tpu.memref_slice %arg5[%c22_i32_439, %c0_i32_440] : memref<64x32xf32, #tpu.memory_space<vmem>> -> memref<1x32xf32, #tpu.memory_space<vmem>>
    %616 = tpu.memref_slice %arg6[%c2_i32_436] : memref<8x!tpu.dma_semaphore, #tpu.memory_space<semaphore_mem>> -> memref<1x!tpu.dma_semaphore, #tpu.memory_space<semaphore_mem>>
    %617 = tpu.memref_squeeze %616 : memref<1x!tpu.dma_semaphore, #tpu.memory_space<semaphore_mem>> -> memref<!tpu.dma_semaphore, #tpu.memory_space<semaphore_mem>>
    tpu.wait_dma2 semaphore(%617 : memref<!tpu.dma_semaphore, #tpu.memory_space<semaphore_mem>>) src(%614 : memref<1x32xf32, #tpu.memory_space<any>>) dst(%615 : memref<1x32xf32, #tpu.memory_space<vmem>>)
    %c2_i32_441 = arith.constant 2 : i32
    %c0_i32_442 = arith.constant 0 : i32
    %c0_i32_443 = arith.constant 0 : i32
    %618 = tpu.memref_slice %arg3[%c0_i32_442, %c0_i32_443] : memref<64x32xf32, #tpu.memory_space<any>> -> memref<1x32xf32, #tpu.memory_space<any>>
    %c23_i32_444 = arith.constant 23 : i32
    %c0_i32_445 = arith.constant 0 : i32
    %619 = tpu.memref_slice %arg5[%c23_i32_444, %c0_i32_445] : memref<64x32xf32, #tpu.memory_space<vmem>> -> memref<1x32xf32, #tpu.memory_space<vmem>>
    %620 = tpu.memref_slice %arg6[%c2_i32_441] : memref<8x!tpu.dma_semaphore, #tpu.memory_space<semaphore_mem>> -> memref<1x!tpu.dma_semaphore, #tpu.memory_space<semaphore_mem>>
    %621 = tpu.memref_squeeze %620 : memref<1x!tpu.dma_semaphore, #tpu.memory_space<semaphore_mem>> -> memref<!tpu.dma_semaphore, #tpu.memory_space<semaphore_mem>>
    tpu.wait_dma2 semaphore(%621 : memref<!tpu.dma_semaphore, #tpu.memory_space<semaphore_mem>>) src(%618 : memref<1x32xf32, #tpu.memory_space<any>>) dst(%619 : memref<1x32xf32, #tpu.memory_space<vmem>>)
    %c16 = arith.constant 16 : index
    %c0_446 = arith.constant 0 : index
    %622 = vector.load %arg5[%c16, %c0_446] : memref<64x32xf32, #tpu.memory_space<vmem>>, vector<8x32xf32>
    %623 = vector.extract_strided_slice %514 {offsets = [0, 2], sizes = [8, 1], strides = [1, 1]} : vector<8x8xf32> to vector<8x1xf32>
    %624 = vector.broadcast %623 : vector<8x1xf32> to vector<8x32xf32>
    %625 = arith.mulf %622, %624 : vector<8x32xf32>
    %626 = arith.addf %589, %625 : vector<8x32xf32>
    %c3_i32_447 = arith.constant 3 : i32
    %c0_i32_448 = arith.constant 0 : i32
    %c0_i32_449 = arith.constant 0 : i32
    %627 = tpu.memref_slice %arg3[%c0_i32_448, %c0_i32_449] : memref<64x32xf32, #tpu.memory_space<any>> -> memref<1x32xf32, #tpu.memory_space<any>>
    %c24_i32_450 = arith.constant 24 : i32
    %c0_i32_451 = arith.constant 0 : i32
    %628 = tpu.memref_slice %arg5[%c24_i32_450, %c0_i32_451] : memref<64x32xf32, #tpu.memory_space<vmem>> -> memref<1x32xf32, #tpu.memory_space<vmem>>
    %629 = tpu.memref_slice %arg6[%c3_i32_447] : memref<8x!tpu.dma_semaphore, #tpu.memory_space<semaphore_mem>> -> memref<1x!tpu.dma_semaphore, #tpu.memory_space<semaphore_mem>>
    %630 = tpu.memref_squeeze %629 : memref<1x!tpu.dma_semaphore, #tpu.memory_space<semaphore_mem>> -> memref<!tpu.dma_semaphore, #tpu.memory_space<semaphore_mem>>
    tpu.wait_dma2 semaphore(%630 : memref<!tpu.dma_semaphore, #tpu.memory_space<semaphore_mem>>) src(%627 : memref<1x32xf32, #tpu.memory_space<any>>) dst(%628 : memref<1x32xf32, #tpu.memory_space<vmem>>)
    %c3_i32_452 = arith.constant 3 : i32
    %c0_i32_453 = arith.constant 0 : i32
    %c0_i32_454 = arith.constant 0 : i32
    %631 = tpu.memref_slice %arg3[%c0_i32_453, %c0_i32_454] : memref<64x32xf32, #tpu.memory_space<any>> -> memref<1x32xf32, #tpu.memory_space<any>>
    %c25_i32_455 = arith.constant 25 : i32
    %c0_i32_456 = arith.constant 0 : i32
    %632 = tpu.memref_slice %arg5[%c25_i32_455, %c0_i32_456] : memref<64x32xf32, #tpu.memory_space<vmem>> -> memref<1x32xf32, #tpu.memory_space<vmem>>
    %633 = tpu.memref_slice %arg6[%c3_i32_452] : memref<8x!tpu.dma_semaphore, #tpu.memory_space<semaphore_mem>> -> memref<1x!tpu.dma_semaphore, #tpu.memory_space<semaphore_mem>>
    %634 = tpu.memref_squeeze %633 : memref<1x!tpu.dma_semaphore, #tpu.memory_space<semaphore_mem>> -> memref<!tpu.dma_semaphore, #tpu.memory_space<semaphore_mem>>
    tpu.wait_dma2 semaphore(%634 : memref<!tpu.dma_semaphore, #tpu.memory_space<semaphore_mem>>) src(%631 : memref<1x32xf32, #tpu.memory_space<any>>) dst(%632 : memref<1x32xf32, #tpu.memory_space<vmem>>)
    %c3_i32_457 = arith.constant 3 : i32
    %c0_i32_458 = arith.constant 0 : i32
    %c0_i32_459 = arith.constant 0 : i32
    %635 = tpu.memref_slice %arg3[%c0_i32_458, %c0_i32_459] : memref<64x32xf32, #tpu.memory_space<any>> -> memref<1x32xf32, #tpu.memory_space<any>>
    %c26_i32_460 = arith.constant 26 : i32
    %c0_i32_461 = arith.constant 0 : i32
    %636 = tpu.memref_slice %arg5[%c26_i32_460, %c0_i32_461] : memref<64x32xf32, #tpu.memory_space<vmem>> -> memref<1x32xf32, #tpu.memory_space<vmem>>
    %637 = tpu.memref_slice %arg6[%c3_i32_457] : memref<8x!tpu.dma_semaphore, #tpu.memory_space<semaphore_mem>> -> memref<1x!tpu.dma_semaphore, #tpu.memory_space<semaphore_mem>>
    %638 = tpu.memref_squeeze %637 : memref<1x!tpu.dma_semaphore, #tpu.memory_space<semaphore_mem>> -> memref<!tpu.dma_semaphore, #tpu.memory_space<semaphore_mem>>
    tpu.wait_dma2 semaphore(%638 : memref<!tpu.dma_semaphore, #tpu.memory_space<semaphore_mem>>) src(%635 : memref<1x32xf32, #tpu.memory_space<any>>) dst(%636 : memref<1x32xf32, #tpu.memory_space<vmem>>)
    %c3_i32_462 = arith.constant 3 : i32
    %c0_i32_463 = arith.constant 0 : i32
    %c0_i32_464 = arith.constant 0 : i32
    %639 = tpu.memref_slice %arg3[%c0_i32_463, %c0_i32_464] : memref<64x32xf32, #tpu.memory_space<any>> -> memref<1x32xf32, #tpu.memory_space<any>>
    %c27_i32_465 = arith.constant 27 : i32
    %c0_i32_466 = arith.constant 0 : i32
    %640 = tpu.memref_slice %arg5[%c27_i32_465, %c0_i32_466] : memref<64x32xf32, #tpu.memory_space<vmem>> -> memref<1x32xf32, #tpu.memory_space<vmem>>
    %641 = tpu.memref_slice %arg6[%c3_i32_462] : memref<8x!tpu.dma_semaphore, #tpu.memory_space<semaphore_mem>> -> memref<1x!tpu.dma_semaphore, #tpu.memory_space<semaphore_mem>>
    %642 = tpu.memref_squeeze %641 : memref<1x!tpu.dma_semaphore, #tpu.memory_space<semaphore_mem>> -> memref<!tpu.dma_semaphore, #tpu.memory_space<semaphore_mem>>
    tpu.wait_dma2 semaphore(%642 : memref<!tpu.dma_semaphore, #tpu.memory_space<semaphore_mem>>) src(%639 : memref<1x32xf32, #tpu.memory_space<any>>) dst(%640 : memref<1x32xf32, #tpu.memory_space<vmem>>)
    %c3_i32_467 = arith.constant 3 : i32
    %c0_i32_468 = arith.constant 0 : i32
    %c0_i32_469 = arith.constant 0 : i32
    %643 = tpu.memref_slice %arg3[%c0_i32_468, %c0_i32_469] : memref<64x32xf32, #tpu.memory_space<any>> -> memref<1x32xf32, #tpu.memory_space<any>>
    %c28_i32_470 = arith.constant 28 : i32
    %c0_i32_471 = arith.constant 0 : i32
    %644 = tpu.memref_slice %arg5[%c28_i32_470, %c0_i32_471] : memref<64x32xf32, #tpu.memory_space<vmem>> -> memref<1x32xf32, #tpu.memory_space<vmem>>
    %645 = tpu.memref_slice %arg6[%c3_i32_467] : memref<8x!tpu.dma_semaphore, #tpu.memory_space<semaphore_mem>> -> memref<1x!tpu.dma_semaphore, #tpu.memory_space<semaphore_mem>>
    %646 = tpu.memref_squeeze %645 : memref<1x!tpu.dma_semaphore, #tpu.memory_space<semaphore_mem>> -> memref<!tpu.dma_semaphore, #tpu.memory_space<semaphore_mem>>
    tpu.wait_dma2 semaphore(%646 : memref<!tpu.dma_semaphore, #tpu.memory_space<semaphore_mem>>) src(%643 : memref<1x32xf32, #tpu.memory_space<any>>) dst(%644 : memref<1x32xf32, #tpu.memory_space<vmem>>)
    %c3_i32_472 = arith.constant 3 : i32
    %c0_i32_473 = arith.constant 0 : i32
    %c0_i32_474 = arith.constant 0 : i32
    %647 = tpu.memref_slice %arg3[%c0_i32_473, %c0_i32_474] : memref<64x32xf32, #tpu.memory_space<any>> -> memref<1x32xf32, #tpu.memory_space<any>>
    %c29_i32_475 = arith.constant 29 : i32
    %c0_i32_476 = arith.constant 0 : i32
    %648 = tpu.memref_slice %arg5[%c29_i32_475, %c0_i32_476] : memref<64x32xf32, #tpu.memory_space<vmem>> -> memref<1x32xf32, #tpu.memory_space<vmem>>
    %649 = tpu.memref_slice %arg6[%c3_i32_472] : memref<8x!tpu.dma_semaphore, #tpu.memory_space<semaphore_mem>> -> memref<1x!tpu.dma_semaphore, #tpu.memory_space<semaphore_mem>>
    %650 = tpu.memref_squeeze %649 : memref<1x!tpu.dma_semaphore, #tpu.memory_space<semaphore_mem>> -> memref<!tpu.dma_semaphore, #tpu.memory_space<semaphore_mem>>
    tpu.wait_dma2 semaphore(%650 : memref<!tpu.dma_semaphore, #tpu.memory_space<semaphore_mem>>) src(%647 : memref<1x32xf32, #tpu.memory_space<any>>) dst(%648 : memref<1x32xf32, #tpu.memory_space<vmem>>)
    %c3_i32_477 = arith.constant 3 : i32
    %c0_i32_478 = arith.constant 0 : i32
    %c0_i32_479 = arith.constant 0 : i32
    %651 = tpu.memref_slice %arg3[%c0_i32_478, %c0_i32_479] : memref<64x32xf32, #tpu.memory_space<any>> -> memref<1x32xf32, #tpu.memory_space<any>>
    %c30_i32_480 = arith.constant 30 : i32
    %c0_i32_481 = arith.constant 0 : i32
    %652 = tpu.memref_slice %arg5[%c30_i32_480, %c0_i32_481] : memref<64x32xf32, #tpu.memory_space<vmem>> -> memref<1x32xf32, #tpu.memory_space<vmem>>
    %653 = tpu.memref_slice %arg6[%c3_i32_477] : memref<8x!tpu.dma_semaphore, #tpu.memory_space<semaphore_mem>> -> memref<1x!tpu.dma_semaphore, #tpu.memory_space<semaphore_mem>>
    %654 = tpu.memref_squeeze %653 : memref<1x!tpu.dma_semaphore, #tpu.memory_space<semaphore_mem>> -> memref<!tpu.dma_semaphore, #tpu.memory_space<semaphore_mem>>
    tpu.wait_dma2 semaphore(%654 : memref<!tpu.dma_semaphore, #tpu.memory_space<semaphore_mem>>) src(%651 : memref<1x32xf32, #tpu.memory_space<any>>) dst(%652 : memref<1x32xf32, #tpu.memory_space<vmem>>)
    %c3_i32_482 = arith.constant 3 : i32
    %c0_i32_483 = arith.constant 0 : i32
    %c0_i32_484 = arith.constant 0 : i32
    %655 = tpu.memref_slice %arg3[%c0_i32_483, %c0_i32_484] : memref<64x32xf32, #tpu.memory_space<any>> -> memref<1x32xf32, #tpu.memory_space<any>>
    %c31_i32_485 = arith.constant 31 : i32
    %c0_i32_486 = arith.constant 0 : i32
    %656 = tpu.memref_slice %arg5[%c31_i32_485, %c0_i32_486] : memref<64x32xf32, #tpu.memory_space<vmem>> -> memref<1x32xf32, #tpu.memory_space<vmem>>
    %657 = tpu.memref_slice %arg6[%c3_i32_482] : memref<8x!tpu.dma_semaphore, #tpu.memory_space<semaphore_mem>> -> memref<1x!tpu.dma_semaphore, #tpu.memory_space<semaphore_mem>>
    %658 = tpu.memref_squeeze %657 : memref<1x!tpu.dma_semaphore, #tpu.memory_space<semaphore_mem>> -> memref<!tpu.dma_semaphore, #tpu.memory_space<semaphore_mem>>
    tpu.wait_dma2 semaphore(%658 : memref<!tpu.dma_semaphore, #tpu.memory_space<semaphore_mem>>) src(%655 : memref<1x32xf32, #tpu.memory_space<any>>) dst(%656 : memref<1x32xf32, #tpu.memory_space<vmem>>)
    %c24 = arith.constant 24 : index
    %c0_487 = arith.constant 0 : index
    %659 = vector.load %arg5[%c24, %c0_487] : memref<64x32xf32, #tpu.memory_space<vmem>>, vector<8x32xf32>
    %660 = vector.extract_strided_slice %514 {offsets = [0, 3], sizes = [8, 1], strides = [1, 1]} : vector<8x8xf32> to vector<8x1xf32>
    %661 = vector.broadcast %660 : vector<8x1xf32> to vector<8x32xf32>
    %662 = arith.mulf %659, %661 : vector<8x32xf32>
    %663 = arith.addf %626, %662 : vector<8x32xf32>
    %c4_i32_488 = arith.constant 4 : i32
    %c0_i32_489 = arith.constant 0 : i32
    %c0_i32_490 = arith.constant 0 : i32
    %664 = tpu.memref_slice %arg3[%c0_i32_489, %c0_i32_490] : memref<64x32xf32, #tpu.memory_space<any>> -> memref<1x32xf32, #tpu.memory_space<any>>
    %c32_i32_491 = arith.constant 32 : i32
    %c0_i32_492 = arith.constant 0 : i32
    %665 = tpu.memref_slice %arg5[%c32_i32_491, %c0_i32_492] : memref<64x32xf32, #tpu.memory_space<vmem>> -> memref<1x32xf32, #tpu.memory_space<vmem>>
    %666 = tpu.memref_slice %arg6[%c4_i32_488] : memref<8x!tpu.dma_semaphore, #tpu.memory_space<semaphore_mem>> -> memref<1x!tpu.dma_semaphore, #tpu.memory_space<semaphore_mem>>
    %667 = tpu.memref_squeeze %666 : memref<1x!tpu.dma_semaphore, #tpu.memory_space<semaphore_mem>> -> memref<!tpu.dma_semaphore, #tpu.memory_space<semaphore_mem>>
    tpu.wait_dma2 semaphore(%667 : memref<!tpu.dma_semaphore, #tpu.memory_space<semaphore_mem>>) src(%664 : memref<1x32xf32, #tpu.memory_space<any>>) dst(%665 : memref<1x32xf32, #tpu.memory_space<vmem>>)
    %c4_i32_493 = arith.constant 4 : i32
    %c0_i32_494 = arith.constant 0 : i32
    %c0_i32_495 = arith.constant 0 : i32
    %668 = tpu.memref_slice %arg3[%c0_i32_494, %c0_i32_495] : memref<64x32xf32, #tpu.memory_space<any>> -> memref<1x32xf32, #tpu.memory_space<any>>
    %c33_i32_496 = arith.constant 33 : i32
    %c0_i32_497 = arith.constant 0 : i32
    %669 = tpu.memref_slice %arg5[%c33_i32_496, %c0_i32_497] : memref<64x32xf32, #tpu.memory_space<vmem>> -> memref<1x32xf32, #tpu.memory_space<vmem>>
    %670 = tpu.memref_slice %arg6[%c4_i32_493] : memref<8x!tpu.dma_semaphore, #tpu.memory_space<semaphore_mem>> -> memref<1x!tpu.dma_semaphore, #tpu.memory_space<semaphore_mem>>
    %671 = tpu.memref_squeeze %670 : memref<1x!tpu.dma_semaphore, #tpu.memory_space<semaphore_mem>> -> memref<!tpu.dma_semaphore, #tpu.memory_space<semaphore_mem>>
    tpu.wait_dma2 semaphore(%671 : memref<!tpu.dma_semaphore, #tpu.memory_space<semaphore_mem>>) src(%668 : memref<1x32xf32, #tpu.memory_space<any>>) dst(%669 : memref<1x32xf32, #tpu.memory_space<vmem>>)
    %c4_i32_498 = arith.constant 4 : i32
    %c0_i32_499 = arith.constant 0 : i32
    %c0_i32_500 = arith.constant 0 : i32
    %672 = tpu.memref_slice %arg3[%c0_i32_499, %c0_i32_500] : memref<64x32xf32, #tpu.memory_space<any>> -> memref<1x32xf32, #tpu.memory_space<any>>
    %c34_i32_501 = arith.constant 34 : i32
    %c0_i32_502 = arith.constant 0 : i32
    %673 = tpu.memref_slice %arg5[%c34_i32_501, %c0_i32_502] : memref<64x32xf32, #tpu.memory_space<vmem>> -> memref<1x32xf32, #tpu.memory_space<vmem>>
    %674 = tpu.memref_slice %arg6[%c4_i32_498] : memref<8x!tpu.dma_semaphore, #tpu.memory_space<semaphore_mem>> -> memref<1x!tpu.dma_semaphore, #tpu.memory_space<semaphore_mem>>
    %675 = tpu.memref_squeeze %674 : memref<1x!tpu.dma_semaphore, #tpu.memory_space<semaphore_mem>> -> memref<!tpu.dma_semaphore, #tpu.memory_space<semaphore_mem>>
    tpu.wait_dma2 semaphore(%675 : memref<!tpu.dma_semaphore, #tpu.memory_space<semaphore_mem>>) src(%672 : memref<1x32xf32, #tpu.memory_space<any>>) dst(%673 : memref<1x32xf32, #tpu.memory_space<vmem>>)
    %c4_i32_503 = arith.constant 4 : i32
    %c0_i32_504 = arith.constant 0 : i32
    %c0_i32_505 = arith.constant 0 : i32
    %676 = tpu.memref_slice %arg3[%c0_i32_504, %c0_i32_505] : memref<64x32xf32, #tpu.memory_space<any>> -> memref<1x32xf32, #tpu.memory_space<any>>
    %c35_i32_506 = arith.constant 35 : i32
    %c0_i32_507 = arith.constant 0 : i32
    %677 = tpu.memref_slice %arg5[%c35_i32_506, %c0_i32_507] : memref<64x32xf32, #tpu.memory_space<vmem>> -> memref<1x32xf32, #tpu.memory_space<vmem>>
    %678 = tpu.memref_slice %arg6[%c4_i32_503] : memref<8x!tpu.dma_semaphore, #tpu.memory_space<semaphore_mem>> -> memref<1x!tpu.dma_semaphore, #tpu.memory_space<semaphore_mem>>
    %679 = tpu.memref_squeeze %678 : memref<1x!tpu.dma_semaphore, #tpu.memory_space<semaphore_mem>> -> memref<!tpu.dma_semaphore, #tpu.memory_space<semaphore_mem>>
    tpu.wait_dma2 semaphore(%679 : memref<!tpu.dma_semaphore, #tpu.memory_space<semaphore_mem>>) src(%676 : memref<1x32xf32, #tpu.memory_space<any>>) dst(%677 : memref<1x32xf32, #tpu.memory_space<vmem>>)
    %c4_i32_508 = arith.constant 4 : i32
    %c0_i32_509 = arith.constant 0 : i32
    %c0_i32_510 = arith.constant 0 : i32
    %680 = tpu.memref_slice %arg3[%c0_i32_509, %c0_i32_510] : memref<64x32xf32, #tpu.memory_space<any>> -> memref<1x32xf32, #tpu.memory_space<any>>
    %c36_i32_511 = arith.constant 36 : i32
    %c0_i32_512 = arith.constant 0 : i32
    %681 = tpu.memref_slice %arg5[%c36_i32_511, %c0_i32_512] : memref<64x32xf32, #tpu.memory_space<vmem>> -> memref<1x32xf32, #tpu.memory_space<vmem>>
    %682 = tpu.memref_slice %arg6[%c4_i32_508] : memref<8x!tpu.dma_semaphore, #tpu.memory_space<semaphore_mem>> -> memref<1x!tpu.dma_semaphore, #tpu.memory_space<semaphore_mem>>
    %683 = tpu.memref_squeeze %682 : memref<1x!tpu.dma_semaphore, #tpu.memory_space<semaphore_mem>> -> memref<!tpu.dma_semaphore, #tpu.memory_space<semaphore_mem>>
    tpu.wait_dma2 semaphore(%683 : memref<!tpu.dma_semaphore, #tpu.memory_space<semaphore_mem>>) src(%680 : memref<1x32xf32, #tpu.memory_space<any>>) dst(%681 : memref<1x32xf32, #tpu.memory_space<vmem>>)
    %c4_i32_513 = arith.constant 4 : i32
    %c0_i32_514 = arith.constant 0 : i32
    %c0_i32_515 = arith.constant 0 : i32
    %684 = tpu.memref_slice %arg3[%c0_i32_514, %c0_i32_515] : memref<64x32xf32, #tpu.memory_space<any>> -> memref<1x32xf32, #tpu.memory_space<any>>
    %c37_i32_516 = arith.constant 37 : i32
    %c0_i32_517 = arith.constant 0 : i32
    %685 = tpu.memref_slice %arg5[%c37_i32_516, %c0_i32_517] : memref<64x32xf32, #tpu.memory_space<vmem>> -> memref<1x32xf32, #tpu.memory_space<vmem>>
    %686 = tpu.memref_slice %arg6[%c4_i32_513] : memref<8x!tpu.dma_semaphore, #tpu.memory_space<semaphore_mem>> -> memref<1x!tpu.dma_semaphore, #tpu.memory_space<semaphore_mem>>
    %687 = tpu.memref_squeeze %686 : memref<1x!tpu.dma_semaphore, #tpu.memory_space<semaphore_mem>> -> memref<!tpu.dma_semaphore, #tpu.memory_space<semaphore_mem>>
    tpu.wait_dma2 semaphore(%687 : memref<!tpu.dma_semaphore, #tpu.memory_space<semaphore_mem>>) src(%684 : memref<1x32xf32, #tpu.memory_space<any>>) dst(%685 : memref<1x32xf32, #tpu.memory_space<vmem>>)
    %c4_i32_518 = arith.constant 4 : i32
    %c0_i32_519 = arith.constant 0 : i32
    %c0_i32_520 = arith.constant 0 : i32
    %688 = tpu.memref_slice %arg3[%c0_i32_519, %c0_i32_520] : memref<64x32xf32, #tpu.memory_space<any>> -> memref<1x32xf32, #tpu.memory_space<any>>
    %c38_i32_521 = arith.constant 38 : i32
    %c0_i32_522 = arith.constant 0 : i32
    %689 = tpu.memref_slice %arg5[%c38_i32_521, %c0_i32_522] : memref<64x32xf32, #tpu.memory_space<vmem>> -> memref<1x32xf32, #tpu.memory_space<vmem>>
    %690 = tpu.memref_slice %arg6[%c4_i32_518] : memref<8x!tpu.dma_semaphore, #tpu.memory_space<semaphore_mem>> -> memref<1x!tpu.dma_semaphore, #tpu.memory_space<semaphore_mem>>
    %691 = tpu.memref_squeeze %690 : memref<1x!tpu.dma_semaphore, #tpu.memory_space<semaphore_mem>> -> memref<!tpu.dma_semaphore, #tpu.memory_space<semaphore_mem>>
    tpu.wait_dma2 semaphore(%691 : memref<!tpu.dma_semaphore, #tpu.memory_space<semaphore_mem>>) src(%688 : memref<1x32xf32, #tpu.memory_space<any>>) dst(%689 : memref<1x32xf32, #tpu.memory_space<vmem>>)
    %c4_i32_523 = arith.constant 4 : i32
    %c0_i32_524 = arith.constant 0 : i32
    %c0_i32_525 = arith.constant 0 : i32
    %692 = tpu.memref_slice %arg3[%c0_i32_524, %c0_i32_525] : memref<64x32xf32, #tpu.memory_space<any>> -> memref<1x32xf32, #tpu.memory_space<any>>
    %c39_i32_526 = arith.constant 39 : i32
    %c0_i32_527 = arith.constant 0 : i32
    %693 = tpu.memref_slice %arg5[%c39_i32_526, %c0_i32_527] : memref<64x32xf32, #tpu.memory_space<vmem>> -> memref<1x32xf32, #tpu.memory_space<vmem>>
    %694 = tpu.memref_slice %arg6[%c4_i32_523] : memref<8x!tpu.dma_semaphore, #tpu.memory_space<semaphore_mem>> -> memref<1x!tpu.dma_semaphore, #tpu.memory_space<semaphore_mem>>
    %695 = tpu.memref_squeeze %694 : memref<1x!tpu.dma_semaphore, #tpu.memory_space<semaphore_mem>> -> memref<!tpu.dma_semaphore, #tpu.memory_space<semaphore_mem>>
    tpu.wait_dma2 semaphore(%695 : memref<!tpu.dma_semaphore, #tpu.memory_space<semaphore_mem>>) src(%692 : memref<1x32xf32, #tpu.memory_space<any>>) dst(%693 : memref<1x32xf32, #tpu.memory_space<vmem>>)
    %c32 = arith.constant 32 : index
    %c0_528 = arith.constant 0 : index
    %696 = vector.load %arg5[%c32, %c0_528] : memref<64x32xf32, #tpu.memory_space<vmem>>, vector<8x32xf32>
    %697 = vector.extract_strided_slice %514 {offsets = [0, 4], sizes = [8, 1], strides = [1, 1]} : vector<8x8xf32> to vector<8x1xf32>
    %698 = vector.broadcast %697 : vector<8x1xf32> to vector<8x32xf32>
    %699 = arith.mulf %696, %698 : vector<8x32xf32>
    %700 = arith.addf %663, %699 : vector<8x32xf32>
    %c5_i32_529 = arith.constant 5 : i32
    %c0_i32_530 = arith.constant 0 : i32
    %c0_i32_531 = arith.constant 0 : i32
    %701 = tpu.memref_slice %arg3[%c0_i32_530, %c0_i32_531] : memref<64x32xf32, #tpu.memory_space<any>> -> memref<1x32xf32, #tpu.memory_space<any>>
    %c40_i32_532 = arith.constant 40 : i32
    %c0_i32_533 = arith.constant 0 : i32
    %702 = tpu.memref_slice %arg5[%c40_i32_532, %c0_i32_533] : memref<64x32xf32, #tpu.memory_space<vmem>> -> memref<1x32xf32, #tpu.memory_space<vmem>>
    %703 = tpu.memref_slice %arg6[%c5_i32_529] : memref<8x!tpu.dma_semaphore, #tpu.memory_space<semaphore_mem>> -> memref<1x!tpu.dma_semaphore, #tpu.memory_space<semaphore_mem>>
    %704 = tpu.memref_squeeze %703 : memref<1x!tpu.dma_semaphore, #tpu.memory_space<semaphore_mem>> -> memref<!tpu.dma_semaphore, #tpu.memory_space<semaphore_mem>>
    tpu.wait_dma2 semaphore(%704 : memref<!tpu.dma_semaphore, #tpu.memory_space<semaphore_mem>>) src(%701 : memref<1x32xf32, #tpu.memory_space<any>>) dst(%702 : memref<1x32xf32, #tpu.memory_space<vmem>>)
    %c5_i32_534 = arith.constant 5 : i32
    %c0_i32_535 = arith.constant 0 : i32
    %c0_i32_536 = arith.constant 0 : i32
    %705 = tpu.memref_slice %arg3[%c0_i32_535, %c0_i32_536] : memref<64x32xf32, #tpu.memory_space<any>> -> memref<1x32xf32, #tpu.memory_space<any>>
    %c41_i32_537 = arith.constant 41 : i32
    %c0_i32_538 = arith.constant 0 : i32
    %706 = tpu.memref_slice %arg5[%c41_i32_537, %c0_i32_538] : memref<64x32xf32, #tpu.memory_space<vmem>> -> memref<1x32xf32, #tpu.memory_space<vmem>>
    %707 = tpu.memref_slice %arg6[%c5_i32_534] : memref<8x!tpu.dma_semaphore, #tpu.memory_space<semaphore_mem>> -> memref<1x!tpu.dma_semaphore, #tpu.memory_space<semaphore_mem>>
    %708 = tpu.memref_squeeze %707 : memref<1x!tpu.dma_semaphore, #tpu.memory_space<semaphore_mem>> -> memref<!tpu.dma_semaphore, #tpu.memory_space<semaphore_mem>>
    tpu.wait_dma2 semaphore(%708 : memref<!tpu.dma_semaphore, #tpu.memory_space<semaphore_mem>>) src(%705 : memref<1x32xf32, #tpu.memory_space<any>>) dst(%706 : memref<1x32xf32, #tpu.memory_space<vmem>>)
    %c5_i32_539 = arith.constant 5 : i32
    %c0_i32_540 = arith.constant 0 : i32
    %c0_i32_541 = arith.constant 0 : i32
    %709 = tpu.memref_slice %arg3[%c0_i32_540, %c0_i32_541] : memref<64x32xf32, #tpu.memory_space<any>> -> memref<1x32xf32, #tpu.memory_space<any>>
    %c42_i32_542 = arith.constant 42 : i32
    %c0_i32_543 = arith.constant 0 : i32
    %710 = tpu.memref_slice %arg5[%c42_i32_542, %c0_i32_543] : memref<64x32xf32, #tpu.memory_space<vmem>> -> memref<1x32xf32, #tpu.memory_space<vmem>>
    %711 = tpu.memref_slice %arg6[%c5_i32_539] : memref<8x!tpu.dma_semaphore, #tpu.memory_space<semaphore_mem>> -> memref<1x!tpu.dma_semaphore, #tpu.memory_space<semaphore_mem>>
    %712 = tpu.memref_squeeze %711 : memref<1x!tpu.dma_semaphore, #tpu.memory_space<semaphore_mem>> -> memref<!tpu.dma_semaphore, #tpu.memory_space<semaphore_mem>>
    tpu.wait_dma2 semaphore(%712 : memref<!tpu.dma_semaphore, #tpu.memory_space<semaphore_mem>>) src(%709 : memref<1x32xf32, #tpu.memory_space<any>>) dst(%710 : memref<1x32xf32, #tpu.memory_space<vmem>>)
    %c5_i32_544 = arith.constant 5 : i32
    %c0_i32_545 = arith.constant 0 : i32
    %c0_i32_546 = arith.constant 0 : i32
    %713 = tpu.memref_slice %arg3[%c0_i32_545, %c0_i32_546] : memref<64x32xf32, #tpu.memory_space<any>> -> memref<1x32xf32, #tpu.memory_space<any>>
    %c43_i32_547 = arith.constant 43 : i32
    %c0_i32_548 = arith.constant 0 : i32
    %714 = tpu.memref_slice %arg5[%c43_i32_547, %c0_i32_548] : memref<64x32xf32, #tpu.memory_space<vmem>> -> memref<1x32xf32, #tpu.memory_space<vmem>>
    %715 = tpu.memref_slice %arg6[%c5_i32_544] : memref<8x!tpu.dma_semaphore, #tpu.memory_space<semaphore_mem>> -> memref<1x!tpu.dma_semaphore, #tpu.memory_space<semaphore_mem>>
    %716 = tpu.memref_squeeze %715 : memref<1x!tpu.dma_semaphore, #tpu.memory_space<semaphore_mem>> -> memref<!tpu.dma_semaphore, #tpu.memory_space<semaphore_mem>>
    tpu.wait_dma2 semaphore(%716 : memref<!tpu.dma_semaphore, #tpu.memory_space<semaphore_mem>>) src(%713 : memref<1x32xf32, #tpu.memory_space<any>>) dst(%714 : memref<1x32xf32, #tpu.memory_space<vmem>>)
    %c5_i32_549 = arith.constant 5 : i32
    %c0_i32_550 = arith.constant 0 : i32
    %c0_i32_551 = arith.constant 0 : i32
    %717 = tpu.memref_slice %arg3[%c0_i32_550, %c0_i32_551] : memref<64x32xf32, #tpu.memory_space<any>> -> memref<1x32xf32, #tpu.memory_space<any>>
    %c44_i32_552 = arith.constant 44 : i32
    %c0_i32_553 = arith.constant 0 : i32
    %718 = tpu.memref_slice %arg5[%c44_i32_552, %c0_i32_553] : memref<64x32xf32, #tpu.memory_space<vmem>> -> memref<1x32xf32, #tpu.memory_space<vmem>>
    %719 = tpu.memref_slice %arg6[%c5_i32_549] : memref<8x!tpu.dma_semaphore, #tpu.memory_space<semaphore_mem>> -> memref<1x!tpu.dma_semaphore, #tpu.memory_space<semaphore_mem>>
    %720 = tpu.memref_squeeze %719 : memref<1x!tpu.dma_semaphore, #tpu.memory_space<semaphore_mem>> -> memref<!tpu.dma_semaphore, #tpu.memory_space<semaphore_mem>>
    tpu.wait_dma2 semaphore(%720 : memref<!tpu.dma_semaphore, #tpu.memory_space<semaphore_mem>>) src(%717 : memref<1x32xf32, #tpu.memory_space<any>>) dst(%718 : memref<1x32xf32, #tpu.memory_space<vmem>>)
    %c5_i32_554 = arith.constant 5 : i32
    %c0_i32_555 = arith.constant 0 : i32
    %c0_i32_556 = arith.constant 0 : i32
    %721 = tpu.memref_slice %arg3[%c0_i32_555, %c0_i32_556] : memref<64x32xf32, #tpu.memory_space<any>> -> memref<1x32xf32, #tpu.memory_space<any>>
    %c45_i32_557 = arith.constant 45 : i32
    %c0_i32_558 = arith.constant 0 : i32
    %722 = tpu.memref_slice %arg5[%c45_i32_557, %c0_i32_558] : memref<64x32xf32, #tpu.memory_space<vmem>> -> memref<1x32xf32, #tpu.memory_space<vmem>>
    %723 = tpu.memref_slice %arg6[%c5_i32_554] : memref<8x!tpu.dma_semaphore, #tpu.memory_space<semaphore_mem>> -> memref<1x!tpu.dma_semaphore, #tpu.memory_space<semaphore_mem>>
    %724 = tpu.memref_squeeze %723 : memref<1x!tpu.dma_semaphore, #tpu.memory_space<semaphore_mem>> -> memref<!tpu.dma_semaphore, #tpu.memory_space<semaphore_mem>>
    tpu.wait_dma2 semaphore(%724 : memref<!tpu.dma_semaphore, #tpu.memory_space<semaphore_mem>>) src(%721 : memref<1x32xf32, #tpu.memory_space<any>>) dst(%722 : memref<1x32xf32, #tpu.memory_space<vmem>>)
    %c5_i32_559 = arith.constant 5 : i32
    %c0_i32_560 = arith.constant 0 : i32
    %c0_i32_561 = arith.constant 0 : i32
    %725 = tpu.memref_slice %arg3[%c0_i32_560, %c0_i32_561] : memref<64x32xf32, #tpu.memory_space<any>> -> memref<1x32xf32, #tpu.memory_space<any>>
    %c46_i32_562 = arith.constant 46 : i32
    %c0_i32_563 = arith.constant 0 : i32
    %726 = tpu.memref_slice %arg5[%c46_i32_562, %c0_i32_563] : memref<64x32xf32, #tpu.memory_space<vmem>> -> memref<1x32xf32, #tpu.memory_space<vmem>>
    %727 = tpu.memref_slice %arg6[%c5_i32_559] : memref<8x!tpu.dma_semaphore, #tpu.memory_space<semaphore_mem>> -> memref<1x!tpu.dma_semaphore, #tpu.memory_space<semaphore_mem>>
    %728 = tpu.memref_squeeze %727 : memref<1x!tpu.dma_semaphore, #tpu.memory_space<semaphore_mem>> -> memref<!tpu.dma_semaphore, #tpu.memory_space<semaphore_mem>>
    tpu.wait_dma2 semaphore(%728 : memref<!tpu.dma_semaphore, #tpu.memory_space<semaphore_mem>>) src(%725 : memref<1x32xf32, #tpu.memory_space<any>>) dst(%726 : memref<1x32xf32, #tpu.memory_space<vmem>>)
    %c5_i32_564 = arith.constant 5 : i32
    %c0_i32_565 = arith.constant 0 : i32
    %c0_i32_566 = arith.constant 0 : i32
    %729 = tpu.memref_slice %arg3[%c0_i32_565, %c0_i32_566] : memref<64x32xf32, #tpu.memory_space<any>> -> memref<1x32xf32, #tpu.memory_space<any>>
    %c47_i32_567 = arith.constant 47 : i32
    %c0_i32_568 = arith.constant 0 : i32
    %730 = tpu.memref_slice %arg5[%c47_i32_567, %c0_i32_568] : memref<64x32xf32, #tpu.memory_space<vmem>> -> memref<1x32xf32, #tpu.memory_space<vmem>>
    %731 = tpu.memref_slice %arg6[%c5_i32_564] : memref<8x!tpu.dma_semaphore, #tpu.memory_space<semaphore_mem>> -> memref<1x!tpu.dma_semaphore, #tpu.memory_space<semaphore_mem>>
    %732 = tpu.memref_squeeze %731 : memref<1x!tpu.dma_semaphore, #tpu.memory_space<semaphore_mem>> -> memref<!tpu.dma_semaphore, #tpu.memory_space<semaphore_mem>>
    tpu.wait_dma2 semaphore(%732 : memref<!tpu.dma_semaphore, #tpu.memory_space<semaphore_mem>>) src(%729 : memref<1x32xf32, #tpu.memory_space<any>>) dst(%730 : memref<1x32xf32, #tpu.memory_space<vmem>>)
    %c40 = arith.constant 40 : index
    %c0_569 = arith.constant 0 : index
    %733 = vector.load %arg5[%c40, %c0_569] : memref<64x32xf32, #tpu.memory_space<vmem>>, vector<8x32xf32>
    %734 = vector.extract_strided_slice %514 {offsets = [0, 5], sizes = [8, 1], strides = [1, 1]} : vector<8x8xf32> to vector<8x1xf32>
    %735 = vector.broadcast %734 : vector<8x1xf32> to vector<8x32xf32>
    %736 = arith.mulf %733, %735 : vector<8x32xf32>
    %737 = arith.addf %700, %736 : vector<8x32xf32>
    %c6_i32_570 = arith.constant 6 : i32
    %c0_i32_571 = arith.constant 0 : i32
    %c0_i32_572 = arith.constant 0 : i32
    %738 = tpu.memref_slice %arg3[%c0_i32_571, %c0_i32_572] : memref<64x32xf32, #tpu.memory_space<any>> -> memref<1x32xf32, #tpu.memory_space<any>>
    %c48_i32_573 = arith.constant 48 : i32
    %c0_i32_574 = arith.constant 0 : i32
    %739 = tpu.memref_slice %arg5[%c48_i32_573, %c0_i32_574] : memref<64x32xf32, #tpu.memory_space<vmem>> -> memref<1x32xf32, #tpu.memory_space<vmem>>
    %740 = tpu.memref_slice %arg6[%c6_i32_570] : memref<8x!tpu.dma_semaphore, #tpu.memory_space<semaphore_mem>> -> memref<1x!tpu.dma_semaphore, #tpu.memory_space<semaphore_mem>>
    %741 = tpu.memref_squeeze %740 : memref<1x!tpu.dma_semaphore, #tpu.memory_space<semaphore_mem>> -> memref<!tpu.dma_semaphore, #tpu.memory_space<semaphore_mem>>
    tpu.wait_dma2 semaphore(%741 : memref<!tpu.dma_semaphore, #tpu.memory_space<semaphore_mem>>) src(%738 : memref<1x32xf32, #tpu.memory_space<any>>) dst(%739 : memref<1x32xf32, #tpu.memory_space<vmem>>)
    %c6_i32_575 = arith.constant 6 : i32
    %c0_i32_576 = arith.constant 0 : i32
    %c0_i32_577 = arith.constant 0 : i32
    %742 = tpu.memref_slice %arg3[%c0_i32_576, %c0_i32_577] : memref<64x32xf32, #tpu.memory_space<any>> -> memref<1x32xf32, #tpu.memory_space<any>>
    %c49_i32_578 = arith.constant 49 : i32
    %c0_i32_579 = arith.constant 0 : i32
    %743 = tpu.memref_slice %arg5[%c49_i32_578, %c0_i32_579] : memref<64x32xf32, #tpu.memory_space<vmem>> -> memref<1x32xf32, #tpu.memory_space<vmem>>
    %744 = tpu.memref_slice %arg6[%c6_i32_575] : memref<8x!tpu.dma_semaphore, #tpu.memory_space<semaphore_mem>> -> memref<1x!tpu.dma_semaphore, #tpu.memory_space<semaphore_mem>>
    %745 = tpu.memref_squeeze %744 : memref<1x!tpu.dma_semaphore, #tpu.memory_space<semaphore_mem>> -> memref<!tpu.dma_semaphore, #tpu.memory_space<semaphore_mem>>
    tpu.wait_dma2 semaphore(%745 : memref<!tpu.dma_semaphore, #tpu.memory_space<semaphore_mem>>) src(%742 : memref<1x32xf32, #tpu.memory_space<any>>) dst(%743 : memref<1x32xf32, #tpu.memory_space<vmem>>)
    %c6_i32_580 = arith.constant 6 : i32
    %c0_i32_581 = arith.constant 0 : i32
    %c0_i32_582 = arith.constant 0 : i32
    %746 = tpu.memref_slice %arg3[%c0_i32_581, %c0_i32_582] : memref<64x32xf32, #tpu.memory_space<any>> -> memref<1x32xf32, #tpu.memory_space<any>>
    %c50_i32_583 = arith.constant 50 : i32
    %c0_i32_584 = arith.constant 0 : i32
    %747 = tpu.memref_slice %arg5[%c50_i32_583, %c0_i32_584] : memref<64x32xf32, #tpu.memory_space<vmem>> -> memref<1x32xf32, #tpu.memory_space<vmem>>
    %748 = tpu.memref_slice %arg6[%c6_i32_580] : memref<8x!tpu.dma_semaphore, #tpu.memory_space<semaphore_mem>> -> memref<1x!tpu.dma_semaphore, #tpu.memory_space<semaphore_mem>>
    %749 = tpu.memref_squeeze %748 : memref<1x!tpu.dma_semaphore, #tpu.memory_space<semaphore_mem>> -> memref<!tpu.dma_semaphore, #tpu.memory_space<semaphore_mem>>
    tpu.wait_dma2 semaphore(%749 : memref<!tpu.dma_semaphore, #tpu.memory_space<semaphore_mem>>) src(%746 : memref<1x32xf32, #tpu.memory_space<any>>) dst(%747 : memref<1x32xf32, #tpu.memory_space<vmem>>)
    %c6_i32_585 = arith.constant 6 : i32
    %c0_i32_586 = arith.constant 0 : i32
    %c0_i32_587 = arith.constant 0 : i32
    %750 = tpu.memref_slice %arg3[%c0_i32_586, %c0_i32_587] : memref<64x32xf32, #tpu.memory_space<any>> -> memref<1x32xf32, #tpu.memory_space<any>>
    %c51_i32_588 = arith.constant 51 : i32
    %c0_i32_589 = arith.constant 0 : i32
    %751 = tpu.memref_slice %arg5[%c51_i32_588, %c0_i32_589] : memref<64x32xf32, #tpu.memory_space<vmem>> -> memref<1x32xf32, #tpu.memory_space<vmem>>
    %752 = tpu.memref_slice %arg6[%c6_i32_585] : memref<8x!tpu.dma_semaphore, #tpu.memory_space<semaphore_mem>> -> memref<1x!tpu.dma_semaphore, #tpu.memory_space<semaphore_mem>>
    %753 = tpu.memref_squeeze %752 : memref<1x!tpu.dma_semaphore, #tpu.memory_space<semaphore_mem>> -> memref<!tpu.dma_semaphore, #tpu.memory_space<semaphore_mem>>
    tpu.wait_dma2 semaphore(%753 : memref<!tpu.dma_semaphore, #tpu.memory_space<semaphore_mem>>) src(%750 : memref<1x32xf32, #tpu.memory_space<any>>) dst(%751 : memref<1x32xf32, #tpu.memory_space<vmem>>)
    %c6_i32_590 = arith.constant 6 : i32
    %c0_i32_591 = arith.constant 0 : i32
    %c0_i32_592 = arith.constant 0 : i32
    %754 = tpu.memref_slice %arg3[%c0_i32_591, %c0_i32_592] : memref<64x32xf32, #tpu.memory_space<any>> -> memref<1x32xf32, #tpu.memory_space<any>>
    %c52_i32_593 = arith.constant 52 : i32
    %c0_i32_594 = arith.constant 0 : i32
    %755 = tpu.memref_slice %arg5[%c52_i32_593, %c0_i32_594] : memref<64x32xf32, #tpu.memory_space<vmem>> -> memref<1x32xf32, #tpu.memory_space<vmem>>
    %756 = tpu.memref_slice %arg6[%c6_i32_590] : memref<8x!tpu.dma_semaphore, #tpu.memory_space<semaphore_mem>> -> memref<1x!tpu.dma_semaphore, #tpu.memory_space<semaphore_mem>>
    %757 = tpu.memref_squeeze %756 : memref<1x!tpu.dma_semaphore, #tpu.memory_space<semaphore_mem>> -> memref<!tpu.dma_semaphore, #tpu.memory_space<semaphore_mem>>
    tpu.wait_dma2 semaphore(%757 : memref<!tpu.dma_semaphore, #tpu.memory_space<semaphore_mem>>) src(%754 : memref<1x32xf32, #tpu.memory_space<any>>) dst(%755 : memref<1x32xf32, #tpu.memory_space<vmem>>)
    %c6_i32_595 = arith.constant 6 : i32
    %c0_i32_596 = arith.constant 0 : i32
    %c0_i32_597 = arith.constant 0 : i32
    %758 = tpu.memref_slice %arg3[%c0_i32_596, %c0_i32_597] : memref<64x32xf32, #tpu.memory_space<any>> -> memref<1x32xf32, #tpu.memory_space<any>>
    %c53_i32_598 = arith.constant 53 : i32
    %c0_i32_599 = arith.constant 0 : i32
    %759 = tpu.memref_slice %arg5[%c53_i32_598, %c0_i32_599] : memref<64x32xf32, #tpu.memory_space<vmem>> -> memref<1x32xf32, #tpu.memory_space<vmem>>
    %760 = tpu.memref_slice %arg6[%c6_i32_595] : memref<8x!tpu.dma_semaphore, #tpu.memory_space<semaphore_mem>> -> memref<1x!tpu.dma_semaphore, #tpu.memory_space<semaphore_mem>>
    %761 = tpu.memref_squeeze %760 : memref<1x!tpu.dma_semaphore, #tpu.memory_space<semaphore_mem>> -> memref<!tpu.dma_semaphore, #tpu.memory_space<semaphore_mem>>
    tpu.wait_dma2 semaphore(%761 : memref<!tpu.dma_semaphore, #tpu.memory_space<semaphore_mem>>) src(%758 : memref<1x32xf32, #tpu.memory_space<any>>) dst(%759 : memref<1x32xf32, #tpu.memory_space<vmem>>)
    %c6_i32_600 = arith.constant 6 : i32
    %c0_i32_601 = arith.constant 0 : i32
    %c0_i32_602 = arith.constant 0 : i32
    %762 = tpu.memref_slice %arg3[%c0_i32_601, %c0_i32_602] : memref<64x32xf32, #tpu.memory_space<any>> -> memref<1x32xf32, #tpu.memory_space<any>>
    %c54_i32_603 = arith.constant 54 : i32
    %c0_i32_604 = arith.constant 0 : i32
    %763 = tpu.memref_slice %arg5[%c54_i32_603, %c0_i32_604] : memref<64x32xf32, #tpu.memory_space<vmem>> -> memref<1x32xf32, #tpu.memory_space<vmem>>
    %764 = tpu.memref_slice %arg6[%c6_i32_600] : memref<8x!tpu.dma_semaphore, #tpu.memory_space<semaphore_mem>> -> memref<1x!tpu.dma_semaphore, #tpu.memory_space<semaphore_mem>>
    %765 = tpu.memref_squeeze %764 : memref<1x!tpu.dma_semaphore, #tpu.memory_space<semaphore_mem>> -> memref<!tpu.dma_semaphore, #tpu.memory_space<semaphore_mem>>
    tpu.wait_dma2 semaphore(%765 : memref<!tpu.dma_semaphore, #tpu.memory_space<semaphore_mem>>) src(%762 : memref<1x32xf32, #tpu.memory_space<any>>) dst(%763 : memref<1x32xf32, #tpu.memory_space<vmem>>)
    %c6_i32_605 = arith.constant 6 : i32
    %c0_i32_606 = arith.constant 0 : i32
    %c0_i32_607 = arith.constant 0 : i32
    %766 = tpu.memref_slice %arg3[%c0_i32_606, %c0_i32_607] : memref<64x32xf32, #tpu.memory_space<any>> -> memref<1x32xf32, #tpu.memory_space<any>>
    %c55_i32_608 = arith.constant 55 : i32
    %c0_i32_609 = arith.constant 0 : i32
    %767 = tpu.memref_slice %arg5[%c55_i32_608, %c0_i32_609] : memref<64x32xf32, #tpu.memory_space<vmem>> -> memref<1x32xf32, #tpu.memory_space<vmem>>
    %768 = tpu.memref_slice %arg6[%c6_i32_605] : memref<8x!tpu.dma_semaphore, #tpu.memory_space<semaphore_mem>> -> memref<1x!tpu.dma_semaphore, #tpu.memory_space<semaphore_mem>>
    %769 = tpu.memref_squeeze %768 : memref<1x!tpu.dma_semaphore, #tpu.memory_space<semaphore_mem>> -> memref<!tpu.dma_semaphore, #tpu.memory_space<semaphore_mem>>
    tpu.wait_dma2 semaphore(%769 : memref<!tpu.dma_semaphore, #tpu.memory_space<semaphore_mem>>) src(%766 : memref<1x32xf32, #tpu.memory_space<any>>) dst(%767 : memref<1x32xf32, #tpu.memory_space<vmem>>)
    %c48 = arith.constant 48 : index
    %c0_610 = arith.constant 0 : index
    %770 = vector.load %arg5[%c48, %c0_610] : memref<64x32xf32, #tpu.memory_space<vmem>>, vector<8x32xf32>
    %771 = vector.extract_strided_slice %514 {offsets = [0, 6], sizes = [8, 1], strides = [1, 1]} : vector<8x8xf32> to vector<8x1xf32>
    %772 = vector.broadcast %771 : vector<8x1xf32> to vector<8x32xf32>
    %773 = arith.mulf %770, %772 : vector<8x32xf32>
    %774 = arith.addf %737, %773 : vector<8x32xf32>
    %c7_i32_611 = arith.constant 7 : i32
    %c0_i32_612 = arith.constant 0 : i32
    %c0_i32_613 = arith.constant 0 : i32
    %775 = tpu.memref_slice %arg3[%c0_i32_612, %c0_i32_613] : memref<64x32xf32, #tpu.memory_space<any>> -> memref<1x32xf32, #tpu.memory_space<any>>
    %c56_i32_614 = arith.constant 56 : i32
    %c0_i32_615 = arith.constant 0 : i32
    %776 = tpu.memref_slice %arg5[%c56_i32_614, %c0_i32_615] : memref<64x32xf32, #tpu.memory_space<vmem>> -> memref<1x32xf32, #tpu.memory_space<vmem>>
    %777 = tpu.memref_slice %arg6[%c7_i32_611] : memref<8x!tpu.dma_semaphore, #tpu.memory_space<semaphore_mem>> -> memref<1x!tpu.dma_semaphore, #tpu.memory_space<semaphore_mem>>
    %778 = tpu.memref_squeeze %777 : memref<1x!tpu.dma_semaphore, #tpu.memory_space<semaphore_mem>> -> memref<!tpu.dma_semaphore, #tpu.memory_space<semaphore_mem>>
    tpu.wait_dma2 semaphore(%778 : memref<!tpu.dma_semaphore, #tpu.memory_space<semaphore_mem>>) src(%775 : memref<1x32xf32, #tpu.memory_space<any>>) dst(%776 : memref<1x32xf32, #tpu.memory_space<vmem>>)
    %c7_i32_616 = arith.constant 7 : i32
    %c0_i32_617 = arith.constant 0 : i32
    %c0_i32_618 = arith.constant 0 : i32
    %779 = tpu.memref_slice %arg3[%c0_i32_617, %c0_i32_618] : memref<64x32xf32, #tpu.memory_space<any>> -> memref<1x32xf32, #tpu.memory_space<any>>
    %c57_i32_619 = arith.constant 57 : i32
    %c0_i32_620 = arith.constant 0 : i32
    %780 = tpu.memref_slice %arg5[%c57_i32_619, %c0_i32_620] : memref<64x32xf32, #tpu.memory_space<vmem>> -> memref<1x32xf32, #tpu.memory_space<vmem>>
    %781 = tpu.memref_slice %arg6[%c7_i32_616] : memref<8x!tpu.dma_semaphore, #tpu.memory_space<semaphore_mem>> -> memref<1x!tpu.dma_semaphore, #tpu.memory_space<semaphore_mem>>
    %782 = tpu.memref_squeeze %781 : memref<1x!tpu.dma_semaphore, #tpu.memory_space<semaphore_mem>> -> memref<!tpu.dma_semaphore, #tpu.memory_space<semaphore_mem>>
    tpu.wait_dma2 semaphore(%782 : memref<!tpu.dma_semaphore, #tpu.memory_space<semaphore_mem>>) src(%779 : memref<1x32xf32, #tpu.memory_space<any>>) dst(%780 : memref<1x32xf32, #tpu.memory_space<vmem>>)
    %c7_i32_621 = arith.constant 7 : i32
    %c0_i32_622 = arith.constant 0 : i32
    %c0_i32_623 = arith.constant 0 : i32
    %783 = tpu.memref_slice %arg3[%c0_i32_622, %c0_i32_623] : memref<64x32xf32, #tpu.memory_space<any>> -> memref<1x32xf32, #tpu.memory_space<any>>
    %c58_i32_624 = arith.constant 58 : i32
    %c0_i32_625 = arith.constant 0 : i32
    %784 = tpu.memref_slice %arg5[%c58_i32_624, %c0_i32_625] : memref<64x32xf32, #tpu.memory_space<vmem>> -> memref<1x32xf32, #tpu.memory_space<vmem>>
    %785 = tpu.memref_slice %arg6[%c7_i32_621] : memref<8x!tpu.dma_semaphore, #tpu.memory_space<semaphore_mem>> -> memref<1x!tpu.dma_semaphore, #tpu.memory_space<semaphore_mem>>
    %786 = tpu.memref_squeeze %785 : memref<1x!tpu.dma_semaphore, #tpu.memory_space<semaphore_mem>> -> memref<!tpu.dma_semaphore, #tpu.memory_space<semaphore_mem>>
    tpu.wait_dma2 semaphore(%786 : memref<!tpu.dma_semaphore, #tpu.memory_space<semaphore_mem>>) src(%783 : memref<1x32xf32, #tpu.memory_space<any>>) dst(%784 : memref<1x32xf32, #tpu.memory_space<vmem>>)
    %c7_i32_626 = arith.constant 7 : i32
    %c0_i32_627 = arith.constant 0 : i32
    %c0_i32_628 = arith.constant 0 : i32
    %787 = tpu.memref_slice %arg3[%c0_i32_627, %c0_i32_628] : memref<64x32xf32, #tpu.memory_space<any>> -> memref<1x32xf32, #tpu.memory_space<any>>
    %c59_i32_629 = arith.constant 59 : i32
    %c0_i32_630 = arith.constant 0 : i32
    %788 = tpu.memref_slice %arg5[%c59_i32_629, %c0_i32_630] : memref<64x32xf32, #tpu.memory_space<vmem>> -> memref<1x32xf32, #tpu.memory_space<vmem>>
    %789 = tpu.memref_slice %arg6[%c7_i32_626] : memref<8x!tpu.dma_semaphore, #tpu.memory_space<semaphore_mem>> -> memref<1x!tpu.dma_semaphore, #tpu.memory_space<semaphore_mem>>
    %790 = tpu.memref_squeeze %789 : memref<1x!tpu.dma_semaphore, #tpu.memory_space<semaphore_mem>> -> memref<!tpu.dma_semaphore, #tpu.memory_space<semaphore_mem>>
    tpu.wait_dma2 semaphore(%790 : memref<!tpu.dma_semaphore, #tpu.memory_space<semaphore_mem>>) src(%787 : memref<1x32xf32, #tpu.memory_space<any>>) dst(%788 : memref<1x32xf32, #tpu.memory_space<vmem>>)
    %c7_i32_631 = arith.constant 7 : i32
    %c0_i32_632 = arith.constant 0 : i32
    %c0_i32_633 = arith.constant 0 : i32
    %791 = tpu.memref_slice %arg3[%c0_i32_632, %c0_i32_633] : memref<64x32xf32, #tpu.memory_space<any>> -> memref<1x32xf32, #tpu.memory_space<any>>
    %c60_i32_634 = arith.constant 60 : i32
    %c0_i32_635 = arith.constant 0 : i32
    %792 = tpu.memref_slice %arg5[%c60_i32_634, %c0_i32_635] : memref<64x32xf32, #tpu.memory_space<vmem>> -> memref<1x32xf32, #tpu.memory_space<vmem>>
    %793 = tpu.memref_slice %arg6[%c7_i32_631] : memref<8x!tpu.dma_semaphore, #tpu.memory_space<semaphore_mem>> -> memref<1x!tpu.dma_semaphore, #tpu.memory_space<semaphore_mem>>
    %794 = tpu.memref_squeeze %793 : memref<1x!tpu.dma_semaphore, #tpu.memory_space<semaphore_mem>> -> memref<!tpu.dma_semaphore, #tpu.memory_space<semaphore_mem>>
    tpu.wait_dma2 semaphore(%794 : memref<!tpu.dma_semaphore, #tpu.memory_space<semaphore_mem>>) src(%791 : memref<1x32xf32, #tpu.memory_space<any>>) dst(%792 : memref<1x32xf32, #tpu.memory_space<vmem>>)
    %c7_i32_636 = arith.constant 7 : i32
    %c0_i32_637 = arith.constant 0 : i32
    %c0_i32_638 = arith.constant 0 : i32
    %795 = tpu.memref_slice %arg3[%c0_i32_637, %c0_i32_638] : memref<64x32xf32, #tpu.memory_space<any>> -> memref<1x32xf32, #tpu.memory_space<any>>
    %c61_i32_639 = arith.constant 61 : i32
    %c0_i32_640 = arith.constant 0 : i32
    %796 = tpu.memref_slice %arg5[%c61_i32_639, %c0_i32_640] : memref<64x32xf32, #tpu.memory_space<vmem>> -> memref<1x32xf32, #tpu.memory_space<vmem>>
    %797 = tpu.memref_slice %arg6[%c7_i32_636] : memref<8x!tpu.dma_semaphore, #tpu.memory_space<semaphore_mem>> -> memref<1x!tpu.dma_semaphore, #tpu.memory_space<semaphore_mem>>
    %798 = tpu.memref_squeeze %797 : memref<1x!tpu.dma_semaphore, #tpu.memory_space<semaphore_mem>> -> memref<!tpu.dma_semaphore, #tpu.memory_space<semaphore_mem>>
    tpu.wait_dma2 semaphore(%798 : memref<!tpu.dma_semaphore, #tpu.memory_space<semaphore_mem>>) src(%795 : memref<1x32xf32, #tpu.memory_space<any>>) dst(%796 : memref<1x32xf32, #tpu.memory_space<vmem>>)
    %c7_i32_641 = arith.constant 7 : i32
    %c0_i32_642 = arith.constant 0 : i32
    %c0_i32_643 = arith.constant 0 : i32
    %799 = tpu.memref_slice %arg3[%c0_i32_642, %c0_i32_643] : memref<64x32xf32, #tpu.memory_space<any>> -> memref<1x32xf32, #tpu.memory_space<any>>
    %c62_i32_644 = arith.constant 62 : i32
    %c0_i32_645 = arith.constant 0 : i32
    %800 = tpu.memref_slice %arg5[%c62_i32_644, %c0_i32_645] : memref<64x32xf32, #tpu.memory_space<vmem>> -> memref<1x32xf32, #tpu.memory_space<vmem>>
    %801 = tpu.memref_slice %arg6[%c7_i32_641] : memref<8x!tpu.dma_semaphore, #tpu.memory_space<semaphore_mem>> -> memref<1x!tpu.dma_semaphore, #tpu.memory_space<semaphore_mem>>
    %802 = tpu.memref_squeeze %801 : memref<1x!tpu.dma_semaphore, #tpu.memory_space<semaphore_mem>> -> memref<!tpu.dma_semaphore, #tpu.memory_space<semaphore_mem>>
    tpu.wait_dma2 semaphore(%802 : memref<!tpu.dma_semaphore, #tpu.memory_space<semaphore_mem>>) src(%799 : memref<1x32xf32, #tpu.memory_space<any>>) dst(%800 : memref<1x32xf32, #tpu.memory_space<vmem>>)
    %c7_i32_646 = arith.constant 7 : i32
    %c0_i32_647 = arith.constant 0 : i32
    %c0_i32_648 = arith.constant 0 : i32
    %803 = tpu.memref_slice %arg3[%c0_i32_647, %c0_i32_648] : memref<64x32xf32, #tpu.memory_space<any>> -> memref<1x32xf32, #tpu.memory_space<any>>
    %c63_i32_649 = arith.constant 63 : i32
    %c0_i32_650 = arith.constant 0 : i32
    %804 = tpu.memref_slice %arg5[%c63_i32_649, %c0_i32_650] : memref<64x32xf32, #tpu.memory_space<vmem>> -> memref<1x32xf32, #tpu.memory_space<vmem>>
    %805 = tpu.memref_slice %arg6[%c7_i32_646] : memref<8x!tpu.dma_semaphore, #tpu.memory_space<semaphore_mem>> -> memref<1x!tpu.dma_semaphore, #tpu.memory_space<semaphore_mem>>
    %806 = tpu.memref_squeeze %805 : memref<1x!tpu.dma_semaphore, #tpu.memory_space<semaphore_mem>> -> memref<!tpu.dma_semaphore, #tpu.memory_space<semaphore_mem>>
    tpu.wait_dma2 semaphore(%806 : memref<!tpu.dma_semaphore, #tpu.memory_space<semaphore_mem>>) src(%803 : memref<1x32xf32, #tpu.memory_space<any>>) dst(%804 : memref<1x32xf32, #tpu.memory_space<vmem>>)
    %c56 = arith.constant 56 : index
    %c0_651 = arith.constant 0 : index
    %807 = vector.load %arg5[%c56, %c0_651] : memref<64x32xf32, #tpu.memory_space<vmem>>, vector<8x32xf32>
    %808 = vector.extract_strided_slice %514 {offsets = [0, 7], sizes = [8, 1], strides = [1, 1]} : vector<8x8xf32> to vector<8x1xf32>
    %809 = vector.broadcast %808 : vector<8x1xf32> to vector<8x32xf32>
    %810 = arith.mulf %807, %809 : vector<8x32xf32>
    %811 = arith.addf %774, %810 : vector<8x32xf32>
    %c0_652 = arith.constant 0 : index
    %c0_653 = arith.constant 0 : index
    %812 = vector.load %arg4[%c0_652, %c0_653] : memref<8x32xf32, #tpu.memory_space<vmem>>, vector<8x32xf32>
    tpu.vector_store %arg4[%c0_652, %c0_653], %811 {strides = array<i32>} : memref<8x32xf32, #tpu.memory_space<vmem>>, vector<8x32xf32>,
    return
  }
  func.func @transform_0(%arg0: i32, %arg1: memref<64xi32, #tpu.memory_space<smem>>) -> (i32, i32) {
    %c0_i32 = arith.constant 0 : i32
    %c0_i32_0 = arith.constant 0 : i32
    return %arg0, %c0_i32 : i32, i32
  }
  func.func @transform_2(%arg0: i32, %arg1: memref<64xi32, #tpu.memory_space<smem>>) -> (i32, i32) {
    %c0_i32 = arith.constant 0 : i32
    %c0_i32_0 = arith.constant 0 : i32
    return %arg0, %c0_i32 : i32, i32
  }
}

</mosaic_0001>

<llo_original>
// kernel: tpu_custom_call.1
$region0: #{tpu_custom_call.1}
  #allocation0 [shape = 'u32[]', space=smem, size = 0x4, offset = 0x4, fixed_abs, tag = 'smem constant byte address 0x4 - core index']
  #allocation1 [shape = 'u32[144,128]{1,0:T(1,128)}', space=vmem, size = 0x12000, scoped, tag = 'internal scratch']
  #allocation2 [shape = 'f32[64,32]{1,0:T(8,128)}', space=vmem, size = 0x8000, scoped, tag = 'scratch operand']
  #allocation3 [shape = 's32[8]{0}', space=sflag, size = 0x20, scoped, tag = 'scratch operand']
  #allocation4 [shape = 's32[1]{0}', space=sflag, size = 0x4, scoped, tag = 'scoped memory for tpu_custom_call.1']
  #allocation5 [shape = 'u8[512]{0}', space=smem, size = 0x200, scoped, tag = 'prefetched SMEM operand 0']
  #allocation8 [shape = 's32[]', space=sflag, size = 0x4, offset = 0, fixed_abs, tag = 'sflag constant byte address 0x0 - dummy sync flag']
  #allocation9 [shape = 's32[]', space=sflag, size = 0x4, offset = 0, fixed_abs, tag = 'sflag constant byte address 0x0 - dummy sync flag']
  #allocation10 [shape = 's32[]', space=sflag, size = 0x4, offset = 0, fixed_abs, tag = 'sflag constant byte address 0x0 - dummy sync flag']
  #allocation11 [shape = 's32[]', space=sflag, size = 0x4, offset = 0, fixed_abs, tag = 'sflag constant byte address 0x0 - dummy sync flag']
  #allocation12 [shape = 's32[]', space=sflag, size = 0x4, offset = 0, fixed_abs, tag = 'sflag constant byte address 0x0 - dummy sync flag']
  #allocation13 [shape = 's32[]', space=sflag, size = 0x4, offset = 0, fixed_abs, tag = 'sflag constant byte address 0x0 - dummy sync flag']
  #allocation14 [shape = 's32[]', space=sflag, size = 0x4, offset = 0, fixed_abs, tag = 'sflag constant byte address 0x0 - dummy sync flag']
  #allocation15 [shape = 's32[]', space=sflag, size = 0x4, offset = 0, fixed_abs, tag = 'sflag constant byte address 0x0 - dummy sync flag']
  #allocation16 [shape = 's32[]', space=sflag, size = 0x4, offset = 0, fixed_abs, tag = 'sflag constant byte address 0x0 - dummy sync flag']
  #allocation17 [shape = 's32[]', space=sflag, size = 0x4, offset = 0, fixed_abs, tag = 'sflag constant byte address 0x0 - dummy sync flag']
  #allocation18 [shape = 's32[]', space=sflag, size = 0x4, offset = 0, fixed_abs, tag = 'sflag constant byte address 0x0 - dummy sync flag']
  #allocation19 [shape = 's32[]', space=sflag, size = 0x4, offset = 0, fixed_abs, tag = 'sflag constant byte address 0x0 - dummy sync flag']
  #allocation20 [shape = 's32[]', space=sflag, size = 0x4, offset = 0, fixed_abs, tag = 'sflag constant byte address 0x0 - dummy sync flag']
  #allocation21 [shape = 's32[]', space=sflag, size = 0x4, offset = 0, fixed_abs, tag = 'sflag constant byte address 0x0 - dummy sync flag']
  #allocation22 [shape = 's32[]', space=sflag, size = 0x4, offset = 0, fixed_abs, tag = 'sflag constant byte address 0x0 - dummy sync flag']
  #allocation23 [shape = 's32[]', space=sflag, size = 0x4, offset = 0, fixed_abs, tag = 'sflag constant byte address 0x0 - dummy sync flag']
  #allocation24 [shape = 's32[]', space=sflag, size = 0x4, offset = 0, fixed_abs, tag = 'sflag constant byte address 0x0 - dummy sync flag']
  #allocation25 [shape = 's32[]', space=sflag, size = 0x4, offset = 0, fixed_abs, tag = 'sflag constant byte address 0x0 - dummy sync flag']
  #allocation26 [shape = 's32[]', space=sflag, size = 0x4, offset = 0, fixed_abs, tag = 'sflag constant byte address 0x0 - dummy sync flag']
  #allocation27 [shape = 's32[]', space=sflag, size = 0x4, offset = 0, fixed_abs, tag = 'sflag constant byte address 0x0 - dummy sync flag']
  #allocation28 [shape = 's32[]', space=sflag, size = 0x4, offset = 0, fixed_abs, tag = 'sflag constant byte address 0x0 - dummy sync flag']
  #allocation29 [shape = 's32[]', space=sflag, size = 0x4, offset = 0, fixed_abs, tag = 'sflag constant byte address 0x0 - dummy sync flag']
  #allocation30 [shape = 's32[]', space=sflag, size = 0x4, offset = 0, fixed_abs, tag = 'sflag constant byte address 0x0 - dummy sync flag']
  #allocation31 [shape = 's32[]', space=sflag, size = 0x4, offset = 0, fixed_abs, tag = 'sflag constant byte address 0x0 - dummy sync flag']
  #allocation32 [shape = 's32[]', space=sflag, size = 0x4, offset = 0, fixed_abs, tag = 'sflag constant byte address 0x0 - dummy sync flag']
  #allocation33 [shape = 's32[]', space=sflag, size = 0x4, offset = 0, fixed_abs, tag = 'sflag constant byte address 0x0 - dummy sync flag']
  #allocation34 [shape = 's32[]', space=sflag, size = 0x4, offset = 0, fixed_abs, tag = 'sflag constant byte address 0x0 - dummy sync flag']
  #allocation35 [shape = 's32[]', space=sflag, size = 0x4, offset = 0, fixed_abs, tag = 'sflag constant byte address 0x0 - dummy sync flag']
  #allocation36 [shape = 's32[]', space=sflag, size = 0x4, offset = 0, fixed_abs, tag = 'sflag constant byte address 0x0 - dummy sync flag']
  #allocation37 [shape = 's32[]', space=sflag, size = 0x4, offset = 0, fixed_abs, tag = 'sflag constant byte address 0x0 - dummy sync flag']
  #allocation38 [shape = 's32[]', space=sflag, size = 0x4, offset = 0, fixed_abs, tag = 'sflag constant byte address 0x0 - dummy sync flag']
  #allocation39 [shape = 's32[]', space=sflag, size = 0x4, offset = 0, fixed_abs, tag = 'sflag constant byte address 0x0 - dummy sync flag']
  #allocation40 [shape = 's32[]', space=sflag, size = 0x4, offset = 0, fixed_abs, tag = 'sflag constant byte address 0x0 - dummy sync flag']
  #allocation41 [shape = 's32[]', space=sflag, size = 0x4, offset = 0, fixed_abs, tag = 'sflag constant byte address 0x0 - dummy sync flag']
  #allocation42 [shape = 's32[]', space=sflag, size = 0x4, offset = 0, fixed_abs, tag = 'sflag constant byte address 0x0 - dummy sync flag']
  #allocation43 [shape = 's32[]', space=sflag, size = 0x4, offset = 0, fixed_abs, tag = 'sflag constant byte address 0x0 - dummy sync flag']
  #allocation44 [shape = 's32[]', space=sflag, size = 0x4, offset = 0, fixed_abs, tag = 'sflag constant byte address 0x0 - dummy sync flag']
  #allocation45 [shape = 's32[]', space=sflag, size = 0x4, offset = 0, fixed_abs, tag = 'sflag constant byte address 0x0 - dummy sync flag']
  #allocation46 [shape = 's32[]', space=sflag, size = 0x4, offset = 0, fixed_abs, tag = 'sflag constant byte address 0x0 - dummy sync flag']
  #allocation47 [shape = 's32[]', space=sflag, size = 0x4, offset = 0, fixed_abs, tag = 'sflag constant byte address 0x0 - dummy sync flag']
  #allocation48 [shape = 's32[]', space=sflag, size = 0x4, offset = 0, fixed_abs, tag = 'sflag constant byte address 0x0 - dummy sync flag']
  #allocation49 [shape = 's32[]', space=sflag, size = 0x4, offset = 0, fixed_abs, tag = 'sflag constant byte address 0x0 - dummy sync flag']
  #allocation50 [shape = 's32[]', space=sflag, size = 0x4, offset = 0, fixed_abs, tag = 'sflag constant byte address 0x0 - dummy sync flag']
  #allocation51 [shape = 's32[]', space=sflag, size = 0x4, offset = 0, fixed_abs, tag = 'sflag constant byte address 0x0 - dummy sync flag']
  #allocation52 [shape = 's32[]', space=sflag, size = 0x4, offset = 0, fixed_abs, tag = 'sflag constant byte address 0x0 - dummy sync flag']
  #allocation53 [shape = 's32[]', space=sflag, size = 0x4, offset = 0, fixed_abs, tag = 'sflag constant byte address 0x0 - dummy sync flag']
  #allocation54 [shape = 's32[]', space=sflag, size = 0x4, offset = 0, fixed_abs, tag = 'sflag constant byte address 0x0 - dummy sync flag']
  #allocation55 [shape = 's32[]', space=sflag, size = 0x4, offset = 0, fixed_abs, tag = 'sflag constant byte address 0x0 - dummy sync flag']
  #allocation56 [shape = 's32[]', space=sflag, size = 0x4, offset = 0, fixed_abs, tag = 'sflag constant byte address 0x0 - dummy sync flag']
  #allocation57 [shape = 's32[]', space=sflag, size = 0x4, offset = 0, fixed_abs, tag = 'sflag constant byte address 0x0 - dummy sync flag']
  #allocation58 [shape = 's32[]', space=sflag, size = 0x4, offset = 0, fixed_abs, tag = 'sflag constant byte address 0x0 - dummy sync flag']
  #allocation59 [shape = 's32[]', space=sflag, size = 0x4, offset = 0, fixed_abs, tag = 'sflag constant byte address 0x0 - dummy sync flag']
  #allocation60 [shape = 's32[]', space=sflag, size = 0x4, offset = 0, fixed_abs, tag = 'sflag constant byte address 0x0 - dummy sync flag']
  #allocation61 [shape = 's32[]', space=sflag, size = 0x4, offset = 0, fixed_abs, tag = 'sflag constant byte address 0x0 - dummy sync flag']
  #allocation62 [shape = 's32[]', space=sflag, size = 0x4, offset = 0, fixed_abs, tag = 'sflag constant byte address 0x0 - dummy sync flag']
  #allocation63 [shape = 's32[]', space=sflag, size = 0x4, offset = 0, fixed_abs, tag = 'sflag constant byte address 0x0 - dummy sync flag']
  #allocation64 [shape = 's32[]', space=sflag, size = 0x4, offset = 0, fixed_abs, tag = 'sflag constant byte address 0x0 - dummy sync flag']
  #allocation65 [shape = 's32[]', space=sflag, size = 0x4, offset = 0, fixed_abs, tag = 'sflag constant byte address 0x0 - dummy sync flag']
  #allocation66 [shape = 's32[]', space=sflag, size = 0x4, offset = 0, fixed_abs, tag = 'sflag constant byte address 0x0 - dummy sync flag']
  #allocation67 [shape = 's32[]', space=sflag, size = 0x4, offset = 0, fixed_abs, tag = 'sflag constant byte address 0x0 - dummy sync flag']
  #allocation68 [shape = 's32[]', space=sflag, size = 0x4, offset = 0, fixed_abs, tag = 'sflag constant byte address 0x0 - dummy sync flag']
  #allocation69 [shape = 's32[]', space=sflag, size = 0x4, offset = 0, fixed_abs, tag = 'sflag constant byte address 0x0 - dummy sync flag']
  #allocation70 [shape = 's32[]', space=sflag, size = 0x4, offset = 0, fixed_abs, tag = 'sflag constant byte address 0x0 - dummy sync flag']
  #allocation71 [shape = 's32[]', space=sflag, size = 0x4, offset = 0, fixed_abs, tag = 'sflag constant byte address 0x0 - dummy sync flag']
  %s0 = inlined_call_operand.vmem [shape: s32[64], index: 0, kind: input, shape index: {}]
  %s1 = inlined_call_operand.vmem [shape: f32[8,8], index: 1, kind: input, shape index: {}]
  %s2 = inlined_call_operand.vmem [shape: f32[64,32], index: 2, kind: input, shape index: {}]
  %s3 = inlined_call_operand.hbm [shape: f32[8,32], index: 3, kind: output, shape index: {}]
  %s4 = sld [smem:[#allocation0]]
  $region1934: #{tpu_custom_call.1} parent=0
    _
  %s6 = ssub.s32 1, %s4
  %s7 = scalar_select 0, %s6, %s4
  %s8 = sshll.u32 %s0, 4
  %s9 = int_to_ptr.vmem [resolvable:$true] %s8
  %11 = dma.vmem_to_smem %s9, 16, [#allocation5], [#allocation4]
  %12 = dma.done [#allocation4], 16
  %13 = sfence
  $region1: #{tpu_custom_call.1} parent=0
    #allocation6 [shape = 'u8[4096]{0}', space=vmem, size = 0x1000, scoped, tag = 'output window, operand 0, single buffered']
    #allocation7 [shape = 's32[1]{0}', space=sflag, size = 0x4, scoped, tag = 'scoped memory for tpu_custom_call.1']
    %14 = vsyncpa [#allocation7], 0
    // Predicated region
    $region2: #{tpu_custom_call.1} parent=1 // pred_check
      _
    $region3: #{tpu_custom_call.1} parent=1 // pred_check_branch
      %16 = sbr.rel (0) target = $region5
    $region4: #{tpu_custom_call.1} parent=1 // pred_region
      _
    $region5: #{tpu_custom_call.1} parent=1 // pred_fallthru
      _
    %s17 = smul.u32 0, 64
    %s18 = sld [smem:[#allocation5 + %s17]]
    %s19 = scalar_lea.vmem %s2, %s18
    %p21 = scmp.lt.u32.totalorder 1, 8
    %p22 = pneg %p21
    // Predicated region
    $region6: #{tpu_custom_call.1} parent=1 // pred_check
      _
    $region7: #{tpu_custom_call.1} parent=1 // pred_check_branch
      %24 = sbr.rel (%p21) target = $region9
    $region8: #{tpu_custom_call.1} parent=1 // pred_region
      %s40 = sand.u32 1, 7
      %p41 = scmp.eq.s32.totalorder %s40, 0
      %p42 = pneg %p41
      // Predicated region
      $region21: #{tpu_custom_call.1} parent=8 // pred_check
        _
      $region22: #{tpu_custom_call.1} parent=8 // pred_check_branch
        %44 = sbr.rel (%p41) target = $region24
      $region23: #{tpu_custom_call.1} parent=8 // pred_region
        %s45 = sand.u32 1, 7
        %s46 = ssub.s32 1, %s45
        %s47 = scalar_lea.vmem %s19, %s46
        %s48 = ssub.s32 1, %s45
        %s49 = scalar_lea.vmem [#allocation2], %s48
        %s50 = sshll.u32 1, %s45
        %s51 = ssub.s32 %s50, 1
        loop: start=0, step=1, limit=1
        $region25: #{tpu_custom_call.1} parent=23 // loop_pre_header
          _
        $region26: #{tpu_custom_call.1} parent=23 // loop_header
          %s53 = sphi 0, %s57
          %p54 = scmp.ge.s32.totalorder %s53, 1
          %s58 = sphi %s47, %s47
          %s59 = sphi %s49, %s49
        $region27: #{tpu_custom_call.1} parent=23 // loop_header_branch
          %56 = sbr.rel (%p54) target = $region31
        $region28: #{tpu_custom_call.1} parent=23 // loop_body
          %v60 = vld [vmem:[%s58] sm:%s51]
          %61 = vst [vmem:[%s59] sm:%s51] %v60
        $region29: #{tpu_custom_call.1} parent=23 // loop_footer
          %s57 = sadd.s32 1, %s53
        $region30: #{tpu_custom_call.1} parent=23 // loop_footer_branch
          %52 = sbr.rel target = $region26
        $region31: #{tpu_custom_call.1} parent=23 // loop_exit
          _
      $region24: #{tpu_custom_call.1} parent=8 // pred_fallthru
        _
    $region9: #{tpu_custom_call.1} parent=1 // pred_fallthru
      _
    // Predicated region
    $region10: #{tpu_custom_call.1} parent=1 // pred_check
      %p25 = pneg %p21
    $region11: #{tpu_custom_call.1} parent=1 // pred_check_branch
      %27 = sbr.rel (%p25) target = $region13
    $region12: #{tpu_custom_call.1} parent=1 // pred_region
      %s28 = sshll.u32 1, 1
      %s29 = ssub.s32 %s28, 1
      loop: start=0, step=1, limit=1
      $region14: #{tpu_custom_call.1} parent=12 // loop_pre_header
        _
      $region15: #{tpu_custom_call.1} parent=12 // loop_header
        %s31 = sphi 0, %s35
        %p32 = scmp.ge.s32.totalorder %s31, 1
        %s36 = sphi %s19, %s19
        %s37 = sphi [#allocation2], [#allocation2]
      $region16: #{tpu_custom_call.1} parent=12 // loop_header_branch
        %34 = sbr.rel (%p32) target = $region20
      $region17: #{tpu_custom_call.1} parent=12 // loop_body
        %v38 = vld [vmem:[%s36] sm:%s29]
        %39 = vst [vmem:[%s37] sm:%s29] %v38
      $region18: #{tpu_custom_call.1} parent=12 // loop_footer
        %s35 = sadd.s32 1, %s31
      $region19: #{tpu_custom_call.1} parent=12 // loop_footer_branch
        %30 = sbr.rel target = $region15
      $region20: #{tpu_custom_call.1} parent=12 // loop_exit
        _
    $region13: #{tpu_custom_call.1} parent=1 // pred_fallthru
      _
    // Predicated region
    $region32: #{tpu_custom_call.1} parent=1 // pred_check
      _
    $region33: #{tpu_custom_call.1} parent=1 // pred_check_branch
      %64 = sbr.rel (0) target = $region35
    $region34: #{tpu_custom_call.1} parent=1 // pred_region
      %65 = vsyncadd [#allocation3], 16
    $region35: #{tpu_custom_call.1} parent=1 // pred_fallthru
      _
    %s66 = sadd.s32 %s17, 8
    %s67 = sld [smem:[#allocation5 + %s66]]
    %s68 = scalar_lea.vmem %s2, %s67
    %s69 = scalar_lea.vmem [#allocation2], 1
    %p71 = scmp.lt.u32.totalorder 1, 8
    %p72 = pneg %p71
    // Predicated region
    $region36: #{tpu_custom_call.1} parent=1 // pred_check
      _
    $region37: #{tpu_custom_call.1} parent=1 // pred_check_branch
      %74 = sbr.rel (%p71) target = $region39
    $region38: #{tpu_custom_call.1} parent=1 // pred_region
      %s90 = sand.u32 1, 7
      %p91 = scmp.eq.s32.totalorder %s90, 0
      %p92 = pneg %p91
      // Predicated region
      $region51: #{tpu_custom_call.1} parent=38 // pred_check
        _
      $region52: #{tpu_custom_call.1} parent=38 // pred_check_branch
        %94 = sbr.rel (%p91) target = $region54
      $region53: #{tpu_custom_call.1} parent=38 // pred_region
        %s95 = sand.u32 1, 7
        %s96 = ssub.s32 1, %s95
        %s97 = scalar_lea.vmem %s68, %s96
        %s98 = ssub.s32 1, %s95
        %s99 = scalar_lea.vmem %s69, %s98 [#allocation2]
        %s100 = sshll.u32 1, %s95
        %s101 = ssub.s32 %s100, 1
        loop: start=0, step=1, limit=1
        $region55: #{tpu_custom_call.1} parent=53 // loop_pre_header
          _
        $region56: #{tpu_custom_call.1} parent=53 // loop_header
          %s103 = sphi 0, %s107
          %p104 = scmp.ge.s32.totalorder %s103, 1
          %s108 = sphi %s97, %s97
          %s109 = sphi %s99, %s99
        $region57: #{tpu_custom_call.1} parent=53 // loop_header_branch
          %106 = sbr.rel (%p104) target = $region61
        $region58: #{tpu_custom_call.1} parent=53 // loop_body
          %v110 = vld [vmem:[%s108] sm:%s101]
          %111 = vst [vmem:[%s109] sm:%s101] %v110
        $region59: #{tpu_custom_call.1} parent=53 // loop_footer
          %s107 = sadd.s32 1, %s103
        $region60: #{tpu_custom_call.1} parent=53 // loop_footer_branch
          %102 = sbr.rel target = $region56
        $region61: #{tpu_custom_call.1} parent=53 // loop_exit
          _
      $region54: #{tpu_custom_call.1} parent=38 // pred_fallthru
        _
    $region39: #{tpu_custom_call.1} parent=1 // pred_fallthru
      _
    // Predicated region
    $region40: #{tpu_custom_call.1} parent=1 // pred_check
      %p75 = pneg %p71
    $region41: #{tpu_custom_call.1} parent=1 // pred_check_branch
      %77 = sbr.rel (%p75) target = $region43
    $region42: #{tpu_custom_call.1} parent=1 // pred_region
      %s78 = sshll.u32 1, 1
      %s79 = ssub.s32 %s78, 1
      loop: start=0, step=1, limit=1
      $region44: #{tpu_custom_call.1} parent=42 // loop_pre_header
        _
      $region45: #{tpu_custom_call.1} parent=42 // loop_header
        %s81 = sphi 0, %s85
        %p82 = scmp.ge.s32.totalorder %s81, 1
        %s86 = sphi %s68, %s68
        %s87 = sphi %s69, %s69
      $region46: #{tpu_custom_call.1} parent=42 // loop_header_branch
        %84 = sbr.rel (%p82) target = $region50
      $region47: #{tpu_custom_call.1} parent=42 // loop_body
        %v88 = vld [vmem:[%s86] sm:%s79]
        %89 = vst [vmem:[%s87] sm:%s79] %v88
      $region48: #{tpu_custom_call.1} parent=42 // loop_footer
        %s85 = sadd.s32 1, %s81
      $region49: #{tpu_custom_call.1} parent=42 // loop_footer_branch
        %80 = sbr.rel target = $region45
      $region50: #{tpu_custom_call.1} parent=42 // loop_exit
        _
    $region43: #{tpu_custom_call.1} parent=1 // pred_fallthru
      _
    // Predicated region
    $region62: #{tpu_custom_call.1} parent=1 // pred_check
      _
    $region63: #{tpu_custom_call.1} parent=1 // pred_check_branch
      %114 = sbr.rel (0) target = $region65
    $region64: #{tpu_custom_call.1} parent=1 // pred_region
      %115 = vsyncadd [#allocation3], 16
    $region65: #{tpu_custom_call.1} parent=1 // pred_fallthru
      _
    %s116 = sadd.s32 %s17, 16
    %s117 = sld [smem:[#allocation5 + %s116]]
    %s118 = scalar_lea.vmem %s2, %s117
    %s119 = scalar_lea.vmem [#allocation2], 2
    %p121 = scmp.lt.u32.totalorder 1, 8
    %p122 = pneg %p121
    // Predicated region
    $region66: #{tpu_custom_call.1} parent=1 // pred_check
      _
    $region67: #{tpu_custom_call.1} parent=1 // pred_check_branch
      %124 = sbr.rel (%p121) target = $region69
    $region68: #{tpu_custom_call.1} parent=1 // pred_region
      %s140 = sand.u32 1, 7
      %p141 = scmp.eq.s32.totalorder %s140, 0
      %p142 = pneg %p141
      // Predicated region
      $region81: #{tpu_custom_call.1} parent=68 // pred_check
        _
      $region82: #{tpu_custom_call.1} parent=68 // pred_check_branch
        %144 = sbr.rel (%p141) target = $region84
      $region83: #{tpu_custom_call.1} parent=68 // pred_region
        %s145 = sand.u32 1, 7
        %s146 = ssub.s32 1, %s145
        %s147 = scalar_lea.vmem %s118, %s146
        %s148 = ssub.s32 1, %s145
        %s149 = scalar_lea.vmem %s119, %s148 [#allocation2]
        %s150 = sshll.u32 1, %s145
        %s151 = ssub.s32 %s150, 1
        loop: start=0, step=1, limit=1
        $region85: #{tpu_custom_call.1} parent=83 // loop_pre_header
          _
        $region86: #{tpu_custom_call.1} parent=83 // loop_header
          %s153 = sphi 0, %s157
          %p154 = scmp.ge.s32.totalorder %s153, 1
          %s158 = sphi %s147, %s147
          %s159 = sphi %s149, %s149
        $region87: #{tpu_custom_call.1} parent=83 // loop_header_branch
          %156 = sbr.rel (%p154) target = $region91
        $region88: #{tpu_custom_call.1} parent=83 // loop_body
          %v160 = vld [vmem:[%s158] sm:%s151]
          %161 = vst [vmem:[%s159] sm:%s151] %v160
        $region89: #{tpu_custom_call.1} parent=83 // loop_footer
          %s157 = sadd.s32 1, %s153
        $region90: #{tpu_custom_call.1} parent=83 // loop_footer_branch
          %152 = sbr.rel target = $region86
        $region91: #{tpu_custom_call.1} parent=83 // loop_exit
          _
      $region84: #{tpu_custom_call.1} parent=68 // pred_fallthru
        _
    $region69: #{tpu_custom_call.1} parent=1 // pred_fallthru
      _
    // Predicated region
    $region70: #{tpu_custom_call.1} parent=1 // pred_check
      %p125 = pneg %p121
    $region71: #{tpu_custom_call.1} parent=1 // pred_check_branch
      %127 = sbr.rel (%p125) target = $region73
    $region72: #{tpu_custom_call.1} parent=1 // pred_region
      %s128 = sshll.u32 1, 1
      %s129 = ssub.s32 %s128, 1
      loop: start=0, step=1, limit=1
      $region74: #{tpu_custom_call.1} parent=72 // loop_pre_header
        _
      $region75: #{tpu_custom_call.1} parent=72 // loop_header
        %s131 = sphi 0, %s135
        %p132 = scmp.ge.s32.totalorder %s131, 1
        %s136 = sphi %s118, %s118
        %s137 = sphi %s119, %s119
      $region76: #{tpu_custom_call.1} parent=72 // loop_header_branch
        %134 = sbr.rel (%p132) target = $region80
      $region77: #{tpu_custom_call.1} parent=72 // loop_body
        %v138 = vld [vmem:[%s136] sm:%s129]
        %139 = vst [vmem:[%s137] sm:%s129] %v138
      $region78: #{tpu_custom_call.1} parent=72 // loop_footer
        %s135 = sadd.s32 1, %s131
      $region79: #{tpu_custom_call.1} parent=72 // loop_footer_branch
        %130 = sbr.rel target = $region75
      $region80: #{tpu_custom_call.1} parent=72 // loop_exit
        _
    $region73: #{tpu_custom_call.1} parent=1 // pred_fallthru
      _
    // Predicated region
    $region92: #{tpu_custom_call.1} parent=1 // pred_check
      _
    $region93: #{tpu_custom_call.1} parent=1 // pred_check_branch
      %164 = sbr.rel (0) target = $region95
    $region94: #{tpu_custom_call.1} parent=1 // pred_region
      %165 = vsyncadd [#allocation3], 16
    $region95: #{tpu_custom_call.1} parent=1 // pred_fallthru
      _
    %s166 = sadd.s32 %s17, 24
    %s167 = sld [smem:[#allocation5 + %s166]]
    %s168 = scalar_lea.vmem %s2, %s167
    %s169 = scalar_lea.vmem [#allocation2], 3
    %p171 = scmp.lt.u32.totalorder 1, 8
    %p172 = pneg %p171
    // Predicated region
    $region96: #{tpu_custom_call.1} parent=1 // pred_check
      _
    $region97: #{tpu_custom_call.1} parent=1 // pred_check_branch
      %174 = sbr.rel (%p171) target = $region99
    $region98: #{tpu_custom_call.1} parent=1 // pred_region
      %s190 = sand.u32 1, 7
      %p191 = scmp.eq.s32.totalorder %s190, 0
      %p192 = pneg %p191
      // Predicated region
      $region111: #{tpu_custom_call.1} parent=98 // pred_check
        _
      $region112: #{tpu_custom_call.1} parent=98 // pred_check_branch
        %194 = sbr.rel (%p191) target = $region114
      $region113: #{tpu_custom_call.1} parent=98 // pred_region
        %s195 = sand.u32 1, 7
        %s196 = ssub.s32 1, %s195
        %s197 = scalar_lea.vmem %s168, %s196
        %s198 = ssub.s32 1, %s195
        %s199 = scalar_lea.vmem %s169, %s198 [#allocation2]
        %s200 = sshll.u32 1, %s195
        %s201 = ssub.s32 %s200, 1
        loop: start=0, step=1, limit=1
        $region115: #{tpu_custom_call.1} parent=113 // loop_pre_header
          _
        $region116: #{tpu_custom_call.1} parent=113 // loop_header
          %s203 = sphi 0, %s207
          %p204 = scmp.ge.s32.totalorder %s203, 1
          %s208 = sphi %s197, %s197
          %s209 = sphi %s199, %s199
        $region117: #{tpu_custom_call.1} parent=113 // loop_header_branch
          %206 = sbr.rel (%p204) target = $region121
        $region118: #{tpu_custom_call.1} parent=113 // loop_body
          %v210 = vld [vmem:[%s208] sm:%s201]
          %211 = vst [vmem:[%s209] sm:%s201] %v210
        $region119: #{tpu_custom_call.1} parent=113 // loop_footer
          %s207 = sadd.s32 1, %s203
        $region120: #{tpu_custom_call.1} parent=113 // loop_footer_branch
          %202 = sbr.rel target = $region116
        $region121: #{tpu_custom_call.1} parent=113 // loop_exit
          _
      $region114: #{tpu_custom_call.1} parent=98 // pred_fallthru
        _
    $region99: #{tpu_custom_call.1} parent=1 // pred_fallthru
      _
    // Predicated region
    $region100: #{tpu_custom_call.1} parent=1 // pred_check
      %p175 = pneg %p171
    $region101: #{tpu_custom_call.1} parent=1 // pred_check_branch
      %177 = sbr.rel (%p175) target = $region103
    $region102: #{tpu_custom_call.1} parent=1 // pred_region
      %s178 = sshll.u32 1, 1
      %s179 = ssub.s32 %s178, 1
      loop: start=0, step=1, limit=1
      $region104: #{tpu_custom_call.1} parent=102 // loop_pre_header
        _
      $region105: #{tpu_custom_call.1} parent=102 // loop_header
        %s181 = sphi 0, %s185
        %p182 = scmp.ge.s32.totalorder %s181, 1
        %s186 = sphi %s168, %s168
        %s187 = sphi %s169, %s169
      $region106: #{tpu_custom_call.1} parent=102 // loop_header_branch
        %184 = sbr.rel (%p182) target = $region110
      $region107: #{tpu_custom_call.1} parent=102 // loop_body
        %v188 = vld [vmem:[%s186] sm:%s179]
        %189 = vst [vmem:[%s187] sm:%s179] %v188
      $region108: #{tpu_custom_call.1} parent=102 // loop_footer
        %s185 = sadd.s32 1, %s181
      $region109: #{tpu_custom_call.1} parent=102 // loop_footer_branch
        %180 = sbr.rel target = $region105
      $region110: #{tpu_custom_call.1} parent=102 // loop_exit
        _
    $region103: #{tpu_custom_call.1} parent=1 // pred_fallthru
      _
    // Predicated region
    $region122: #{tpu_custom_call.1} parent=1 // pred_check
      _
    $region123: #{tpu_custom_call.1} parent=1 // pred_check_branch
      %214 = sbr.rel (0) target = $region125
    $region124: #{tpu_custom_call.1} parent=1 // pred_region
      %215 = vsyncadd [#allocation3], 16
    $region125: #{tpu_custom_call.1} parent=1 // pred_fallthru
      _
    %s216 = sadd.s32 %s17, 32
    %s217 = sld [smem:[#allocation5 + %s216]]
    %s218 = scalar_lea.vmem %s2, %s217
    %s219 = scalar_lea.vmem [#allocation2], 4
    %p221 = scmp.lt.u32.totalorder 1, 8
    %p222 = pneg %p221
    // Predicated region
    $region126: #{tpu_custom_call.1} parent=1 // pred_check
      _
    $region127: #{tpu_custom_call.1} parent=1 // pred_check_branch
      %224 = sbr.rel (%p221) target = $region129
    $region128: #{tpu_custom_call.1} parent=1 // pred_region
      %s240 = sand.u32 1, 7
      %p241 = scmp.eq.s32.totalorder %s240, 0
      %p242 = pneg %p241
      // Predicated region
      $region141: #{tpu_custom_call.1} parent=128 // pred_check
        _
      $region142: #{tpu_custom_call.1} parent=128 // pred_check_branch
        %244 = sbr.rel (%p241) target = $region144
      $region143: #{tpu_custom_call.1} parent=128 // pred_region
        %s245 = sand.u32 1, 7
        %s246 = ssub.s32 1, %s245
        %s247 = scalar_lea.vmem %s218, %s246
        %s248 = ssub.s32 1, %s245
        %s249 = scalar_lea.vmem %s219, %s248 [#allocation2]
        %s250 = sshll.u32 1, %s245
        %s251 = ssub.s32 %s250, 1
        loop: start=0, step=1, limit=1
        $region145: #{tpu_custom_call.1} parent=143 // loop_pre_header
          _
        $region146: #{tpu_custom_call.1} parent=143 // loop_header
          %s253 = sphi 0, %s257
          %p254 = scmp.ge.s32.totalorder %s253, 1
          %s258 = sphi %s247, %s247
          %s259 = sphi %s249, %s249
        $region147: #{tpu_custom_call.1} parent=143 // loop_header_branch
          %256 = sbr.rel (%p254) target = $region151
        $region148: #{tpu_custom_call.1} parent=143 // loop_body
          %v260 = vld [vmem:[%s258] sm:%s251]
          %261 = vst [vmem:[%s259] sm:%s251] %v260
        $region149: #{tpu_custom_call.1} parent=143 // loop_footer
          %s257 = sadd.s32 1, %s253
        $region150: #{tpu_custom_call.1} parent=143 // loop_footer_branch
          %252 = sbr.rel target = $region146
        $region151: #{tpu_custom_call.1} parent=143 // loop_exit
          _
      $region144: #{tpu_custom_call.1} parent=128 // pred_fallthru
        _
    $region129: #{tpu_custom_call.1} parent=1 // pred_fallthru
      _
    // Predicated region
    $region130: #{tpu_custom_call.1} parent=1 // pred_check
      %p225 = pneg %p221
    $region131: #{tpu_custom_call.1} parent=1 // pred_check_branch
      %227 = sbr.rel (%p225) target = $region133
    $region132: #{tpu_custom_call.1} parent=1 // pred_region
      %s228 = sshll.u32 1, 1
      %s229 = ssub.s32 %s228, 1
      loop: start=0, step=1, limit=1
      $region134: #{tpu_custom_call.1} parent=132 // loop_pre_header
        _
      $region135: #{tpu_custom_call.1} parent=132 // loop_header
        %s231 = sphi 0, %s235
        %p232 = scmp.ge.s32.totalorder %s231, 1
        %s236 = sphi %s218, %s218
        %s237 = sphi %s219, %s219
      $region136: #{tpu_custom_call.1} parent=132 // loop_header_branch
        %234 = sbr.rel (%p232) target = $region140
      $region137: #{tpu_custom_call.1} parent=132 // loop_body
        %v238 = vld [vmem:[%s236] sm:%s229]
        %239 = vst [vmem:[%s237] sm:%s229] %v238
      $region138: #{tpu_custom_call.1} parent=132 // loop_footer
        %s235 = sadd.s32 1, %s231
      $region139: #{tpu_custom_call.1} parent=132 // loop_footer_branch
        %230 = sbr.rel target = $region135
      $region140: #{tpu_custom_call.1} parent=132 // loop_exit
        _
    $region133: #{tpu_custom_call.1} parent=1 // pred_fallthru
      _
    // Predicated region
    $region152: #{tpu_custom_call.1} parent=1 // pred_check
      _
    $region153: #{tpu_custom_call.1} parent=1 // pred_check_branch
      %264 = sbr.rel (0) target = $region155
    $region154: #{tpu_custom_call.1} parent=1 // pred_region
      %265 = vsyncadd [#allocation3], 16
    $region155: #{tpu_custom_call.1} parent=1 // pred_fallthru
      _
    %s266 = sadd.s32 %s17, 40
    %s267 = sld [smem:[#allocation5 + %s266]]
    %s268 = scalar_lea.vmem %s2, %s267
    %s269 = scalar_lea.vmem [#allocation2], 5
    %p271 = scmp.lt.u32.totalorder 1, 8
    %p272 = pneg %p271
    // Predicated region
    $region156: #{tpu_custom_call.1} parent=1 // pred_check
      _
    $region157: #{tpu_custom_call.1} parent=1 // pred_check_branch
      %274 = sbr.rel (%p271) target = $region159
    $region158: #{tpu_custom_call.1} parent=1 // pred_region
      %s290 = sand.u32 1, 7
      %p291 = scmp.eq.s32.totalorder %s290, 0
      %p292 = pneg %p291
      // Predicated region
      $region171: #{tpu_custom_call.1} parent=158 // pred_check
        _
      $region172: #{tpu_custom_call.1} parent=158 // pred_check_branch
        %294 = sbr.rel (%p291) target = $region174
      $region173: #{tpu_custom_call.1} parent=158 // pred_region
        %s295 = sand.u32 1, 7
        %s296 = ssub.s32 1, %s295
        %s297 = scalar_lea.vmem %s268, %s296
        %s298 = ssub.s32 1, %s295
        %s299 = scalar_lea.vmem %s269, %s298 [#allocation2]
        %s300 = sshll.u32 1, %s295
        %s301 = ssub.s32 %s300, 1
        loop: start=0, step=1, limit=1
        $region175: #{tpu_custom_call.1} parent=173 // loop_pre_header
          _
        $region176: #{tpu_custom_call.1} parent=173 // loop_header
          %s303 = sphi 0, %s307
          %p304 = scmp.ge.s32.totalorder %s303, 1
          %s308 = sphi %s297, %s297
          %s309 = sphi %s299, %s299
        $region177: #{tpu_custom_call.1} parent=173 // loop_header_branch
          %306 = sbr.rel (%p304) target = $region181
        $region178: #{tpu_custom_call.1} parent=173 // loop_body
          %v310 = vld [vmem:[%s308] sm:%s301]
          %311 = vst [vmem:[%s309] sm:%s301] %v310
        $region179: #{tpu_custom_call.1} parent=173 // loop_footer
          %s307 = sadd.s32 1, %s303
        $region180: #{tpu_custom_call.1} parent=173 // loop_footer_branch
          %302 = sbr.rel target = $region176
        $region181: #{tpu_custom_call.1} parent=173 // loop_exit
          _
      $region174: #{tpu_custom_call.1} parent=158 // pred_fallthru
        _
    $region159: #{tpu_custom_call.1} parent=1 // pred_fallthru
      _
    // Predicated region
    $region160: #{tpu_custom_call.1} parent=1 // pred_check
      %p275 = pneg %p271
    $region161: #{tpu_custom_call.1} parent=1 // pred_check_branch
      %277 = sbr.rel (%p275) target = $region163
    $region162: #{tpu_custom_call.1} parent=1 // pred_region
      %s278 = sshll.u32 1, 1
      %s279 = ssub.s32 %s278, 1
      loop: start=0, step=1, limit=1
      $region164: #{tpu_custom_call.1} parent=162 // loop_pre_header
        _
      $region165: #{tpu_custom_call.1} parent=162 // loop_header
        %s281 = sphi 0, %s285
        %p282 = scmp.ge.s32.totalorder %s281, 1
        %s286 = sphi %s268, %s268
        %s287 = sphi %s269, %s269
      $region166: #{tpu_custom_call.1} parent=162 // loop_header_branch
        %284 = sbr.rel (%p282) target = $region170
      $region167: #{tpu_custom_call.1} parent=162 // loop_body
        %v288 = vld [vmem:[%s286] sm:%s279]
        %289 = vst [vmem:[%s287] sm:%s279] %v288
      $region168: #{tpu_custom_call.1} parent=162 // loop_footer
        %s285 = sadd.s32 1, %s281
      $region169: #{tpu_custom_call.1} parent=162 // loop_footer_branch
        %280 = sbr.rel target = $region165
      $region170: #{tpu_custom_call.1} parent=162 // loop_exit
        _
    $region163: #{tpu_custom_call.1} parent=1 // pred_fallthru
      _
    // Predicated region
    $region182: #{tpu_custom_call.1} parent=1 // pred_check
      _
    $region183: #{tpu_custom_call.1} parent=1 // pred_check_branch
      %314 = sbr.rel (0) target = $region185
    $region184: #{tpu_custom_call.1} parent=1 // pred_region
      %315 = vsyncadd [#allocation3], 16
    $region185: #{tpu_custom_call.1} parent=1 // pred_fallthru
      _
    %s316 = sadd.s32 %s17, 48
    %s317 = sld [smem:[#allocation5 + %s316]]
    %s318 = scalar_lea.vmem %s2, %s317
    %s319 = scalar_lea.vmem [#allocation2], 6
    %p321 = scmp.lt.u32.totalorder 1, 8
    %p322 = pneg %p321
    // Predicated region
    $region186: #{tpu_custom_call.1} parent=1 // pred_check
      _
    $region187: #{tpu_custom_call.1} parent=1 // pred_check_branch
      %324 = sbr.rel (%p321) target = $region189
    $region188: #{tpu_custom_call.1} parent=1 // pred_region
      %s340 = sand.u32 1, 7
      %p341 = scmp.eq.s32.totalorder %s340, 0
      %p342 = pneg %p341
      // Predicated region
      $region201: #{tpu_custom_call.1} parent=188 // pred_check
        _
      $region202: #{tpu_custom_call.1} parent=188 // pred_check_branch
        %344 = sbr.rel (%p341) target = $region204
      $region203: #{tpu_custom_call.1} parent=188 // pred_region
        %s345 = sand.u32 1, 7
        %s346 = ssub.s32 1, %s345
        %s347 = scalar_lea.vmem %s318, %s346
        %s348 = ssub.s32 1, %s345
        %s349 = scalar_lea.vmem %s319, %s348 [#allocation2]
        %s350 = sshll.u32 1, %s345
        %s351 = ssub.s32 %s350, 1
        loop: start=0, step=1, limit=1
        $region205: #{tpu_custom_call.1} parent=203 // loop_pre_header
          _
        $region206: #{tpu_custom_call.1} parent=203 // loop_header
          %s353 = sphi 0, %s357
          %p354 = scmp.ge.s32.totalorder %s353, 1
          %s358 = sphi %s347, %s347
          %s359 = sphi %s349, %s349
        $region207: #{tpu_custom_call.1} parent=203 // loop_header_branch
          %356 = sbr.rel (%p354) target = $region211
        $region208: #{tpu_custom_call.1} parent=203 // loop_body
          %v360 = vld [vmem:[%s358] sm:%s351]
          %361 = vst [vmem:[%s359] sm:%s351] %v360
        $region209: #{tpu_custom_call.1} parent=203 // loop_footer
          %s357 = sadd.s32 1, %s353
        $region210: #{tpu_custom_call.1} parent=203 // loop_footer_branch
          %352 = sbr.rel target = $region206
        $region211: #{tpu_custom_call.1} parent=203 // loop_exit
          _
      $region204: #{tpu_custom_call.1} parent=188 // pred_fallthru
        _
    $region189: #{tpu_custom_call.1} parent=1 // pred_fallthru
      _
    // Predicated region
    $region190: #{tpu_custom_call.1} parent=1 // pred_check
      %p325 = pneg %p321
    $region191: #{tpu_custom_call.1} parent=1 // pred_check_branch
      %327 = sbr.rel (%p325) target = $region193
    $region192: #{tpu_custom_call.1} parent=1 // pred_region
      %s328 = sshll.u32 1, 1
      %s329 = ssub.s32 %s328, 1
      loop: start=0, step=1, limit=1
      $region194: #{tpu_custom_call.1} parent=192 // loop_pre_header
        _
      $region195: #{tpu_custom_call.1} parent=192 // loop_header
        %s331 = sphi 0, %s335
        %p332 = scmp.ge.s32.totalorder %s331, 1
        %s336 = sphi %s318, %s318
        %s337 = sphi %s319, %s319
      $region196: #{tpu_custom_call.1} parent=192 // loop_header_branch
        %334 = sbr.rel (%p332) target = $region200
      $region197: #{tpu_custom_call.1} parent=192 // loop_body
        %v338 = vld [vmem:[%s336] sm:%s329]
        %339 = vst [vmem:[%s337] sm:%s329] %v338
      $region198: #{tpu_custom_call.1} parent=192 // loop_footer
        %s335 = sadd.s32 1, %s331
      $region199: #{tpu_custom_call.1} parent=192 // loop_footer_branch
        %330 = sbr.rel target = $region195
      $region200: #{tpu_custom_call.1} parent=192 // loop_exit
        _
    $region193: #{tpu_custom_call.1} parent=1 // pred_fallthru
      _
    // Predicated region
    $region212: #{tpu_custom_call.1} parent=1 // pred_check
      _
    $region213: #{tpu_custom_call.1} parent=1 // pred_check_branch
      %364 = sbr.rel (0) target = $region215
    $region214: #{tpu_custom_call.1} parent=1 // pred_region
      %365 = vsyncadd [#allocation3], 16
    $region215: #{tpu_custom_call.1} parent=1 // pred_fallthru
      _
    %s366 = sadd.s32 %s17, 56
    %s367 = sld [smem:[#allocation5 + %s366]]
    %s368 = scalar_lea.vmem %s2, %s367
    %s369 = scalar_lea.vmem [#allocation2], 7
    %p371 = scmp.lt.u32.totalorder 1, 8
    %p372 = pneg %p371
    // Predicated region
    $region216: #{tpu_custom_call.1} parent=1 // pred_check
      _
    $region217: #{tpu_custom_call.1} parent=1 // pred_check_branch
      %374 = sbr.rel (%p371) target = $region219
    $region218: #{tpu_custom_call.1} parent=1 // pred_region
      %s390 = sand.u32 1, 7
      %p391 = scmp.eq.s32.totalorder %s390, 0
      %p392 = pneg %p391
      // Predicated region
      $region231: #{tpu_custom_call.1} parent=218 // pred_check
        _
      $region232: #{tpu_custom_call.1} parent=218 // pred_check_branch
        %394 = sbr.rel (%p391) target = $region234
      $region233: #{tpu_custom_call.1} parent=218 // pred_region
        %s395 = sand.u32 1, 7
        %s396 = ssub.s32 1, %s395
        %s397 = scalar_lea.vmem %s368, %s396
        %s398 = ssub.s32 1, %s395
        %s399 = scalar_lea.vmem %s369, %s398 [#allocation2]
        %s400 = sshll.u32 1, %s395
        %s401 = ssub.s32 %s400, 1
        loop: start=0, step=1, limit=1
        $region235: #{tpu_custom_call.1} parent=233 // loop_pre_header
          _
        $region236: #{tpu_custom_call.1} parent=233 // loop_header
          %s403 = sphi 0, %s407
          %p404 = scmp.ge.s32.totalorder %s403, 1
          %s408 = sphi %s397, %s397
          %s409 = sphi %s399, %s399
        $region237: #{tpu_custom_call.1} parent=233 // loop_header_branch
          %406 = sbr.rel (%p404) target = $region241
        $region238: #{tpu_custom_call.1} parent=233 // loop_body
          %v410 = vld [vmem:[%s408] sm:%s401]
          %411 = vst [vmem:[%s409] sm:%s401] %v410
        $region239: #{tpu_custom_call.1} parent=233 // loop_footer
          %s407 = sadd.s32 1, %s403
        $region240: #{tpu_custom_call.1} parent=233 // loop_footer_branch
          %402 = sbr.rel target = $region236
        $region241: #{tpu_custom_call.1} parent=233 // loop_exit
          _
      $region234: #{tpu_custom_call.1} parent=218 // pred_fallthru
        _
    $region219: #{tpu_custom_call.1} parent=1 // pred_fallthru
      _
    // Predicated region
    $region220: #{tpu_custom_call.1} parent=1 // pred_check
      %p375 = pneg %p371
    $region221: #{tpu_custom_call.1} parent=1 // pred_check_branch
      %377 = sbr.rel (%p375) target = $region223
    $region222: #{tpu_custom_call.1} parent=1 // pred_region
      %s378 = sshll.u32 1, 1
      %s379 = ssub.s32 %s378, 1
      loop: start=0, step=1, limit=1
      $region224: #{tpu_custom_call.1} parent=222 // loop_pre_header
        _
      $region225: #{tpu_custom_call.1} parent=222 // loop_header
        %s381 = sphi 0, %s385
        %p382 = scmp.ge.s32.totalorder %s381, 1
        %s386 = sphi %s368, %s368
        %s387 = sphi %s369, %s369
      $region226: #{tpu_custom_call.1} parent=222 // loop_header_branch
        %384 = sbr.rel (%p382) target = $region230
      $region227: #{tpu_custom_call.1} parent=222 // loop_body
        %v388 = vld [vmem:[%s386] sm:%s379]
        %389 = vst [vmem:[%s387] sm:%s379] %v388
      $region228: #{tpu_custom_call.1} parent=222 // loop_footer
        %s385 = sadd.s32 1, %s381
      $region229: #{tpu_custom_call.1} parent=222 // loop_footer_branch
        %380 = sbr.rel target = $region225
      $region230: #{tpu_custom_call.1} parent=222 // loop_exit
        _
    $region223: #{tpu_custom_call.1} parent=1 // pred_fallthru
      _
    // Predicated region
    $region242: #{tpu_custom_call.1} parent=1 // pred_check
      _
    $region243: #{tpu_custom_call.1} parent=1 // pred_check_branch
      %414 = sbr.rel (0) target = $region245
    $region244: #{tpu_custom_call.1} parent=1 // pred_region
      %415 = vsyncadd [#allocation3], 16
    $region245: #{tpu_custom_call.1} parent=1 // pred_fallthru
      _
    %s416 = sadd.s32 %s17, 1
    %s417 = sld [smem:[#allocation5 + %s416]]
    %s418 = scalar_lea.vmem %s2, %s417
    %s419 = scalar_lea.vmem [#allocation2], 8
    %s420 = scalar_lea.sflag [#allocation3], 1
    %p422 = scmp.lt.u32.totalorder 1, 8
    %p423 = pneg %p422
    // Predicated region
    $region246: #{tpu_custom_call.1} parent=1 // pred_check
      _
    $region247: #{tpu_custom_call.1} parent=1 // pred_check_branch
      %425 = sbr.rel (%p422) target = $region249
    $region248: #{tpu_custom_call.1} parent=1 // pred_region
      %s441 = sand.u32 1, 7
      %p442 = scmp.eq.s32.totalorder %s441, 0
      %p443 = pneg %p442
      // Predicated region
      $region261: #{tpu_custom_call.1} parent=248 // pred_check
        _
      $region262: #{tpu_custom_call.1} parent=248 // pred_check_branch
        %445 = sbr.rel (%p442) target = $region264
      $region263: #{tpu_custom_call.1} parent=248 // pred_region
        %s446 = sand.u32 1, 7
        %s447 = ssub.s32 1, %s446
        %s448 = scalar_lea.vmem %s418, %s447
        %s449 = ssub.s32 1, %s446
        %s450 = scalar_lea.vmem %s419, %s449 [#allocation2]
        %s451 = sshll.u32 1, %s446
        %s452 = ssub.s32 %s451, 1
        loop: start=0, step=1, limit=1
        $region265: #{tpu_custom_call.1} parent=263 // loop_pre_header
          _
        $region266: #{tpu_custom_call.1} parent=263 // loop_header
          %s454 = sphi 0, %s458
          %p455 = scmp.ge.s32.totalorder %s454, 1
          %s459 = sphi %s448, %s448
          %s460 = sphi %s450, %s450
        $region267: #{tpu_custom_call.1} parent=263 // loop_header_branch
          %457 = sbr.rel (%p455) target = $region271
        $region268: #{tpu_custom_call.1} parent=263 // loop_body
          %v461 = vld [vmem:[%s459] sm:%s452]
          %462 = vst [vmem:[%s460] sm:%s452] %v461
        $region269: #{tpu_custom_call.1} parent=263 // loop_footer
          %s458 = sadd.s32 1, %s454
        $region270: #{tpu_custom_call.1} parent=263 // loop_footer_branch
          %453 = sbr.rel target = $region266
        $region271: #{tpu_custom_call.1} parent=263 // loop_exit
          _
      $region264: #{tpu_custom_call.1} parent=248 // pred_fallthru
        _
    $region249: #{tpu_custom_call.1} parent=1 // pred_fallthru
      _
    // Predicated region
    $region250: #{tpu_custom_call.1} parent=1 // pred_check
      %p426 = pneg %p422
    $region251: #{tpu_custom_call.1} parent=1 // pred_check_branch
      %428 = sbr.rel (%p426) target = $region253
    $region252: #{tpu_custom_call.1} parent=1 // pred_region
      %s429 = sshll.u32 1, 1
      %s430 = ssub.s32 %s429, 1
      loop: start=0, step=1, limit=1
      $region254: #{tpu_custom_call.1} parent=252 // loop_pre_header
        _
      $region255: #{tpu_custom_call.1} parent=252 // loop_header
        %s432 = sphi 0, %s436
        %p433 = scmp.ge.s32.totalorder %s432, 1
        %s437 = sphi %s418, %s418
        %s438 = sphi %s419, %s419
      $region256: #{tpu_custom_call.1} parent=252 // loop_header_branch
        %435 = sbr.rel (%p433) target = $region260
      $region257: #{tpu_custom_call.1} parent=252 // loop_body
        %v439 = vld [vmem:[%s437] sm:%s430]
        %440 = vst [vmem:[%s438] sm:%s430] %v439
      $region258: #{tpu_custom_call.1} parent=252 // loop_footer
        %s436 = sadd.s32 1, %s432
      $region259: #{tpu_custom_call.1} parent=252 // loop_footer_branch
        %431 = sbr.rel target = $region255
      $region260: #{tpu_custom_call.1} parent=252 // loop_exit
        _
    $region253: #{tpu_custom_call.1} parent=1 // pred_fallthru
      _
    // Predicated region
    $region272: #{tpu_custom_call.1} parent=1 // pred_check
      _
    $region273: #{tpu_custom_call.1} parent=1 // pred_check_branch
      %465 = sbr.rel (0) target = $region275
    $region274: #{tpu_custom_call.1} parent=1 // pred_region
      %466 = vsyncadd %s420, 16
    $region275: #{tpu_custom_call.1} parent=1 // pred_fallthru
      _
    %s467 = sadd.s32 %s17, 9
    %s468 = sld [smem:[#allocation5 + %s467]]
    %s469 = scalar_lea.vmem %s2, %s468
    %s470 = scalar_lea.vmem [#allocation2], 9
    %p472 = scmp.lt.u32.totalorder 1, 8
    %p473 = pneg %p472
    // Predicated region
    $region276: #{tpu_custom_call.1} parent=1 // pred_check
      _
    $region277: #{tpu_custom_call.1} parent=1 // pred_check_branch
      %475 = sbr.rel (%p472) target = $region279
    $region278: #{tpu_custom_call.1} parent=1 // pred_region
      %s491 = sand.u32 1, 7
      %p492 = scmp.eq.s32.totalorder %s491, 0
      %p493 = pneg %p492
      // Predicated region
      $region291: #{tpu_custom_call.1} parent=278 // pred_check
        _
      $region292: #{tpu_custom_call.1} parent=278 // pred_check_branch
        %495 = sbr.rel (%p492) target = $region294
      $region293: #{tpu_custom_call.1} parent=278 // pred_region
        %s496 = sand.u32 1, 7
        %s497 = ssub.s32 1, %s496
        %s498 = scalar_lea.vmem %s469, %s497
        %s499 = ssub.s32 1, %s496
        %s500 = scalar_lea.vmem %s470, %s499 [#allocation2]
        %s501 = sshll.u32 1, %s496
        %s502 = ssub.s32 %s501, 1
        loop: start=0, step=1, limit=1
        $region295: #{tpu_custom_call.1} parent=293 // loop_pre_header
          _
        $region296: #{tpu_custom_call.1} parent=293 // loop_header
          %s504 = sphi 0, %s508
          %p505 = scmp.ge.s32.totalorder %s504, 1
          %s509 = sphi %s498, %s498
          %s510 = sphi %s500, %s500
        $region297: #{tpu_custom_call.1} parent=293 // loop_header_branch
          %507 = sbr.rel (%p505) target = $region301
        $region298: #{tpu_custom_call.1} parent=293 // loop_body
          %v511 = vld [vmem:[%s509] sm:%s502]
          %512 = vst [vmem:[%s510] sm:%s502] %v511
        $region299: #{tpu_custom_call.1} parent=293 // loop_footer
          %s508 = sadd.s32 1, %s504
        $region300: #{tpu_custom_call.1} parent=293 // loop_footer_branch
          %503 = sbr.rel target = $region296
        $region301: #{tpu_custom_call.1} parent=293 // loop_exit
          _
      $region294: #{tpu_custom_call.1} parent=278 // pred_fallthru
        _
    $region279: #{tpu_custom_call.1} parent=1 // pred_fallthru
      _
    // Predicated region
    $region280: #{tpu_custom_call.1} parent=1 // pred_check
      %p476 = pneg %p472
    $region281: #{tpu_custom_call.1} parent=1 // pred_check_branch
      %478 = sbr.rel (%p476) target = $region283
    $region282: #{tpu_custom_call.1} parent=1 // pred_region
      %s479 = sshll.u32 1, 1
      %s480 = ssub.s32 %s479, 1
      loop: start=0, step=1, limit=1
      $region284: #{tpu_custom_call.1} parent=282 // loop_pre_header
        _
      $region285: #{tpu_custom_call.1} parent=282 // loop_header
        %s482 = sphi 0, %s486
        %p483 = scmp.ge.s32.totalorder %s482, 1
        %s487 = sphi %s469, %s469
        %s488 = sphi %s470, %s470
      $region286: #{tpu_custom_call.1} parent=282 // loop_header_branch
        %485 = sbr.rel (%p483) target = $region290
      $region287: #{tpu_custom_call.1} parent=282 // loop_body
        %v489 = vld [vmem:[%s487] sm:%s480]
        %490 = vst [vmem:[%s488] sm:%s480] %v489
      $region288: #{tpu_custom_call.1} parent=282 // loop_footer
        %s486 = sadd.s32 1, %s482
      $region289: #{tpu_custom_call.1} parent=282 // loop_footer_branch
        %481 = sbr.rel target = $region285
      $region290: #{tpu_custom_call.1} parent=282 // loop_exit
        _
    $region283: #{tpu_custom_call.1} parent=1 // pred_fallthru
      _
    // Predicated region
    $region302: #{tpu_custom_call.1} parent=1 // pred_check
      _
    $region303: #{tpu_custom_call.1} parent=1 // pred_check_branch
      %515 = sbr.rel (0) target = $region305
    $region304: #{tpu_custom_call.1} parent=1 // pred_region
      %516 = vsyncadd %s420, 16
    $region305: #{tpu_custom_call.1} parent=1 // pred_fallthru
      _
    %s517 = sadd.s32 %s17, 17
    %s518 = sld [smem:[#allocation5 + %s517]]
    %s519 = scalar_lea.vmem %s2, %s518
    %s520 = scalar_lea.vmem [#allocation2], 10
    %p522 = scmp.lt.u32.totalorder 1, 8
    %p523 = pneg %p522
    // Predicated region
    $region306: #{tpu_custom_call.1} parent=1 // pred_check
      _
    $region307: #{tpu_custom_call.1} parent=1 // pred_check_branch
      %525 = sbr.rel (%p522) target = $region309
    $region308: #{tpu_custom_call.1} parent=1 // pred_region
      %s541 = sand.u32 1, 7
      %p542 = scmp.eq.s32.totalorder %s541, 0
      %p543 = pneg %p542
      // Predicated region
      $region321: #{tpu_custom_call.1} parent=308 // pred_check
        _
      $region322: #{tpu_custom_call.1} parent=308 // pred_check_branch
        %545 = sbr.rel (%p542) target = $region324
      $region323: #{tpu_custom_call.1} parent=308 // pred_region
        %s546 = sand.u32 1, 7
        %s547 = ssub.s32 1, %s546
        %s548 = scalar_lea.vmem %s519, %s547
        %s549 = ssub.s32 1, %s546
        %s550 = scalar_lea.vmem %s520, %s549 [#allocation2]
        %s551 = sshll.u32 1, %s546
        %s552 = ssub.s32 %s551, 1
        loop: start=0, step=1, limit=1
        $region325: #{tpu_custom_call.1} parent=323 // loop_pre_header
          _
        $region326: #{tpu_custom_call.1} parent=323 // loop_header
          %s554 = sphi 0, %s558
          %p555 = scmp.ge.s32.totalorder %s554, 1
          %s559 = sphi %s548, %s548
          %s560 = sphi %s550, %s550
        $region327: #{tpu_custom_call.1} parent=323 // loop_header_branch
          %557 = sbr.rel (%p555) target = $region331
        $region328: #{tpu_custom_call.1} parent=323 // loop_body
          %v561 = vld [vmem:[%s559] sm:%s552]
          %562 = vst [vmem:[%s560] sm:%s552] %v561
        $region329: #{tpu_custom_call.1} parent=323 // loop_footer
          %s558 = sadd.s32 1, %s554
        $region330: #{tpu_custom_call.1} parent=323 // loop_footer_branch
          %553 = sbr.rel target = $region326
        $region331: #{tpu_custom_call.1} parent=323 // loop_exit
          _
      $region324: #{tpu_custom_call.1} parent=308 // pred_fallthru
        _
    $region309: #{tpu_custom_call.1} parent=1 // pred_fallthru
      _
    // Predicated region
    $region310: #{tpu_custom_call.1} parent=1 // pred_check
      %p526 = pneg %p522
    $region311: #{tpu_custom_call.1} parent=1 // pred_check_branch
      %528 = sbr.rel (%p526) target = $region313
    $region312: #{tpu_custom_call.1} parent=1 // pred_region
      %s529 = sshll.u32 1, 1
      %s530 = ssub.s32 %s529, 1
      loop: start=0, step=1, limit=1
      $region314: #{tpu_custom_call.1} parent=312 // loop_pre_header
        _
      $region315: #{tpu_custom_call.1} parent=312 // loop_header
        %s532 = sphi 0, %s536
        %p533 = scmp.ge.s32.totalorder %s532, 1
        %s537 = sphi %s519, %s519
        %s538 = sphi %s520, %s520
      $region316: #{tpu_custom_call.1} parent=312 // loop_header_branch
        %535 = sbr.rel (%p533) target = $region320
      $region317: #{tpu_custom_call.1} parent=312 // loop_body
        %v539 = vld [vmem:[%s537] sm:%s530]
        %540 = vst [vmem:[%s538] sm:%s530] %v539
      $region318: #{tpu_custom_call.1} parent=312 // loop_footer
        %s536 = sadd.s32 1, %s532
      $region319: #{tpu_custom_call.1} parent=312 // loop_footer_branch
        %531 = sbr.rel target = $region315
      $region320: #{tpu_custom_call.1} parent=312 // loop_exit
        _
    $region313: #{tpu_custom_call.1} parent=1 // pred_fallthru
      _
    // Predicated region
    $region332: #{tpu_custom_call.1} parent=1 // pred_check
      _
    $region333: #{tpu_custom_call.1} parent=1 // pred_check_branch
      %565 = sbr.rel (0) target = $region335
    $region334: #{tpu_custom_call.1} parent=1 // pred_region
      %566 = vsyncadd %s420, 16
    $region335: #{tpu_custom_call.1} parent=1 // pred_fallthru
      _
    %s567 = sadd.s32 %s17, 25
    %s568 = sld [smem:[#allocation5 + %s567]]
    %s569 = scalar_lea.vmem %s2, %s568
    %s570 = scalar_lea.vmem [#allocation2], 11
    %p572 = scmp.lt.u32.totalorder 1, 8
    %p573 = pneg %p572
    // Predicated region
    $region336: #{tpu_custom_call.1} parent=1 // pred_check
      _
    $region337: #{tpu_custom_call.1} parent=1 // pred_check_branch
      %575 = sbr.rel (%p572) target = $region339
    $region338: #{tpu_custom_call.1} parent=1 // pred_region
      %s591 = sand.u32 1, 7
      %p592 = scmp.eq.s32.totalorder %s591, 0
      %p593 = pneg %p592
      // Predicated region
      $region351: #{tpu_custom_call.1} parent=338 // pred_check
        _
      $region352: #{tpu_custom_call.1} parent=338 // pred_check_branch
        %595 = sbr.rel (%p592) target = $region354
      $region353: #{tpu_custom_call.1} parent=338 // pred_region
        %s596 = sand.u32 1, 7
        %s597 = ssub.s32 1, %s596
        %s598 = scalar_lea.vmem %s569, %s597
        %s599 = ssub.s32 1, %s596
        %s600 = scalar_lea.vmem %s570, %s599 [#allocation2]
        %s601 = sshll.u32 1, %s596
        %s602 = ssub.s32 %s601, 1
        loop: start=0, step=1, limit=1
        $region355: #{tpu_custom_call.1} parent=353 // loop_pre_header
          _
        $region356: #{tpu_custom_call.1} parent=353 // loop_header
          %s604 = sphi 0, %s608
          %p605 = scmp.ge.s32.totalorder %s604, 1
          %s609 = sphi %s598, %s598
          %s610 = sphi %s600, %s600
        $region357: #{tpu_custom_call.1} parent=353 // loop_header_branch
          %607 = sbr.rel (%p605) target = $region361
        $region358: #{tpu_custom_call.1} parent=353 // loop_body
          %v611 = vld [vmem:[%s609] sm:%s602]
          %612 = vst [vmem:[%s610] sm:%s602] %v611
        $region359: #{tpu_custom_call.1} parent=353 // loop_footer
          %s608 = sadd.s32 1, %s604
        $region360: #{tpu_custom_call.1} parent=353 // loop_footer_branch
          %603 = sbr.rel target = $region356
        $region361: #{tpu_custom_call.1} parent=353 // loop_exit
          _
      $region354: #{tpu_custom_call.1} parent=338 // pred_fallthru
        _
    $region339: #{tpu_custom_call.1} parent=1 // pred_fallthru
      _
    // Predicated region
    $region340: #{tpu_custom_call.1} parent=1 // pred_check
      %p576 = pneg %p572
    $region341: #{tpu_custom_call.1} parent=1 // pred_check_branch
      %578 = sbr.rel (%p576) target = $region343
    $region342: #{tpu_custom_call.1} parent=1 // pred_region
      %s579 = sshll.u32 1, 1
      %s580 = ssub.s32 %s579, 1
      loop: start=0, step=1, limit=1
      $region344: #{tpu_custom_call.1} parent=342 // loop_pre_header
        _
      $region345: #{tpu_custom_call.1} parent=342 // loop_header
        %s582 = sphi 0, %s586
        %p583 = scmp.ge.s32.totalorder %s582, 1
        %s587 = sphi %s569, %s569
        %s588 = sphi %s570, %s570
      $region346: #{tpu_custom_call.1} parent=342 // loop_header_branch
        %585 = sbr.rel (%p583) target = $region350
      $region347: #{tpu_custom_call.1} parent=342 // loop_body
        %v589 = vld [vmem:[%s587] sm:%s580]
        %590 = vst [vmem:[%s588] sm:%s580] %v589
      $region348: #{tpu_custom_call.1} parent=342 // loop_footer
        %s586 = sadd.s32 1, %s582
      $region349: #{tpu_custom_call.1} parent=342 // loop_footer_branch
        %581 = sbr.rel target = $region345
      $region350: #{tpu_custom_call.1} parent=342 // loop_exit
        _
    $region343: #{tpu_custom_call.1} parent=1 // pred_fallthru
      _
    // Predicated region
    $region362: #{tpu_custom_call.1} parent=1 // pred_check
      _
    $region363: #{tpu_custom_call.1} parent=1 // pred_check_branch
      %615 = sbr.rel (0) target = $region365
    $region364: #{tpu_custom_call.1} parent=1 // pred_region
      %616 = vsyncadd %s420, 16
    $region365: #{tpu_custom_call.1} parent=1 // pred_fallthru
      _
    %s617 = sadd.s32 %s17, 33
    %s618 = sld [smem:[#allocation5 + %s617]]
    %s619 = scalar_lea.vmem %s2, %s618
    %s620 = scalar_lea.vmem [#allocation2], 12
    %p622 = scmp.lt.u32.totalorder 1, 8
    %p623 = pneg %p622
    // Predicated region
    $region366: #{tpu_custom_call.1} parent=1 // pred_check
      _
    $region367: #{tpu_custom_call.1} parent=1 // pred_check_branch
      %625 = sbr.rel (%p622) target = $region369
    $region368: #{tpu_custom_call.1} parent=1 // pred_region
      %s641 = sand.u32 1, 7
      %p642 = scmp.eq.s32.totalorder %s641, 0
      %p643 = pneg %p642
      // Predicated region
      $region381: #{tpu_custom_call.1} parent=368 // pred_check
        _
      $region382: #{tpu_custom_call.1} parent=368 // pred_check_branch
        %645 = sbr.rel (%p642) target = $region384
      $region383: #{tpu_custom_call.1} parent=368 // pred_region
        %s646 = sand.u32 1, 7
        %s647 = ssub.s32 1, %s646
        %s648 = scalar_lea.vmem %s619, %s647
        %s649 = ssub.s32 1, %s646
        %s650 = scalar_lea.vmem %s620, %s649 [#allocation2]
        %s651 = sshll.u32 1, %s646
        %s652 = ssub.s32 %s651, 1
        loop: start=0, step=1, limit=1
        $region385: #{tpu_custom_call.1} parent=383 // loop_pre_header
          _
        $region386: #{tpu_custom_call.1} parent=383 // loop_header
          %s654 = sphi 0, %s658
          %p655 = scmp.ge.s32.totalorder %s654, 1
          %s659 = sphi %s648, %s648
          %s660 = sphi %s650, %s650
        $region387: #{tpu_custom_call.1} parent=383 // loop_header_branch
          %657 = sbr.rel (%p655) target = $region391
        $region388: #{tpu_custom_call.1} parent=383 // loop_body
          %v661 = vld [vmem:[%s659] sm:%s652]
          %662 = vst [vmem:[%s660] sm:%s652] %v661
        $region389: #{tpu_custom_call.1} parent=383 // loop_footer
          %s658 = sadd.s32 1, %s654
        $region390: #{tpu_custom_call.1} parent=383 // loop_footer_branch
          %653 = sbr.rel target = $region386
        $region391: #{tpu_custom_call.1} parent=383 // loop_exit
          _
      $region384: #{tpu_custom_call.1} parent=368 // pred_fallthru
        _
    $region369: #{tpu_custom_call.1} parent=1 // pred_fallthru
      _
    // Predicated region
    $region370: #{tpu_custom_call.1} parent=1 // pred_check
      %p626 = pneg %p622
    $region371: #{tpu_custom_call.1} parent=1 // pred_check_branch
      %628 = sbr.rel (%p626) target = $region373
    $region372: #{tpu_custom_call.1} parent=1 // pred_region
      %s629 = sshll.u32 1, 1
      %s630 = ssub.s32 %s629, 1
      loop: start=0, step=1, limit=1
      $region374: #{tpu_custom_call.1} parent=372 // loop_pre_header
        _
      $region375: #{tpu_custom_call.1} parent=372 // loop_header
        %s632 = sphi 0, %s636
        %p633 = scmp.ge.s32.totalorder %s632, 1
        %s637 = sphi %s619, %s619
        %s638 = sphi %s620, %s620
      $region376: #{tpu_custom_call.1} parent=372 // loop_header_branch
        %635 = sbr.rel (%p633) target = $region380
      $region377: #{tpu_custom_call.1} parent=372 // loop_body
        %v639 = vld [vmem:[%s637] sm:%s630]
        %640 = vst [vmem:[%s638] sm:%s630] %v639
      $region378: #{tpu_custom_call.1} parent=372 // loop_footer
        %s636 = sadd.s32 1, %s632
      $region379: #{tpu_custom_call.1} parent=372 // loop_footer_branch
        %631 = sbr.rel target = $region375
      $region380: #{tpu_custom_call.1} parent=372 // loop_exit
        _
    $region373: #{tpu_custom_call.1} parent=1 // pred_fallthru
      _
    // Predicated region
    $region392: #{tpu_custom_call.1} parent=1 // pred_check
      _
    $region393: #{tpu_custom_call.1} parent=1 // pred_check_branch
      %665 = sbr.rel (0) target = $region395
    $region394: #{tpu_custom_call.1} parent=1 // pred_region
      %666 = vsyncadd %s420, 16
    $region395: #{tpu_custom_call.1} parent=1 // pred_fallthru
      _
    %s667 = sadd.s32 %s17, 41
    %s668 = sld [smem:[#allocation5 + %s667]]
    %s669 = scalar_lea.vmem %s2, %s668
    %s670 = scalar_lea.vmem [#allocation2], 13
    %p672 = scmp.lt.u32.totalorder 1, 8
    %p673 = pneg %p672
    // Predicated region
    $region396: #{tpu_custom_call.1} parent=1 // pred_check
      _
    $region397: #{tpu_custom_call.1} parent=1 // pred_check_branch
      %675 = sbr.rel (%p672) target = $region399
    $region398: #{tpu_custom_call.1} parent=1 // pred_region
      %s691 = sand.u32 1, 7
      %p692 = scmp.eq.s32.totalorder %s691, 0
      %p693 = pneg %p692
      // Predicated region
      $region411: #{tpu_custom_call.1} parent=398 // pred_check
        _
      $region412: #{tpu_custom_call.1} parent=398 // pred_check_branch
        %695 = sbr.rel (%p692) target = $region414
      $region413: #{tpu_custom_call.1} parent=398 // pred_region
        %s696 = sand.u32 1, 7
        %s697 = ssub.s32 1, %s696
        %s698 = scalar_lea.vmem %s669, %s697
        %s699 = ssub.s32 1, %s696
        %s700 = scalar_lea.vmem %s670, %s699 [#allocation2]
        %s701 = sshll.u32 1, %s696
        %s702 = ssub.s32 %s701, 1
        loop: start=0, step=1, limit=1
        $region415: #{tpu_custom_call.1} parent=413 // loop_pre_header
          _
        $region416: #{tpu_custom_call.1} parent=413 // loop_header
          %s704 = sphi 0, %s708
          %p705 = scmp.ge.s32.totalorder %s704, 1
          %s709 = sphi %s698, %s698
          %s710 = sphi %s700, %s700
        $region417: #{tpu_custom_call.1} parent=413 // loop_header_branch
          %707 = sbr.rel (%p705) target = $region421
        $region418: #{tpu_custom_call.1} parent=413 // loop_body
          %v711 = vld [vmem:[%s709] sm:%s702]
          %712 = vst [vmem:[%s710] sm:%s702] %v711
        $region419: #{tpu_custom_call.1} parent=413 // loop_footer
          %s708 = sadd.s32 1, %s704
        $region420: #{tpu_custom_call.1} parent=413 // loop_footer_branch
          %703 = sbr.rel target = $region416
        $region421: #{tpu_custom_call.1} parent=413 // loop_exit
          _
      $region414: #{tpu_custom_call.1} parent=398 // pred_fallthru
        _
    $region399: #{tpu_custom_call.1} parent=1 // pred_fallthru
      _
    // Predicated region
    $region400: #{tpu_custom_call.1} parent=1 // pred_check
      %p676 = pneg %p672
    $region401: #{tpu_custom_call.1} parent=1 // pred_check_branch
      %678 = sbr.rel (%p676) target = $region403
    $region402: #{tpu_custom_call.1} parent=1 // pred_region
      %s679 = sshll.u32 1, 1
      %s680 = ssub.s32 %s679, 1
      loop: start=0, step=1, limit=1
      $region404: #{tpu_custom_call.1} parent=402 // loop_pre_header
        _
      $region405: #{tpu_custom_call.1} parent=402 // loop_header
        %s682 = sphi 0, %s686
        %p683 = scmp.ge.s32.totalorder %s682, 1
        %s687 = sphi %s669, %s669
        %s688 = sphi %s670, %s670
      $region406: #{tpu_custom_call.1} parent=402 // loop_header_branch
        %685 = sbr.rel (%p683) target = $region410
      $region407: #{tpu_custom_call.1} parent=402 // loop_body
        %v689 = vld [vmem:[%s687] sm:%s680]
        %690 = vst [vmem:[%s688] sm:%s680] %v689
      $region408: #{tpu_custom_call.1} parent=402 // loop_footer
        %s686 = sadd.s32 1, %s682
      $region409: #{tpu_custom_call.1} parent=402 // loop_footer_branch
        %681 = sbr.rel target = $region405
      $region410: #{tpu_custom_call.1} parent=402 // loop_exit
        _
    $region403: #{tpu_custom_call.1} parent=1 // pred_fallthru
      _
    // Predicated region
    $region422: #{tpu_custom_call.1} parent=1 // pred_check
      _
    $region423: #{tpu_custom_call.1} parent=1 // pred_check_branch
      %715 = sbr.rel (0) target = $region425
    $region424: #{tpu_custom_call.1} parent=1 // pred_region
      %716 = vsyncadd %s420, 16
    $region425: #{tpu_custom_call.1} parent=1 // pred_fallthru
      _
    %s717 = sadd.s32 %s17, 49
    %s718 = sld [smem:[#allocation5 + %s717]]
    %s719 = scalar_lea.vmem %s2, %s718
    %s720 = scalar_lea.vmem [#allocation2], 14
    %p722 = scmp.lt.u32.totalorder 1, 8
    %p723 = pneg %p722
    // Predicated region
    $region426: #{tpu_custom_call.1} parent=1 // pred_check
      _
    $region427: #{tpu_custom_call.1} parent=1 // pred_check_branch
      %725 = sbr.rel (%p722) target = $region429
    $region428: #{tpu_custom_call.1} parent=1 // pred_region
      %s741 = sand.u32 1, 7
      %p742 = scmp.eq.s32.totalorder %s741, 0
      %p743 = pneg %p742
      // Predicated region
      $region441: #{tpu_custom_call.1} parent=428 // pred_check
        _
      $region442: #{tpu_custom_call.1} parent=428 // pred_check_branch
        %745 = sbr.rel (%p742) target = $region444
      $region443: #{tpu_custom_call.1} parent=428 // pred_region
        %s746 = sand.u32 1, 7
        %s747 = ssub.s32 1, %s746
        %s748 = scalar_lea.vmem %s719, %s747
        %s749 = ssub.s32 1, %s746
        %s750 = scalar_lea.vmem %s720, %s749 [#allocation2]
        %s751 = sshll.u32 1, %s746
        %s752 = ssub.s32 %s751, 1
        loop: start=0, step=1, limit=1
        $region445: #{tpu_custom_call.1} parent=443 // loop_pre_header
          _
        $region446: #{tpu_custom_call.1} parent=443 // loop_header
          %s754 = sphi 0, %s758
          %p755 = scmp.ge.s32.totalorder %s754, 1
          %s759 = sphi %s748, %s748
          %s760 = sphi %s750, %s750
        $region447: #{tpu_custom_call.1} parent=443 // loop_header_branch
          %757 = sbr.rel (%p755) target = $region451
        $region448: #{tpu_custom_call.1} parent=443 // loop_body
          %v761 = vld [vmem:[%s759] sm:%s752]
          %762 = vst [vmem:[%s760] sm:%s752] %v761
        $region449: #{tpu_custom_call.1} parent=443 // loop_footer
          %s758 = sadd.s32 1, %s754
        $region450: #{tpu_custom_call.1} parent=443 // loop_footer_branch
          %753 = sbr.rel target = $region446
        $region451: #{tpu_custom_call.1} parent=443 // loop_exit
          _
      $region444: #{tpu_custom_call.1} parent=428 // pred_fallthru
        _
    $region429: #{tpu_custom_call.1} parent=1 // pred_fallthru
      _
    // Predicated region
    $region430: #{tpu_custom_call.1} parent=1 // pred_check
      %p726 = pneg %p722
    $region431: #{tpu_custom_call.1} parent=1 // pred_check_branch
      %728 = sbr.rel (%p726) target = $region433
    $region432: #{tpu_custom_call.1} parent=1 // pred_region
      %s729 = sshll.u32 1, 1
      %s730 = ssub.s32 %s729, 1
      loop: start=0, step=1, limit=1
      $region434: #{tpu_custom_call.1} parent=432 // loop_pre_header
        _
      $region435: #{tpu_custom_call.1} parent=432 // loop_header
        %s732 = sphi 0, %s736
        %p733 = scmp.ge.s32.totalorder %s732, 1
        %s737 = sphi %s719, %s719
        %s738 = sphi %s720, %s720
      $region436: #{tpu_custom_call.1} parent=432 // loop_header_branch
        %735 = sbr.rel (%p733) target = $region440
      $region437: #{tpu_custom_call.1} parent=432 // loop_body
        %v739 = vld [vmem:[%s737] sm:%s730]
        %740 = vst [vmem:[%s738] sm:%s730] %v739
      $region438: #{tpu_custom_call.1} parent=432 // loop_footer
        %s736 = sadd.s32 1, %s732
      $region439: #{tpu_custom_call.1} parent=432 // loop_footer_branch
        %731 = sbr.rel target = $region435
      $region440: #{tpu_custom_call.1} parent=432 // loop_exit
        _
    $region433: #{tpu_custom_call.1} parent=1 // pred_fallthru
      _
    // Predicated region
    $region452: #{tpu_custom_call.1} parent=1 // pred_check
      _
    $region453: #{tpu_custom_call.1} parent=1 // pred_check_branch
      %765 = sbr.rel (0) target = $region455
    $region454: #{tpu_custom_call.1} parent=1 // pred_region
      %766 = vsyncadd %s420, 16
    $region455: #{tpu_custom_call.1} parent=1 // pred_fallthru
      _
    %s767 = sadd.s32 %s17, 57
    %s768 = sld [smem:[#allocation5 + %s767]]
    %s769 = scalar_lea.vmem %s2, %s768
    %s770 = scalar_lea.vmem [#allocation2], 15
    %p772 = scmp.lt.u32.totalorder 1, 8
    %p773 = pneg %p772
    // Predicated region
    $region456: #{tpu_custom_call.1} parent=1 // pred_check
      _
    $region457: #{tpu_custom_call.1} parent=1 // pred_check_branch
      %775 = sbr.rel (%p772) target = $region459
    $region458: #{tpu_custom_call.1} parent=1 // pred_region
      %s791 = sand.u32 1, 7
      %p792 = scmp.eq.s32.totalorder %s791, 0
      %p793 = pneg %p792
      // Predicated region
      $region471: #{tpu_custom_call.1} parent=458 // pred_check
        _
      $region472: #{tpu_custom_call.1} parent=458 // pred_check_branch
        %795 = sbr.rel (%p792) target = $region474
      $region473: #{tpu_custom_call.1} parent=458 // pred_region
        %s796 = sand.u32 1, 7
        %s797 = ssub.s32 1, %s796
        %s798 = scalar_lea.vmem %s769, %s797
        %s799 = ssub.s32 1, %s796
        %s800 = scalar_lea.vmem %s770, %s799 [#allocation2]
        %s801 = sshll.u32 1, %s796
        %s802 = ssub.s32 %s801, 1
        loop: start=0, step=1, limit=1
        $region475: #{tpu_custom_call.1} parent=473 // loop_pre_header
          _
        $region476: #{tpu_custom_call.1} parent=473 // loop_header
          %s804 = sphi 0, %s808
          %p805 = scmp.ge.s32.totalorder %s804, 1
          %s809 = sphi %s798, %s798
          %s810 = sphi %s800, %s800
        $region477: #{tpu_custom_call.1} parent=473 // loop_header_branch
          %807 = sbr.rel (%p805) target = $region481
        $region478: #{tpu_custom_call.1} parent=473 // loop_body
          %v811 = vld [vmem:[%s809] sm:%s802]
          %812 = vst [vmem:[%s810] sm:%s802] %v811
        $region479: #{tpu_custom_call.1} parent=473 // loop_footer
          %s808 = sadd.s32 1, %s804
        $region480: #{tpu_custom_call.1} parent=473 // loop_footer_branch
          %803 = sbr.rel target = $region476
        $region481: #{tpu_custom_call.1} parent=473 // loop_exit
          _
      $region474: #{tpu_custom_call.1} parent=458 // pred_fallthru
        _
    $region459: #{tpu_custom_call.1} parent=1 // pred_fallthru
      _
    // Predicated region
    $region460: #{tpu_custom_call.1} parent=1 // pred_check
      %p776 = pneg %p772
    $region461: #{tpu_custom_call.1} parent=1 // pred_check_branch
      %778 = sbr.rel (%p776) target = $region463
    $region462: #{tpu_custom_call.1} parent=1 // pred_region
      %s779 = sshll.u32 1, 1
      %s780 = ssub.s32 %s779, 1
      loop: start=0, step=1, limit=1
      $region464: #{tpu_custom_call.1} parent=462 // loop_pre_header
        _
      $region465: #{tpu_custom_call.1} parent=462 // loop_header
        %s782 = sphi 0, %s786
        %p783 = scmp.ge.s32.totalorder %s782, 1
        %s787 = sphi %s769, %s769
        %s788 = sphi %s770, %s770
      $region466: #{tpu_custom_call.1} parent=462 // loop_header_branch
        %785 = sbr.rel (%p783) target = $region470
      $region467: #{tpu_custom_call.1} parent=462 // loop_body
        %v789 = vld [vmem:[%s787] sm:%s780]
        %790 = vst [vmem:[%s788] sm:%s780] %v789
      $region468: #{tpu_custom_call.1} parent=462 // loop_footer
        %s786 = sadd.s32 1, %s782
      $region469: #{tpu_custom_call.1} parent=462 // loop_footer_branch
        %781 = sbr.rel target = $region465
      $region470: #{tpu_custom_call.1} parent=462 // loop_exit
        _
    $region463: #{tpu_custom_call.1} parent=1 // pred_fallthru
      _
    // Predicated region
    $region482: #{tpu_custom_call.1} parent=1 // pred_check
      _
    $region483: #{tpu_custom_call.1} parent=1 // pred_check_branch
      %815 = sbr.rel (0) target = $region485
    $region484: #{tpu_custom_call.1} parent=1 // pred_region
      %816 = vsyncadd %s420, 16
    $region485: #{tpu_custom_call.1} parent=1 // pred_fallthru
      _
    %s817 = sadd.s32 %s17, 2
    %s818 = sld [smem:[#allocation5 + %s817]]
    %s819 = scalar_lea.vmem %s2, %s818
    %s820 = scalar_lea.vmem [#allocation2], 16
    %s821 = scalar_lea.sflag [#allocation3], 2
    %p823 = scmp.lt.u32.totalorder 1, 8
    %p824 = pneg %p823
    // Predicated region
    $region486: #{tpu_custom_call.1} parent=1 // pred_check
      _
    $region487: #{tpu_custom_call.1} parent=1 // pred_check_branch
      %826 = sbr.rel (%p823) target = $region489
    $region488: #{tpu_custom_call.1} parent=1 // pred_region
      %s842 = sand.u32 1, 7
      %p843 = scmp.eq.s32.totalorder %s842, 0
      %p844 = pneg %p843
      // Predicated region
      $region501: #{tpu_custom_call.1} parent=488 // pred_check
        _
      $region502: #{tpu_custom_call.1} parent=488 // pred_check_branch
        %846 = sbr.rel (%p843) target = $region504
      $region503: #{tpu_custom_call.1} parent=488 // pred_region
        %s847 = sand.u32 1, 7
        %s848 = ssub.s32 1, %s847
        %s849 = scalar_lea.vmem %s819, %s848
        %s850 = ssub.s32 1, %s847
        %s851 = scalar_lea.vmem %s820, %s850 [#allocation2]
        %s852 = sshll.u32 1, %s847
        %s853 = ssub.s32 %s852, 1
        loop: start=0, step=1, limit=1
        $region505: #{tpu_custom_call.1} parent=503 // loop_pre_header
          _
        $region506: #{tpu_custom_call.1} parent=503 // loop_header
          %s855 = sphi 0, %s859
          %p856 = scmp.ge.s32.totalorder %s855, 1
          %s860 = sphi %s849, %s849
          %s861 = sphi %s851, %s851
        $region507: #{tpu_custom_call.1} parent=503 // loop_header_branch
          %858 = sbr.rel (%p856) target = $region511
        $region508: #{tpu_custom_call.1} parent=503 // loop_body
          %v862 = vld [vmem:[%s860] sm:%s853]
          %863 = vst [vmem:[%s861] sm:%s853] %v862
        $region509: #{tpu_custom_call.1} parent=503 // loop_footer
          %s859 = sadd.s32 1, %s855
        $region510: #{tpu_custom_call.1} parent=503 // loop_footer_branch
          %854 = sbr.rel target = $region506
        $region511: #{tpu_custom_call.1} parent=503 // loop_exit
          _
      $region504: #{tpu_custom_call.1} parent=488 // pred_fallthru
        _
    $region489: #{tpu_custom_call.1} parent=1 // pred_fallthru
      _
    // Predicated region
    $region490: #{tpu_custom_call.1} parent=1 // pred_check
      %p827 = pneg %p823
    $region491: #{tpu_custom_call.1} parent=1 // pred_check_branch
      %829 = sbr.rel (%p827) target = $region493
    $region492: #{tpu_custom_call.1} parent=1 // pred_region
      %s830 = sshll.u32 1, 1
      %s831 = ssub.s32 %s830, 1
      loop: start=0, step=1, limit=1
      $region494: #{tpu_custom_call.1} parent=492 // loop_pre_header
        _
      $region495: #{tpu_custom_call.1} parent=492 // loop_header
        %s833 = sphi 0, %s837
        %p834 = scmp.ge.s32.totalorder %s833, 1
        %s838 = sphi %s819, %s819
        %s839 = sphi %s820, %s820
      $region496: #{tpu_custom_call.1} parent=492 // loop_header_branch
        %836 = sbr.rel (%p834) target = $region500
      $region497: #{tpu_custom_call.1} parent=492 // loop_body
        %v840 = vld [vmem:[%s838] sm:%s831]
        %841 = vst [vmem:[%s839] sm:%s831] %v840
      $region498: #{tpu_custom_call.1} parent=492 // loop_footer
        %s837 = sadd.s32 1, %s833
      $region499: #{tpu_custom_call.1} parent=492 // loop_footer_branch
        %832 = sbr.rel target = $region495
      $region500: #{tpu_custom_call.1} parent=492 // loop_exit
        _
    $region493: #{tpu_custom_call.1} parent=1 // pred_fallthru
      _
    // Predicated region
    $region512: #{tpu_custom_call.1} parent=1 // pred_check
      _
    $region513: #{tpu_custom_call.1} parent=1 // pred_check_branch
      %866 = sbr.rel (0) target = $region515
    $region514: #{tpu_custom_call.1} parent=1 // pred_region
      %867 = vsyncadd %s821, 16
    $region515: #{tpu_custom_call.1} parent=1 // pred_fallthru
      _
    %s868 = sadd.s32 %s17, 10
    %s869 = sld [smem:[#allocation5 + %s868]]
    %s870 = scalar_lea.vmem %s2, %s869
    %s871 = scalar_lea.vmem [#allocation2], 17
    %p873 = scmp.lt.u32.totalorder 1, 8
    %p874 = pneg %p873
    // Predicated region
    $region516: #{tpu_custom_call.1} parent=1 // pred_check
      _
    $region517: #{tpu_custom_call.1} parent=1 // pred_check_branch
      %876 = sbr.rel (%p873) target = $region519
    $region518: #{tpu_custom_call.1} parent=1 // pred_region
      %s892 = sand.u32 1, 7
      %p893 = scmp.eq.s32.totalorder %s892, 0
      %p894 = pneg %p893
      // Predicated region
      $region531: #{tpu_custom_call.1} parent=518 // pred_check
        _
      $region532: #{tpu_custom_call.1} parent=518 // pred_check_branch
        %896 = sbr.rel (%p893) target = $region534
      $region533: #{tpu_custom_call.1} parent=518 // pred_region
        %s897 = sand.u32 1, 7
        %s898 = ssub.s32 1, %s897
        %s899 = scalar_lea.vmem %s870, %s898
        %s900 = ssub.s32 1, %s897
        %s901 = scalar_lea.vmem %s871, %s900 [#allocation2]
        %s902 = sshll.u32 1, %s897
        %s903 = ssub.s32 %s902, 1
        loop: start=0, step=1, limit=1
        $region535: #{tpu_custom_call.1} parent=533 // loop_pre_header
          _
        $region536: #{tpu_custom_call.1} parent=533 // loop_header
          %s905 = sphi 0, %s909
          %p906 = scmp.ge.s32.totalorder %s905, 1
          %s910 = sphi %s899, %s899
          %s911 = sphi %s901, %s901
        $region537: #{tpu_custom_call.1} parent=533 // loop_header_branch
          %908 = sbr.rel (%p906) target = $region541
        $region538: #{tpu_custom_call.1} parent=533 // loop_body
          %v912 = vld [vmem:[%s910] sm:%s903]
          %913 = vst [vmem:[%s911] sm:%s903] %v912
        $region539: #{tpu_custom_call.1} parent=533 // loop_footer
          %s909 = sadd.s32 1, %s905
        $region540: #{tpu_custom_call.1} parent=533 // loop_footer_branch
          %904 = sbr.rel target = $region536
        $region541: #{tpu_custom_call.1} parent=533 // loop_exit
          _
      $region534: #{tpu_custom_call.1} parent=518 // pred_fallthru
        _
    $region519: #{tpu_custom_call.1} parent=1 // pred_fallthru
      _
    // Predicated region
    $region520: #{tpu_custom_call.1} parent=1 // pred_check
      %p877 = pneg %p873
    $region521: #{tpu_custom_call.1} parent=1 // pred_check_branch
      %879 = sbr.rel (%p877) target = $region523
    $region522: #{tpu_custom_call.1} parent=1 // pred_region
      %s880 = sshll.u32 1, 1
      %s881 = ssub.s32 %s880, 1
      loop: start=0, step=1, limit=1
      $region524: #{tpu_custom_call.1} parent=522 // loop_pre_header
        _
      $region525: #{tpu_custom_call.1} parent=522 // loop_header
        %s883 = sphi 0, %s887
        %p884 = scmp.ge.s32.totalorder %s883, 1
        %s888 = sphi %s870, %s870
        %s889 = sphi %s871, %s871
      $region526: #{tpu_custom_call.1} parent=522 // loop_header_branch
        %886 = sbr.rel (%p884) target = $region530
      $region527: #{tpu_custom_call.1} parent=522 // loop_body
        %v890 = vld [vmem:[%s888] sm:%s881]
        %891 = vst [vmem:[%s889] sm:%s881] %v890
      $region528: #{tpu_custom_call.1} parent=522 // loop_footer
        %s887 = sadd.s32 1, %s883
      $region529: #{tpu_custom_call.1} parent=522 // loop_footer_branch
        %882 = sbr.rel target = $region525
      $region530: #{tpu_custom_call.1} parent=522 // loop_exit
        _
    $region523: #{tpu_custom_call.1} parent=1 // pred_fallthru
      _
    // Predicated region
    $region542: #{tpu_custom_call.1} parent=1 // pred_check
      _
    $region543: #{tpu_custom_call.1} parent=1 // pred_check_branch
      %916 = sbr.rel (0) target = $region545
    $region544: #{tpu_custom_call.1} parent=1 // pred_region
      %917 = vsyncadd %s821, 16
    $region545: #{tpu_custom_call.1} parent=1 // pred_fallthru
      _
    %s918 = sadd.s32 %s17, 18
    %s919 = sld [smem:[#allocation5 + %s918]]
    %s920 = scalar_lea.vmem %s2, %s919
    %s921 = scalar_lea.vmem [#allocation2], 18
    %p923 = scmp.lt.u32.totalorder 1, 8
    %p924 = pneg %p923
    // Predicated region
    $region546: #{tpu_custom_call.1} parent=1 // pred_check
      _
    $region547: #{tpu_custom_call.1} parent=1 // pred_check_branch
      %926 = sbr.rel (%p923) target = $region549
    $region548: #{tpu_custom_call.1} parent=1 // pred_region
      %s942 = sand.u32 1, 7
      %p943 = scmp.eq.s32.totalorder %s942, 0
      %p944 = pneg %p943
      // Predicated region
      $region561: #{tpu_custom_call.1} parent=548 // pred_check
        _
      $region562: #{tpu_custom_call.1} parent=548 // pred_check_branch
        %946 = sbr.rel (%p943) target = $region564
      $region563: #{tpu_custom_call.1} parent=548 // pred_region
        %s947 = sand.u32 1, 7
        %s948 = ssub.s32 1, %s947
        %s949 = scalar_lea.vmem %s920, %s948
        %s950 = ssub.s32 1, %s947
        %s951 = scalar_lea.vmem %s921, %s950 [#allocation2]
        %s952 = sshll.u32 1, %s947
        %s953 = ssub.s32 %s952, 1
        loop: start=0, step=1, limit=1
        $region565: #{tpu_custom_call.1} parent=563 // loop_pre_header
          _
        $region566: #{tpu_custom_call.1} parent=563 // loop_header
          %s955 = sphi 0, %s959
          %p956 = scmp.ge.s32.totalorder %s955, 1
          %s960 = sphi %s949, %s949
          %s961 = sphi %s951, %s951
        $region567: #{tpu_custom_call.1} parent=563 // loop_header_branch
          %958 = sbr.rel (%p956) target = $region571
        $region568: #{tpu_custom_call.1} parent=563 // loop_body
          %v962 = vld [vmem:[%s960] sm:%s953]
          %963 = vst [vmem:[%s961] sm:%s953] %v962
        $region569: #{tpu_custom_call.1} parent=563 // loop_footer
          %s959 = sadd.s32 1, %s955
        $region570: #{tpu_custom_call.1} parent=563 // loop_footer_branch
          %954 = sbr.rel target = $region566
        $region571: #{tpu_custom_call.1} parent=563 // loop_exit
          _
      $region564: #{tpu_custom_call.1} parent=548 // pred_fallthru
        _
    $region549: #{tpu_custom_call.1} parent=1 // pred_fallthru
      _
    // Predicated region
    $region550: #{tpu_custom_call.1} parent=1 // pred_check
      %p927 = pneg %p923
    $region551: #{tpu_custom_call.1} parent=1 // pred_check_branch
      %929 = sbr.rel (%p927) target = $region553
    $region552: #{tpu_custom_call.1} parent=1 // pred_region
      %s930 = sshll.u32 1, 1
      %s931 = ssub.s32 %s930, 1
      loop: start=0, step=1, limit=1
      $region554: #{tpu_custom_call.1} parent=552 // loop_pre_header
        _
      $region555: #{tpu_custom_call.1} parent=552 // loop_header
        %s933 = sphi 0, %s937
        %p934 = scmp.ge.s32.totalorder %s933, 1
        %s938 = sphi %s920, %s920
        %s939 = sphi %s921, %s921
      $region556: #{tpu_custom_call.1} parent=552 // loop_header_branch
        %936 = sbr.rel (%p934) target = $region560
      $region557: #{tpu_custom_call.1} parent=552 // loop_body
        %v940 = vld [vmem:[%s938] sm:%s931]
        %941 = vst [vmem:[%s939] sm:%s931] %v940
      $region558: #{tpu_custom_call.1} parent=552 // loop_footer
        %s937 = sadd.s32 1, %s933
      $region559: #{tpu_custom_call.1} parent=552 // loop_footer_branch
        %932 = sbr.rel target = $region555
      $region560: #{tpu_custom_call.1} parent=552 // loop_exit
        _
    $region553: #{tpu_custom_call.1} parent=1 // pred_fallthru
      _
    // Predicated region
    $region572: #{tpu_custom_call.1} parent=1 // pred_check
      _
    $region573: #{tpu_custom_call.1} parent=1 // pred_check_branch
      %966 = sbr.rel (0) target = $region575
    $region574: #{tpu_custom_call.1} parent=1 // pred_region
      %967 = vsyncadd %s821, 16
    $region575: #{tpu_custom_call.1} parent=1 // pred_fallthru
      _
    %s968 = sadd.s32 %s17, 26
    %s969 = sld [smem:[#allocation5 + %s968]]
    %s970 = scalar_lea.vmem %s2, %s969
    %s971 = scalar_lea.vmem [#allocation2], 19
    %p973 = scmp.lt.u32.totalorder 1, 8
    %p974 = pneg %p973
    // Predicated region
    $region576: #{tpu_custom_call.1} parent=1 // pred_check
      _
    $region577: #{tpu_custom_call.1} parent=1 // pred_check_branch
      %976 = sbr.rel (%p973) target = $region579
    $region578: #{tpu_custom_call.1} parent=1 // pred_region
      %s992 = sand.u32 1, 7
      %p993 = scmp.eq.s32.totalorder %s992, 0
      %p994 = pneg %p993
      // Predicated region
      $region591: #{tpu_custom_call.1} parent=578 // pred_check
        _
      $region592: #{tpu_custom_call.1} parent=578 // pred_check_branch
        %996 = sbr.rel (%p993) target = $region594
      $region593: #{tpu_custom_call.1} parent=578 // pred_region
        %s997 = sand.u32 1, 7
        %s998 = ssub.s32 1, %s997
        %s999 = scalar_lea.vmem %s970, %s998
        %s1000 = ssub.s32 1, %s997
        %s1001 = scalar_lea.vmem %s971, %s1000 [#allocation2]
        %s1002 = sshll.u32 1, %s997
        %s1003 = ssub.s32 %s1002, 1
        loop: start=0, step=1, limit=1
        $region595: #{tpu_custom_call.1} parent=593 // loop_pre_header
          _
        $region596: #{tpu_custom_call.1} parent=593 // loop_header
          %s1005 = sphi 0, %s1009
          %p1006 = scmp.ge.s32.totalorder %s1005, 1
          %s1010 = sphi %s999, %s999
          %s1011 = sphi %s1001, %s1001
        $region597: #{tpu_custom_call.1} parent=593 // loop_header_branch
          %1008 = sbr.rel (%p1006) target = $region601
        $region598: #{tpu_custom_call.1} parent=593 // loop_body
          %v1012 = vld [vmem:[%s1010] sm:%s1003]
          %1013 = vst [vmem:[%s1011] sm:%s1003] %v1012
        $region599: #{tpu_custom_call.1} parent=593 // loop_footer
          %s1009 = sadd.s32 1, %s1005
        $region600: #{tpu_custom_call.1} parent=593 // loop_footer_branch
          %1004 = sbr.rel target = $region596
        $region601: #{tpu_custom_call.1} parent=593 // loop_exit
          _
      $region594: #{tpu_custom_call.1} parent=578 // pred_fallthru
        _
    $region579: #{tpu_custom_call.1} parent=1 // pred_fallthru
      _
    // Predicated region
    $region580: #{tpu_custom_call.1} parent=1 // pred_check
      %p977 = pneg %p973
    $region581: #{tpu_custom_call.1} parent=1 // pred_check_branch
      %979 = sbr.rel (%p977) target = $region583
    $region582: #{tpu_custom_call.1} parent=1 // pred_region
      %s980 = sshll.u32 1, 1
      %s981 = ssub.s32 %s980, 1
      loop: start=0, step=1, limit=1
      $region584: #{tpu_custom_call.1} parent=582 // loop_pre_header
        _
      $region585: #{tpu_custom_call.1} parent=582 // loop_header
        %s983 = sphi 0, %s987
        %p984 = scmp.ge.s32.totalorder %s983, 1
        %s988 = sphi %s970, %s970
        %s989 = sphi %s971, %s971
      $region586: #{tpu_custom_call.1} parent=582 // loop_header_branch
        %986 = sbr.rel (%p984) target = $region590
      $region587: #{tpu_custom_call.1} parent=582 // loop_body
        %v990 = vld [vmem:[%s988] sm:%s981]
        %991 = vst [vmem:[%s989] sm:%s981] %v990
      $region588: #{tpu_custom_call.1} parent=582 // loop_footer
        %s987 = sadd.s32 1, %s983
      $region589: #{tpu_custom_call.1} parent=582 // loop_footer_branch
        %982 = sbr.rel target = $region585
      $region590: #{tpu_custom_call.1} parent=582 // loop_exit
        _
    $region583: #{tpu_custom_call.1} parent=1 // pred_fallthru
      _
    // Predicated region
    $region602: #{tpu_custom_call.1} parent=1 // pred_check
      _
    $region603: #{tpu_custom_call.1} parent=1 // pred_check_branch
      %1016 = sbr.rel (0) target = $region605
    $region604: #{tpu_custom_call.1} parent=1 // pred_region
      %1017 = vsyncadd %s821, 16
    $region605: #{tpu_custom_call.1} parent=1 // pred_fallthru
      _
    %s1018 = sadd.s32 %s17, 34
    %s1019 = sld [smem:[#allocation5 + %s1018]]
    %s1020 = scalar_lea.vmem %s2, %s1019
    %s1021 = scalar_lea.vmem [#allocation2], 20
    %p1023 = scmp.lt.u32.totalorder 1, 8
    %p1024 = pneg %p1023
    // Predicated region
    $region606: #{tpu_custom_call.1} parent=1 // pred_check
      _
    $region607: #{tpu_custom_call.1} parent=1 // pred_check_branch
      %1026 = sbr.rel (%p1023) target = $region609
    $region608: #{tpu_custom_call.1} parent=1 // pred_region
      %s1042 = sand.u32 1, 7
      %p1043 = scmp.eq.s32.totalorder %s1042, 0
      %p1044 = pneg %p1043
      // Predicated region
      $region621: #{tpu_custom_call.1} parent=608 // pred_check
        _
      $region622: #{tpu_custom_call.1} parent=608 // pred_check_branch
        %1046 = sbr.rel (%p1043) target = $region624
      $region623: #{tpu_custom_call.1} parent=608 // pred_region
        %s1047 = sand.u32 1, 7
        %s1048 = ssub.s32 1, %s1047
        %s1049 = scalar_lea.vmem %s1020, %s1048
        %s1050 = ssub.s32 1, %s1047
        %s1051 = scalar_lea.vmem %s1021, %s1050 [#allocation2]
        %s1052 = sshll.u32 1, %s1047
        %s1053 = ssub.s32 %s1052, 1
        loop: start=0, step=1, limit=1
        $region625: #{tpu_custom_call.1} parent=623 // loop_pre_header
          _
        $region626: #{tpu_custom_call.1} parent=623 // loop_header
          %s1055 = sphi 0, %s1059
          %p1056 = scmp.ge.s32.totalorder %s1055, 1
          %s1060 = sphi %s1049, %s1049
          %s1061 = sphi %s1051, %s1051
        $region627: #{tpu_custom_call.1} parent=623 // loop_header_branch
          %1058 = sbr.rel (%p1056) target = $region631
        $region628: #{tpu_custom_call.1} parent=623 // loop_body
          %v1062 = vld [vmem:[%s1060] sm:%s1053]
          %1063 = vst [vmem:[%s1061] sm:%s1053] %v1062
        $region629: #{tpu_custom_call.1} parent=623 // loop_footer
          %s1059 = sadd.s32 1, %s1055
        $region630: #{tpu_custom_call.1} parent=623 // loop_footer_branch
          %1054 = sbr.rel target = $region626
        $region631: #{tpu_custom_call.1} parent=623 // loop_exit
          _
      $region624: #{tpu_custom_call.1} parent=608 // pred_fallthru
        _
    $region609: #{tpu_custom_call.1} parent=1 // pred_fallthru
      _
    // Predicated region
    $region610: #{tpu_custom_call.1} parent=1 // pred_check
      %p1027 = pneg %p1023
    $region611: #{tpu_custom_call.1} parent=1 // pred_check_branch
      %1029 = sbr.rel (%p1027) target = $region613
    $region612: #{tpu_custom_call.1} parent=1 // pred_region
      %s1030 = sshll.u32 1, 1
      %s1031 = ssub.s32 %s1030, 1
      loop: start=0, step=1, limit=1
      $region614: #{tpu_custom_call.1} parent=612 // loop_pre_header
        _
      $region615: #{tpu_custom_call.1} parent=612 // loop_header
        %s1033 = sphi 0, %s1037
        %p1034 = scmp.ge.s32.totalorder %s1033, 1
        %s1038 = sphi %s1020, %s1020
        %s1039 = sphi %s1021, %s1021
      $region616: #{tpu_custom_call.1} parent=612 // loop_header_branch
        %1036 = sbr.rel (%p1034) target = $region620
      $region617: #{tpu_custom_call.1} parent=612 // loop_body
        %v1040 = vld [vmem:[%s1038] sm:%s1031]
        %1041 = vst [vmem:[%s1039] sm:%s1031] %v1040
      $region618: #{tpu_custom_call.1} parent=612 // loop_footer
        %s1037 = sadd.s32 1, %s1033
      $region619: #{tpu_custom_call.1} parent=612 // loop_footer_branch
        %1032 = sbr.rel target = $region615
      $region620: #{tpu_custom_call.1} parent=612 // loop_exit
        _
    $region613: #{tpu_custom_call.1} parent=1 // pred_fallthru
      _
    // Predicated region
    $region632: #{tpu_custom_call.1} parent=1 // pred_check
      _
    $region633: #{tpu_custom_call.1} parent=1 // pred_check_branch
      %1066 = sbr.rel (0) target = $region635
    $region634: #{tpu_custom_call.1} parent=1 // pred_region
      %1067 = vsyncadd %s821, 16
    $region635: #{tpu_custom_call.1} parent=1 // pred_fallthru
      _
    %s1068 = sadd.s32 %s17, 42
    %s1069 = sld [smem:[#allocation5 + %s1068]]
    %s1070 = scalar_lea.vmem %s2, %s1069
    %s1071 = scalar_lea.vmem [#allocation2], 21
    %p1073 = scmp.lt.u32.totalorder 1, 8
    %p1074 = pneg %p1073
    // Predicated region
    $region636: #{tpu_custom_call.1} parent=1 // pred_check
      _
    $region637: #{tpu_custom_call.1} parent=1 // pred_check_branch
      %1076 = sbr.rel (%p1073) target = $region639
    $region638: #{tpu_custom_call.1} parent=1 // pred_region
      %s1092 = sand.u32 1, 7
      %p1093 = scmp.eq.s32.totalorder %s1092, 0
      %p1094 = pneg %p1093
      // Predicated region
      $region651: #{tpu_custom_call.1} parent=638 // pred_check
        _
      $region652: #{tpu_custom_call.1} parent=638 // pred_check_branch
        %1096 = sbr.rel (%p1093) target = $region654
      $region653: #{tpu_custom_call.1} parent=638 // pred_region
        %s1097 = sand.u32 1, 7
        %s1098 = ssub.s32 1, %s1097
        %s1099 = scalar_lea.vmem %s1070, %s1098
        %s1100 = ssub.s32 1, %s1097
        %s1101 = scalar_lea.vmem %s1071, %s1100 [#allocation2]
        %s1102 = sshll.u32 1, %s1097
        %s1103 = ssub.s32 %s1102, 1
        loop: start=0, step=1, limit=1
        $region655: #{tpu_custom_call.1} parent=653 // loop_pre_header
          _
        $region656: #{tpu_custom_call.1} parent=653 // loop_header
          %s1105 = sphi 0, %s1109
          %p1106 = scmp.ge.s32.totalorder %s1105, 1
          %s1110 = sphi %s1099, %s1099
          %s1111 = sphi %s1101, %s1101
        $region657: #{tpu_custom_call.1} parent=653 // loop_header_branch
          %1108 = sbr.rel (%p1106) target = $region661
        $region658: #{tpu_custom_call.1} parent=653 // loop_body
          %v1112 = vld [vmem:[%s1110] sm:%s1103]
          %1113 = vst [vmem:[%s1111] sm:%s1103] %v1112
        $region659: #{tpu_custom_call.1} parent=653 // loop_footer
          %s1109 = sadd.s32 1, %s1105
        $region660: #{tpu_custom_call.1} parent=653 // loop_footer_branch
          %1104 = sbr.rel target = $region656
        $region661: #{tpu_custom_call.1} parent=653 // loop_exit
          _
      $region654: #{tpu_custom_call.1} parent=638 // pred_fallthru
        _
    $region639: #{tpu_custom_call.1} parent=1 // pred_fallthru
      _
    // Predicated region
    $region640: #{tpu_custom_call.1} parent=1 // pred_check
      %p1077 = pneg %p1073
    $region641: #{tpu_custom_call.1} parent=1 // pred_check_branch
      %1079 = sbr.rel (%p1077) target = $region643
    $region642: #{tpu_custom_call.1} parent=1 // pred_region
      %s1080 = sshll.u32 1, 1
      %s1081 = ssub.s32 %s1080, 1
      loop: start=0, step=1, limit=1
      $region644: #{tpu_custom_call.1} parent=642 // loop_pre_header
        _
      $region645: #{tpu_custom_call.1} parent=642 // loop_header
        %s1083 = sphi 0, %s1087
        %p1084 = scmp.ge.s32.totalorder %s1083, 1
        %s1088 = sphi %s1070, %s1070
        %s1089 = sphi %s1071, %s1071
      $region646: #{tpu_custom_call.1} parent=642 // loop_header_branch
        %1086 = sbr.rel (%p1084) target = $region650
      $region647: #{tpu_custom_call.1} parent=642 // loop_body
        %v1090 = vld [vmem:[%s1088] sm:%s1081]
        %1091 = vst [vmem:[%s1089] sm:%s1081] %v1090
      $region648: #{tpu_custom_call.1} parent=642 // loop_footer
        %s1087 = sadd.s32 1, %s1083
      $region649: #{tpu_custom_call.1} parent=642 // loop_footer_branch
        %1082 = sbr.rel target = $region645
      $region650: #{tpu_custom_call.1} parent=642 // loop_exit
        _
    $region643: #{tpu_custom_call.1} parent=1 // pred_fallthru
      _
    // Predicated region
    $region662: #{tpu_custom_call.1} parent=1 // pred_check
      _
    $region663: #{tpu_custom_call.1} parent=1 // pred_check_branch
      %1116 = sbr.rel (0) target = $region665
    $region664: #{tpu_custom_call.1} parent=1 // pred_region
      %1117 = vsyncadd %s821, 16
    $region665: #{tpu_custom_call.1} parent=1 // pred_fallthru
      _
    %s1118 = sadd.s32 %s17, 50
    %s1119 = sld [smem:[#allocation5 + %s1118]]
    %s1120 = scalar_lea.vmem %s2, %s1119
    %s1121 = scalar_lea.vmem [#allocation2], 22
    %p1123 = scmp.lt.u32.totalorder 1, 8
    %p1124 = pneg %p1123
    // Predicated region
    $region666: #{tpu_custom_call.1} parent=1 // pred_check
      _
    $region667: #{tpu_custom_call.1} parent=1 // pred_check_branch
      %1126 = sbr.rel (%p1123) target = $region669
    $region668: #{tpu_custom_call.1} parent=1 // pred_region
      %s1142 = sand.u32 1, 7
      %p1143 = scmp.eq.s32.totalorder %s1142, 0
      %p1144 = pneg %p1143
      // Predicated region
      $region681: #{tpu_custom_call.1} parent=668 // pred_check
        _
      $region682: #{tpu_custom_call.1} parent=668 // pred_check_branch
        %1146 = sbr.rel (%p1143) target = $region684
      $region683: #{tpu_custom_call.1} parent=668 // pred_region
        %s1147 = sand.u32 1, 7
        %s1148 = ssub.s32 1, %s1147
        %s1149 = scalar_lea.vmem %s1120, %s1148
        %s1150 = ssub.s32 1, %s1147
        %s1151 = scalar_lea.vmem %s1121, %s1150 [#allocation2]
        %s1152 = sshll.u32 1, %s1147
        %s1153 = ssub.s32 %s1152, 1
        loop: start=0, step=1, limit=1
        $region685: #{tpu_custom_call.1} parent=683 // loop_pre_header
          _
        $region686: #{tpu_custom_call.1} parent=683 // loop_header
          %s1155 = sphi 0, %s1159
          %p1156 = scmp.ge.s32.totalorder %s1155, 1
          %s1160 = sphi %s1149, %s1149
          %s1161 = sphi %s1151, %s1151
        $region687: #{tpu_custom_call.1} parent=683 // loop_header_branch
          %1158 = sbr.rel (%p1156) target = $region691
        $region688: #{tpu_custom_call.1} parent=683 // loop_body
          %v1162 = vld [vmem:[%s1160] sm:%s1153]
          %1163 = vst [vmem:[%s1161] sm:%s1153] %v1162
        $region689: #{tpu_custom_call.1} parent=683 // loop_footer
          %s1159 = sadd.s32 1, %s1155
        $region690: #{tpu_custom_call.1} parent=683 // loop_footer_branch
          %1154 = sbr.rel target = $region686
        $region691: #{tpu_custom_call.1} parent=683 // loop_exit
          _
      $region684: #{tpu_custom_call.1} parent=668 // pred_fallthru
        _
    $region669: #{tpu_custom_call.1} parent=1 // pred_fallthru
      _
    // Predicated region
    $region670: #{tpu_custom_call.1} parent=1 // pred_check
      %p1127 = pneg %p1123
    $region671: #{tpu_custom_call.1} parent=1 // pred_check_branch
      %1129 = sbr.rel (%p1127) target = $region673
    $region672: #{tpu_custom_call.1} parent=1 // pred_region
      %s1130 = sshll.u32 1, 1
      %s1131 = ssub.s32 %s1130, 1
      loop: start=0, step=1, limit=1
      $region674: #{tpu_custom_call.1} parent=672 // loop_pre_header
        _
      $region675: #{tpu_custom_call.1} parent=672 // loop_header
        %s1133 = sphi 0, %s1137
        %p1134 = scmp.ge.s32.totalorder %s1133, 1
        %s1138 = sphi %s1120, %s1120
        %s1139 = sphi %s1121, %s1121
      $region676: #{tpu_custom_call.1} parent=672 // loop_header_branch
        %1136 = sbr.rel (%p1134) target = $region680
      $region677: #{tpu_custom_call.1} parent=672 // loop_body
        %v1140 = vld [vmem:[%s1138] sm:%s1131]
        %1141 = vst [vmem:[%s1139] sm:%s1131] %v1140
      $region678: #{tpu_custom_call.1} parent=672 // loop_footer
        %s1137 = sadd.s32 1, %s1133
      $region679: #{tpu_custom_call.1} parent=672 // loop_footer_branch
        %1132 = sbr.rel target = $region675
      $region680: #{tpu_custom_call.1} parent=672 // loop_exit
        _
    $region673: #{tpu_custom_call.1} parent=1 // pred_fallthru
      _
    // Predicated region
    $region692: #{tpu_custom_call.1} parent=1 // pred_check
      _
    $region693: #{tpu_custom_call.1} parent=1 // pred_check_branch
      %1166 = sbr.rel (0) target = $region695
    $region694: #{tpu_custom_call.1} parent=1 // pred_region
      %1167 = vsyncadd %s821, 16
    $region695: #{tpu_custom_call.1} parent=1 // pred_fallthru
      _
    %s1168 = sadd.s32 %s17, 58
    %s1169 = sld [smem:[#allocation5 + %s1168]]
    %s1170 = scalar_lea.vmem %s2, %s1169
    %s1171 = scalar_lea.vmem [#allocation2], 23
    %p1173 = scmp.lt.u32.totalorder 1, 8
    %p1174 = pneg %p1173
    // Predicated region
    $region696: #{tpu_custom_call.1} parent=1 // pred_check
      _
    $region697: #{tpu_custom_call.1} parent=1 // pred_check_branch
      %1176 = sbr.rel (%p1173) target = $region699
    $region698: #{tpu_custom_call.1} parent=1 // pred_region
      %s1192 = sand.u32 1, 7
      %p1193 = scmp.eq.s32.totalorder %s1192, 0
      %p1194 = pneg %p1193
      // Predicated region
      $region711: #{tpu_custom_call.1} parent=698 // pred_check
        _
      $region712: #{tpu_custom_call.1} parent=698 // pred_check_branch
        %1196 = sbr.rel (%p1193) target = $region714
      $region713: #{tpu_custom_call.1} parent=698 // pred_region
        %s1197 = sand.u32 1, 7
        %s1198 = ssub.s32 1, %s1197
        %s1199 = scalar_lea.vmem %s1170, %s1198
        %s1200 = ssub.s32 1, %s1197
        %s1201 = scalar_lea.vmem %s1171, %s1200 [#allocation2]
        %s1202 = sshll.u32 1, %s1197
        %s1203 = ssub.s32 %s1202, 1
        loop: start=0, step=1, limit=1
        $region715: #{tpu_custom_call.1} parent=713 // loop_pre_header
          _
        $region716: #{tpu_custom_call.1} parent=713 // loop_header
          %s1205 = sphi 0, %s1209
          %p1206 = scmp.ge.s32.totalorder %s1205, 1
          %s1210 = sphi %s1199, %s1199
          %s1211 = sphi %s1201, %s1201
        $region717: #{tpu_custom_call.1} parent=713 // loop_header_branch
          %1208 = sbr.rel (%p1206) target = $region721
        $region718: #{tpu_custom_call.1} parent=713 // loop_body
          %v1212 = vld [vmem:[%s1210] sm:%s1203]
          %1213 = vst [vmem:[%s1211] sm:%s1203] %v1212
        $region719: #{tpu_custom_call.1} parent=713 // loop_footer
          %s1209 = sadd.s32 1, %s1205
        $region720: #{tpu_custom_call.1} parent=713 // loop_footer_branch
          %1204 = sbr.rel target = $region716
        $region721: #{tpu_custom_call.1} parent=713 // loop_exit
          _
      $region714: #{tpu_custom_call.1} parent=698 // pred_fallthru
        _
    $region699: #{tpu_custom_call.1} parent=1 // pred_fallthru
      _
    // Predicated region
    $region700: #{tpu_custom_call.1} parent=1 // pred_check
      %p1177 = pneg %p1173
    $region701: #{tpu_custom_call.1} parent=1 // pred_check_branch
      %1179 = sbr.rel (%p1177) target = $region703
    $region702: #{tpu_custom_call.1} parent=1 // pred_region
      %s1180 = sshll.u32 1, 1
      %s1181 = ssub.s32 %s1180, 1
      loop: start=0, step=1, limit=1
      $region704: #{tpu_custom_call.1} parent=702 // loop_pre_header
        _
      $region705: #{tpu_custom_call.1} parent=702 // loop_header
        %s1183 = sphi 0, %s1187
        %p1184 = scmp.ge.s32.totalorder %s1183, 1
        %s1188 = sphi %s1170, %s1170
        %s1189 = sphi %s1171, %s1171
      $region706: #{tpu_custom_call.1} parent=702 // loop_header_branch
        %1186 = sbr.rel (%p1184) target = $region710
      $region707: #{tpu_custom_call.1} parent=702 // loop_body
        %v1190 = vld [vmem:[%s1188] sm:%s1181]
        %1191 = vst [vmem:[%s1189] sm:%s1181] %v1190
      $region708: #{tpu_custom_call.1} parent=702 // loop_footer
        %s1187 = sadd.s32 1, %s1183
      $region709: #{tpu_custom_call.1} parent=702 // loop_footer_branch
        %1182 = sbr.rel target = $region705
      $region710: #{tpu_custom_call.1} parent=702 // loop_exit
        _
    $region703: #{tpu_custom_call.1} parent=1 // pred_fallthru
      _
    // Predicated region
    $region722: #{tpu_custom_call.1} parent=1 // pred_check
      _
    $region723: #{tpu_custom_call.1} parent=1 // pred_check_branch
      %1216 = sbr.rel (0) target = $region725
    $region724: #{tpu_custom_call.1} parent=1 // pred_region
      %1217 = vsyncadd %s821, 16
    $region725: #{tpu_custom_call.1} parent=1 // pred_fallthru
      _
    %s1218 = sadd.s32 %s17, 3
    %s1219 = sld [smem:[#allocation5 + %s1218]]
    %s1220 = scalar_lea.vmem %s2, %s1219
    %s1221 = scalar_lea.vmem [#allocation2], 24
    %s1222 = scalar_lea.sflag [#allocation3], 3
    %p1224 = scmp.lt.u32.totalorder 1, 8
    %p1225 = pneg %p1224
    // Predicated region
    $region726: #{tpu_custom_call.1} parent=1 // pred_check
      _
    $region727: #{tpu_custom_call.1} parent=1 // pred_check_branch
      %1227 = sbr.rel (%p1224) target = $region729
    $region728: #{tpu_custom_call.1} parent=1 // pred_region
      %s1243 = sand.u32 1, 7
      %p1244 = scmp.eq.s32.totalorder %s1243, 0
      %p1245 = pneg %p1244
      // Predicated region
      $region741: #{tpu_custom_call.1} parent=728 // pred_check
        _
      $region742: #{tpu_custom_call.1} parent=728 // pred_check_branch
        %1247 = sbr.rel (%p1244) target = $region744
      $region743: #{tpu_custom_call.1} parent=728 // pred_region
        %s1248 = sand.u32 1, 7
        %s1249 = ssub.s32 1, %s1248
        %s1250 = scalar_lea.vmem %s1220, %s1249
        %s1251 = ssub.s32 1, %s1248
        %s1252 = scalar_lea.vmem %s1221, %s1251 [#allocation2]
        %s1253 = sshll.u32 1, %s1248
        %s1254 = ssub.s32 %s1253, 1
        loop: start=0, step=1, limit=1
        $region745: #{tpu_custom_call.1} parent=743 // loop_pre_header
          _
        $region746: #{tpu_custom_call.1} parent=743 // loop_header
          %s1256 = sphi 0, %s1260
          %p1257 = scmp.ge.s32.totalorder %s1256, 1
          %s1261 = sphi %s1250, %s1250
          %s1262 = sphi %s1252, %s1252
        $region747: #{tpu_custom_call.1} parent=743 // loop_header_branch
          %1259 = sbr.rel (%p1257) target = $region751
        $region748: #{tpu_custom_call.1} parent=743 // loop_body
          %v1263 = vld [vmem:[%s1261] sm:%s1254]
          %1264 = vst [vmem:[%s1262] sm:%s1254] %v1263
        $region749: #{tpu_custom_call.1} parent=743 // loop_footer
          %s1260 = sadd.s32 1, %s1256
        $region750: #{tpu_custom_call.1} parent=743 // loop_footer_branch
          %1255 = sbr.rel target = $region746
        $region751: #{tpu_custom_call.1} parent=743 // loop_exit
          _
      $region744: #{tpu_custom_call.1} parent=728 // pred_fallthru
        _
    $region729: #{tpu_custom_call.1} parent=1 // pred_fallthru
      _
    // Predicated region
    $region730: #{tpu_custom_call.1} parent=1 // pred_check
      %p1228 = pneg %p1224
    $region731: #{tpu_custom_call.1} parent=1 // pred_check_branch
      %1230 = sbr.rel (%p1228) target = $region733
    $region732: #{tpu_custom_call.1} parent=1 // pred_region
      %s1231 = sshll.u32 1, 1
      %s1232 = ssub.s32 %s1231, 1
      loop: start=0, step=1, limit=1
      $region734: #{tpu_custom_call.1} parent=732 // loop_pre_header
        _
      $region735: #{tpu_custom_call.1} parent=732 // loop_header
        %s1234 = sphi 0, %s1238
        %p1235 = scmp.ge.s32.totalorder %s1234, 1
        %s1239 = sphi %s1220, %s1220
        %s1240 = sphi %s1221, %s1221
      $region736: #{tpu_custom_call.1} parent=732 // loop_header_branch
        %1237 = sbr.rel (%p1235) target = $region740
      $region737: #{tpu_custom_call.1} parent=732 // loop_body
        %v1241 = vld [vmem:[%s1239] sm:%s1232]
        %1242 = vst [vmem:[%s1240] sm:%s1232] %v1241
      $region738: #{tpu_custom_call.1} parent=732 // loop_footer
        %s1238 = sadd.s32 1, %s1234
      $region739: #{tpu_custom_call.1} parent=732 // loop_footer_branch
        %1233 = sbr.rel target = $region735
      $region740: #{tpu_custom_call.1} parent=732 // loop_exit
        _
    $region733: #{tpu_custom_call.1} parent=1 // pred_fallthru
      _
    // Predicated region
    $region752: #{tpu_custom_call.1} parent=1 // pred_check
      _
    $region753: #{tpu_custom_call.1} parent=1 // pred_check_branch
      %1267 = sbr.rel (0) target = $region755
    $region754: #{tpu_custom_call.1} parent=1 // pred_region
      %1268 = vsyncadd %s1222, 16
    $region755: #{tpu_custom_call.1} parent=1 // pred_fallthru
      _
    %s1269 = sadd.s32 %s17, 11
    %s1270 = sld [smem:[#allocation5 + %s1269]]
    %s1271 = scalar_lea.vmem %s2, %s1270
    %s1272 = scalar_lea.vmem [#allocation2], 25
    %p1274 = scmp.lt.u32.totalorder 1, 8
    %p1275 = pneg %p1274
    // Predicated region
    $region756: #{tpu_custom_call.1} parent=1 // pred_check
      _
    $region757: #{tpu_custom_call.1} parent=1 // pred_check_branch
      %1277 = sbr.rel (%p1274) target = $region759
    $region758: #{tpu_custom_call.1} parent=1 // pred_region
      %s1293 = sand.u32 1, 7
      %p1294 = scmp.eq.s32.totalorder %s1293, 0
      %p1295 = pneg %p1294
      // Predicated region
      $region771: #{tpu_custom_call.1} parent=758 // pred_check
        _
      $region772: #{tpu_custom_call.1} parent=758 // pred_check_branch
        %1297 = sbr.rel (%p1294) target = $region774
      $region773: #{tpu_custom_call.1} parent=758 // pred_region
        %s1298 = sand.u32 1, 7
        %s1299 = ssub.s32 1, %s1298
        %s1300 = scalar_lea.vmem %s1271, %s1299
        %s1301 = ssub.s32 1, %s1298
        %s1302 = scalar_lea.vmem %s1272, %s1301 [#allocation2]
        %s1303 = sshll.u32 1, %s1298
        %s1304 = ssub.s32 %s1303, 1
        loop: start=0, step=1, limit=1
        $region775: #{tpu_custom_call.1} parent=773 // loop_pre_header
          _
        $region776: #{tpu_custom_call.1} parent=773 // loop_header
          %s1306 = sphi 0, %s1310
          %p1307 = scmp.ge.s32.totalorder %s1306, 1
          %s1311 = sphi %s1300, %s1300
          %s1312 = sphi %s1302, %s1302
        $region777: #{tpu_custom_call.1} parent=773 // loop_header_branch
          %1309 = sbr.rel (%p1307) target = $region781
        $region778: #{tpu_custom_call.1} parent=773 // loop_body
          %v1313 = vld [vmem:[%s1311] sm:%s1304]
          %1314 = vst [vmem:[%s1312] sm:%s1304] %v1313
        $region779: #{tpu_custom_call.1} parent=773 // loop_footer
          %s1310 = sadd.s32 1, %s1306
        $region780: #{tpu_custom_call.1} parent=773 // loop_footer_branch
          %1305 = sbr.rel target = $region776
        $region781: #{tpu_custom_call.1} parent=773 // loop_exit
          _
      $region774: #{tpu_custom_call.1} parent=758 // pred_fallthru
        _
    $region759: #{tpu_custom_call.1} parent=1 // pred_fallthru
      _
    // Predicated region
    $region760: #{tpu_custom_call.1} parent=1 // pred_check
      %p1278 = pneg %p1274
    $region761: #{tpu_custom_call.1} parent=1 // pred_check_branch
      %1280 = sbr.rel (%p1278) target = $region763
    $region762: #{tpu_custom_call.1} parent=1 // pred_region
      %s1281 = sshll.u32 1, 1
      %s1282 = ssub.s32 %s1281, 1
      loop: start=0, step=1, limit=1
      $region764: #{tpu_custom_call.1} parent=762 // loop_pre_header
        _
      $region765: #{tpu_custom_call.1} parent=762 // loop_header
        %s1284 = sphi 0, %s1288
        %p1285 = scmp.ge.s32.totalorder %s1284, 1
        %s1289 = sphi %s1271, %s1271
        %s1290 = sphi %s1272, %s1272
      $region766: #{tpu_custom_call.1} parent=762 // loop_header_branch
        %1287 = sbr.rel (%p1285) target = $region770
      $region767: #{tpu_custom_call.1} parent=762 // loop_body
        %v1291 = vld [vmem:[%s1289] sm:%s1282]
        %1292 = vst [vmem:[%s1290] sm:%s1282] %v1291
      $region768: #{tpu_custom_call.1} parent=762 // loop_footer
        %s1288 = sadd.s32 1, %s1284
      $region769: #{tpu_custom_call.1} parent=762 // loop_footer_branch
        %1283 = sbr.rel target = $region765
      $region770: #{tpu_custom_call.1} parent=762 // loop_exit
        _
    $region763: #{tpu_custom_call.1} parent=1 // pred_fallthru
      _
    // Predicated region
    $region782: #{tpu_custom_call.1} parent=1 // pred_check
      _
    $region783: #{tpu_custom_call.1} parent=1 // pred_check_branch
      %1317 = sbr.rel (0) target = $region785
    $region784: #{tpu_custom_call.1} parent=1 // pred_region
      %1318 = vsyncadd %s1222, 16
    $region785: #{tpu_custom_call.1} parent=1 // pred_fallthru
      _
    %s1319 = sadd.s32 %s17, 19
    %s1320 = sld [smem:[#allocation5 + %s1319]]
    %s1321 = scalar_lea.vmem %s2, %s1320
    %s1322 = scalar_lea.vmem [#allocation2], 26
    %p1324 = scmp.lt.u32.totalorder 1, 8
    %p1325 = pneg %p1324
    // Predicated region
    $region786: #{tpu_custom_call.1} parent=1 // pred_check
      _
    $region787: #{tpu_custom_call.1} parent=1 // pred_check_branch
      %1327 = sbr.rel (%p1324) target = $region789
    $region788: #{tpu_custom_call.1} parent=1 // pred_region
      %s1343 = sand.u32 1, 7
      %p1344 = scmp.eq.s32.totalorder %s1343, 0
      %p1345 = pneg %p1344
      // Predicated region
      $region801: #{tpu_custom_call.1} parent=788 // pred_check
        _
      $region802: #{tpu_custom_call.1} parent=788 // pred_check_branch
        %1347 = sbr.rel (%p1344) target = $region804
      $region803: #{tpu_custom_call.1} parent=788 // pred_region
        %s1348 = sand.u32 1, 7
        %s1349 = ssub.s32 1, %s1348
        %s1350 = scalar_lea.vmem %s1321, %s1349
        %s1351 = ssub.s32 1, %s1348
        %s1352 = scalar_lea.vmem %s1322, %s1351 [#allocation2]
        %s1353 = sshll.u32 1, %s1348
        %s1354 = ssub.s32 %s1353, 1
        loop: start=0, step=1, limit=1
        $region805: #{tpu_custom_call.1} parent=803 // loop_pre_header
          _
        $region806: #{tpu_custom_call.1} parent=803 // loop_header
          %s1356 = sphi 0, %s1360
          %p1357 = scmp.ge.s32.totalorder %s1356, 1
          %s1361 = sphi %s1350, %s1350
          %s1362 = sphi %s1352, %s1352
        $region807: #{tpu_custom_call.1} parent=803 // loop_header_branch
          %1359 = sbr.rel (%p1357) target = $region811
        $region808: #{tpu_custom_call.1} parent=803 // loop_body
          %v1363 = vld [vmem:[%s1361] sm:%s1354]
          %1364 = vst [vmem:[%s1362] sm:%s1354] %v1363
        $region809: #{tpu_custom_call.1} parent=803 // loop_footer
          %s1360 = sadd.s32 1, %s1356
        $region810: #{tpu_custom_call.1} parent=803 // loop_footer_branch
          %1355 = sbr.rel target = $region806
        $region811: #{tpu_custom_call.1} parent=803 // loop_exit
          _
      $region804: #{tpu_custom_call.1} parent=788 // pred_fallthru
        _
    $region789: #{tpu_custom_call.1} parent=1 // pred_fallthru
      _
    // Predicated region
    $region790: #{tpu_custom_call.1} parent=1 // pred_check
      %p1328 = pneg %p1324
    $region791: #{tpu_custom_call.1} parent=1 // pred_check_branch
      %1330 = sbr.rel (%p1328) target = $region793
    $region792: #{tpu_custom_call.1} parent=1 // pred_region
      %s1331 = sshll.u32 1, 1
      %s1332 = ssub.s32 %s1331, 1
      loop: start=0, step=1, limit=1
      $region794: #{tpu_custom_call.1} parent=792 // loop_pre_header
        _
      $region795: #{tpu_custom_call.1} parent=792 // loop_header
        %s1334 = sphi 0, %s1338
        %p1335 = scmp.ge.s32.totalorder %s1334, 1
        %s1339 = sphi %s1321, %s1321
        %s1340 = sphi %s1322, %s1322
      $region796: #{tpu_custom_call.1} parent=792 // loop_header_branch
        %1337 = sbr.rel (%p1335) target = $region800
      $region797: #{tpu_custom_call.1} parent=792 // loop_body
        %v1341 = vld [vmem:[%s1339] sm:%s1332]
        %1342 = vst [vmem:[%s1340] sm:%s1332] %v1341
      $region798: #{tpu_custom_call.1} parent=792 // loop_footer
        %s1338 = sadd.s32 1, %s1334
      $region799: #{tpu_custom_call.1} parent=792 // loop_footer_branch
        %1333 = sbr.rel target = $region795
      $region800: #{tpu_custom_call.1} parent=792 // loop_exit
        _
    $region793: #{tpu_custom_call.1} parent=1 // pred_fallthru
      _
    // Predicated region
    $region812: #{tpu_custom_call.1} parent=1 // pred_check
      _
    $region813: #{tpu_custom_call.1} parent=1 // pred_check_branch
      %1367 = sbr.rel (0) target = $region815
    $region814: #{tpu_custom_call.1} parent=1 // pred_region
      %1368 = vsyncadd %s1222, 16
    $region815: #{tpu_custom_call.1} parent=1 // pred_fallthru
      _
    %s1369 = sadd.s32 %s17, 27
    %s1370 = sld [smem:[#allocation5 + %s1369]]
    %s1371 = scalar_lea.vmem %s2, %s1370
    %s1372 = scalar_lea.vmem [#allocation2], 27
    %p1374 = scmp.lt.u32.totalorder 1, 8
    %p1375 = pneg %p1374
    // Predicated region
    $region816: #{tpu_custom_call.1} parent=1 // pred_check
      _
    $region817: #{tpu_custom_call.1} parent=1 // pred_check_branch
      %1377 = sbr.rel (%p1374) target = $region819
    $region818: #{tpu_custom_call.1} parent=1 // pred_region
      %s1393 = sand.u32 1, 7
      %p1394 = scmp.eq.s32.totalorder %s1393, 0
      %p1395 = pneg %p1394
      // Predicated region
      $region831: #{tpu_custom_call.1} parent=818 // pred_check
        _
      $region832: #{tpu_custom_call.1} parent=818 // pred_check_branch
        %1397 = sbr.rel (%p1394) target = $region834
      $region833: #{tpu_custom_call.1} parent=818 // pred_region
        %s1398 = sand.u32 1, 7
        %s1399 = ssub.s32 1, %s1398
        %s1400 = scalar_lea.vmem %s1371, %s1399
        %s1401 = ssub.s32 1, %s1398
        %s1402 = scalar_lea.vmem %s1372, %s1401 [#allocation2]
        %s1403 = sshll.u32 1, %s1398
        %s1404 = ssub.s32 %s1403, 1
        loop: start=0, step=1, limit=1
        $region835: #{tpu_custom_call.1} parent=833 // loop_pre_header
          _
        $region836: #{tpu_custom_call.1} parent=833 // loop_header
          %s1406 = sphi 0, %s1410
          %p1407 = scmp.ge.s32.totalorder %s1406, 1
          %s1411 = sphi %s1400, %s1400
          %s1412 = sphi %s1402, %s1402
        $region837: #{tpu_custom_call.1} parent=833 // loop_header_branch
          %1409 = sbr.rel (%p1407) target = $region841
        $region838: #{tpu_custom_call.1} parent=833 // loop_body
          %v1413 = vld [vmem:[%s1411] sm:%s1404]
          %1414 = vst [vmem:[%s1412] sm:%s1404] %v1413
        $region839: #{tpu_custom_call.1} parent=833 // loop_footer
          %s1410 = sadd.s32 1, %s1406
        $region840: #{tpu_custom_call.1} parent=833 // loop_footer_branch
          %1405 = sbr.rel target = $region836
        $region841: #{tpu_custom_call.1} parent=833 // loop_exit
          _
      $region834: #{tpu_custom_call.1} parent=818 // pred_fallthru
        _
    $region819: #{tpu_custom_call.1} parent=1 // pred_fallthru
      _
    // Predicated region
    $region820: #{tpu_custom_call.1} parent=1 // pred_check
      %p1378 = pneg %p1374
    $region821: #{tpu_custom_call.1} parent=1 // pred_check_branch
      %1380 = sbr.rel (%p1378) target = $region823
    $region822: #{tpu_custom_call.1} parent=1 // pred_region
      %s1381 = sshll.u32 1, 1
      %s1382 = ssub.s32 %s1381, 1
      loop: start=0, step=1, limit=1
      $region824: #{tpu_custom_call.1} parent=822 // loop_pre_header
        _
      $region825: #{tpu_custom_call.1} parent=822 // loop_header
        %s1384 = sphi 0, %s1388
        %p1385 = scmp.ge.s32.totalorder %s1384, 1
        %s1389 = sphi %s1371, %s1371
        %s1390 = sphi %s1372, %s1372
      $region826: #{tpu_custom_call.1} parent=822 // loop_header_branch
        %1387 = sbr.rel (%p1385) target = $region830
      $region827: #{tpu_custom_call.1} parent=822 // loop_body
        %v1391 = vld [vmem:[%s1389] sm:%s1382]
        %1392 = vst [vmem:[%s1390] sm:%s1382] %v1391
      $region828: #{tpu_custom_call.1} parent=822 // loop_footer
        %s1388 = sadd.s32 1, %s1384
      $region829: #{tpu_custom_call.1} parent=822 // loop_footer_branch
        %1383 = sbr.rel target = $region825
      $region830: #{tpu_custom_call.1} parent=822 // loop_exit
        _
    $region823: #{tpu_custom_call.1} parent=1 // pred_fallthru
      _
    // Predicated region
    $region842: #{tpu_custom_call.1} parent=1 // pred_check
      _
    $region843: #{tpu_custom_call.1} parent=1 // pred_check_branch
      %1417 = sbr.rel (0) target = $region845
    $region844: #{tpu_custom_call.1} parent=1 // pred_region
      %1418 = vsyncadd %s1222, 16
    $region845: #{tpu_custom_call.1} parent=1 // pred_fallthru
      _
    %s1419 = sadd.s32 %s17, 35
    %s1420 = sld [smem:[#allocation5 + %s1419]]
    %s1421 = scalar_lea.vmem %s2, %s1420
    %s1422 = scalar_lea.vmem [#allocation2], 28
    %p1424 = scmp.lt.u32.totalorder 1, 8
    %p1425 = pneg %p1424
    // Predicated region
    $region846: #{tpu_custom_call.1} parent=1 // pred_check
      _
    $region847: #{tpu_custom_call.1} parent=1 // pred_check_branch
      %1427 = sbr.rel (%p1424) target = $region849
    $region848: #{tpu_custom_call.1} parent=1 // pred_region
      %s1443 = sand.u32 1, 7
      %p1444 = scmp.eq.s32.totalorder %s1443, 0
      %p1445 = pneg %p1444
      // Predicated region
      $region861: #{tpu_custom_call.1} parent=848 // pred_check
        _
      $region862: #{tpu_custom_call.1} parent=848 // pred_check_branch
        %1447 = sbr.rel (%p1444) target = $region864
      $region863: #{tpu_custom_call.1} parent=848 // pred_region
        %s1448 = sand.u32 1, 7
        %s1449 = ssub.s32 1, %s1448
        %s1450 = scalar_lea.vmem %s1421, %s1449
        %s1451 = ssub.s32 1, %s1448
        %s1452 = scalar_lea.vmem %s1422, %s1451 [#allocation2]
        %s1453 = sshll.u32 1, %s1448
        %s1454 = ssub.s32 %s1453, 1
        loop: start=0, step=1, limit=1
        $region865: #{tpu_custom_call.1} parent=863 // loop_pre_header
          _
        $region866: #{tpu_custom_call.1} parent=863 // loop_header
          %s1456 = sphi 0, %s1460
          %p1457 = scmp.ge.s32.totalorder %s1456, 1
          %s1461 = sphi %s1450, %s1450
          %s1462 = sphi %s1452, %s1452
        $region867: #{tpu_custom_call.1} parent=863 // loop_header_branch
          %1459 = sbr.rel (%p1457) target = $region871
        $region868: #{tpu_custom_call.1} parent=863 // loop_body
          %v1463 = vld [vmem:[%s1461] sm:%s1454]
          %1464 = vst [vmem:[%s1462] sm:%s1454] %v1463
        $region869: #{tpu_custom_call.1} parent=863 // loop_footer
          %s1460 = sadd.s32 1, %s1456
        $region870: #{tpu_custom_call.1} parent=863 // loop_footer_branch
          %1455 = sbr.rel target = $region866
        $region871: #{tpu_custom_call.1} parent=863 // loop_exit
          _
      $region864: #{tpu_custom_call.1} parent=848 // pred_fallthru
        _
    $region849: #{tpu_custom_call.1} parent=1 // pred_fallthru
      _
    // Predicated region
    $region850: #{tpu_custom_call.1} parent=1 // pred_check
      %p1428 = pneg %p1424
    $region851: #{tpu_custom_call.1} parent=1 // pred_check_branch
      %1430 = sbr.rel (%p1428) target = $region853
    $region852: #{tpu_custom_call.1} parent=1 // pred_region
      %s1431 = sshll.u32 1, 1
      %s1432 = ssub.s32 %s1431, 1
      loop: start=0, step=1, limit=1
      $region854: #{tpu_custom_call.1} parent=852 // loop_pre_header
        _
      $region855: #{tpu_custom_call.1} parent=852 // loop_header
        %s1434 = sphi 0, %s1438
        %p1435 = scmp.ge.s32.totalorder %s1434, 1
        %s1439 = sphi %s1421, %s1421
        %s1440 = sphi %s1422, %s1422
      $region856: #{tpu_custom_call.1} parent=852 // loop_header_branch
        %1437 = sbr.rel (%p1435) target = $region860
      $region857: #{tpu_custom_call.1} parent=852 // loop_body
        %v1441 = vld [vmem:[%s1439] sm:%s1432]
        %1442 = vst [vmem:[%s1440] sm:%s1432] %v1441
      $region858: #{tpu_custom_call.1} parent=852 // loop_footer
        %s1438 = sadd.s32 1, %s1434
      $region859: #{tpu_custom_call.1} parent=852 // loop_footer_branch
        %1433 = sbr.rel target = $region855
      $region860: #{tpu_custom_call.1} parent=852 // loop_exit
        _
    $region853: #{tpu_custom_call.1} parent=1 // pred_fallthru
      _
    // Predicated region
    $region872: #{tpu_custom_call.1} parent=1 // pred_check
      _
    $region873: #{tpu_custom_call.1} parent=1 // pred_check_branch
      %1467 = sbr.rel (0) target = $region875
    $region874: #{tpu_custom_call.1} parent=1 // pred_region
      %1468 = vsyncadd %s1222, 16
    $region875: #{tpu_custom_call.1} parent=1 // pred_fallthru
      _
    %s1469 = sadd.s32 %s17, 43
    %s1470 = sld [smem:[#allocation5 + %s1469]]
    %s1471 = scalar_lea.vmem %s2, %s1470
    %s1472 = scalar_lea.vmem [#allocation2], 29
    %p1474 = scmp.lt.u32.totalorder 1, 8
    %p1475 = pneg %p1474
    // Predicated region
    $region876: #{tpu_custom_call.1} parent=1 // pred_check
      _
    $region877: #{tpu_custom_call.1} parent=1 // pred_check_branch
      %1477 = sbr.rel (%p1474) target = $region879
    $region878: #{tpu_custom_call.1} parent=1 // pred_region
      %s1493 = sand.u32 1, 7
      %p1494 = scmp.eq.s32.totalorder %s1493, 0
      %p1495 = pneg %p1494
      // Predicated region
      $region891: #{tpu_custom_call.1} parent=878 // pred_check
        _
      $region892: #{tpu_custom_call.1} parent=878 // pred_check_branch
        %1497 = sbr.rel (%p1494) target = $region894
      $region893: #{tpu_custom_call.1} parent=878 // pred_region
        %s1498 = sand.u32 1, 7
        %s1499 = ssub.s32 1, %s1498
        %s1500 = scalar_lea.vmem %s1471, %s1499
        %s1501 = ssub.s32 1, %s1498
        %s1502 = scalar_lea.vmem %s1472, %s1501 [#allocation2]
        %s1503 = sshll.u32 1, %s1498
        %s1504 = ssub.s32 %s1503, 1
        loop: start=0, step=1, limit=1
        $region895: #{tpu_custom_call.1} parent=893 // loop_pre_header
          _
        $region896: #{tpu_custom_call.1} parent=893 // loop_header
          %s1506 = sphi 0, %s1510
          %p1507 = scmp.ge.s32.totalorder %s1506, 1
          %s1511 = sphi %s1500, %s1500
          %s1512 = sphi %s1502, %s1502
        $region897: #{tpu_custom_call.1} parent=893 // loop_header_branch
          %1509 = sbr.rel (%p1507) target = $region901
        $region898: #{tpu_custom_call.1} parent=893 // loop_body
          %v1513 = vld [vmem:[%s1511] sm:%s1504]
          %1514 = vst [vmem:[%s1512] sm:%s1504] %v1513
        $region899: #{tpu_custom_call.1} parent=893 // loop_footer
          %s1510 = sadd.s32 1, %s1506
        $region900: #{tpu_custom_call.1} parent=893 // loop_footer_branch
          %1505 = sbr.rel target = $region896
        $region901: #{tpu_custom_call.1} parent=893 // loop_exit
          _
      $region894: #{tpu_custom_call.1} parent=878 // pred_fallthru
        _
    $region879: #{tpu_custom_call.1} parent=1 // pred_fallthru
      _
    // Predicated region
    $region880: #{tpu_custom_call.1} parent=1 // pred_check
      %p1478 = pneg %p1474
    $region881: #{tpu_custom_call.1} parent=1 // pred_check_branch
      %1480 = sbr.rel (%p1478) target = $region883
    $region882: #{tpu_custom_call.1} parent=1 // pred_region
      %s1481 = sshll.u32 1, 1
      %s1482 = ssub.s32 %s1481, 1
      loop: start=0, step=1, limit=1
      $region884: #{tpu_custom_call.1} parent=882 // loop_pre_header
        _
      $region885: #{tpu_custom_call.1} parent=882 // loop_header
        %s1484 = sphi 0, %s1488
        %p1485 = scmp.ge.s32.totalorder %s1484, 1
        %s1489 = sphi %s1471, %s1471
        %s1490 = sphi %s1472, %s1472
      $region886: #{tpu_custom_call.1} parent=882 // loop_header_branch
        %1487 = sbr.rel (%p1485) target = $region890
      $region887: #{tpu_custom_call.1} parent=882 // loop_body
        %v1491 = vld [vmem:[%s1489] sm:%s1482]
        %1492 = vst [vmem:[%s1490] sm:%s1482] %v1491
      $region888: #{tpu_custom_call.1} parent=882 // loop_footer
        %s1488 = sadd.s32 1, %s1484
      $region889: #{tpu_custom_call.1} parent=882 // loop_footer_branch
        %1483 = sbr.rel target = $region885
      $region890: #{tpu_custom_call.1} parent=882 // loop_exit
        _
    $region883: #{tpu_custom_call.1} parent=1 // pred_fallthru
      _
    // Predicated region
    $region902: #{tpu_custom_call.1} parent=1 // pred_check
      _
    $region903: #{tpu_custom_call.1} parent=1 // pred_check_branch
      %1517 = sbr.rel (0) target = $region905
    $region904: #{tpu_custom_call.1} parent=1 // pred_region
      %1518 = vsyncadd %s1222, 16
    $region905: #{tpu_custom_call.1} parent=1 // pred_fallthru
      _
    %s1519 = sadd.s32 %s17, 51
    %s1520 = sld [smem:[#allocation5 + %s1519]]
    %s1521 = scalar_lea.vmem %s2, %s1520
    %s1522 = scalar_lea.vmem [#allocation2], 30
    %p1524 = scmp.lt.u32.totalorder 1, 8
    %p1525 = pneg %p1524
    // Predicated region
    $region906: #{tpu_custom_call.1} parent=1 // pred_check
      _
    $region907: #{tpu_custom_call.1} parent=1 // pred_check_branch
      %1527 = sbr.rel (%p1524) target = $region909
    $region908: #{tpu_custom_call.1} parent=1 // pred_region
      %s1543 = sand.u32 1, 7
      %p1544 = scmp.eq.s32.totalorder %s1543, 0
      %p1545 = pneg %p1544
      // Predicated region
      $region921: #{tpu_custom_call.1} parent=908 // pred_check
        _
      $region922: #{tpu_custom_call.1} parent=908 // pred_check_branch
        %1547 = sbr.rel (%p1544) target = $region924
      $region923: #{tpu_custom_call.1} parent=908 // pred_region
        %s1548 = sand.u32 1, 7
        %s1549 = ssub.s32 1, %s1548
        %s1550 = scalar_lea.vmem %s1521, %s1549
        %s1551 = ssub.s32 1, %s1548
        %s1552 = scalar_lea.vmem %s1522, %s1551 [#allocation2]
        %s1553 = sshll.u32 1, %s1548
        %s1554 = ssub.s32 %s1553, 1
        loop: start=0, step=1, limit=1
        $region925: #{tpu_custom_call.1} parent=923 // loop_pre_header
          _
        $region926: #{tpu_custom_call.1} parent=923 // loop_header
          %s1556 = sphi 0, %s1560
          %p1557 = scmp.ge.s32.totalorder %s1556, 1
          %s1561 = sphi %s1550, %s1550
          %s1562 = sphi %s1552, %s1552
        $region927: #{tpu_custom_call.1} parent=923 // loop_header_branch
          %1559 = sbr.rel (%p1557) target = $region931
        $region928: #{tpu_custom_call.1} parent=923 // loop_body
          %v1563 = vld [vmem:[%s1561] sm:%s1554]
          %1564 = vst [vmem:[%s1562] sm:%s1554] %v1563
        $region929: #{tpu_custom_call.1} parent=923 // loop_footer
          %s1560 = sadd.s32 1, %s1556
        $region930: #{tpu_custom_call.1} parent=923 // loop_footer_branch
          %1555 = sbr.rel target = $region926
        $region931: #{tpu_custom_call.1} parent=923 // loop_exit
          _
      $region924: #{tpu_custom_call.1} parent=908 // pred_fallthru
        _
    $region909: #{tpu_custom_call.1} parent=1 // pred_fallthru
      _
    // Predicated region
    $region910: #{tpu_custom_call.1} parent=1 // pred_check
      %p1528 = pneg %p1524
    $region911: #{tpu_custom_call.1} parent=1 // pred_check_branch
      %1530 = sbr.rel (%p1528) target = $region913
    $region912: #{tpu_custom_call.1} parent=1 // pred_region
      %s1531 = sshll.u32 1, 1
      %s1532 = ssub.s32 %s1531, 1
      loop: start=0, step=1, limit=1
      $region914: #{tpu_custom_call.1} parent=912 // loop_pre_header
        _
      $region915: #{tpu_custom_call.1} parent=912 // loop_header
        %s1534 = sphi 0, %s1538
        %p1535 = scmp.ge.s32.totalorder %s1534, 1
        %s1539 = sphi %s1521, %s1521
        %s1540 = sphi %s1522, %s1522
      $region916: #{tpu_custom_call.1} parent=912 // loop_header_branch
        %1537 = sbr.rel (%p1535) target = $region920
      $region917: #{tpu_custom_call.1} parent=912 // loop_body
        %v1541 = vld [vmem:[%s1539] sm:%s1532]
        %1542 = vst [vmem:[%s1540] sm:%s1532] %v1541
      $region918: #{tpu_custom_call.1} parent=912 // loop_footer
        %s1538 = sadd.s32 1, %s1534
      $region919: #{tpu_custom_call.1} parent=912 // loop_footer_branch
        %1533 = sbr.rel target = $region915
      $region920: #{tpu_custom_call.1} parent=912 // loop_exit
        _
    $region913: #{tpu_custom_call.1} parent=1 // pred_fallthru
      _
    // Predicated region
    $region932: #{tpu_custom_call.1} parent=1 // pred_check
      _
    $region933: #{tpu_custom_call.1} parent=1 // pred_check_branch
      %1567 = sbr.rel (0) target = $region935
    $region934: #{tpu_custom_call.1} parent=1 // pred_region
      %1568 = vsyncadd %s1222, 16
    $region935: #{tpu_custom_call.1} parent=1 // pred_fallthru
      _
    %s1569 = sadd.s32 %s17, 59
    %s1570 = sld [smem:[#allocation5 + %s1569]]
    %s1571 = scalar_lea.vmem %s2, %s1570
    %s1572 = scalar_lea.vmem [#allocation2], 31
    %p1574 = scmp.lt.u32.totalorder 1, 8
    %p1575 = pneg %p1574
    // Predicated region
    $region936: #{tpu_custom_call.1} parent=1 // pred_check
      _
    $region937: #{tpu_custom_call.1} parent=1 // pred_check_branch
      %1577 = sbr.rel (%p1574) target = $region939
    $region938: #{tpu_custom_call.1} parent=1 // pred_region
      %s1593 = sand.u32 1, 7
      %p1594 = scmp.eq.s32.totalorder %s1593, 0
      %p1595 = pneg %p1594
      // Predicated region
      $region951: #{tpu_custom_call.1} parent=938 // pred_check
        _
      $region952: #{tpu_custom_call.1} parent=938 // pred_check_branch
        %1597 = sbr.rel (%p1594) target = $region954
      $region953: #{tpu_custom_call.1} parent=938 // pred_region
        %s1598 = sand.u32 1, 7
        %s1599 = ssub.s32 1, %s1598
        %s1600 = scalar_lea.vmem %s1571, %s1599
        %s1601 = ssub.s32 1, %s1598
        %s1602 = scalar_lea.vmem %s1572, %s1601 [#allocation2]
        %s1603 = sshll.u32 1, %s1598
        %s1604 = ssub.s32 %s1603, 1
        loop: start=0, step=1, limit=1
        $region955: #{tpu_custom_call.1} parent=953 // loop_pre_header
          _
        $region956: #{tpu_custom_call.1} parent=953 // loop_header
          %s1606 = sphi 0, %s1610
          %p1607 = scmp.ge.s32.totalorder %s1606, 1
          %s1611 = sphi %s1600, %s1600
          %s1612 = sphi %s1602, %s1602
        $region957: #{tpu_custom_call.1} parent=953 // loop_header_branch
          %1609 = sbr.rel (%p1607) target = $region961
        $region958: #{tpu_custom_call.1} parent=953 // loop_body
          %v1613 = vld [vmem:[%s1611] sm:%s1604]
          %1614 = vst [vmem:[%s1612] sm:%s1604] %v1613
        $region959: #{tpu_custom_call.1} parent=953 // loop_footer
          %s1610 = sadd.s32 1, %s1606
        $region960: #{tpu_custom_call.1} parent=953 // loop_footer_branch
          %1605 = sbr.rel target = $region956
        $region961: #{tpu_custom_call.1} parent=953 // loop_exit
          _
      $region954: #{tpu_custom_call.1} parent=938 // pred_fallthru
        _
    $region939: #{tpu_custom_call.1} parent=1 // pred_fallthru
      _
    // Predicated region
    $region940: #{tpu_custom_call.1} parent=1 // pred_check
      %p1578 = pneg %p1574
    $region941: #{tpu_custom_call.1} parent=1 // pred_check_branch
      %1580 = sbr.rel (%p1578) target = $region943
    $region942: #{tpu_custom_call.1} parent=1 // pred_region
      %s1581 = sshll.u32 1, 1
      %s1582 = ssub.s32 %s1581, 1
      loop: start=0, step=1, limit=1
      $region944: #{tpu_custom_call.1} parent=942 // loop_pre_header
        _
      $region945: #{tpu_custom_call.1} parent=942 // loop_header
        %s1584 = sphi 0, %s1588
        %p1585 = scmp.ge.s32.totalorder %s1584, 1
        %s1589 = sphi %s1571, %s1571
        %s1590 = sphi %s1572, %s1572
      $region946: #{tpu_custom_call.1} parent=942 // loop_header_branch
        %1587 = sbr.rel (%p1585) target = $region950
      $region947: #{tpu_custom_call.1} parent=942 // loop_body
        %v1591 = vld [vmem:[%s1589] sm:%s1582]
        %1592 = vst [vmem:[%s1590] sm:%s1582] %v1591
      $region948: #{tpu_custom_call.1} parent=942 // loop_footer
        %s1588 = sadd.s32 1, %s1584
      $region949: #{tpu_custom_call.1} parent=942 // loop_footer_branch
        %1583 = sbr.rel target = $region945
      $region950: #{tpu_custom_call.1} parent=942 // loop_exit
        _
    $region943: #{tpu_custom_call.1} parent=1 // pred_fallthru
      _
    // Predicated region
    $region962: #{tpu_custom_call.1} parent=1 // pred_check
      _
    $region963: #{tpu_custom_call.1} parent=1 // pred_check_branch
      %1617 = sbr.rel (0) target = $region965
    $region964: #{tpu_custom_call.1} parent=1 // pred_region
      %1618 = vsyncadd %s1222, 16
    $region965: #{tpu_custom_call.1} parent=1 // pred_fallthru
      _
    %s1619 = sadd.s32 %s17, 4
    %s1620 = sld [smem:[#allocation5 + %s1619]]
    %s1621 = scalar_lea.vmem %s2, %s1620
    %s1622 = scalar_lea.vmem [#allocation2], 32
    %s1623 = scalar_lea.sflag [#allocation3], 4
    %p1625 = scmp.lt.u32.totalorder 1, 8
    %p1626 = pneg %p1625
    // Predicated region
    $region966: #{tpu_custom_call.1} parent=1 // pred_check
      _
    $region967: #{tpu_custom_call.1} parent=1 // pred_check_branch
      %1628 = sbr.rel (%p1625) target = $region969
    $region968: #{tpu_custom_call.1} parent=1 // pred_region
      %s1644 = sand.u32 1, 7
      %p1645 = scmp.eq.s32.totalorder %s1644, 0
      %p1646 = pneg %p1645
      // Predicated region
      $region981: #{tpu_custom_call.1} parent=968 // pred_check
        _
      $region982: #{tpu_custom_call.1} parent=968 // pred_check_branch
        %1648 = sbr.rel (%p1645) target = $region984
      $region983: #{tpu_custom_call.1} parent=968 // pred_region
        %s1649 = sand.u32 1, 7
        %s1650 = ssub.s32 1, %s1649
        %s1651 = scalar_lea.vmem %s1621, %s1650
        %s1652 = ssub.s32 1, %s1649
        %s1653 = scalar_lea.vmem %s1622, %s1652 [#allocation2]
        %s1654 = sshll.u32 1, %s1649
        %s1655 = ssub.s32 %s1654, 1
        loop: start=0, step=1, limit=1
        $region985: #{tpu_custom_call.1} parent=983 // loop_pre_header
          _
        $region986: #{tpu_custom_call.1} parent=983 // loop_header
          %s1657 = sphi 0, %s1661
          %p1658 = scmp.ge.s32.totalorder %s1657, 1
          %s1662 = sphi %s1651, %s1651
          %s1663 = sphi %s1653, %s1653
        $region987: #{tpu_custom_call.1} parent=983 // loop_header_branch
          %1660 = sbr.rel (%p1658) target = $region991
        $region988: #{tpu_custom_call.1} parent=983 // loop_body
          %v1664 = vld [vmem:[%s1662] sm:%s1655]
          %1665 = vst [vmem:[%s1663] sm:%s1655] %v1664
        $region989: #{tpu_custom_call.1} parent=983 // loop_footer
          %s1661 = sadd.s32 1, %s1657
        $region990: #{tpu_custom_call.1} parent=983 // loop_footer_branch
          %1656 = sbr.rel target = $region986
        $region991: #{tpu_custom_call.1} parent=983 // loop_exit
          _
      $region984: #{tpu_custom_call.1} parent=968 // pred_fallthru
        _
    $region969: #{tpu_custom_call.1} parent=1 // pred_fallthru
      _
    // Predicated region
    $region970: #{tpu_custom_call.1} parent=1 // pred_check
      %p1629 = pneg %p1625
    $region971: #{tpu_custom_call.1} parent=1 // pred_check_branch
      %1631 = sbr.rel (%p1629) target = $region973
    $region972: #{tpu_custom_call.1} parent=1 // pred_region
      %s1632 = sshll.u32 1, 1
      %s1633 = ssub.s32 %s1632, 1
      loop: start=0, step=1, limit=1
      $region974: #{tpu_custom_call.1} parent=972 // loop_pre_header
        _
      $region975: #{tpu_custom_call.1} parent=972 // loop_header
        %s1635 = sphi 0, %s1639
        %p1636 = scmp.ge.s32.totalorder %s1635, 1
        %s1640 = sphi %s1621, %s1621
        %s1641 = sphi %s1622, %s1622
      $region976: #{tpu_custom_call.1} parent=972 // loop_header_branch
        %1638 = sbr.rel (%p1636) target = $region980
      $region977: #{tpu_custom_call.1} parent=972 // loop_body
        %v1642 = vld [vmem:[%s1640] sm:%s1633]
        %1643 = vst [vmem:[%s1641] sm:%s1633] %v1642
      $region978: #{tpu_custom_call.1} parent=972 // loop_footer
        %s1639 = sadd.s32 1, %s1635
      $region979: #{tpu_custom_call.1} parent=972 // loop_footer_branch
        %1634 = sbr.rel target = $region975
      $region980: #{tpu_custom_call.1} parent=972 // loop_exit
        _
    $region973: #{tpu_custom_call.1} parent=1 // pred_fallthru
      _
    // Predicated region
    $region992: #{tpu_custom_call.1} parent=1 // pred_check
      _
    $region993: #{tpu_custom_call.1} parent=1 // pred_check_branch
      %1668 = sbr.rel (0) target = $region995
    $region994: #{tpu_custom_call.1} parent=1 // pred_region
      %1669 = vsyncadd %s1623, 16
    $region995: #{tpu_custom_call.1} parent=1 // pred_fallthru
      _
    %s1670 = sadd.s32 %s17, 12
    %s1671 = sld [smem:[#allocation5 + %s1670]]
    %s1672 = scalar_lea.vmem %s2, %s1671
    %s1673 = scalar_lea.vmem [#allocation2], 33
    %p1675 = scmp.lt.u32.totalorder 1, 8
    %p1676 = pneg %p1675
    // Predicated region
    $region996: #{tpu_custom_call.1} parent=1 // pred_check
      _
    $region997: #{tpu_custom_call.1} parent=1 // pred_check_branch
      %1678 = sbr.rel (%p1675) target = $region999
    $region998: #{tpu_custom_call.1} parent=1 // pred_region
      %s1694 = sand.u32 1, 7
      %p1695 = scmp.eq.s32.totalorder %s1694, 0
      %p1696 = pneg %p1695
      // Predicated region
      $region1011: #{tpu_custom_call.1} parent=998 // pred_check
        _
      $region1012: #{tpu_custom_call.1} parent=998 // pred_check_branch
        %1698 = sbr.rel (%p1695) target = $region1014
      $region1013: #{tpu_custom_call.1} parent=998 // pred_region
        %s1699 = sand.u32 1, 7
        %s1700 = ssub.s32 1, %s1699
        %s1701 = scalar_lea.vmem %s1672, %s1700
        %s1702 = ssub.s32 1, %s1699
        %s1703 = scalar_lea.vmem %s1673, %s1702 [#allocation2]
        %s1704 = sshll.u32 1, %s1699
        %s1705 = ssub.s32 %s1704, 1
        loop: start=0, step=1, limit=1
        $region1015: #{tpu_custom_call.1} parent=1013 // loop_pre_header
          _
        $region1016: #{tpu_custom_call.1} parent=1013 // loop_header
          %s1707 = sphi 0, %s1711
          %p1708 = scmp.ge.s32.totalorder %s1707, 1
          %s1712 = sphi %s1701, %s1701
          %s1713 = sphi %s1703, %s1703
        $region1017: #{tpu_custom_call.1} parent=1013 // loop_header_branch
          %1710 = sbr.rel (%p1708) target = $region1021
        $region1018: #{tpu_custom_call.1} parent=1013 // loop_body
          %v1714 = vld [vmem:[%s1712] sm:%s1705]
          %1715 = vst [vmem:[%s1713] sm:%s1705] %v1714
        $region1019: #{tpu_custom_call.1} parent=1013 // loop_footer
          %s1711 = sadd.s32 1, %s1707
        $region1020: #{tpu_custom_call.1} parent=1013 // loop_footer_branch
          %1706 = sbr.rel target = $region1016
        $region1021: #{tpu_custom_call.1} parent=1013 // loop_exit
          _
      $region1014: #{tpu_custom_call.1} parent=998 // pred_fallthru
        _
    $region999: #{tpu_custom_call.1} parent=1 // pred_fallthru
      _
    // Predicated region
    $region1000: #{tpu_custom_call.1} parent=1 // pred_check
      %p1679 = pneg %p1675
    $region1001: #{tpu_custom_call.1} parent=1 // pred_check_branch
      %1681 = sbr.rel (%p1679) target = $region1003
    $region1002: #{tpu_custom_call.1} parent=1 // pred_region
      %s1682 = sshll.u32 1, 1
      %s1683 = ssub.s32 %s1682, 1
      loop: start=0, step=1, limit=1
      $region1004: #{tpu_custom_call.1} parent=1002 // loop_pre_header
        _
      $region1005: #{tpu_custom_call.1} parent=1002 // loop_header
        %s1685 = sphi 0, %s1689
        %p1686 = scmp.ge.s32.totalorder %s1685, 1
        %s1690 = sphi %s1672, %s1672
        %s1691 = sphi %s1673, %s1673
      $region1006: #{tpu_custom_call.1} parent=1002 // loop_header_branch
        %1688 = sbr.rel (%p1686) target = $region1010
      $region1007: #{tpu_custom_call.1} parent=1002 // loop_body
        %v1692 = vld [vmem:[%s1690] sm:%s1683]
        %1693 = vst [vmem:[%s1691] sm:%s1683] %v1692
      $region1008: #{tpu_custom_call.1} parent=1002 // loop_footer
        %s1689 = sadd.s32 1, %s1685
      $region1009: #{tpu_custom_call.1} parent=1002 // loop_footer_branch
        %1684 = sbr.rel target = $region1005
      $region1010: #{tpu_custom_call.1} parent=1002 // loop_exit
        _
    $region1003: #{tpu_custom_call.1} parent=1 // pred_fallthru
      _
    // Predicated region
    $region1022: #{tpu_custom_call.1} parent=1 // pred_check
      _
    $region1023: #{tpu_custom_call.1} parent=1 // pred_check_branch
      %1718 = sbr.rel (0) target = $region1025
    $region1024: #{tpu_custom_call.1} parent=1 // pred_region
      %1719 = vsyncadd %s1623, 16
    $region1025: #{tpu_custom_call.1} parent=1 // pred_fallthru
      _
    %s1720 = sadd.s32 %s17, 20
    %s1721 = sld [smem:[#allocation5 + %s1720]]
    %s1722 = scalar_lea.vmem %s2, %s1721
    %s1723 = scalar_lea.vmem [#allocation2], 34
    %p1725 = scmp.lt.u32.totalorder 1, 8
    %p1726 = pneg %p1725
    // Predicated region
    $region1026: #{tpu_custom_call.1} parent=1 // pred_check
      _
    $region1027: #{tpu_custom_call.1} parent=1 // pred_check_branch
      %1728 = sbr.rel (%p1725) target = $region1029
    $region1028: #{tpu_custom_call.1} parent=1 // pred_region
      %s1744 = sand.u32 1, 7
      %p1745 = scmp.eq.s32.totalorder %s1744, 0
      %p1746 = pneg %p1745
      // Predicated region
      $region1041: #{tpu_custom_call.1} parent=1028 // pred_check
        _
      $region1042: #{tpu_custom_call.1} parent=1028 // pred_check_branch
        %1748 = sbr.rel (%p1745) target = $region1044
      $region1043: #{tpu_custom_call.1} parent=1028 // pred_region
        %s1749 = sand.u32 1, 7
        %s1750 = ssub.s32 1, %s1749
        %s1751 = scalar_lea.vmem %s1722, %s1750
        %s1752 = ssub.s32 1, %s1749
        %s1753 = scalar_lea.vmem %s1723, %s1752 [#allocation2]
        %s1754 = sshll.u32 1, %s1749
        %s1755 = ssub.s32 %s1754, 1
        loop: start=0, step=1, limit=1
        $region1045: #{tpu_custom_call.1} parent=1043 // loop_pre_header
          _
        $region1046: #{tpu_custom_call.1} parent=1043 // loop_header
          %s1757 = sphi 0, %s1761
          %p1758 = scmp.ge.s32.totalorder %s1757, 1
          %s1762 = sphi %s1751, %s1751
          %s1763 = sphi %s1753, %s1753
        $region1047: #{tpu_custom_call.1} parent=1043 // loop_header_branch
          %1760 = sbr.rel (%p1758) target = $region1051
        $region1048: #{tpu_custom_call.1} parent=1043 // loop_body
          %v1764 = vld [vmem:[%s1762] sm:%s1755]
          %1765 = vst [vmem:[%s1763] sm:%s1755] %v1764
        $region1049: #{tpu_custom_call.1} parent=1043 // loop_footer
          %s1761 = sadd.s32 1, %s1757
        $region1050: #{tpu_custom_call.1} parent=1043 // loop_footer_branch
          %1756 = sbr.rel target = $region1046
        $region1051: #{tpu_custom_call.1} parent=1043 // loop_exit
          _
      $region1044: #{tpu_custom_call.1} parent=1028 // pred_fallthru
        _
    $region1029: #{tpu_custom_call.1} parent=1 // pred_fallthru
      _
    // Predicated region
    $region1030: #{tpu_custom_call.1} parent=1 // pred_check
      %p1729 = pneg %p1725
    $region1031: #{tpu_custom_call.1} parent=1 // pred_check_branch
      %1731 = sbr.rel (%p1729) target = $region1033
    $region1032: #{tpu_custom_call.1} parent=1 // pred_region
      %s1732 = sshll.u32 1, 1
      %s1733 = ssub.s32 %s1732, 1
      loop: start=0, step=1, limit=1
      $region1034: #{tpu_custom_call.1} parent=1032 // loop_pre_header
        _
      $region1035: #{tpu_custom_call.1} parent=1032 // loop_header
        %s1735 = sphi 0, %s1739
        %p1736 = scmp.ge.s32.totalorder %s1735, 1
        %s1740 = sphi %s1722, %s1722
        %s1741 = sphi %s1723, %s1723
      $region1036: #{tpu_custom_call.1} parent=1032 // loop_header_branch
        %1738 = sbr.rel (%p1736) target = $region1040
      $region1037: #{tpu_custom_call.1} parent=1032 // loop_body
        %v1742 = vld [vmem:[%s1740] sm:%s1733]
        %1743 = vst [vmem:[%s1741] sm:%s1733] %v1742
      $region1038: #{tpu_custom_call.1} parent=1032 // loop_footer
        %s1739 = sadd.s32 1, %s1735
      $region1039: #{tpu_custom_call.1} parent=1032 // loop_footer_branch
        %1734 = sbr.rel target = $region1035
      $region1040: #{tpu_custom_call.1} parent=1032 // loop_exit
        _
    $region1033: #{tpu_custom_call.1} parent=1 // pred_fallthru
      _
    // Predicated region
    $region1052: #{tpu_custom_call.1} parent=1 // pred_check
      _
    $region1053: #{tpu_custom_call.1} parent=1 // pred_check_branch
      %1768 = sbr.rel (0) target = $region1055
    $region1054: #{tpu_custom_call.1} parent=1 // pred_region
      %1769 = vsyncadd %s1623, 16
    $region1055: #{tpu_custom_call.1} parent=1 // pred_fallthru
      _
    %s1770 = sadd.s32 %s17, 28
    %s1771 = sld [smem:[#allocation5 + %s1770]]
    %s1772 = scalar_lea.vmem %s2, %s1771
    %s1773 = scalar_lea.vmem [#allocation2], 35
    %p1775 = scmp.lt.u32.totalorder 1, 8
    %p1776 = pneg %p1775
    // Predicated region
    $region1056: #{tpu_custom_call.1} parent=1 // pred_check
      _
    $region1057: #{tpu_custom_call.1} parent=1 // pred_check_branch
      %1778 = sbr.rel (%p1775) target = $region1059
    $region1058: #{tpu_custom_call.1} parent=1 // pred_region
      %s1794 = sand.u32 1, 7
      %p1795 = scmp.eq.s32.totalorder %s1794, 0
      %p1796 = pneg %p1795
      // Predicated region
      $region1071: #{tpu_custom_call.1} parent=1058 // pred_check
        _
      $region1072: #{tpu_custom_call.1} parent=1058 // pred_check_branch
        %1798 = sbr.rel (%p1795) target = $region1074
      $region1073: #{tpu_custom_call.1} parent=1058 // pred_region
        %s1799 = sand.u32 1, 7
        %s1800 = ssub.s32 1, %s1799
        %s1801 = scalar_lea.vmem %s1772, %s1800
        %s1802 = ssub.s32 1, %s1799
        %s1803 = scalar_lea.vmem %s1773, %s1802 [#allocation2]
        %s1804 = sshll.u32 1, %s1799
        %s1805 = ssub.s32 %s1804, 1
        loop: start=0, step=1, limit=1
        $region1075: #{tpu_custom_call.1} parent=1073 // loop_pre_header
          _
        $region1076: #{tpu_custom_call.1} parent=1073 // loop_header
          %s1807 = sphi 0, %s1811
          %p1808 = scmp.ge.s32.totalorder %s1807, 1
          %s1812 = sphi %s1801, %s1801
          %s1813 = sphi %s1803, %s1803
        $region1077: #{tpu_custom_call.1} parent=1073 // loop_header_branch
          %1810 = sbr.rel (%p1808) target = $region1081
        $region1078: #{tpu_custom_call.1} parent=1073 // loop_body
          %v1814 = vld [vmem:[%s1812] sm:%s1805]
          %1815 = vst [vmem:[%s1813] sm:%s1805] %v1814
        $region1079: #{tpu_custom_call.1} parent=1073 // loop_footer
          %s1811 = sadd.s32 1, %s1807
        $region1080: #{tpu_custom_call.1} parent=1073 // loop_footer_branch
          %1806 = sbr.rel target = $region1076
        $region1081: #{tpu_custom_call.1} parent=1073 // loop_exit
          _
      $region1074: #{tpu_custom_call.1} parent=1058 // pred_fallthru
        _
    $region1059: #{tpu_custom_call.1} parent=1 // pred_fallthru
      _
    // Predicated region
    $region1060: #{tpu_custom_call.1} parent=1 // pred_check
      %p1779 = pneg %p1775
    $region1061: #{tpu_custom_call.1} parent=1 // pred_check_branch
      %1781 = sbr.rel (%p1779) target = $region1063
    $region1062: #{tpu_custom_call.1} parent=1 // pred_region
      %s1782 = sshll.u32 1, 1
      %s1783 = ssub.s32 %s1782, 1
      loop: start=0, step=1, limit=1
      $region1064: #{tpu_custom_call.1} parent=1062 // loop_pre_header
        _
      $region1065: #{tpu_custom_call.1} parent=1062 // loop_header
        %s1785 = sphi 0, %s1789
        %p1786 = scmp.ge.s32.totalorder %s1785, 1
        %s1790 = sphi %s1772, %s1772
        %s1791 = sphi %s1773, %s1773
      $region1066: #{tpu_custom_call.1} parent=1062 // loop_header_branch
        %1788 = sbr.rel (%p1786) target = $region1070
      $region1067: #{tpu_custom_call.1} parent=1062 // loop_body
        %v1792 = vld [vmem:[%s1790] sm:%s1783]
        %1793 = vst [vmem:[%s1791] sm:%s1783] %v1792
      $region1068: #{tpu_custom_call.1} parent=1062 // loop_footer
        %s1789 = sadd.s32 1, %s1785
      $region1069: #{tpu_custom_call.1} parent=1062 // loop_footer_branch
        %1784 = sbr.rel target = $region1065
      $region1070: #{tpu_custom_call.1} parent=1062 // loop_exit
        _
    $region1063: #{tpu_custom_call.1} parent=1 // pred_fallthru
      _
    // Predicated region
    $region1082: #{tpu_custom_call.1} parent=1 // pred_check
      _
    $region1083: #{tpu_custom_call.1} parent=1 // pred_check_branch
      %1818 = sbr.rel (0) target = $region1085
    $region1084: #{tpu_custom_call.1} parent=1 // pred_region
      %1819 = vsyncadd %s1623, 16
    $region1085: #{tpu_custom_call.1} parent=1 // pred_fallthru
      _
    %s1820 = sadd.s32 %s17, 36
    %s1821 = sld [smem:[#allocation5 + %s1820]]
    %s1822 = scalar_lea.vmem %s2, %s1821
    %s1823 = scalar_lea.vmem [#allocation2], 36
    %p1825 = scmp.lt.u32.totalorder 1, 8
    %p1826 = pneg %p1825
    // Predicated region
    $region1086: #{tpu_custom_call.1} parent=1 // pred_check
      _
    $region1087: #{tpu_custom_call.1} parent=1 // pred_check_branch
      %1828 = sbr.rel (%p1825) target = $region1089
    $region1088: #{tpu_custom_call.1} parent=1 // pred_region
      %s1844 = sand.u32 1, 7
      %p1845 = scmp.eq.s32.totalorder %s1844, 0
      %p1846 = pneg %p1845
      // Predicated region
      $region1101: #{tpu_custom_call.1} parent=1088 // pred_check
        _
      $region1102: #{tpu_custom_call.1} parent=1088 // pred_check_branch
        %1848 = sbr.rel (%p1845) target = $region1104
      $region1103: #{tpu_custom_call.1} parent=1088 // pred_region
        %s1849 = sand.u32 1, 7
        %s1850 = ssub.s32 1, %s1849
        %s1851 = scalar_lea.vmem %s1822, %s1850
        %s1852 = ssub.s32 1, %s1849
        %s1853 = scalar_lea.vmem %s1823, %s1852 [#allocation2]
        %s1854 = sshll.u32 1, %s1849
        %s1855 = ssub.s32 %s1854, 1
        loop: start=0, step=1, limit=1
        $region1105: #{tpu_custom_call.1} parent=1103 // loop_pre_header
          _
        $region1106: #{tpu_custom_call.1} parent=1103 // loop_header
          %s1857 = sphi 0, %s1861
          %p1858 = scmp.ge.s32.totalorder %s1857, 1
          %s1862 = sphi %s1851, %s1851
          %s1863 = sphi %s1853, %s1853
        $region1107: #{tpu_custom_call.1} parent=1103 // loop_header_branch
          %1860 = sbr.rel (%p1858) target = $region1111
        $region1108: #{tpu_custom_call.1} parent=1103 // loop_body
          %v1864 = vld [vmem:[%s1862] sm:%s1855]
          %1865 = vst [vmem:[%s1863] sm:%s1855] %v1864
        $region1109: #{tpu_custom_call.1} parent=1103 // loop_footer
          %s1861 = sadd.s32 1, %s1857
        $region1110: #{tpu_custom_call.1} parent=1103 // loop_footer_branch
          %1856 = sbr.rel target = $region1106
        $region1111: #{tpu_custom_call.1} parent=1103 // loop_exit
          _
      $region1104: #{tpu_custom_call.1} parent=1088 // pred_fallthru
        _
    $region1089: #{tpu_custom_call.1} parent=1 // pred_fallthru
      _
    // Predicated region
    $region1090: #{tpu_custom_call.1} parent=1 // pred_check
      %p1829 = pneg %p1825
    $region1091: #{tpu_custom_call.1} parent=1 // pred_check_branch
      %1831 = sbr.rel (%p1829) target = $region1093
    $region1092: #{tpu_custom_call.1} parent=1 // pred_region
      %s1832 = sshll.u32 1, 1
      %s1833 = ssub.s32 %s1832, 1
      loop: start=0, step=1, limit=1
      $region1094: #{tpu_custom_call.1} parent=1092 // loop_pre_header
        _
      $region1095: #{tpu_custom_call.1} parent=1092 // loop_header
        %s1835 = sphi 0, %s1839
        %p1836 = scmp.ge.s32.totalorder %s1835, 1
        %s1840 = sphi %s1822, %s1822
        %s1841 = sphi %s1823, %s1823
      $region1096: #{tpu_custom_call.1} parent=1092 // loop_header_branch
        %1838 = sbr.rel (%p1836) target = $region1100
      $region1097: #{tpu_custom_call.1} parent=1092 // loop_body
        %v1842 = vld [vmem:[%s1840] sm:%s1833]
        %1843 = vst [vmem:[%s1841] sm:%s1833] %v1842
      $region1098: #{tpu_custom_call.1} parent=1092 // loop_footer
        %s1839 = sadd.s32 1, %s1835
      $region1099: #{tpu_custom_call.1} parent=1092 // loop_footer_branch
        %1834 = sbr.rel target = $region1095
      $region1100: #{tpu_custom_call.1} parent=1092 // loop_exit
        _
    $region1093: #{tpu_custom_call.1} parent=1 // pred_fallthru
      _
    // Predicated region
    $region1112: #{tpu_custom_call.1} parent=1 // pred_check
      _
    $region1113: #{tpu_custom_call.1} parent=1 // pred_check_branch
      %1868 = sbr.rel (0) target = $region1115
    $region1114: #{tpu_custom_call.1} parent=1 // pred_region
      %1869 = vsyncadd %s1623, 16
    $region1115: #{tpu_custom_call.1} parent=1 // pred_fallthru
      _
    %s1870 = sadd.s32 %s17, 44
    %s1871 = sld [smem:[#allocation5 + %s1870]]
    %s1872 = scalar_lea.vmem %s2, %s1871
    %s1873 = scalar_lea.vmem [#allocation2], 37
    %p1875 = scmp.lt.u32.totalorder 1, 8
    %p1876 = pneg %p1875
    // Predicated region
    $region1116: #{tpu_custom_call.1} parent=1 // pred_check
      _
    $region1117: #{tpu_custom_call.1} parent=1 // pred_check_branch
      %1878 = sbr.rel (%p1875) target = $region1119
    $region1118: #{tpu_custom_call.1} parent=1 // pred_region
      %s1894 = sand.u32 1, 7
      %p1895 = scmp.eq.s32.totalorder %s1894, 0
      %p1896 = pneg %p1895
      // Predicated region
      $region1131: #{tpu_custom_call.1} parent=1118 // pred_check
        _
      $region1132: #{tpu_custom_call.1} parent=1118 // pred_check_branch
        %1898 = sbr.rel (%p1895) target = $region1134
      $region1133: #{tpu_custom_call.1} parent=1118 // pred_region
        %s1899 = sand.u32 1, 7
        %s1900 = ssub.s32 1, %s1899
        %s1901 = scalar_lea.vmem %s1872, %s1900
        %s1902 = ssub.s32 1, %s1899
        %s1903 = scalar_lea.vmem %s1873, %s1902 [#allocation2]
        %s1904 = sshll.u32 1, %s1899
        %s1905 = ssub.s32 %s1904, 1
        loop: start=0, step=1, limit=1
        $region1135: #{tpu_custom_call.1} parent=1133 // loop_pre_header
          _
        $region1136: #{tpu_custom_call.1} parent=1133 // loop_header
          %s1907 = sphi 0, %s1911
          %p1908 = scmp.ge.s32.totalorder %s1907, 1
          %s1912 = sphi %s1901, %s1901
          %s1913 = sphi %s1903, %s1903
        $region1137: #{tpu_custom_call.1} parent=1133 // loop_header_branch
          %1910 = sbr.rel (%p1908) target = $region1141
        $region1138: #{tpu_custom_call.1} parent=1133 // loop_body
          %v1914 = vld [vmem:[%s1912] sm:%s1905]
          %1915 = vst [vmem:[%s1913] sm:%s1905] %v1914
        $region1139: #{tpu_custom_call.1} parent=1133 // loop_footer
          %s1911 = sadd.s32 1, %s1907
        $region1140: #{tpu_custom_call.1} parent=1133 // loop_footer_branch
          %1906 = sbr.rel target = $region1136
        $region1141: #{tpu_custom_call.1} parent=1133 // loop_exit
          _
      $region1134: #{tpu_custom_call.1} parent=1118 // pred_fallthru
        _
    $region1119: #{tpu_custom_call.1} parent=1 // pred_fallthru
      _
    // Predicated region
    $region1120: #{tpu_custom_call.1} parent=1 // pred_check
      %p1879 = pneg %p1875
    $region1121: #{tpu_custom_call.1} parent=1 // pred_check_branch
      %1881 = sbr.rel (%p1879) target = $region1123
    $region1122: #{tpu_custom_call.1} parent=1 // pred_region
      %s1882 = sshll.u32 1, 1
      %s1883 = ssub.s32 %s1882, 1
      loop: start=0, step=1, limit=1
      $region1124: #{tpu_custom_call.1} parent=1122 // loop_pre_header
        _
      $region1125: #{tpu_custom_call.1} parent=1122 // loop_header
        %s1885 = sphi 0, %s1889
        %p1886 = scmp.ge.s32.totalorder %s1885, 1
        %s1890 = sphi %s1872, %s1872
        %s1891 = sphi %s1873, %s1873
      $region1126: #{tpu_custom_call.1} parent=1122 // loop_header_branch
        %1888 = sbr.rel (%p1886) target = $region1130
      $region1127: #{tpu_custom_call.1} parent=1122 // loop_body
        %v1892 = vld [vmem:[%s1890] sm:%s1883]
        %1893 = vst [vmem:[%s1891] sm:%s1883] %v1892
      $region1128: #{tpu_custom_call.1} parent=1122 // loop_footer
        %s1889 = sadd.s32 1, %s1885
      $region1129: #{tpu_custom_call.1} parent=1122 // loop_footer_branch
        %1884 = sbr.rel target = $region1125
      $region1130: #{tpu_custom_call.1} parent=1122 // loop_exit
        _
    $region1123: #{tpu_custom_call.1} parent=1 // pred_fallthru
      _
    // Predicated region
    $region1142: #{tpu_custom_call.1} parent=1 // pred_check
      _
    $region1143: #{tpu_custom_call.1} parent=1 // pred_check_branch
      %1918 = sbr.rel (0) target = $region1145
    $region1144: #{tpu_custom_call.1} parent=1 // pred_region
      %1919 = vsyncadd %s1623, 16
    $region1145: #{tpu_custom_call.1} parent=1 // pred_fallthru
      _
    %s1920 = sadd.s32 %s17, 52
    %s1921 = sld [smem:[#allocation5 + %s1920]]
    %s1922 = scalar_lea.vmem %s2, %s1921
    %s1923 = scalar_lea.vmem [#allocation2], 38
    %p1925 = scmp.lt.u32.totalorder 1, 8
    %p1926 = pneg %p1925
    // Predicated region
    $region1146: #{tpu_custom_call.1} parent=1 // pred_check
      _
    $region1147: #{tpu_custom_call.1} parent=1 // pred_check_branch
      %1928 = sbr.rel (%p1925) target = $region1149
    $region1148: #{tpu_custom_call.1} parent=1 // pred_region
      %s1944 = sand.u32 1, 7
      %p1945 = scmp.eq.s32.totalorder %s1944, 0
      %p1946 = pneg %p1945
      // Predicated region
      $region1161: #{tpu_custom_call.1} parent=1148 // pred_check
        _
      $region1162: #{tpu_custom_call.1} parent=1148 // pred_check_branch
        %1948 = sbr.rel (%p1945) target = $region1164
      $region1163: #{tpu_custom_call.1} parent=1148 // pred_region
        %s1949 = sand.u32 1, 7
        %s1950 = ssub.s32 1, %s1949
        %s1951 = scalar_lea.vmem %s1922, %s1950
        %s1952 = ssub.s32 1, %s1949
        %s1953 = scalar_lea.vmem %s1923, %s1952 [#allocation2]
        %s1954 = sshll.u32 1, %s1949
        %s1955 = ssub.s32 %s1954, 1
        loop: start=0, step=1, limit=1
        $region1165: #{tpu_custom_call.1} parent=1163 // loop_pre_header
          _
        $region1166: #{tpu_custom_call.1} parent=1163 // loop_header
          %s1957 = sphi 0, %s1961
          %p1958 = scmp.ge.s32.totalorder %s1957, 1
          %s1962 = sphi %s1951, %s1951
          %s1963 = sphi %s1953, %s1953
        $region1167: #{tpu_custom_call.1} parent=1163 // loop_header_branch
          %1960 = sbr.rel (%p1958) target = $region1171
        $region1168: #{tpu_custom_call.1} parent=1163 // loop_body
          %v1964 = vld [vmem:[%s1962] sm:%s1955]
          %1965 = vst [vmem:[%s1963] sm:%s1955] %v1964
        $region1169: #{tpu_custom_call.1} parent=1163 // loop_footer
          %s1961 = sadd.s32 1, %s1957
        $region1170: #{tpu_custom_call.1} parent=1163 // loop_footer_branch
          %1956 = sbr.rel target = $region1166
        $region1171: #{tpu_custom_call.1} parent=1163 // loop_exit
          _
      $region1164: #{tpu_custom_call.1} parent=1148 // pred_fallthru
        _
    $region1149: #{tpu_custom_call.1} parent=1 // pred_fallthru
      _
    // Predicated region
    $region1150: #{tpu_custom_call.1} parent=1 // pred_check
      %p1929 = pneg %p1925
    $region1151: #{tpu_custom_call.1} parent=1 // pred_check_branch
      %1931 = sbr.rel (%p1929) target = $region1153
    $region1152: #{tpu_custom_call.1} parent=1 // pred_region
      %s1932 = sshll.u32 1, 1
      %s1933 = ssub.s32 %s1932, 1
      loop: start=0, step=1, limit=1
      $region1154: #{tpu_custom_call.1} parent=1152 // loop_pre_header
        _
      $region1155: #{tpu_custom_call.1} parent=1152 // loop_header
        %s1935 = sphi 0, %s1939
        %p1936 = scmp.ge.s32.totalorder %s1935, 1
        %s1940 = sphi %s1922, %s1922
        %s1941 = sphi %s1923, %s1923
      $region1156: #{tpu_custom_call.1} parent=1152 // loop_header_branch
        %1938 = sbr.rel (%p1936) target = $region1160
      $region1157: #{tpu_custom_call.1} parent=1152 // loop_body
        %v1942 = vld [vmem:[%s1940] sm:%s1933]
        %1943 = vst [vmem:[%s1941] sm:%s1933] %v1942
      $region1158: #{tpu_custom_call.1} parent=1152 // loop_footer
        %s1939 = sadd.s32 1, %s1935
      $region1159: #{tpu_custom_call.1} parent=1152 // loop_footer_branch
        %1934 = sbr.rel target = $region1155
      $region1160: #{tpu_custom_call.1} parent=1152 // loop_exit
        _
    $region1153: #{tpu_custom_call.1} parent=1 // pred_fallthru
      _
    // Predicated region
    $region1172: #{tpu_custom_call.1} parent=1 // pred_check
      _
    $region1173: #{tpu_custom_call.1} parent=1 // pred_check_branch
      %1968 = sbr.rel (0) target = $region1175
    $region1174: #{tpu_custom_call.1} parent=1 // pred_region
      %1969 = vsyncadd %s1623, 16
    $region1175: #{tpu_custom_call.1} parent=1 // pred_fallthru
      _
    %s1970 = sadd.s32 %s17, 60
    %s1971 = sld [smem:[#allocation5 + %s1970]]
    %s1972 = scalar_lea.vmem %s2, %s1971
    %s1973 = scalar_lea.vmem [#allocation2], 39
    %p1975 = scmp.lt.u32.totalorder 1, 8
    %p1976 = pneg %p1975
    // Predicated region
    $region1176: #{tpu_custom_call.1} parent=1 // pred_check
      _
    $region1177: #{tpu_custom_call.1} parent=1 // pred_check_branch
      %1978 = sbr.rel (%p1975) target = $region1179
    $region1178: #{tpu_custom_call.1} parent=1 // pred_region
      %s1994 = sand.u32 1, 7
      %p1995 = scmp.eq.s32.totalorder %s1994, 0
      %p1996 = pneg %p1995
      // Predicated region
      $region1191: #{tpu_custom_call.1} parent=1178 // pred_check
        _
      $region1192: #{tpu_custom_call.1} parent=1178 // pred_check_branch
        %1998 = sbr.rel (%p1995) target = $region1194
      $region1193: #{tpu_custom_call.1} parent=1178 // pred_region
        %s1999 = sand.u32 1, 7
        %s2000 = ssub.s32 1, %s1999
        %s2001 = scalar_lea.vmem %s1972, %s2000
        %s2002 = ssub.s32 1, %s1999
        %s2003 = scalar_lea.vmem %s1973, %s2002 [#allocation2]
        %s2004 = sshll.u32 1, %s1999
        %s2005 = ssub.s32 %s2004, 1
        loop: start=0, step=1, limit=1
        $region1195: #{tpu_custom_call.1} parent=1193 // loop_pre_header
          _
        $region1196: #{tpu_custom_call.1} parent=1193 // loop_header
          %s2007 = sphi 0, %s2011
          %p2008 = scmp.ge.s32.totalorder %s2007, 1
          %s2012 = sphi %s2001, %s2001
          %s2013 = sphi %s2003, %s2003
        $region1197: #{tpu_custom_call.1} parent=1193 // loop_header_branch
          %2010 = sbr.rel (%p2008) target = $region1201
        $region1198: #{tpu_custom_call.1} parent=1193 // loop_body
          %v2014 = vld [vmem:[%s2012] sm:%s2005]
          %2015 = vst [vmem:[%s2013] sm:%s2005] %v2014
        $region1199: #{tpu_custom_call.1} parent=1193 // loop_footer
          %s2011 = sadd.s32 1, %s2007
        $region1200: #{tpu_custom_call.1} parent=1193 // loop_footer_branch
          %2006 = sbr.rel target = $region1196
        $region1201: #{tpu_custom_call.1} parent=1193 // loop_exit
          _
      $region1194: #{tpu_custom_call.1} parent=1178 // pred_fallthru
        _
    $region1179: #{tpu_custom_call.1} parent=1 // pred_fallthru
      _
    // Predicated region
    $region1180: #{tpu_custom_call.1} parent=1 // pred_check
      %p1979 = pneg %p1975
    $region1181: #{tpu_custom_call.1} parent=1 // pred_check_branch
      %1981 = sbr.rel (%p1979) target = $region1183
    $region1182: #{tpu_custom_call.1} parent=1 // pred_region
      %s1982 = sshll.u32 1, 1
      %s1983 = ssub.s32 %s1982, 1
      loop: start=0, step=1, limit=1
      $region1184: #{tpu_custom_call.1} parent=1182 // loop_pre_header
        _
      $region1185: #{tpu_custom_call.1} parent=1182 // loop_header
        %s1985 = sphi 0, %s1989
        %p1986 = scmp.ge.s32.totalorder %s1985, 1
        %s1990 = sphi %s1972, %s1972
        %s1991 = sphi %s1973, %s1973
      $region1186: #{tpu_custom_call.1} parent=1182 // loop_header_branch
        %1988 = sbr.rel (%p1986) target = $region1190
      $region1187: #{tpu_custom_call.1} parent=1182 // loop_body
        %v1992 = vld [vmem:[%s1990] sm:%s1983]
        %1993 = vst [vmem:[%s1991] sm:%s1983] %v1992
      $region1188: #{tpu_custom_call.1} parent=1182 // loop_footer
        %s1989 = sadd.s32 1, %s1985
      $region1189: #{tpu_custom_call.1} parent=1182 // loop_footer_branch
        %1984 = sbr.rel target = $region1185
      $region1190: #{tpu_custom_call.1} parent=1182 // loop_exit
        _
    $region1183: #{tpu_custom_call.1} parent=1 // pred_fallthru
      _
    // Predicated region
    $region1202: #{tpu_custom_call.1} parent=1 // pred_check
      _
    $region1203: #{tpu_custom_call.1} parent=1 // pred_check_branch
      %2018 = sbr.rel (0) target = $region1205
    $region1204: #{tpu_custom_call.1} parent=1 // pred_region
      %2019 = vsyncadd %s1623, 16
    $region1205: #{tpu_custom_call.1} parent=1 // pred_fallthru
      _
    %s2020 = sadd.s32 %s17, 5
    %s2021 = sld [smem:[#allocation5 + %s2020]]
    %s2022 = scalar_lea.vmem %s2, %s2021
    %s2023 = scalar_lea.vmem [#allocation2], 40
    %s2024 = scalar_lea.sflag [#allocation3], 5
    %p2026 = scmp.lt.u32.totalorder 1, 8
    %p2027 = pneg %p2026
    // Predicated region
    $region1206: #{tpu_custom_call.1} parent=1 // pred_check
      _
    $region1207: #{tpu_custom_call.1} parent=1 // pred_check_branch
      %2029 = sbr.rel (%p2026) target = $region1209
    $region1208: #{tpu_custom_call.1} parent=1 // pred_region
      %s2045 = sand.u32 1, 7
      %p2046 = scmp.eq.s32.totalorder %s2045, 0
      %p2047 = pneg %p2046
      // Predicated region
      $region1221: #{tpu_custom_call.1} parent=1208 // pred_check
        _
      $region1222: #{tpu_custom_call.1} parent=1208 // pred_check_branch
        %2049 = sbr.rel (%p2046) target = $region1224
      $region1223: #{tpu_custom_call.1} parent=1208 // pred_region
        %s2050 = sand.u32 1, 7
        %s2051 = ssub.s32 1, %s2050
        %s2052 = scalar_lea.vmem %s2022, %s2051
        %s2053 = ssub.s32 1, %s2050
        %s2054 = scalar_lea.vmem %s2023, %s2053 [#allocation2]
        %s2055 = sshll.u32 1, %s2050
        %s2056 = ssub.s32 %s2055, 1
        loop: start=0, step=1, limit=1
        $region1225: #{tpu_custom_call.1} parent=1223 // loop_pre_header
          _
        $region1226: #{tpu_custom_call.1} parent=1223 // loop_header
          %s2058 = sphi 0, %s2062
          %p2059 = scmp.ge.s32.totalorder %s2058, 1
          %s2063 = sphi %s2052, %s2052
          %s2064 = sphi %s2054, %s2054
        $region1227: #{tpu_custom_call.1} parent=1223 // loop_header_branch
          %2061 = sbr.rel (%p2059) target = $region1231
        $region1228: #{tpu_custom_call.1} parent=1223 // loop_body
          %v2065 = vld [vmem:[%s2063] sm:%s2056]
          %2066 = vst [vmem:[%s2064] sm:%s2056] %v2065
        $region1229: #{tpu_custom_call.1} parent=1223 // loop_footer
          %s2062 = sadd.s32 1, %s2058
        $region1230: #{tpu_custom_call.1} parent=1223 // loop_footer_branch
          %2057 = sbr.rel target = $region1226
        $region1231: #{tpu_custom_call.1} parent=1223 // loop_exit
          _
      $region1224: #{tpu_custom_call.1} parent=1208 // pred_fallthru
        _
    $region1209: #{tpu_custom_call.1} parent=1 // pred_fallthru
      _
    // Predicated region
    $region1210: #{tpu_custom_call.1} parent=1 // pred_check
      %p2030 = pneg %p2026
    $region1211: #{tpu_custom_call.1} parent=1 // pred_check_branch
      %2032 = sbr.rel (%p2030) target = $region1213
    $region1212: #{tpu_custom_call.1} parent=1 // pred_region
      %s2033 = sshll.u32 1, 1
      %s2034 = ssub.s32 %s2033, 1
      loop: start=0, step=1, limit=1
      $region1214: #{tpu_custom_call.1} parent=1212 // loop_pre_header
        _
      $region1215: #{tpu_custom_call.1} parent=1212 // loop_header
        %s2036 = sphi 0, %s2040
        %p2037 = scmp.ge.s32.totalorder %s2036, 1
        %s2041 = sphi %s2022, %s2022
        %s2042 = sphi %s2023, %s2023
      $region1216: #{tpu_custom_call.1} parent=1212 // loop_header_branch
        %2039 = sbr.rel (%p2037) target = $region1220
      $region1217: #{tpu_custom_call.1} parent=1212 // loop_body
        %v2043 = vld [vmem:[%s2041] sm:%s2034]
        %2044 = vst [vmem:[%s2042] sm:%s2034] %v2043
      $region1218: #{tpu_custom_call.1} parent=1212 // loop_footer
        %s2040 = sadd.s32 1, %s2036
      $region1219: #{tpu_custom_call.1} parent=1212 // loop_footer_branch
        %2035 = sbr.rel target = $region1215
      $region1220: #{tpu_custom_call.1} parent=1212 // loop_exit
        _
    $region1213: #{tpu_custom_call.1} parent=1 // pred_fallthru
      _
    // Predicated region
    $region1232: #{tpu_custom_call.1} parent=1 // pred_check
      _
    $region1233: #{tpu_custom_call.1} parent=1 // pred_check_branch
      %2069 = sbr.rel (0) target = $region1235
    $region1234: #{tpu_custom_call.1} parent=1 // pred_region
      %2070 = vsyncadd %s2024, 16
    $region1235: #{tpu_custom_call.1} parent=1 // pred_fallthru
      _
    %s2071 = sadd.s32 %s17, 13
    %s2072 = sld [smem:[#allocation5 + %s2071]]
    %s2073 = scalar_lea.vmem %s2, %s2072
    %s2074 = scalar_lea.vmem [#allocation2], 41
    %p2076 = scmp.lt.u32.totalorder 1, 8
    %p2077 = pneg %p2076
    // Predicated region
    $region1236: #{tpu_custom_call.1} parent=1 // pred_check
      _
    $region1237: #{tpu_custom_call.1} parent=1 // pred_check_branch
      %2079 = sbr.rel (%p2076) target = $region1239
    $region1238: #{tpu_custom_call.1} parent=1 // pred_region
      %s2095 = sand.u32 1, 7
      %p2096 = scmp.eq.s32.totalorder %s2095, 0
      %p2097 = pneg %p2096
      // Predicated region
      $region1251: #{tpu_custom_call.1} parent=1238 // pred_check
        _
      $region1252: #{tpu_custom_call.1} parent=1238 // pred_check_branch
        %2099 = sbr.rel (%p2096) target = $region1254
      $region1253: #{tpu_custom_call.1} parent=1238 // pred_region
        %s2100 = sand.u32 1, 7
        %s2101 = ssub.s32 1, %s2100
        %s2102 = scalar_lea.vmem %s2073, %s2101
        %s2103 = ssub.s32 1, %s2100
        %s2104 = scalar_lea.vmem %s2074, %s2103 [#allocation2]
        %s2105 = sshll.u32 1, %s2100
        %s2106 = ssub.s32 %s2105, 1
        loop: start=0, step=1, limit=1
        $region1255: #{tpu_custom_call.1} parent=1253 // loop_pre_header
          _
        $region1256: #{tpu_custom_call.1} parent=1253 // loop_header
          %s2108 = sphi 0, %s2112
          %p2109 = scmp.ge.s32.totalorder %s2108, 1
          %s2113 = sphi %s2102, %s2102
          %s2114 = sphi %s2104, %s2104
        $region1257: #{tpu_custom_call.1} parent=1253 // loop_header_branch
          %2111 = sbr.rel (%p2109) target = $region1261
        $region1258: #{tpu_custom_call.1} parent=1253 // loop_body
          %v2115 = vld [vmem:[%s2113] sm:%s2106]
          %2116 = vst [vmem:[%s2114] sm:%s2106] %v2115
        $region1259: #{tpu_custom_call.1} parent=1253 // loop_footer
          %s2112 = sadd.s32 1, %s2108
        $region1260: #{tpu_custom_call.1} parent=1253 // loop_footer_branch
          %2107 = sbr.rel target = $region1256
        $region1261: #{tpu_custom_call.1} parent=1253 // loop_exit
          _
      $region1254: #{tpu_custom_call.1} parent=1238 // pred_fallthru
        _
    $region1239: #{tpu_custom_call.1} parent=1 // pred_fallthru
      _
    // Predicated region
    $region1240: #{tpu_custom_call.1} parent=1 // pred_check
      %p2080 = pneg %p2076
    $region1241: #{tpu_custom_call.1} parent=1 // pred_check_branch
      %2082 = sbr.rel (%p2080) target = $region1243
    $region1242: #{tpu_custom_call.1} parent=1 // pred_region
      %s2083 = sshll.u32 1, 1
      %s2084 = ssub.s32 %s2083, 1
      loop: start=0, step=1, limit=1
      $region1244: #{tpu_custom_call.1} parent=1242 // loop_pre_header
        _
      $region1245: #{tpu_custom_call.1} parent=1242 // loop_header
        %s2086 = sphi 0, %s2090
        %p2087 = scmp.ge.s32.totalorder %s2086, 1
        %s2091 = sphi %s2073, %s2073
        %s2092 = sphi %s2074, %s2074
      $region1246: #{tpu_custom_call.1} parent=1242 // loop_header_branch
        %2089 = sbr.rel (%p2087) target = $region1250
      $region1247: #{tpu_custom_call.1} parent=1242 // loop_body
        %v2093 = vld [vmem:[%s2091] sm:%s2084]
        %2094 = vst [vmem:[%s2092] sm:%s2084] %v2093
      $region1248: #{tpu_custom_call.1} parent=1242 // loop_footer
        %s2090 = sadd.s32 1, %s2086
      $region1249: #{tpu_custom_call.1} parent=1242 // loop_footer_branch
        %2085 = sbr.rel target = $region1245
      $region1250: #{tpu_custom_call.1} parent=1242 // loop_exit
        _
    $region1243: #{tpu_custom_call.1} parent=1 // pred_fallthru
      _
    // Predicated region
    $region1262: #{tpu_custom_call.1} parent=1 // pred_check
      _
    $region1263: #{tpu_custom_call.1} parent=1 // pred_check_branch
      %2119 = sbr.rel (0) target = $region1265
    $region1264: #{tpu_custom_call.1} parent=1 // pred_region
      %2120 = vsyncadd %s2024, 16
    $region1265: #{tpu_custom_call.1} parent=1 // pred_fallthru
      _
    %s2121 = sadd.s32 %s17, 21
    %s2122 = sld [smem:[#allocation5 + %s2121]]
    %s2123 = scalar_lea.vmem %s2, %s2122
    %s2124 = scalar_lea.vmem [#allocation2], 42
    %p2126 = scmp.lt.u32.totalorder 1, 8
    %p2127 = pneg %p2126
    // Predicated region
    $region1266: #{tpu_custom_call.1} parent=1 // pred_check
      _
    $region1267: #{tpu_custom_call.1} parent=1 // pred_check_branch
      %2129 = sbr.rel (%p2126) target = $region1269
    $region1268: #{tpu_custom_call.1} parent=1 // pred_region
      %s2145 = sand.u32 1, 7
      %p2146 = scmp.eq.s32.totalorder %s2145, 0
      %p2147 = pneg %p2146
      // Predicated region
      $region1281: #{tpu_custom_call.1} parent=1268 // pred_check
        _
      $region1282: #{tpu_custom_call.1} parent=1268 // pred_check_branch
        %2149 = sbr.rel (%p2146) target = $region1284
      $region1283: #{tpu_custom_call.1} parent=1268 // pred_region
        %s2150 = sand.u32 1, 7
        %s2151 = ssub.s32 1, %s2150
        %s2152 = scalar_lea.vmem %s2123, %s2151
        %s2153 = ssub.s32 1, %s2150
        %s2154 = scalar_lea.vmem %s2124, %s2153 [#allocation2]
        %s2155 = sshll.u32 1, %s2150
        %s2156 = ssub.s32 %s2155, 1
        loop: start=0, step=1, limit=1
        $region1285: #{tpu_custom_call.1} parent=1283 // loop_pre_header
          _
        $region1286: #{tpu_custom_call.1} parent=1283 // loop_header
          %s2158 = sphi 0, %s2162
          %p2159 = scmp.ge.s32.totalorder %s2158, 1
          %s2163 = sphi %s2152, %s2152
          %s2164 = sphi %s2154, %s2154
        $region1287: #{tpu_custom_call.1} parent=1283 // loop_header_branch
          %2161 = sbr.rel (%p2159) target = $region1291
        $region1288: #{tpu_custom_call.1} parent=1283 // loop_body
          %v2165 = vld [vmem:[%s2163] sm:%s2156]
          %2166 = vst [vmem:[%s2164] sm:%s2156] %v2165
        $region1289: #{tpu_custom_call.1} parent=1283 // loop_footer
          %s2162 = sadd.s32 1, %s2158
        $region1290: #{tpu_custom_call.1} parent=1283 // loop_footer_branch
          %2157 = sbr.rel target = $region1286
        $region1291: #{tpu_custom_call.1} parent=1283 // loop_exit
          _
      $region1284: #{tpu_custom_call.1} parent=1268 // pred_fallthru
        _
    $region1269: #{tpu_custom_call.1} parent=1 // pred_fallthru
      _
    // Predicated region
    $region1270: #{tpu_custom_call.1} parent=1 // pred_check
      %p2130 = pneg %p2126
    $region1271: #{tpu_custom_call.1} parent=1 // pred_check_branch
      %2132 = sbr.rel (%p2130) target = $region1273
    $region1272: #{tpu_custom_call.1} parent=1 // pred_region
      %s2133 = sshll.u32 1, 1
      %s2134 = ssub.s32 %s2133, 1
      loop: start=0, step=1, limit=1
      $region1274: #{tpu_custom_call.1} parent=1272 // loop_pre_header
        _
      $region1275: #{tpu_custom_call.1} parent=1272 // loop_header
        %s2136 = sphi 0, %s2140
        %p2137 = scmp.ge.s32.totalorder %s2136, 1
        %s2141 = sphi %s2123, %s2123
        %s2142 = sphi %s2124, %s2124
      $region1276: #{tpu_custom_call.1} parent=1272 // loop_header_branch
        %2139 = sbr.rel (%p2137) target = $region1280
      $region1277: #{tpu_custom_call.1} parent=1272 // loop_body
        %v2143 = vld [vmem:[%s2141] sm:%s2134]
        %2144 = vst [vmem:[%s2142] sm:%s2134] %v2143
      $region1278: #{tpu_custom_call.1} parent=1272 // loop_footer
        %s2140 = sadd.s32 1, %s2136
      $region1279: #{tpu_custom_call.1} parent=1272 // loop_footer_branch
        %2135 = sbr.rel target = $region1275
      $region1280: #{tpu_custom_call.1} parent=1272 // loop_exit
        _
    $region1273: #{tpu_custom_call.1} parent=1 // pred_fallthru
      _
    // Predicated region
    $region1292: #{tpu_custom_call.1} parent=1 // pred_check
      _
    $region1293: #{tpu_custom_call.1} parent=1 // pred_check_branch
      %2169 = sbr.rel (0) target = $region1295
    $region1294: #{tpu_custom_call.1} parent=1 // pred_region
      %2170 = vsyncadd %s2024, 16
    $region1295: #{tpu_custom_call.1} parent=1 // pred_fallthru
      _
    %s2171 = sadd.s32 %s17, 29
    %s2172 = sld [smem:[#allocation5 + %s2171]]
    %s2173 = scalar_lea.vmem %s2, %s2172
    %s2174 = scalar_lea.vmem [#allocation2], 43
    %p2176 = scmp.lt.u32.totalorder 1, 8
    %p2177 = pneg %p2176
    // Predicated region
    $region1296: #{tpu_custom_call.1} parent=1 // pred_check
      _
    $region1297: #{tpu_custom_call.1} parent=1 // pred_check_branch
      %2179 = sbr.rel (%p2176) target = $region1299
    $region1298: #{tpu_custom_call.1} parent=1 // pred_region
      %s2195 = sand.u32 1, 7
      %p2196 = scmp.eq.s32.totalorder %s2195, 0
      %p2197 = pneg %p2196
      // Predicated region
      $region1311: #{tpu_custom_call.1} parent=1298 // pred_check
        _
      $region1312: #{tpu_custom_call.1} parent=1298 // pred_check_branch
        %2199 = sbr.rel (%p2196) target = $region1314
      $region1313: #{tpu_custom_call.1} parent=1298 // pred_region
        %s2200 = sand.u32 1, 7
        %s2201 = ssub.s32 1, %s2200
        %s2202 = scalar_lea.vmem %s2173, %s2201
        %s2203 = ssub.s32 1, %s2200
        %s2204 = scalar_lea.vmem %s2174, %s2203 [#allocation2]
        %s2205 = sshll.u32 1, %s2200
        %s2206 = ssub.s32 %s2205, 1
        loop: start=0, step=1, limit=1
        $region1315: #{tpu_custom_call.1} parent=1313 // loop_pre_header
          _
        $region1316: #{tpu_custom_call.1} parent=1313 // loop_header
          %s2208 = sphi 0, %s2212
          %p2209 = scmp.ge.s32.totalorder %s2208, 1
          %s2213 = sphi %s2202, %s2202
          %s2214 = sphi %s2204, %s2204
        $region1317: #{tpu_custom_call.1} parent=1313 // loop_header_branch
          %2211 = sbr.rel (%p2209) target = $region1321
        $region1318: #{tpu_custom_call.1} parent=1313 // loop_body
          %v2215 = vld [vmem:[%s2213] sm:%s2206]
          %2216 = vst [vmem:[%s2214] sm:%s2206] %v2215
        $region1319: #{tpu_custom_call.1} parent=1313 // loop_footer
          %s2212 = sadd.s32 1, %s2208
        $region1320: #{tpu_custom_call.1} parent=1313 // loop_footer_branch
          %2207 = sbr.rel target = $region1316
        $region1321: #{tpu_custom_call.1} parent=1313 // loop_exit
          _
      $region1314: #{tpu_custom_call.1} parent=1298 // pred_fallthru
        _
    $region1299: #{tpu_custom_call.1} parent=1 // pred_fallthru
      _
    // Predicated region
    $region1300: #{tpu_custom_call.1} parent=1 // pred_check
      %p2180 = pneg %p2176
    $region1301: #{tpu_custom_call.1} parent=1 // pred_check_branch
      %2182 = sbr.rel (%p2180) target = $region1303
    $region1302: #{tpu_custom_call.1} parent=1 // pred_region
      %s2183 = sshll.u32 1, 1
      %s2184 = ssub.s32 %s2183, 1
      loop: start=0, step=1, limit=1
      $region1304: #{tpu_custom_call.1} parent=1302 // loop_pre_header
        _
      $region1305: #{tpu_custom_call.1} parent=1302 // loop_header
        %s2186 = sphi 0, %s2190
        %p2187 = scmp.ge.s32.totalorder %s2186, 1
        %s2191 = sphi %s2173, %s2173
        %s2192 = sphi %s2174, %s2174
      $region1306: #{tpu_custom_call.1} parent=1302 // loop_header_branch
        %2189 = sbr.rel (%p2187) target = $region1310
      $region1307: #{tpu_custom_call.1} parent=1302 // loop_body
        %v2193 = vld [vmem:[%s2191] sm:%s2184]
        %2194 = vst [vmem:[%s2192] sm:%s2184] %v2193
      $region1308: #{tpu_custom_call.1} parent=1302 // loop_footer
        %s2190 = sadd.s32 1, %s2186
      $region1309: #{tpu_custom_call.1} parent=1302 // loop_footer_branch
        %2185 = sbr.rel target = $region1305
      $region1310: #{tpu_custom_call.1} parent=1302 // loop_exit
        _
    $region1303: #{tpu_custom_call.1} parent=1 // pred_fallthru
      _
    // Predicated region
    $region1322: #{tpu_custom_call.1} parent=1 // pred_check
      _
    $region1323: #{tpu_custom_call.1} parent=1 // pred_check_branch
      %2219 = sbr.rel (0) target = $region1325
    $region1324: #{tpu_custom_call.1} parent=1 // pred_region
      %2220 = vsyncadd %s2024, 16
    $region1325: #{tpu_custom_call.1} parent=1 // pred_fallthru
      _
    %s2221 = sadd.s32 %s17, 37
    %s2222 = sld [smem:[#allocation5 + %s2221]]
    %s2223 = scalar_lea.vmem %s2, %s2222
    %s2224 = scalar_lea.vmem [#allocation2], 44
    %p2226 = scmp.lt.u32.totalorder 1, 8
    %p2227 = pneg %p2226
    // Predicated region
    $region1326: #{tpu_custom_call.1} parent=1 // pred_check
      _
    $region1327: #{tpu_custom_call.1} parent=1 // pred_check_branch
      %2229 = sbr.rel (%p2226) target = $region1329
    $region1328: #{tpu_custom_call.1} parent=1 // pred_region
      %s2245 = sand.u32 1, 7
      %p2246 = scmp.eq.s32.totalorder %s2245, 0
      %p2247 = pneg %p2246
      // Predicated region
      $region1341: #{tpu_custom_call.1} parent=1328 // pred_check
        _
      $region1342: #{tpu_custom_call.1} parent=1328 // pred_check_branch
        %2249 = sbr.rel (%p2246) target = $region1344
      $region1343: #{tpu_custom_call.1} parent=1328 // pred_region
        %s2250 = sand.u32 1, 7
        %s2251 = ssub.s32 1, %s2250
        %s2252 = scalar_lea.vmem %s2223, %s2251
        %s2253 = ssub.s32 1, %s2250
        %s2254 = scalar_lea.vmem %s2224, %s2253 [#allocation2]
        %s2255 = sshll.u32 1, %s2250
        %s2256 = ssub.s32 %s2255, 1
        loop: start=0, step=1, limit=1
        $region1345: #{tpu_custom_call.1} parent=1343 // loop_pre_header
          _
        $region1346: #{tpu_custom_call.1} parent=1343 // loop_header
          %s2258 = sphi 0, %s2262
          %p2259 = scmp.ge.s32.totalorder %s2258, 1
          %s2263 = sphi %s2252, %s2252
          %s2264 = sphi %s2254, %s2254
        $region1347: #{tpu_custom_call.1} parent=1343 // loop_header_branch
          %2261 = sbr.rel (%p2259) target = $region1351
        $region1348: #{tpu_custom_call.1} parent=1343 // loop_body
          %v2265 = vld [vmem:[%s2263] sm:%s2256]
          %2266 = vst [vmem:[%s2264] sm:%s2256] %v2265
        $region1349: #{tpu_custom_call.1} parent=1343 // loop_footer
          %s2262 = sadd.s32 1, %s2258
        $region1350: #{tpu_custom_call.1} parent=1343 // loop_footer_branch
          %2257 = sbr.rel target = $region1346
        $region1351: #{tpu_custom_call.1} parent=1343 // loop_exit
          _
      $region1344: #{tpu_custom_call.1} parent=1328 // pred_fallthru
        _
    $region1329: #{tpu_custom_call.1} parent=1 // pred_fallthru
      _
    // Predicated region
    $region1330: #{tpu_custom_call.1} parent=1 // pred_check
      %p2230 = pneg %p2226
    $region1331: #{tpu_custom_call.1} parent=1 // pred_check_branch
      %2232 = sbr.rel (%p2230) target = $region1333
    $region1332: #{tpu_custom_call.1} parent=1 // pred_region
      %s2233 = sshll.u32 1, 1
      %s2234 = ssub.s32 %s2233, 1
      loop: start=0, step=1, limit=1
      $region1334: #{tpu_custom_call.1} parent=1332 // loop_pre_header
        _
      $region1335: #{tpu_custom_call.1} parent=1332 // loop_header
        %s2236 = sphi 0, %s2240
        %p2237 = scmp.ge.s32.totalorder %s2236, 1
        %s2241 = sphi %s2223, %s2223
        %s2242 = sphi %s2224, %s2224
      $region1336: #{tpu_custom_call.1} parent=1332 // loop_header_branch
        %2239 = sbr.rel (%p2237) target = $region1340
      $region1337: #{tpu_custom_call.1} parent=1332 // loop_body
        %v2243 = vld [vmem:[%s2241] sm:%s2234]
        %2244 = vst [vmem:[%s2242] sm:%s2234] %v2243
      $region1338: #{tpu_custom_call.1} parent=1332 // loop_footer
        %s2240 = sadd.s32 1, %s2236
      $region1339: #{tpu_custom_call.1} parent=1332 // loop_footer_branch
        %2235 = sbr.rel target = $region1335
      $region1340: #{tpu_custom_call.1} parent=1332 // loop_exit
        _
    $region1333: #{tpu_custom_call.1} parent=1 // pred_fallthru
      _
    // Predicated region
    $region1352: #{tpu_custom_call.1} parent=1 // pred_check
      _
    $region1353: #{tpu_custom_call.1} parent=1 // pred_check_branch
      %2269 = sbr.rel (0) target = $region1355
    $region1354: #{tpu_custom_call.1} parent=1 // pred_region
      %2270 = vsyncadd %s2024, 16
    $region1355: #{tpu_custom_call.1} parent=1 // pred_fallthru
      _
    %s2271 = sadd.s32 %s17, 45
    %s2272 = sld [smem:[#allocation5 + %s2271]]
    %s2273 = scalar_lea.vmem %s2, %s2272
    %s2274 = scalar_lea.vmem [#allocation2], 45
    %p2276 = scmp.lt.u32.totalorder 1, 8
    %p2277 = pneg %p2276
    // Predicated region
    $region1356: #{tpu_custom_call.1} parent=1 // pred_check
      _
    $region1357: #{tpu_custom_call.1} parent=1 // pred_check_branch
      %2279 = sbr.rel (%p2276) target = $region1359
    $region1358: #{tpu_custom_call.1} parent=1 // pred_region
      %s2295 = sand.u32 1, 7
      %p2296 = scmp.eq.s32.totalorder %s2295, 0
      %p2297 = pneg %p2296
      // Predicated region
      $region1371: #{tpu_custom_call.1} parent=1358 // pred_check
        _
      $region1372: #{tpu_custom_call.1} parent=1358 // pred_check_branch
        %2299 = sbr.rel (%p2296) target = $region1374
      $region1373: #{tpu_custom_call.1} parent=1358 // pred_region
        %s2300 = sand.u32 1, 7
        %s2301 = ssub.s32 1, %s2300
        %s2302 = scalar_lea.vmem %s2273, %s2301
        %s2303 = ssub.s32 1, %s2300
        %s2304 = scalar_lea.vmem %s2274, %s2303 [#allocation2]
        %s2305 = sshll.u32 1, %s2300
        %s2306 = ssub.s32 %s2305, 1
        loop: start=0, step=1, limit=1
        $region1375: #{tpu_custom_call.1} parent=1373 // loop_pre_header
          _
        $region1376: #{tpu_custom_call.1} parent=1373 // loop_header
          %s2308 = sphi 0, %s2312
          %p2309 = scmp.ge.s32.totalorder %s2308, 1
          %s2313 = sphi %s2302, %s2302
          %s2314 = sphi %s2304, %s2304
        $region1377: #{tpu_custom_call.1} parent=1373 // loop_header_branch
          %2311 = sbr.rel (%p2309) target = $region1381
        $region1378: #{tpu_custom_call.1} parent=1373 // loop_body
          %v2315 = vld [vmem:[%s2313] sm:%s2306]
          %2316 = vst [vmem:[%s2314] sm:%s2306] %v2315
        $region1379: #{tpu_custom_call.1} parent=1373 // loop_footer
          %s2312 = sadd.s32 1, %s2308
        $region1380: #{tpu_custom_call.1} parent=1373 // loop_footer_branch
          %2307 = sbr.rel target = $region1376
        $region1381: #{tpu_custom_call.1} parent=1373 // loop_exit
          _
      $region1374: #{tpu_custom_call.1} parent=1358 // pred_fallthru
        _
    $region1359: #{tpu_custom_call.1} parent=1 // pred_fallthru
      _
    // Predicated region
    $region1360: #{tpu_custom_call.1} parent=1 // pred_check
      %p2280 = pneg %p2276
    $region1361: #{tpu_custom_call.1} parent=1 // pred_check_branch
      %2282 = sbr.rel (%p2280) target = $region1363
    $region1362: #{tpu_custom_call.1} parent=1 // pred_region
      %s2283 = sshll.u32 1, 1
      %s2284 = ssub.s32 %s2283, 1
      loop: start=0, step=1, limit=1
      $region1364: #{tpu_custom_call.1} parent=1362 // loop_pre_header
        _
      $region1365: #{tpu_custom_call.1} parent=1362 // loop_header
        %s2286 = sphi 0, %s2290
        %p2287 = scmp.ge.s32.totalorder %s2286, 1
        %s2291 = sphi %s2273, %s2273
        %s2292 = sphi %s2274, %s2274
      $region1366: #{tpu_custom_call.1} parent=1362 // loop_header_branch
        %2289 = sbr.rel (%p2287) target = $region1370
      $region1367: #{tpu_custom_call.1} parent=1362 // loop_body
        %v2293 = vld [vmem:[%s2291] sm:%s2284]
        %2294 = vst [vmem:[%s2292] sm:%s2284] %v2293
      $region1368: #{tpu_custom_call.1} parent=1362 // loop_footer
        %s2290 = sadd.s32 1, %s2286
      $region1369: #{tpu_custom_call.1} parent=1362 // loop_footer_branch
        %2285 = sbr.rel target = $region1365
      $region1370: #{tpu_custom_call.1} parent=1362 // loop_exit
        _
    $region1363: #{tpu_custom_call.1} parent=1 // pred_fallthru
      _
    // Predicated region
    $region1382: #{tpu_custom_call.1} parent=1 // pred_check
      _
    $region1383: #{tpu_custom_call.1} parent=1 // pred_check_branch
      %2319 = sbr.rel (0) target = $region1385
    $region1384: #{tpu_custom_call.1} parent=1 // pred_region
      %2320 = vsyncadd %s2024, 16
    $region1385: #{tpu_custom_call.1} parent=1 // pred_fallthru
      _
    %s2321 = sadd.s32 %s17, 53
    %s2322 = sld [smem:[#allocation5 + %s2321]]
    %s2323 = scalar_lea.vmem %s2, %s2322
    %s2324 = scalar_lea.vmem [#allocation2], 46
    %p2326 = scmp.lt.u32.totalorder 1, 8
    %p2327 = pneg %p2326
    // Predicated region
    $region1386: #{tpu_custom_call.1} parent=1 // pred_check
      _
    $region1387: #{tpu_custom_call.1} parent=1 // pred_check_branch
      %2329 = sbr.rel (%p2326) target = $region1389
    $region1388: #{tpu_custom_call.1} parent=1 // pred_region
      %s2345 = sand.u32 1, 7
      %p2346 = scmp.eq.s32.totalorder %s2345, 0
      %p2347 = pneg %p2346
      // Predicated region
      $region1401: #{tpu_custom_call.1} parent=1388 // pred_check
        _
      $region1402: #{tpu_custom_call.1} parent=1388 // pred_check_branch
        %2349 = sbr.rel (%p2346) target = $region1404
      $region1403: #{tpu_custom_call.1} parent=1388 // pred_region
        %s2350 = sand.u32 1, 7
        %s2351 = ssub.s32 1, %s2350
        %s2352 = scalar_lea.vmem %s2323, %s2351
        %s2353 = ssub.s32 1, %s2350
        %s2354 = scalar_lea.vmem %s2324, %s2353 [#allocation2]
        %s2355 = sshll.u32 1, %s2350
        %s2356 = ssub.s32 %s2355, 1
        loop: start=0, step=1, limit=1
        $region1405: #{tpu_custom_call.1} parent=1403 // loop_pre_header
          _
        $region1406: #{tpu_custom_call.1} parent=1403 // loop_header
          %s2358 = sphi 0, %s2362
          %p2359 = scmp.ge.s32.totalorder %s2358, 1
          %s2363 = sphi %s2352, %s2352
          %s2364 = sphi %s2354, %s2354
        $region1407: #{tpu_custom_call.1} parent=1403 // loop_header_branch
          %2361 = sbr.rel (%p2359) target = $region1411
        $region1408: #{tpu_custom_call.1} parent=1403 // loop_body
          %v2365 = vld [vmem:[%s2363] sm:%s2356]
          %2366 = vst [vmem:[%s2364] sm:%s2356] %v2365
        $region1409: #{tpu_custom_call.1} parent=1403 // loop_footer
          %s2362 = sadd.s32 1, %s2358
        $region1410: #{tpu_custom_call.1} parent=1403 // loop_footer_branch
          %2357 = sbr.rel target = $region1406
        $region1411: #{tpu_custom_call.1} parent=1403 // loop_exit
          _
      $region1404: #{tpu_custom_call.1} parent=1388 // pred_fallthru
        _
    $region1389: #{tpu_custom_call.1} parent=1 // pred_fallthru
      _
    // Predicated region
    $region1390: #{tpu_custom_call.1} parent=1 // pred_check
      %p2330 = pneg %p2326
    $region1391: #{tpu_custom_call.1} parent=1 // pred_check_branch
      %2332 = sbr.rel (%p2330) target = $region1393
    $region1392: #{tpu_custom_call.1} parent=1 // pred_region
      %s2333 = sshll.u32 1, 1
      %s2334 = ssub.s32 %s2333, 1
      loop: start=0, step=1, limit=1
      $region1394: #{tpu_custom_call.1} parent=1392 // loop_pre_header
        _
      $region1395: #{tpu_custom_call.1} parent=1392 // loop_header
        %s2336 = sphi 0, %s2340
        %p2337 = scmp.ge.s32.totalorder %s2336, 1
        %s2341 = sphi %s2323, %s2323
        %s2342 = sphi %s2324, %s2324
      $region1396: #{tpu_custom_call.1} parent=1392 // loop_header_branch
        %2339 = sbr.rel (%p2337) target = $region1400
      $region1397: #{tpu_custom_call.1} parent=1392 // loop_body
        %v2343 = vld [vmem:[%s2341] sm:%s2334]
        %2344 = vst [vmem:[%s2342] sm:%s2334] %v2343
      $region1398: #{tpu_custom_call.1} parent=1392 // loop_footer
        %s2340 = sadd.s32 1, %s2336
      $region1399: #{tpu_custom_call.1} parent=1392 // loop_footer_branch
        %2335 = sbr.rel target = $region1395
      $region1400: #{tpu_custom_call.1} parent=1392 // loop_exit
        _
    $region1393: #{tpu_custom_call.1} parent=1 // pred_fallthru
      _
    // Predicated region
    $region1412: #{tpu_custom_call.1} parent=1 // pred_check
      _
    $region1413: #{tpu_custom_call.1} parent=1 // pred_check_branch
      %2369 = sbr.rel (0) target = $region1415
    $region1414: #{tpu_custom_call.1} parent=1 // pred_region
      %2370 = vsyncadd %s2024, 16
    $region1415: #{tpu_custom_call.1} parent=1 // pred_fallthru
      _
    %s2371 = sadd.s32 %s17, 61
    %s2372 = sld [smem:[#allocation5 + %s2371]]
    %s2373 = scalar_lea.vmem %s2, %s2372
    %s2374 = scalar_lea.vmem [#allocation2], 47
    %p2376 = scmp.lt.u32.totalorder 1, 8
    %p2377 = pneg %p2376
    // Predicated region
    $region1416: #{tpu_custom_call.1} parent=1 // pred_check
      _
    $region1417: #{tpu_custom_call.1} parent=1 // pred_check_branch
      %2379 = sbr.rel (%p2376) target = $region1419
    $region1418: #{tpu_custom_call.1} parent=1 // pred_region
      %s2395 = sand.u32 1, 7
      %p2396 = scmp.eq.s32.totalorder %s2395, 0
      %p2397 = pneg %p2396
      // Predicated region
      $region1431: #{tpu_custom_call.1} parent=1418 // pred_check
        _
      $region1432: #{tpu_custom_call.1} parent=1418 // pred_check_branch
        %2399 = sbr.rel (%p2396) target = $region1434
      $region1433: #{tpu_custom_call.1} parent=1418 // pred_region
        %s2400 = sand.u32 1, 7
        %s2401 = ssub.s32 1, %s2400
        %s2402 = scalar_lea.vmem %s2373, %s2401
        %s2403 = ssub.s32 1, %s2400
        %s2404 = scalar_lea.vmem %s2374, %s2403 [#allocation2]
        %s2405 = sshll.u32 1, %s2400
        %s2406 = ssub.s32 %s2405, 1
        loop: start=0, step=1, limit=1
        $region1435: #{tpu_custom_call.1} parent=1433 // loop_pre_header
          _
        $region1436: #{tpu_custom_call.1} parent=1433 // loop_header
          %s2408 = sphi 0, %s2412
          %p2409 = scmp.ge.s32.totalorder %s2408, 1
          %s2413 = sphi %s2402, %s2402
          %s2414 = sphi %s2404, %s2404
        $region1437: #{tpu_custom_call.1} parent=1433 // loop_header_branch
          %2411 = sbr.rel (%p2409) target = $region1441
        $region1438: #{tpu_custom_call.1} parent=1433 // loop_body
          %v2415 = vld [vmem:[%s2413] sm:%s2406]
          %2416 = vst [vmem:[%s2414] sm:%s2406] %v2415
        $region1439: #{tpu_custom_call.1} parent=1433 // loop_footer
          %s2412 = sadd.s32 1, %s2408
        $region1440: #{tpu_custom_call.1} parent=1433 // loop_footer_branch
          %2407 = sbr.rel target = $region1436
        $region1441: #{tpu_custom_call.1} parent=1433 // loop_exit
          _
      $region1434: #{tpu_custom_call.1} parent=1418 // pred_fallthru
        _
    $region1419: #{tpu_custom_call.1} parent=1 // pred_fallthru
      _
    // Predicated region
    $region1420: #{tpu_custom_call.1} parent=1 // pred_check
      %p2380 = pneg %p2376
    $region1421: #{tpu_custom_call.1} parent=1 // pred_check_branch
      %2382 = sbr.rel (%p2380) target = $region1423
    $region1422: #{tpu_custom_call.1} parent=1 // pred_region
      %s2383 = sshll.u32 1, 1
      %s2384 = ssub.s32 %s2383, 1
      loop: start=0, step=1, limit=1
      $region1424: #{tpu_custom_call.1} parent=1422 // loop_pre_header
        _
      $region1425: #{tpu_custom_call.1} parent=1422 // loop_header
        %s2386 = sphi 0, %s2390
        %p2387 = scmp.ge.s32.totalorder %s2386, 1
        %s2391 = sphi %s2373, %s2373
        %s2392 = sphi %s2374, %s2374
      $region1426: #{tpu_custom_call.1} parent=1422 // loop_header_branch
        %2389 = sbr.rel (%p2387) target = $region1430
      $region1427: #{tpu_custom_call.1} parent=1422 // loop_body
        %v2393 = vld [vmem:[%s2391] sm:%s2384]
        %2394 = vst [vmem:[%s2392] sm:%s2384] %v2393
      $region1428: #{tpu_custom_call.1} parent=1422 // loop_footer
        %s2390 = sadd.s32 1, %s2386
      $region1429: #{tpu_custom_call.1} parent=1422 // loop_footer_branch
        %2385 = sbr.rel target = $region1425
      $region1430: #{tpu_custom_call.1} parent=1422 // loop_exit
        _
    $region1423: #{tpu_custom_call.1} parent=1 // pred_fallthru
      _
    // Predicated region
    $region1442: #{tpu_custom_call.1} parent=1 // pred_check
      _
    $region1443: #{tpu_custom_call.1} parent=1 // pred_check_branch
      %2419 = sbr.rel (0) target = $region1445
    $region1444: #{tpu_custom_call.1} parent=1 // pred_region
      %2420 = vsyncadd %s2024, 16
    $region1445: #{tpu_custom_call.1} parent=1 // pred_fallthru
      _
    %s2421 = sadd.s32 %s17, 6
    %s2422 = sld [smem:[#allocation5 + %s2421]]
    %s2423 = scalar_lea.vmem %s2, %s2422
    %s2424 = scalar_lea.vmem [#allocation2], 48
    %s2425 = scalar_lea.sflag [#allocation3], 6
    %p2427 = scmp.lt.u32.totalorder 1, 8
    %p2428 = pneg %p2427
    // Predicated region
    $region1446: #{tpu_custom_call.1} parent=1 // pred_check
      _
    $region1447: #{tpu_custom_call.1} parent=1 // pred_check_branch
      %2430 = sbr.rel (%p2427) target = $region1449
    $region1448: #{tpu_custom_call.1} parent=1 // pred_region
      %s2446 = sand.u32 1, 7
      %p2447 = scmp.eq.s32.totalorder %s2446, 0
      %p2448 = pneg %p2447
      // Predicated region
      $region1461: #{tpu_custom_call.1} parent=1448 // pred_check
        _
      $region1462: #{tpu_custom_call.1} parent=1448 // pred_check_branch
        %2450 = sbr.rel (%p2447) target = $region1464
      $region1463: #{tpu_custom_call.1} parent=1448 // pred_region
        %s2451 = sand.u32 1, 7
        %s2452 = ssub.s32 1, %s2451
        %s2453 = scalar_lea.vmem %s2423, %s2452
        %s2454 = ssub.s32 1, %s2451
        %s2455 = scalar_lea.vmem %s2424, %s2454 [#allocation2]
        %s2456 = sshll.u32 1, %s2451
        %s2457 = ssub.s32 %s2456, 1
        loop: start=0, step=1, limit=1
        $region1465: #{tpu_custom_call.1} parent=1463 // loop_pre_header
          _
        $region1466: #{tpu_custom_call.1} parent=1463 // loop_header
          %s2459 = sphi 0, %s2463
          %p2460 = scmp.ge.s32.totalorder %s2459, 1
          %s2464 = sphi %s2453, %s2453
          %s2465 = sphi %s2455, %s2455
        $region1467: #{tpu_custom_call.1} parent=1463 // loop_header_branch
          %2462 = sbr.rel (%p2460) target = $region1471
        $region1468: #{tpu_custom_call.1} parent=1463 // loop_body
          %v2466 = vld [vmem:[%s2464] sm:%s2457]
          %2467 = vst [vmem:[%s2465] sm:%s2457] %v2466
        $region1469: #{tpu_custom_call.1} parent=1463 // loop_footer
          %s2463 = sadd.s32 1, %s2459
        $region1470: #{tpu_custom_call.1} parent=1463 // loop_footer_branch
          %2458 = sbr.rel target = $region1466
        $region1471: #{tpu_custom_call.1} parent=1463 // loop_exit
          _
      $region1464: #{tpu_custom_call.1} parent=1448 // pred_fallthru
        _
    $region1449: #{tpu_custom_call.1} parent=1 // pred_fallthru
      _
    // Predicated region
    $region1450: #{tpu_custom_call.1} parent=1 // pred_check
      %p2431 = pneg %p2427
    $region1451: #{tpu_custom_call.1} parent=1 // pred_check_branch
      %2433 = sbr.rel (%p2431) target = $region1453
    $region1452: #{tpu_custom_call.1} parent=1 // pred_region
      %s2434 = sshll.u32 1, 1
      %s2435 = ssub.s32 %s2434, 1
      loop: start=0, step=1, limit=1
      $region1454: #{tpu_custom_call.1} parent=1452 // loop_pre_header
        _
      $region1455: #{tpu_custom_call.1} parent=1452 // loop_header
        %s2437 = sphi 0, %s2441
        %p2438 = scmp.ge.s32.totalorder %s2437, 1
        %s2442 = sphi %s2423, %s2423
        %s2443 = sphi %s2424, %s2424
      $region1456: #{tpu_custom_call.1} parent=1452 // loop_header_branch
        %2440 = sbr.rel (%p2438) target = $region1460
      $region1457: #{tpu_custom_call.1} parent=1452 // loop_body
        %v2444 = vld [vmem:[%s2442] sm:%s2435]
        %2445 = vst [vmem:[%s2443] sm:%s2435] %v2444
      $region1458: #{tpu_custom_call.1} parent=1452 // loop_footer
        %s2441 = sadd.s32 1, %s2437
      $region1459: #{tpu_custom_call.1} parent=1452 // loop_footer_branch
        %2436 = sbr.rel target = $region1455
      $region1460: #{tpu_custom_call.1} parent=1452 // loop_exit
        _
    $region1453: #{tpu_custom_call.1} parent=1 // pred_fallthru
      _
    // Predicated region
    $region1472: #{tpu_custom_call.1} parent=1 // pred_check
      _
    $region1473: #{tpu_custom_call.1} parent=1 // pred_check_branch
      %2470 = sbr.rel (0) target = $region1475
    $region1474: #{tpu_custom_call.1} parent=1 // pred_region
      %2471 = vsyncadd %s2425, 16
    $region1475: #{tpu_custom_call.1} parent=1 // pred_fallthru
      _
    %s2472 = sadd.s32 %s17, 14
    %s2473 = sld [smem:[#allocation5 + %s2472]]
    %s2474 = scalar_lea.vmem %s2, %s2473
    %s2475 = scalar_lea.vmem [#allocation2], 49
    %p2477 = scmp.lt.u32.totalorder 1, 8
    %p2478 = pneg %p2477
    // Predicated region
    $region1476: #{tpu_custom_call.1} parent=1 // pred_check
      _
    $region1477: #{tpu_custom_call.1} parent=1 // pred_check_branch
      %2480 = sbr.rel (%p2477) target = $region1479
    $region1478: #{tpu_custom_call.1} parent=1 // pred_region
      %s2496 = sand.u32 1, 7
      %p2497 = scmp.eq.s32.totalorder %s2496, 0
      %p2498 = pneg %p2497
      // Predicated region
      $region1491: #{tpu_custom_call.1} parent=1478 // pred_check
        _
      $region1492: #{tpu_custom_call.1} parent=1478 // pred_check_branch
        %2500 = sbr.rel (%p2497) target = $region1494
      $region1493: #{tpu_custom_call.1} parent=1478 // pred_region
        %s2501 = sand.u32 1, 7
        %s2502 = ssub.s32 1, %s2501
        %s2503 = scalar_lea.vmem %s2474, %s2502
        %s2504 = ssub.s32 1, %s2501
        %s2505 = scalar_lea.vmem %s2475, %s2504 [#allocation2]
        %s2506 = sshll.u32 1, %s2501
        %s2507 = ssub.s32 %s2506, 1
        loop: start=0, step=1, limit=1
        $region1495: #{tpu_custom_call.1} parent=1493 // loop_pre_header
          _
        $region1496: #{tpu_custom_call.1} parent=1493 // loop_header
          %s2509 = sphi 0, %s2513
          %p2510 = scmp.ge.s32.totalorder %s2509, 1
          %s2514 = sphi %s2503, %s2503
          %s2515 = sphi %s2505, %s2505
        $region1497: #{tpu_custom_call.1} parent=1493 // loop_header_branch
          %2512 = sbr.rel (%p2510) target = $region1501
        $region1498: #{tpu_custom_call.1} parent=1493 // loop_body
          %v2516 = vld [vmem:[%s2514] sm:%s2507]
          %2517 = vst [vmem:[%s2515] sm:%s2507] %v2516
        $region1499: #{tpu_custom_call.1} parent=1493 // loop_footer
          %s2513 = sadd.s32 1, %s2509
        $region1500: #{tpu_custom_call.1} parent=1493 // loop_footer_branch
          %2508 = sbr.rel target = $region1496
        $region1501: #{tpu_custom_call.1} parent=1493 // loop_exit
          _
      $region1494: #{tpu_custom_call.1} parent=1478 // pred_fallthru
        _
    $region1479: #{tpu_custom_call.1} parent=1 // pred_fallthru
      _
    // Predicated region
    $region1480: #{tpu_custom_call.1} parent=1 // pred_check
      %p2481 = pneg %p2477
    $region1481: #{tpu_custom_call.1} parent=1 // pred_check_branch
      %2483 = sbr.rel (%p2481) target = $region1483
    $region1482: #{tpu_custom_call.1} parent=1 // pred_region
      %s2484 = sshll.u32 1, 1
      %s2485 = ssub.s32 %s2484, 1
      loop: start=0, step=1, limit=1
      $region1484: #{tpu_custom_call.1} parent=1482 // loop_pre_header
        _
      $region1485: #{tpu_custom_call.1} parent=1482 // loop_header
        %s2487 = sphi 0, %s2491
        %p2488 = scmp.ge.s32.totalorder %s2487, 1
        %s2492 = sphi %s2474, %s2474
        %s2493 = sphi %s2475, %s2475
      $region1486: #{tpu_custom_call.1} parent=1482 // loop_header_branch
        %2490 = sbr.rel (%p2488) target = $region1490
      $region1487: #{tpu_custom_call.1} parent=1482 // loop_body
        %v2494 = vld [vmem:[%s2492] sm:%s2485]
        %2495 = vst [vmem:[%s2493] sm:%s2485] %v2494
      $region1488: #{tpu_custom_call.1} parent=1482 // loop_footer
        %s2491 = sadd.s32 1, %s2487
      $region1489: #{tpu_custom_call.1} parent=1482 // loop_footer_branch
        %2486 = sbr.rel target = $region1485
      $region1490: #{tpu_custom_call.1} parent=1482 // loop_exit
        _
    $region1483: #{tpu_custom_call.1} parent=1 // pred_fallthru
      _
    // Predicated region
    $region1502: #{tpu_custom_call.1} parent=1 // pred_check
      _
    $region1503: #{tpu_custom_call.1} parent=1 // pred_check_branch
      %2520 = sbr.rel (0) target = $region1505
    $region1504: #{tpu_custom_call.1} parent=1 // pred_region
      %2521 = vsyncadd %s2425, 16
    $region1505: #{tpu_custom_call.1} parent=1 // pred_fallthru
      _
    %s2522 = sadd.s32 %s17, 22
    %s2523 = sld [smem:[#allocation5 + %s2522]]
    %s2524 = scalar_lea.vmem %s2, %s2523
    %s2525 = scalar_lea.vmem [#allocation2], 50
    %p2527 = scmp.lt.u32.totalorder 1, 8
    %p2528 = pneg %p2527
    // Predicated region
    $region1506: #{tpu_custom_call.1} parent=1 // pred_check
      _
    $region1507: #{tpu_custom_call.1} parent=1 // pred_check_branch
      %2530 = sbr.rel (%p2527) target = $region1509
    $region1508: #{tpu_custom_call.1} parent=1 // pred_region
      %s2546 = sand.u32 1, 7
      %p2547 = scmp.eq.s32.totalorder %s2546, 0
      %p2548 = pneg %p2547
      // Predicated region
      $region1521: #{tpu_custom_call.1} parent=1508 // pred_check
        _
      $region1522: #{tpu_custom_call.1} parent=1508 // pred_check_branch
        %2550 = sbr.rel (%p2547) target = $region1524
      $region1523: #{tpu_custom_call.1} parent=1508 // pred_region
        %s2551 = sand.u32 1, 7
        %s2552 = ssub.s32 1, %s2551
        %s2553 = scalar_lea.vmem %s2524, %s2552
        %s2554 = ssub.s32 1, %s2551
        %s2555 = scalar_lea.vmem %s2525, %s2554 [#allocation2]
        %s2556 = sshll.u32 1, %s2551
        %s2557 = ssub.s32 %s2556, 1
        loop: start=0, step=1, limit=1
        $region1525: #{tpu_custom_call.1} parent=1523 // loop_pre_header
          _
        $region1526: #{tpu_custom_call.1} parent=1523 // loop_header
          %s2559 = sphi 0, %s2563
          %p2560 = scmp.ge.s32.totalorder %s2559, 1
          %s2564 = sphi %s2553, %s2553
          %s2565 = sphi %s2555, %s2555
        $region1527: #{tpu_custom_call.1} parent=1523 // loop_header_branch
          %2562 = sbr.rel (%p2560) target = $region1531
        $region1528: #{tpu_custom_call.1} parent=1523 // loop_body
          %v2566 = vld [vmem:[%s2564] sm:%s2557]
          %2567 = vst [vmem:[%s2565] sm:%s2557] %v2566
        $region1529: #{tpu_custom_call.1} parent=1523 // loop_footer
          %s2563 = sadd.s32 1, %s2559
        $region1530: #{tpu_custom_call.1} parent=1523 // loop_footer_branch
          %2558 = sbr.rel target = $region1526
        $region1531: #{tpu_custom_call.1} parent=1523 // loop_exit
          _
      $region1524: #{tpu_custom_call.1} parent=1508 // pred_fallthru
        _
    $region1509: #{tpu_custom_call.1} parent=1 // pred_fallthru
      _
    // Predicated region
    $region1510: #{tpu_custom_call.1} parent=1 // pred_check
      %p2531 = pneg %p2527
    $region1511: #{tpu_custom_call.1} parent=1 // pred_check_branch
      %2533 = sbr.rel (%p2531) target = $region1513
    $region1512: #{tpu_custom_call.1} parent=1 // pred_region
      %s2534 = sshll.u32 1, 1
      %s2535 = ssub.s32 %s2534, 1
      loop: start=0, step=1, limit=1
      $region1514: #{tpu_custom_call.1} parent=1512 // loop_pre_header
        _
      $region1515: #{tpu_custom_call.1} parent=1512 // loop_header
        %s2537 = sphi 0, %s2541
        %p2538 = scmp.ge.s32.totalorder %s2537, 1
        %s2542 = sphi %s2524, %s2524
        %s2543 = sphi %s2525, %s2525
      $region1516: #{tpu_custom_call.1} parent=1512 // loop_header_branch
        %2540 = sbr.rel (%p2538) target = $region1520
      $region1517: #{tpu_custom_call.1} parent=1512 // loop_body
        %v2544 = vld [vmem:[%s2542] sm:%s2535]
        %2545 = vst [vmem:[%s2543] sm:%s2535] %v2544
      $region1518: #{tpu_custom_call.1} parent=1512 // loop_footer
        %s2541 = sadd.s32 1, %s2537
      $region1519: #{tpu_custom_call.1} parent=1512 // loop_footer_branch
        %2536 = sbr.rel target = $region1515
      $region1520: #{tpu_custom_call.1} parent=1512 // loop_exit
        _
    $region1513: #{tpu_custom_call.1} parent=1 // pred_fallthru
      _
    // Predicated region
    $region1532: #{tpu_custom_call.1} parent=1 // pred_check
      _
    $region1533: #{tpu_custom_call.1} parent=1 // pred_check_branch
      %2570 = sbr.rel (0) target = $region1535
    $region1534: #{tpu_custom_call.1} parent=1 // pred_region
      %2571 = vsyncadd %s2425, 16
    $region1535: #{tpu_custom_call.1} parent=1 // pred_fallthru
      _
    %s2572 = sadd.s32 %s17, 30
    %s2573 = sld [smem:[#allocation5 + %s2572]]
    %s2574 = scalar_lea.vmem %s2, %s2573
    %s2575 = scalar_lea.vmem [#allocation2], 51
    %p2577 = scmp.lt.u32.totalorder 1, 8
    %p2578 = pneg %p2577
    // Predicated region
    $region1536: #{tpu_custom_call.1} parent=1 // pred_check
      _
    $region1537: #{tpu_custom_call.1} parent=1 // pred_check_branch
      %2580 = sbr.rel (%p2577) target = $region1539
    $region1538: #{tpu_custom_call.1} parent=1 // pred_region
      %s2596 = sand.u32 1, 7
      %p2597 = scmp.eq.s32.totalorder %s2596, 0
      %p2598 = pneg %p2597
      // Predicated region
      $region1551: #{tpu_custom_call.1} parent=1538 // pred_check
        _
      $region1552: #{tpu_custom_call.1} parent=1538 // pred_check_branch
        %2600 = sbr.rel (%p2597) target = $region1554
      $region1553: #{tpu_custom_call.1} parent=1538 // pred_region
        %s2601 = sand.u32 1, 7
        %s2602 = ssub.s32 1, %s2601
        %s2603 = scalar_lea.vmem %s2574, %s2602
        %s2604 = ssub.s32 1, %s2601
        %s2605 = scalar_lea.vmem %s2575, %s2604 [#allocation2]
        %s2606 = sshll.u32 1, %s2601
        %s2607 = ssub.s32 %s2606, 1
        loop: start=0, step=1, limit=1
        $region1555: #{tpu_custom_call.1} parent=1553 // loop_pre_header
          _
        $region1556: #{tpu_custom_call.1} parent=1553 // loop_header
          %s2609 = sphi 0, %s2613
          %p2610 = scmp.ge.s32.totalorder %s2609, 1
          %s2614 = sphi %s2603, %s2603
          %s2615 = sphi %s2605, %s2605
        $region1557: #{tpu_custom_call.1} parent=1553 // loop_header_branch
          %2612 = sbr.rel (%p2610) target = $region1561
        $region1558: #{tpu_custom_call.1} parent=1553 // loop_body
          %v2616 = vld [vmem:[%s2614] sm:%s2607]
          %2617 = vst [vmem:[%s2615] sm:%s2607] %v2616
        $region1559: #{tpu_custom_call.1} parent=1553 // loop_footer
          %s2613 = sadd.s32 1, %s2609
        $region1560: #{tpu_custom_call.1} parent=1553 // loop_footer_branch
          %2608 = sbr.rel target = $region1556
        $region1561: #{tpu_custom_call.1} parent=1553 // loop_exit
          _
      $region1554: #{tpu_custom_call.1} parent=1538 // pred_fallthru
        _
    $region1539: #{tpu_custom_call.1} parent=1 // pred_fallthru
      _
    // Predicated region
    $region1540: #{tpu_custom_call.1} parent=1 // pred_check
      %p2581 = pneg %p2577
    $region1541: #{tpu_custom_call.1} parent=1 // pred_check_branch
      %2583 = sbr.rel (%p2581) target = $region1543
    $region1542: #{tpu_custom_call.1} parent=1 // pred_region
      %s2584 = sshll.u32 1, 1
      %s2585 = ssub.s32 %s2584, 1
      loop: start=0, step=1, limit=1
      $region1544: #{tpu_custom_call.1} parent=1542 // loop_pre_header
        _
      $region1545: #{tpu_custom_call.1} parent=1542 // loop_header
        %s2587 = sphi 0, %s2591
        %p2588 = scmp.ge.s32.totalorder %s2587, 1
        %s2592 = sphi %s2574, %s2574
        %s2593 = sphi %s2575, %s2575
      $region1546: #{tpu_custom_call.1} parent=1542 // loop_header_branch
        %2590 = sbr.rel (%p2588) target = $region1550
      $region1547: #{tpu_custom_call.1} parent=1542 // loop_body
        %v2594 = vld [vmem:[%s2592] sm:%s2585]
        %2595 = vst [vmem:[%s2593] sm:%s2585] %v2594
      $region1548: #{tpu_custom_call.1} parent=1542 // loop_footer
        %s2591 = sadd.s32 1, %s2587
      $region1549: #{tpu_custom_call.1} parent=1542 // loop_footer_branch
        %2586 = sbr.rel target = $region1545
      $region1550: #{tpu_custom_call.1} parent=1542 // loop_exit
        _
    $region1543: #{tpu_custom_call.1} parent=1 // pred_fallthru
      _
    // Predicated region
    $region1562: #{tpu_custom_call.1} parent=1 // pred_check
      _
    $region1563: #{tpu_custom_call.1} parent=1 // pred_check_branch
      %2620 = sbr.rel (0) target = $region1565
    $region1564: #{tpu_custom_call.1} parent=1 // pred_region
      %2621 = vsyncadd %s2425, 16
    $region1565: #{tpu_custom_call.1} parent=1 // pred_fallthru
      _
    %s2622 = sadd.s32 %s17, 38
    %s2623 = sld [smem:[#allocation5 + %s2622]]
    %s2624 = scalar_lea.vmem %s2, %s2623
    %s2625 = scalar_lea.vmem [#allocation2], 52
    %p2627 = scmp.lt.u32.totalorder 1, 8
    %p2628 = pneg %p2627
    // Predicated region
    $region1566: #{tpu_custom_call.1} parent=1 // pred_check
      _
    $region1567: #{tpu_custom_call.1} parent=1 // pred_check_branch
      %2630 = sbr.rel (%p2627) target = $region1569
    $region1568: #{tpu_custom_call.1} parent=1 // pred_region
      %s2646 = sand.u32 1, 7
      %p2647 = scmp.eq.s32.totalorder %s2646, 0
      %p2648 = pneg %p2647
      // Predicated region
      $region1581: #{tpu_custom_call.1} parent=1568 // pred_check
        _
      $region1582: #{tpu_custom_call.1} parent=1568 // pred_check_branch
        %2650 = sbr.rel (%p2647) target = $region1584
      $region1583: #{tpu_custom_call.1} parent=1568 // pred_region
        %s2651 = sand.u32 1, 7
        %s2652 = ssub.s32 1, %s2651
        %s2653 = scalar_lea.vmem %s2624, %s2652
        %s2654 = ssub.s32 1, %s2651
        %s2655 = scalar_lea.vmem %s2625, %s2654 [#allocation2]
        %s2656 = sshll.u32 1, %s2651
        %s2657 = ssub.s32 %s2656, 1
        loop: start=0, step=1, limit=1
        $region1585: #{tpu_custom_call.1} parent=1583 // loop_pre_header
          _
        $region1586: #{tpu_custom_call.1} parent=1583 // loop_header
          %s2659 = sphi 0, %s2663
          %p2660 = scmp.ge.s32.totalorder %s2659, 1
          %s2664 = sphi %s2653, %s2653
          %s2665 = sphi %s2655, %s2655
        $region1587: #{tpu_custom_call.1} parent=1583 // loop_header_branch
          %2662 = sbr.rel (%p2660) target = $region1591
        $region1588: #{tpu_custom_call.1} parent=1583 // loop_body
          %v2666 = vld [vmem:[%s2664] sm:%s2657]
          %2667 = vst [vmem:[%s2665] sm:%s2657] %v2666
        $region1589: #{tpu_custom_call.1} parent=1583 // loop_footer
          %s2663 = sadd.s32 1, %s2659
        $region1590: #{tpu_custom_call.1} parent=1583 // loop_footer_branch
          %2658 = sbr.rel target = $region1586
        $region1591: #{tpu_custom_call.1} parent=1583 // loop_exit
          _
      $region1584: #{tpu_custom_call.1} parent=1568 // pred_fallthru
        _
    $region1569: #{tpu_custom_call.1} parent=1 // pred_fallthru
      _
    // Predicated region
    $region1570: #{tpu_custom_call.1} parent=1 // pred_check
      %p2631 = pneg %p2627
    $region1571: #{tpu_custom_call.1} parent=1 // pred_check_branch
      %2633 = sbr.rel (%p2631) target = $region1573
    $region1572: #{tpu_custom_call.1} parent=1 // pred_region
      %s2634 = sshll.u32 1, 1
      %s2635 = ssub.s32 %s2634, 1
      loop: start=0, step=1, limit=1
      $region1574: #{tpu_custom_call.1} parent=1572 // loop_pre_header
        _
      $region1575: #{tpu_custom_call.1} parent=1572 // loop_header
        %s2637 = sphi 0, %s2641
        %p2638 = scmp.ge.s32.totalorder %s2637, 1
        %s2642 = sphi %s2624, %s2624
        %s2643 = sphi %s2625, %s2625
      $region1576: #{tpu_custom_call.1} parent=1572 // loop_header_branch
        %2640 = sbr.rel (%p2638) target = $region1580
      $region1577: #{tpu_custom_call.1} parent=1572 // loop_body
        %v2644 = vld [vmem:[%s2642] sm:%s2635]
        %2645 = vst [vmem:[%s2643] sm:%s2635] %v2644
      $region1578: #{tpu_custom_call.1} parent=1572 // loop_footer
        %s2641 = sadd.s32 1, %s2637
      $region1579: #{tpu_custom_call.1} parent=1572 // loop_footer_branch
        %2636 = sbr.rel target = $region1575
      $region1580: #{tpu_custom_call.1} parent=1572 // loop_exit
        _
    $region1573: #{tpu_custom_call.1} parent=1 // pred_fallthru
      _
    // Predicated region
    $region1592: #{tpu_custom_call.1} parent=1 // pred_check
      _
    $region1593: #{tpu_custom_call.1} parent=1 // pred_check_branch
      %2670 = sbr.rel (0) target = $region1595
    $region1594: #{tpu_custom_call.1} parent=1 // pred_region
      %2671 = vsyncadd %s2425, 16
    $region1595: #{tpu_custom_call.1} parent=1 // pred_fallthru
      _
    %s2672 = sadd.s32 %s17, 46
    %s2673 = sld [smem:[#allocation5 + %s2672]]
    %s2674 = scalar_lea.vmem %s2, %s2673
    %s2675 = scalar_lea.vmem [#allocation2], 53
    %p2677 = scmp.lt.u32.totalorder 1, 8
    %p2678 = pneg %p2677
    // Predicated region
    $region1596: #{tpu_custom_call.1} parent=1 // pred_check
      _
    $region1597: #{tpu_custom_call.1} parent=1 // pred_check_branch
      %2680 = sbr.rel (%p2677) target = $region1599
    $region1598: #{tpu_custom_call.1} parent=1 // pred_region
      %s2696 = sand.u32 1, 7
      %p2697 = scmp.eq.s32.totalorder %s2696, 0
      %p2698 = pneg %p2697
      // Predicated region
      $region1611: #{tpu_custom_call.1} parent=1598 // pred_check
        _
      $region1612: #{tpu_custom_call.1} parent=1598 // pred_check_branch
        %2700 = sbr.rel (%p2697) target = $region1614
      $region1613: #{tpu_custom_call.1} parent=1598 // pred_region
        %s2701 = sand.u32 1, 7
        %s2702 = ssub.s32 1, %s2701
        %s2703 = scalar_lea.vmem %s2674, %s2702
        %s2704 = ssub.s32 1, %s2701
        %s2705 = scalar_lea.vmem %s2675, %s2704 [#allocation2]
        %s2706 = sshll.u32 1, %s2701
        %s2707 = ssub.s32 %s2706, 1
        loop: start=0, step=1, limit=1
        $region1615: #{tpu_custom_call.1} parent=1613 // loop_pre_header
          _
        $region1616: #{tpu_custom_call.1} parent=1613 // loop_header
          %s2709 = sphi 0, %s2713
          %p2710 = scmp.ge.s32.totalorder %s2709, 1
          %s2714 = sphi %s2703, %s2703
          %s2715 = sphi %s2705, %s2705
        $region1617: #{tpu_custom_call.1} parent=1613 // loop_header_branch
          %2712 = sbr.rel (%p2710) target = $region1621
        $region1618: #{tpu_custom_call.1} parent=1613 // loop_body
          %v2716 = vld [vmem:[%s2714] sm:%s2707]
          %2717 = vst [vmem:[%s2715] sm:%s2707] %v2716
        $region1619: #{tpu_custom_call.1} parent=1613 // loop_footer
          %s2713 = sadd.s32 1, %s2709
        $region1620: #{tpu_custom_call.1} parent=1613 // loop_footer_branch
          %2708 = sbr.rel target = $region1616
        $region1621: #{tpu_custom_call.1} parent=1613 // loop_exit
          _
      $region1614: #{tpu_custom_call.1} parent=1598 // pred_fallthru
        _
    $region1599: #{tpu_custom_call.1} parent=1 // pred_fallthru
      _
    // Predicated region
    $region1600: #{tpu_custom_call.1} parent=1 // pred_check
      %p2681 = pneg %p2677
    $region1601: #{tpu_custom_call.1} parent=1 // pred_check_branch
      %2683 = sbr.rel (%p2681) target = $region1603
    $region1602: #{tpu_custom_call.1} parent=1 // pred_region
      %s2684 = sshll.u32 1, 1
      %s2685 = ssub.s32 %s2684, 1
      loop: start=0, step=1, limit=1
      $region1604: #{tpu_custom_call.1} parent=1602 // loop_pre_header
        _
      $region1605: #{tpu_custom_call.1} parent=1602 // loop_header
        %s2687 = sphi 0, %s2691
        %p2688 = scmp.ge.s32.totalorder %s2687, 1
        %s2692 = sphi %s2674, %s2674
        %s2693 = sphi %s2675, %s2675
      $region1606: #{tpu_custom_call.1} parent=1602 // loop_header_branch
        %2690 = sbr.rel (%p2688) target = $region1610
      $region1607: #{tpu_custom_call.1} parent=1602 // loop_body
        %v2694 = vld [vmem:[%s2692] sm:%s2685]
        %2695 = vst [vmem:[%s2693] sm:%s2685] %v2694
      $region1608: #{tpu_custom_call.1} parent=1602 // loop_footer
        %s2691 = sadd.s32 1, %s2687
      $region1609: #{tpu_custom_call.1} parent=1602 // loop_footer_branch
        %2686 = sbr.rel target = $region1605
      $region1610: #{tpu_custom_call.1} parent=1602 // loop_exit
        _
    $region1603: #{tpu_custom_call.1} parent=1 // pred_fallthru
      _
    // Predicated region
    $region1622: #{tpu_custom_call.1} parent=1 // pred_check
      _
    $region1623: #{tpu_custom_call.1} parent=1 // pred_check_branch
      %2720 = sbr.rel (0) target = $region1625
    $region1624: #{tpu_custom_call.1} parent=1 // pred_region
      %2721 = vsyncadd %s2425, 16
    $region1625: #{tpu_custom_call.1} parent=1 // pred_fallthru
      _
    %s2722 = sadd.s32 %s17, 54
    %s2723 = sld [smem:[#allocation5 + %s2722]]
    %s2724 = scalar_lea.vmem %s2, %s2723
    %s2725 = scalar_lea.vmem [#allocation2], 54
    %p2727 = scmp.lt.u32.totalorder 1, 8
    %p2728 = pneg %p2727
    // Predicated region
    $region1626: #{tpu_custom_call.1} parent=1 // pred_check
      _
    $region1627: #{tpu_custom_call.1} parent=1 // pred_check_branch
      %2730 = sbr.rel (%p2727) target = $region1629
    $region1628: #{tpu_custom_call.1} parent=1 // pred_region
      %s2746 = sand.u32 1, 7
      %p2747 = scmp.eq.s32.totalorder %s2746, 0
      %p2748 = pneg %p2747
      // Predicated region
      $region1641: #{tpu_custom_call.1} parent=1628 // pred_check
        _
      $region1642: #{tpu_custom_call.1} parent=1628 // pred_check_branch
        %2750 = sbr.rel (%p2747) target = $region1644
      $region1643: #{tpu_custom_call.1} parent=1628 // pred_region
        %s2751 = sand.u32 1, 7
        %s2752 = ssub.s32 1, %s2751
        %s2753 = scalar_lea.vmem %s2724, %s2752
        %s2754 = ssub.s32 1, %s2751
        %s2755 = scalar_lea.vmem %s2725, %s2754 [#allocation2]
        %s2756 = sshll.u32 1, %s2751
        %s2757 = ssub.s32 %s2756, 1
        loop: start=0, step=1, limit=1
        $region1645: #{tpu_custom_call.1} parent=1643 // loop_pre_header
          _
        $region1646: #{tpu_custom_call.1} parent=1643 // loop_header
          %s2759 = sphi 0, %s2763
          %p2760 = scmp.ge.s32.totalorder %s2759, 1
          %s2764 = sphi %s2753, %s2753
          %s2765 = sphi %s2755, %s2755
        $region1647: #{tpu_custom_call.1} parent=1643 // loop_header_branch
          %2762 = sbr.rel (%p2760) target = $region1651
        $region1648: #{tpu_custom_call.1} parent=1643 // loop_body
          %v2766 = vld [vmem:[%s2764] sm:%s2757]
          %2767 = vst [vmem:[%s2765] sm:%s2757] %v2766
        $region1649: #{tpu_custom_call.1} parent=1643 // loop_footer
          %s2763 = sadd.s32 1, %s2759
        $region1650: #{tpu_custom_call.1} parent=1643 // loop_footer_branch
          %2758 = sbr.rel target = $region1646
        $region1651: #{tpu_custom_call.1} parent=1643 // loop_exit
          _
      $region1644: #{tpu_custom_call.1} parent=1628 // pred_fallthru
        _
    $region1629: #{tpu_custom_call.1} parent=1 // pred_fallthru
      _
    // Predicated region
    $region1630: #{tpu_custom_call.1} parent=1 // pred_check
      %p2731 = pneg %p2727
    $region1631: #{tpu_custom_call.1} parent=1 // pred_check_branch
      %2733 = sbr.rel (%p2731) target = $region1633
    $region1632: #{tpu_custom_call.1} parent=1 // pred_region
      %s2734 = sshll.u32 1, 1
      %s2735 = ssub.s32 %s2734, 1
      loop: start=0, step=1, limit=1
      $region1634: #{tpu_custom_call.1} parent=1632 // loop_pre_header
        _
      $region1635: #{tpu_custom_call.1} parent=1632 // loop_header
        %s2737 = sphi 0, %s2741
        %p2738 = scmp.ge.s32.totalorder %s2737, 1
        %s2742 = sphi %s2724, %s2724
        %s2743 = sphi %s2725, %s2725
      $region1636: #{tpu_custom_call.1} parent=1632 // loop_header_branch
        %2740 = sbr.rel (%p2738) target = $region1640
      $region1637: #{tpu_custom_call.1} parent=1632 // loop_body
        %v2744 = vld [vmem:[%s2742] sm:%s2735]
        %2745 = vst [vmem:[%s2743] sm:%s2735] %v2744
      $region1638: #{tpu_custom_call.1} parent=1632 // loop_footer
        %s2741 = sadd.s32 1, %s2737
      $region1639: #{tpu_custom_call.1} parent=1632 // loop_footer_branch
        %2736 = sbr.rel target = $region1635
      $region1640: #{tpu_custom_call.1} parent=1632 // loop_exit
        _
    $region1633: #{tpu_custom_call.1} parent=1 // pred_fallthru
      _
    // Predicated region
    $region1652: #{tpu_custom_call.1} parent=1 // pred_check
      _
    $region1653: #{tpu_custom_call.1} parent=1 // pred_check_branch
      %2770 = sbr.rel (0) target = $region1655
    $region1654: #{tpu_custom_call.1} parent=1 // pred_region
      %2771 = vsyncadd %s2425, 16
    $region1655: #{tpu_custom_call.1} parent=1 // pred_fallthru
      _
    %s2772 = sadd.s32 %s17, 62
    %s2773 = sld [smem:[#allocation5 + %s2772]]
    %s2774 = scalar_lea.vmem %s2, %s2773
    %s2775 = scalar_lea.vmem [#allocation2], 55
    %p2777 = scmp.lt.u32.totalorder 1, 8
    %p2778 = pneg %p2777
    // Predicated region
    $region1656: #{tpu_custom_call.1} parent=1 // pred_check
      _
    $region1657: #{tpu_custom_call.1} parent=1 // pred_check_branch
      %2780 = sbr.rel (%p2777) target = $region1659
    $region1658: #{tpu_custom_call.1} parent=1 // pred_region
      %s2796 = sand.u32 1, 7
      %p2797 = scmp.eq.s32.totalorder %s2796, 0
      %p2798 = pneg %p2797
      // Predicated region
      $region1671: #{tpu_custom_call.1} parent=1658 // pred_check
        _
      $region1672: #{tpu_custom_call.1} parent=1658 // pred_check_branch
        %2800 = sbr.rel (%p2797) target = $region1674
      $region1673: #{tpu_custom_call.1} parent=1658 // pred_region
        %s2801 = sand.u32 1, 7
        %s2802 = ssub.s32 1, %s2801
        %s2803 = scalar_lea.vmem %s2774, %s2802
        %s2804 = ssub.s32 1, %s2801
        %s2805 = scalar_lea.vmem %s2775, %s2804 [#allocation2]
        %s2806 = sshll.u32 1, %s2801
        %s2807 = ssub.s32 %s2806, 1
        loop: start=0, step=1, limit=1
        $region1675: #{tpu_custom_call.1} parent=1673 // loop_pre_header
          _
        $region1676: #{tpu_custom_call.1} parent=1673 // loop_header
          %s2809 = sphi 0, %s2813
          %p2810 = scmp.ge.s32.totalorder %s2809, 1
          %s2814 = sphi %s2803, %s2803
          %s2815 = sphi %s2805, %s2805
        $region1677: #{tpu_custom_call.1} parent=1673 // loop_header_branch
          %2812 = sbr.rel (%p2810) target = $region1681
        $region1678: #{tpu_custom_call.1} parent=1673 // loop_body
          %v2816 = vld [vmem:[%s2814] sm:%s2807]
          %2817 = vst [vmem:[%s2815] sm:%s2807] %v2816
        $region1679: #{tpu_custom_call.1} parent=1673 // loop_footer
          %s2813 = sadd.s32 1, %s2809
        $region1680: #{tpu_custom_call.1} parent=1673 // loop_footer_branch
          %2808 = sbr.rel target = $region1676
        $region1681: #{tpu_custom_call.1} parent=1673 // loop_exit
          _
      $region1674: #{tpu_custom_call.1} parent=1658 // pred_fallthru
        _
    $region1659: #{tpu_custom_call.1} parent=1 // pred_fallthru
      _
    // Predicated region
    $region1660: #{tpu_custom_call.1} parent=1 // pred_check
      %p2781 = pneg %p2777
    $region1661: #{tpu_custom_call.1} parent=1 // pred_check_branch
      %2783 = sbr.rel (%p2781) target = $region1663
    $region1662: #{tpu_custom_call.1} parent=1 // pred_region
      %s2784 = sshll.u32 1, 1
      %s2785 = ssub.s32 %s2784, 1
      loop: start=0, step=1, limit=1
      $region1664: #{tpu_custom_call.1} parent=1662 // loop_pre_header
        _
      $region1665: #{tpu_custom_call.1} parent=1662 // loop_header
        %s2787 = sphi 0, %s2791
        %p2788 = scmp.ge.s32.totalorder %s2787, 1
        %s2792 = sphi %s2774, %s2774
        %s2793 = sphi %s2775, %s2775
      $region1666: #{tpu_custom_call.1} parent=1662 // loop_header_branch
        %2790 = sbr.rel (%p2788) target = $region1670
      $region1667: #{tpu_custom_call.1} parent=1662 // loop_body
        %v2794 = vld [vmem:[%s2792] sm:%s2785]
        %2795 = vst [vmem:[%s2793] sm:%s2785] %v2794
      $region1668: #{tpu_custom_call.1} parent=1662 // loop_footer
        %s2791 = sadd.s32 1, %s2787
      $region1669: #{tpu_custom_call.1} parent=1662 // loop_footer_branch
        %2786 = sbr.rel target = $region1665
      $region1670: #{tpu_custom_call.1} parent=1662 // loop_exit
        _
    $region1663: #{tpu_custom_call.1} parent=1 // pred_fallthru
      _
    // Predicated region
    $region1682: #{tpu_custom_call.1} parent=1 // pred_check
      _
    $region1683: #{tpu_custom_call.1} parent=1 // pred_check_branch
      %2820 = sbr.rel (0) target = $region1685
    $region1684: #{tpu_custom_call.1} parent=1 // pred_region
      %2821 = vsyncadd %s2425, 16
    $region1685: #{tpu_custom_call.1} parent=1 // pred_fallthru
      _
    %s2822 = sadd.s32 %s17, 7
    %s2823 = sld [smem:[#allocation5 + %s2822]]
    %s2824 = scalar_lea.vmem %s2, %s2823
    %s2825 = scalar_lea.vmem [#allocation2], 56
    %s2826 = scalar_lea.sflag [#allocation3], 7
    %p2828 = scmp.lt.u32.totalorder 1, 8
    %p2829 = pneg %p2828
    // Predicated region
    $region1686: #{tpu_custom_call.1} parent=1 // pred_check
      _
    $region1687: #{tpu_custom_call.1} parent=1 // pred_check_branch
      %2831 = sbr.rel (%p2828) target = $region1689
    $region1688: #{tpu_custom_call.1} parent=1 // pred_region
      %s2847 = sand.u32 1, 7
      %p2848 = scmp.eq.s32.totalorder %s2847, 0
      %p2849 = pneg %p2848
      // Predicated region
      $region1701: #{tpu_custom_call.1} parent=1688 // pred_check
        _
      $region1702: #{tpu_custom_call.1} parent=1688 // pred_check_branch
        %2851 = sbr.rel (%p2848) target = $region1704
      $region1703: #{tpu_custom_call.1} parent=1688 // pred_region
        %s2852 = sand.u32 1, 7
        %s2853 = ssub.s32 1, %s2852
        %s2854 = scalar_lea.vmem %s2824, %s2853
        %s2855 = ssub.s32 1, %s2852
        %s2856 = scalar_lea.vmem %s2825, %s2855 [#allocation2]
        %s2857 = sshll.u32 1, %s2852
        %s2858 = ssub.s32 %s2857, 1
        loop: start=0, step=1, limit=1
        $region1705: #{tpu_custom_call.1} parent=1703 // loop_pre_header
          _
        $region1706: #{tpu_custom_call.1} parent=1703 // loop_header
          %s2860 = sphi 0, %s2864
          %p2861 = scmp.ge.s32.totalorder %s2860, 1
          %s2865 = sphi %s2854, %s2854
          %s2866 = sphi %s2856, %s2856
        $region1707: #{tpu_custom_call.1} parent=1703 // loop_header_branch
          %2863 = sbr.rel (%p2861) target = $region1711
        $region1708: #{tpu_custom_call.1} parent=1703 // loop_body
          %v2867 = vld [vmem:[%s2865] sm:%s2858]
          %2868 = vst [vmem:[%s2866] sm:%s2858] %v2867
        $region1709: #{tpu_custom_call.1} parent=1703 // loop_footer
          %s2864 = sadd.s32 1, %s2860
        $region1710: #{tpu_custom_call.1} parent=1703 // loop_footer_branch
          %2859 = sbr.rel target = $region1706
        $region1711: #{tpu_custom_call.1} parent=1703 // loop_exit
          _
      $region1704: #{tpu_custom_call.1} parent=1688 // pred_fallthru
        _
    $region1689: #{tpu_custom_call.1} parent=1 // pred_fallthru
      _
    // Predicated region
    $region1690: #{tpu_custom_call.1} parent=1 // pred_check
      %p2832 = pneg %p2828
    $region1691: #{tpu_custom_call.1} parent=1 // pred_check_branch
      %2834 = sbr.rel (%p2832) target = $region1693
    $region1692: #{tpu_custom_call.1} parent=1 // pred_region
      %s2835 = sshll.u32 1, 1
      %s2836 = ssub.s32 %s2835, 1
      loop: start=0, step=1, limit=1
      $region1694: #{tpu_custom_call.1} parent=1692 // loop_pre_header
        _
      $region1695: #{tpu_custom_call.1} parent=1692 // loop_header
        %s2838 = sphi 0, %s2842
        %p2839 = scmp.ge.s32.totalorder %s2838, 1
        %s2843 = sphi %s2824, %s2824
        %s2844 = sphi %s2825, %s2825
      $region1696: #{tpu_custom_call.1} parent=1692 // loop_header_branch
        %2841 = sbr.rel (%p2839) target = $region1700
      $region1697: #{tpu_custom_call.1} parent=1692 // loop_body
        %v2845 = vld [vmem:[%s2843] sm:%s2836]
        %2846 = vst [vmem:[%s2844] sm:%s2836] %v2845
      $region1698: #{tpu_custom_call.1} parent=1692 // loop_footer
        %s2842 = sadd.s32 1, %s2838
      $region1699: #{tpu_custom_call.1} parent=1692 // loop_footer_branch
        %2837 = sbr.rel target = $region1695
      $region1700: #{tpu_custom_call.1} parent=1692 // loop_exit
        _
    $region1693: #{tpu_custom_call.1} parent=1 // pred_fallthru
      _
    // Predicated region
    $region1712: #{tpu_custom_call.1} parent=1 // pred_check
      _
    $region1713: #{tpu_custom_call.1} parent=1 // pred_check_branch
      %2871 = sbr.rel (0) target = $region1715
    $region1714: #{tpu_custom_call.1} parent=1 // pred_region
      %2872 = vsyncadd %s2826, 16
    $region1715: #{tpu_custom_call.1} parent=1 // pred_fallthru
      _
    %s2873 = sadd.s32 %s17, 15
    %s2874 = sld [smem:[#allocation5 + %s2873]]
    %s2875 = scalar_lea.vmem %s2, %s2874
    %s2876 = scalar_lea.vmem [#allocation2], 57
    %p2878 = scmp.lt.u32.totalorder 1, 8
    %p2879 = pneg %p2878
    // Predicated region
    $region1716: #{tpu_custom_call.1} parent=1 // pred_check
      _
    $region1717: #{tpu_custom_call.1} parent=1 // pred_check_branch
      %2881 = sbr.rel (%p2878) target = $region1719
    $region1718: #{tpu_custom_call.1} parent=1 // pred_region
      %s2897 = sand.u32 1, 7
      %p2898 = scmp.eq.s32.totalorder %s2897, 0
      %p2899 = pneg %p2898
      // Predicated region
      $region1731: #{tpu_custom_call.1} parent=1718 // pred_check
        _
      $region1732: #{tpu_custom_call.1} parent=1718 // pred_check_branch
        %2901 = sbr.rel (%p2898) target = $region1734
      $region1733: #{tpu_custom_call.1} parent=1718 // pred_region
        %s2902 = sand.u32 1, 7
        %s2903 = ssub.s32 1, %s2902
        %s2904 = scalar_lea.vmem %s2875, %s2903
        %s2905 = ssub.s32 1, %s2902
        %s2906 = scalar_lea.vmem %s2876, %s2905 [#allocation2]
        %s2907 = sshll.u32 1, %s2902
        %s2908 = ssub.s32 %s2907, 1
        loop: start=0, step=1, limit=1
        $region1735: #{tpu_custom_call.1} parent=1733 // loop_pre_header
          _
        $region1736: #{tpu_custom_call.1} parent=1733 // loop_header
          %s2910 = sphi 0, %s2914
          %p2911 = scmp.ge.s32.totalorder %s2910, 1
          %s2915 = sphi %s2904, %s2904
          %s2916 = sphi %s2906, %s2906
        $region1737: #{tpu_custom_call.1} parent=1733 // loop_header_branch
          %2913 = sbr.rel (%p2911) target = $region1741
        $region1738: #{tpu_custom_call.1} parent=1733 // loop_body
          %v2917 = vld [vmem:[%s2915] sm:%s2908]
          %2918 = vst [vmem:[%s2916] sm:%s2908] %v2917
        $region1739: #{tpu_custom_call.1} parent=1733 // loop_footer
          %s2914 = sadd.s32 1, %s2910
        $region1740: #{tpu_custom_call.1} parent=1733 // loop_footer_branch
          %2909 = sbr.rel target = $region1736
        $region1741: #{tpu_custom_call.1} parent=1733 // loop_exit
          _
      $region1734: #{tpu_custom_call.1} parent=1718 // pred_fallthru
        _
    $region1719: #{tpu_custom_call.1} parent=1 // pred_fallthru
      _
    // Predicated region
    $region1720: #{tpu_custom_call.1} parent=1 // pred_check
      %p2882 = pneg %p2878
    $region1721: #{tpu_custom_call.1} parent=1 // pred_check_branch
      %2884 = sbr.rel (%p2882) target = $region1723
    $region1722: #{tpu_custom_call.1} parent=1 // pred_region
      %s2885 = sshll.u32 1, 1
      %s2886 = ssub.s32 %s2885, 1
      loop: start=0, step=1, limit=1
      $region1724: #{tpu_custom_call.1} parent=1722 // loop_pre_header
        _
      $region1725: #{tpu_custom_call.1} parent=1722 // loop_header
        %s2888 = sphi 0, %s2892
        %p2889 = scmp.ge.s32.totalorder %s2888, 1
        %s2893 = sphi %s2875, %s2875
        %s2894 = sphi %s2876, %s2876
      $region1726: #{tpu_custom_call.1} parent=1722 // loop_header_branch
        %2891 = sbr.rel (%p2889) target = $region1730
      $region1727: #{tpu_custom_call.1} parent=1722 // loop_body
        %v2895 = vld [vmem:[%s2893] sm:%s2886]
        %2896 = vst [vmem:[%s2894] sm:%s2886] %v2895
      $region1728: #{tpu_custom_call.1} parent=1722 // loop_footer
        %s2892 = sadd.s32 1, %s2888
      $region1729: #{tpu_custom_call.1} parent=1722 // loop_footer_branch
        %2887 = sbr.rel target = $region1725
      $region1730: #{tpu_custom_call.1} parent=1722 // loop_exit
        _
    $region1723: #{tpu_custom_call.1} parent=1 // pred_fallthru
      _
    // Predicated region
    $region1742: #{tpu_custom_call.1} parent=1 // pred_check
      _
    $region1743: #{tpu_custom_call.1} parent=1 // pred_check_branch
      %2921 = sbr.rel (0) target = $region1745
    $region1744: #{tpu_custom_call.1} parent=1 // pred_region
      %2922 = vsyncadd %s2826, 16
    $region1745: #{tpu_custom_call.1} parent=1 // pred_fallthru
      _
    %s2923 = sadd.s32 %s17, 23
    %s2924 = sld [smem:[#allocation5 + %s2923]]
    %s2925 = scalar_lea.vmem %s2, %s2924
    %s2926 = scalar_lea.vmem [#allocation2], 58
    %p2928 = scmp.lt.u32.totalorder 1, 8
    %p2929 = pneg %p2928
    // Predicated region
    $region1746: #{tpu_custom_call.1} parent=1 // pred_check
      _
    $region1747: #{tpu_custom_call.1} parent=1 // pred_check_branch
      %2931 = sbr.rel (%p2928) target = $region1749
    $region1748: #{tpu_custom_call.1} parent=1 // pred_region
      %s2947 = sand.u32 1, 7
      %p2948 = scmp.eq.s32.totalorder %s2947, 0
      %p2949 = pneg %p2948
      // Predicated region
      $region1761: #{tpu_custom_call.1} parent=1748 // pred_check
        _
      $region1762: #{tpu_custom_call.1} parent=1748 // pred_check_branch
        %2951 = sbr.rel (%p2948) target = $region1764
      $region1763: #{tpu_custom_call.1} parent=1748 // pred_region
        %s2952 = sand.u32 1, 7
        %s2953 = ssub.s32 1, %s2952
        %s2954 = scalar_lea.vmem %s2925, %s2953
        %s2955 = ssub.s32 1, %s2952
        %s2956 = scalar_lea.vmem %s2926, %s2955 [#allocation2]
        %s2957 = sshll.u32 1, %s2952
        %s2958 = ssub.s32 %s2957, 1
        loop: start=0, step=1, limit=1
        $region1765: #{tpu_custom_call.1} parent=1763 // loop_pre_header
          _
        $region1766: #{tpu_custom_call.1} parent=1763 // loop_header
          %s2960 = sphi 0, %s2964
          %p2961 = scmp.ge.s32.totalorder %s2960, 1
          %s2965 = sphi %s2954, %s2954
          %s2966 = sphi %s2956, %s2956
        $region1767: #{tpu_custom_call.1} parent=1763 // loop_header_branch
          %2963 = sbr.rel (%p2961) target = $region1771
        $region1768: #{tpu_custom_call.1} parent=1763 // loop_body
          %v2967 = vld [vmem:[%s2965] sm:%s2958]
          %2968 = vst [vmem:[%s2966] sm:%s2958] %v2967
        $region1769: #{tpu_custom_call.1} parent=1763 // loop_footer
          %s2964 = sadd.s32 1, %s2960
        $region1770: #{tpu_custom_call.1} parent=1763 // loop_footer_branch
          %2959 = sbr.rel target = $region1766
        $region1771: #{tpu_custom_call.1} parent=1763 // loop_exit
          _
      $region1764: #{tpu_custom_call.1} parent=1748 // pred_fallthru
        _
    $region1749: #{tpu_custom_call.1} parent=1 // pred_fallthru
      _
    // Predicated region
    $region1750: #{tpu_custom_call.1} parent=1 // pred_check
      %p2932 = pneg %p2928
    $region1751: #{tpu_custom_call.1} parent=1 // pred_check_branch
      %2934 = sbr.rel (%p2932) target = $region1753
    $region1752: #{tpu_custom_call.1} parent=1 // pred_region
      %s2935 = sshll.u32 1, 1
      %s2936 = ssub.s32 %s2935, 1
      loop: start=0, step=1, limit=1
      $region1754: #{tpu_custom_call.1} parent=1752 // loop_pre_header
        _
      $region1755: #{tpu_custom_call.1} parent=1752 // loop_header
        %s2938 = sphi 0, %s2942
        %p2939 = scmp.ge.s32.totalorder %s2938, 1
        %s2943 = sphi %s2925, %s2925
        %s2944 = sphi %s2926, %s2926
      $region1756: #{tpu_custom_call.1} parent=1752 // loop_header_branch
        %2941 = sbr.rel (%p2939) target = $region1760
      $region1757: #{tpu_custom_call.1} parent=1752 // loop_body
        %v2945 = vld [vmem:[%s2943] sm:%s2936]
        %2946 = vst [vmem:[%s2944] sm:%s2936] %v2945
      $region1758: #{tpu_custom_call.1} parent=1752 // loop_footer
        %s2942 = sadd.s32 1, %s2938
      $region1759: #{tpu_custom_call.1} parent=1752 // loop_footer_branch
        %2937 = sbr.rel target = $region1755
      $region1760: #{tpu_custom_call.1} parent=1752 // loop_exit
        _
    $region1753: #{tpu_custom_call.1} parent=1 // pred_fallthru
      _
    // Predicated region
    $region1772: #{tpu_custom_call.1} parent=1 // pred_check
      _
    $region1773: #{tpu_custom_call.1} parent=1 // pred_check_branch
      %2971 = sbr.rel (0) target = $region1775
    $region1774: #{tpu_custom_call.1} parent=1 // pred_region
      %2972 = vsyncadd %s2826, 16
    $region1775: #{tpu_custom_call.1} parent=1 // pred_fallthru
      _
    %s2973 = sadd.s32 %s17, 31
    %s2974 = sld [smem:[#allocation5 + %s2973]]
    %s2975 = scalar_lea.vmem %s2, %s2974
    %s2976 = scalar_lea.vmem [#allocation2], 59
    %p2978 = scmp.lt.u32.totalorder 1, 8
    %p2979 = pneg %p2978
    // Predicated region
    $region1776: #{tpu_custom_call.1} parent=1 // pred_check
      _
    $region1777: #{tpu_custom_call.1} parent=1 // pred_check_branch
      %2981 = sbr.rel (%p2978) target = $region1779
    $region1778: #{tpu_custom_call.1} parent=1 // pred_region
      %s2997 = sand.u32 1, 7
      %p2998 = scmp.eq.s32.totalorder %s2997, 0
      %p2999 = pneg %p2998
      // Predicated region
      $region1791: #{tpu_custom_call.1} parent=1778 // pred_check
        _
      $region1792: #{tpu_custom_call.1} parent=1778 // pred_check_branch
        %3001 = sbr.rel (%p2998) target = $region1794
      $region1793: #{tpu_custom_call.1} parent=1778 // pred_region
        %s3002 = sand.u32 1, 7
        %s3003 = ssub.s32 1, %s3002
        %s3004 = scalar_lea.vmem %s2975, %s3003
        %s3005 = ssub.s32 1, %s3002
        %s3006 = scalar_lea.vmem %s2976, %s3005 [#allocation2]
        %s3007 = sshll.u32 1, %s3002
        %s3008 = ssub.s32 %s3007, 1
        loop: start=0, step=1, limit=1
        $region1795: #{tpu_custom_call.1} parent=1793 // loop_pre_header
          _
        $region1796: #{tpu_custom_call.1} parent=1793 // loop_header
          %s3010 = sphi 0, %s3014
          %p3011 = scmp.ge.s32.totalorder %s3010, 1
          %s3015 = sphi %s3004, %s3004
          %s3016 = sphi %s3006, %s3006
        $region1797: #{tpu_custom_call.1} parent=1793 // loop_header_branch
          %3013 = sbr.rel (%p3011) target = $region1801
        $region1798: #{tpu_custom_call.1} parent=1793 // loop_body
          %v3017 = vld [vmem:[%s3015] sm:%s3008]
          %3018 = vst [vmem:[%s3016] sm:%s3008] %v3017
        $region1799: #{tpu_custom_call.1} parent=1793 // loop_footer
          %s3014 = sadd.s32 1, %s3010
        $region1800: #{tpu_custom_call.1} parent=1793 // loop_footer_branch
          %3009 = sbr.rel target = $region1796
        $region1801: #{tpu_custom_call.1} parent=1793 // loop_exit
          _
      $region1794: #{tpu_custom_call.1} parent=1778 // pred_fallthru
        _
    $region1779: #{tpu_custom_call.1} parent=1 // pred_fallthru
      _
    // Predicated region
    $region1780: #{tpu_custom_call.1} parent=1 // pred_check
      %p2982 = pneg %p2978
    $region1781: #{tpu_custom_call.1} parent=1 // pred_check_branch
      %2984 = sbr.rel (%p2982) target = $region1783
    $region1782: #{tpu_custom_call.1} parent=1 // pred_region
      %s2985 = sshll.u32 1, 1
      %s2986 = ssub.s32 %s2985, 1
      loop: start=0, step=1, limit=1
      $region1784: #{tpu_custom_call.1} parent=1782 // loop_pre_header
        _
      $region1785: #{tpu_custom_call.1} parent=1782 // loop_header
        %s2988 = sphi 0, %s2992
        %p2989 = scmp.ge.s32.totalorder %s2988, 1
        %s2993 = sphi %s2975, %s2975
        %s2994 = sphi %s2976, %s2976
      $region1786: #{tpu_custom_call.1} parent=1782 // loop_header_branch
        %2991 = sbr.rel (%p2989) target = $region1790
      $region1787: #{tpu_custom_call.1} parent=1782 // loop_body
        %v2995 = vld [vmem:[%s2993] sm:%s2986]
        %2996 = vst [vmem:[%s2994] sm:%s2986] %v2995
      $region1788: #{tpu_custom_call.1} parent=1782 // loop_footer
        %s2992 = sadd.s32 1, %s2988
      $region1789: #{tpu_custom_call.1} parent=1782 // loop_footer_branch
        %2987 = sbr.rel target = $region1785
      $region1790: #{tpu_custom_call.1} parent=1782 // loop_exit
        _
    $region1783: #{tpu_custom_call.1} parent=1 // pred_fallthru
      _
    // Predicated region
    $region1802: #{tpu_custom_call.1} parent=1 // pred_check
      _
    $region1803: #{tpu_custom_call.1} parent=1 // pred_check_branch
      %3021 = sbr.rel (0) target = $region1805
    $region1804: #{tpu_custom_call.1} parent=1 // pred_region
      %3022 = vsyncadd %s2826, 16
    $region1805: #{tpu_custom_call.1} parent=1 // pred_fallthru
      _
    %s3023 = sadd.s32 %s17, 39
    %s3024 = sld [smem:[#allocation5 + %s3023]]
    %s3025 = scalar_lea.vmem %s2, %s3024
    %s3026 = scalar_lea.vmem [#allocation2], 60
    %p3028 = scmp.lt.u32.totalorder 1, 8
    %p3029 = pneg %p3028
    // Predicated region
    $region1806: #{tpu_custom_call.1} parent=1 // pred_check
      _
    $region1807: #{tpu_custom_call.1} parent=1 // pred_check_branch
      %3031 = sbr.rel (%p3028) target = $region1809
    $region1808: #{tpu_custom_call.1} parent=1 // pred_region
      %s3047 = sand.u32 1, 7
      %p3048 = scmp.eq.s32.totalorder %s3047, 0
      %p3049 = pneg %p3048
      // Predicated region
      $region1821: #{tpu_custom_call.1} parent=1808 // pred_check
        _
      $region1822: #{tpu_custom_call.1} parent=1808 // pred_check_branch
        %3051 = sbr.rel (%p3048) target = $region1824
      $region1823: #{tpu_custom_call.1} parent=1808 // pred_region
        %s3052 = sand.u32 1, 7
        %s3053 = ssub.s32 1, %s3052
        %s3054 = scalar_lea.vmem %s3025, %s3053
        %s3055 = ssub.s32 1, %s3052
        %s3056 = scalar_lea.vmem %s3026, %s3055 [#allocation2]
        %s3057 = sshll.u32 1, %s3052
        %s3058 = ssub.s32 %s3057, 1
        loop: start=0, step=1, limit=1
        $region1825: #{tpu_custom_call.1} parent=1823 // loop_pre_header
          _
        $region1826: #{tpu_custom_call.1} parent=1823 // loop_header
          %s3060 = sphi 0, %s3064
          %p3061 = scmp.ge.s32.totalorder %s3060, 1
          %s3065 = sphi %s3054, %s3054
          %s3066 = sphi %s3056, %s3056
        $region1827: #{tpu_custom_call.1} parent=1823 // loop_header_branch
          %3063 = sbr.rel (%p3061) target = $region1831
        $region1828: #{tpu_custom_call.1} parent=1823 // loop_body
          %v3067 = vld [vmem:[%s3065] sm:%s3058]
          %3068 = vst [vmem:[%s3066] sm:%s3058] %v3067
        $region1829: #{tpu_custom_call.1} parent=1823 // loop_footer
          %s3064 = sadd.s32 1, %s3060
        $region1830: #{tpu_custom_call.1} parent=1823 // loop_footer_branch
          %3059 = sbr.rel target = $region1826
        $region1831: #{tpu_custom_call.1} parent=1823 // loop_exit
          _
      $region1824: #{tpu_custom_call.1} parent=1808 // pred_fallthru
        _
    $region1809: #{tpu_custom_call.1} parent=1 // pred_fallthru
      _
    // Predicated region
    $region1810: #{tpu_custom_call.1} parent=1 // pred_check
      %p3032 = pneg %p3028
    $region1811: #{tpu_custom_call.1} parent=1 // pred_check_branch
      %3034 = sbr.rel (%p3032) target = $region1813
    $region1812: #{tpu_custom_call.1} parent=1 // pred_region
      %s3035 = sshll.u32 1, 1
      %s3036 = ssub.s32 %s3035, 1
      loop: start=0, step=1, limit=1
      $region1814: #{tpu_custom_call.1} parent=1812 // loop_pre_header
        _
      $region1815: #{tpu_custom_call.1} parent=1812 // loop_header
        %s3038 = sphi 0, %s3042
        %p3039 = scmp.ge.s32.totalorder %s3038, 1
        %s3043 = sphi %s3025, %s3025
        %s3044 = sphi %s3026, %s3026
      $region1816: #{tpu_custom_call.1} parent=1812 // loop_header_branch
        %3041 = sbr.rel (%p3039) target = $region1820
      $region1817: #{tpu_custom_call.1} parent=1812 // loop_body
        %v3045 = vld [vmem:[%s3043] sm:%s3036]
        %3046 = vst [vmem:[%s3044] sm:%s3036] %v3045
      $region1818: #{tpu_custom_call.1} parent=1812 // loop_footer
        %s3042 = sadd.s32 1, %s3038
      $region1819: #{tpu_custom_call.1} parent=1812 // loop_footer_branch
        %3037 = sbr.rel target = $region1815
      $region1820: #{tpu_custom_call.1} parent=1812 // loop_exit
        _
    $region1813: #{tpu_custom_call.1} parent=1 // pred_fallthru
      _
    // Predicated region
    $region1832: #{tpu_custom_call.1} parent=1 // pred_check
      _
    $region1833: #{tpu_custom_call.1} parent=1 // pred_check_branch
      %3071 = sbr.rel (0) target = $region1835
    $region1834: #{tpu_custom_call.1} parent=1 // pred_region
      %3072 = vsyncadd %s2826, 16
    $region1835: #{tpu_custom_call.1} parent=1 // pred_fallthru
      _
    %s3073 = sadd.s32 %s17, 47
    %s3074 = sld [smem:[#allocation5 + %s3073]]
    %s3075 = scalar_lea.vmem %s2, %s3074
    %s3076 = scalar_lea.vmem [#allocation2], 61
    %p3078 = scmp.lt.u32.totalorder 1, 8
    %p3079 = pneg %p3078
    // Predicated region
    $region1836: #{tpu_custom_call.1} parent=1 // pred_check
      _
    $region1837: #{tpu_custom_call.1} parent=1 // pred_check_branch
      %3081 = sbr.rel (%p3078) target = $region1839
    $region1838: #{tpu_custom_call.1} parent=1 // pred_region
      %s3097 = sand.u32 1, 7
      %p3098 = scmp.eq.s32.totalorder %s3097, 0
      %p3099 = pneg %p3098
      // Predicated region
      $region1851: #{tpu_custom_call.1} parent=1838 // pred_check
        _
      $region1852: #{tpu_custom_call.1} parent=1838 // pred_check_branch
        %3101 = sbr.rel (%p3098) target = $region1854
      $region1853: #{tpu_custom_call.1} parent=1838 // pred_region
        %s3102 = sand.u32 1, 7
        %s3103 = ssub.s32 1, %s3102
        %s3104 = scalar_lea.vmem %s3075, %s3103
        %s3105 = ssub.s32 1, %s3102
        %s3106 = scalar_lea.vmem %s3076, %s3105 [#allocation2]
        %s3107 = sshll.u32 1, %s3102
        %s3108 = ssub.s32 %s3107, 1
        loop: start=0, step=1, limit=1
        $region1855: #{tpu_custom_call.1} parent=1853 // loop_pre_header
          _
        $region1856: #{tpu_custom_call.1} parent=1853 // loop_header
          %s3110 = sphi 0, %s3114
          %p3111 = scmp.ge.s32.totalorder %s3110, 1
          %s3115 = sphi %s3104, %s3104
          %s3116 = sphi %s3106, %s3106
        $region1857: #{tpu_custom_call.1} parent=1853 // loop_header_branch
          %3113 = sbr.rel (%p3111) target = $region1861
        $region1858: #{tpu_custom_call.1} parent=1853 // loop_body
          %v3117 = vld [vmem:[%s3115] sm:%s3108]
          %3118 = vst [vmem:[%s3116] sm:%s3108] %v3117
        $region1859: #{tpu_custom_call.1} parent=1853 // loop_footer
          %s3114 = sadd.s32 1, %s3110
        $region1860: #{tpu_custom_call.1} parent=1853 // loop_footer_branch
          %3109 = sbr.rel target = $region1856
        $region1861: #{tpu_custom_call.1} parent=1853 // loop_exit
          _
      $region1854: #{tpu_custom_call.1} parent=1838 // pred_fallthru
        _
    $region1839: #{tpu_custom_call.1} parent=1 // pred_fallthru
      _
    // Predicated region
    $region1840: #{tpu_custom_call.1} parent=1 // pred_check
      %p3082 = pneg %p3078
    $region1841: #{tpu_custom_call.1} parent=1 // pred_check_branch
      %3084 = sbr.rel (%p3082) target = $region1843
    $region1842: #{tpu_custom_call.1} parent=1 // pred_region
      %s3085 = sshll.u32 1, 1
      %s3086 = ssub.s32 %s3085, 1
      loop: start=0, step=1, limit=1
      $region1844: #{tpu_custom_call.1} parent=1842 // loop_pre_header
        _
      $region1845: #{tpu_custom_call.1} parent=1842 // loop_header
        %s3088 = sphi 0, %s3092
        %p3089 = scmp.ge.s32.totalorder %s3088, 1
        %s3093 = sphi %s3075, %s3075
        %s3094 = sphi %s3076, %s3076
      $region1846: #{tpu_custom_call.1} parent=1842 // loop_header_branch
        %3091 = sbr.rel (%p3089) target = $region1850
      $region1847: #{tpu_custom_call.1} parent=1842 // loop_body
        %v3095 = vld [vmem:[%s3093] sm:%s3086]
        %3096 = vst [vmem:[%s3094] sm:%s3086] %v3095
      $region1848: #{tpu_custom_call.1} parent=1842 // loop_footer
        %s3092 = sadd.s32 1, %s3088
      $region1849: #{tpu_custom_call.1} parent=1842 // loop_footer_branch
        %3087 = sbr.rel target = $region1845
      $region1850: #{tpu_custom_call.1} parent=1842 // loop_exit
        _
    $region1843: #{tpu_custom_call.1} parent=1 // pred_fallthru
      _
    // Predicated region
    $region1862: #{tpu_custom_call.1} parent=1 // pred_check
      _
    $region1863: #{tpu_custom_call.1} parent=1 // pred_check_branch
      %3121 = sbr.rel (0) target = $region1865
    $region1864: #{tpu_custom_call.1} parent=1 // pred_region
      %3122 = vsyncadd %s2826, 16
    $region1865: #{tpu_custom_call.1} parent=1 // pred_fallthru
      _
    %s3123 = sadd.s32 %s17, 55
    %s3124 = sld [smem:[#allocation5 + %s3123]]
    %s3125 = scalar_lea.vmem %s2, %s3124
    %s3126 = scalar_lea.vmem [#allocation2], 62
    %p3128 = scmp.lt.u32.totalorder 1, 8
    %p3129 = pneg %p3128
    // Predicated region
    $region1866: #{tpu_custom_call.1} parent=1 // pred_check
      _
    $region1867: #{tpu_custom_call.1} parent=1 // pred_check_branch
      %3131 = sbr.rel (%p3128) target = $region1869
    $region1868: #{tpu_custom_call.1} parent=1 // pred_region
      %s3147 = sand.u32 1, 7
      %p3148 = scmp.eq.s32.totalorder %s3147, 0
      %p3149 = pneg %p3148
      // Predicated region
      $region1881: #{tpu_custom_call.1} parent=1868 // pred_check
        _
      $region1882: #{tpu_custom_call.1} parent=1868 // pred_check_branch
        %3151 = sbr.rel (%p3148) target = $region1884
      $region1883: #{tpu_custom_call.1} parent=1868 // pred_region
        %s3152 = sand.u32 1, 7
        %s3153 = ssub.s32 1, %s3152
        %s3154 = scalar_lea.vmem %s3125, %s3153
        %s3155 = ssub.s32 1, %s3152
        %s3156 = scalar_lea.vmem %s3126, %s3155 [#allocation2]
        %s3157 = sshll.u32 1, %s3152
        %s3158 = ssub.s32 %s3157, 1
        loop: start=0, step=1, limit=1
        $region1885: #{tpu_custom_call.1} parent=1883 // loop_pre_header
          _
        $region1886: #{tpu_custom_call.1} parent=1883 // loop_header
          %s3160 = sphi 0, %s3164
          %p3161 = scmp.ge.s32.totalorder %s3160, 1
          %s3165 = sphi %s3154, %s3154
          %s3166 = sphi %s3156, %s3156
        $region1887: #{tpu_custom_call.1} parent=1883 // loop_header_branch
          %3163 = sbr.rel (%p3161) target = $region1891
        $region1888: #{tpu_custom_call.1} parent=1883 // loop_body
          %v3167 = vld [vmem:[%s3165] sm:%s3158]
          %3168 = vst [vmem:[%s3166] sm:%s3158] %v3167
        $region1889: #{tpu_custom_call.1} parent=1883 // loop_footer
          %s3164 = sadd.s32 1, %s3160
        $region1890: #{tpu_custom_call.1} parent=1883 // loop_footer_branch
          %3159 = sbr.rel target = $region1886
        $region1891: #{tpu_custom_call.1} parent=1883 // loop_exit
          _
      $region1884: #{tpu_custom_call.1} parent=1868 // pred_fallthru
        _
    $region1869: #{tpu_custom_call.1} parent=1 // pred_fallthru
      _
    // Predicated region
    $region1870: #{tpu_custom_call.1} parent=1 // pred_check
      %p3132 = pneg %p3128
    $region1871: #{tpu_custom_call.1} parent=1 // pred_check_branch
      %3134 = sbr.rel (%p3132) target = $region1873
    $region1872: #{tpu_custom_call.1} parent=1 // pred_region
      %s3135 = sshll.u32 1, 1
      %s3136 = ssub.s32 %s3135, 1
      loop: start=0, step=1, limit=1
      $region1874: #{tpu_custom_call.1} parent=1872 // loop_pre_header
        _
      $region1875: #{tpu_custom_call.1} parent=1872 // loop_header
        %s3138 = sphi 0, %s3142
        %p3139 = scmp.ge.s32.totalorder %s3138, 1
        %s3143 = sphi %s3125, %s3125
        %s3144 = sphi %s3126, %s3126
      $region1876: #{tpu_custom_call.1} parent=1872 // loop_header_branch
        %3141 = sbr.rel (%p3139) target = $region1880
      $region1877: #{tpu_custom_call.1} parent=1872 // loop_body
        %v3145 = vld [vmem:[%s3143] sm:%s3136]
        %3146 = vst [vmem:[%s3144] sm:%s3136] %v3145
      $region1878: #{tpu_custom_call.1} parent=1872 // loop_footer
        %s3142 = sadd.s32 1, %s3138
      $region1879: #{tpu_custom_call.1} parent=1872 // loop_footer_branch
        %3137 = sbr.rel target = $region1875
      $region1880: #{tpu_custom_call.1} parent=1872 // loop_exit
        _
    $region1873: #{tpu_custom_call.1} parent=1 // pred_fallthru
      _
    // Predicated region
    $region1892: #{tpu_custom_call.1} parent=1 // pred_check
      _
    $region1893: #{tpu_custom_call.1} parent=1 // pred_check_branch
      %3171 = sbr.rel (0) target = $region1895
    $region1894: #{tpu_custom_call.1} parent=1 // pred_region
      %3172 = vsyncadd %s2826, 16
    $region1895: #{tpu_custom_call.1} parent=1 // pred_fallthru
      _
    %s3173 = sadd.s32 %s17, 63
    %s3174 = sld [smem:[#allocation5 + %s3173]]
    %s3175 = scalar_lea.vmem %s2, %s3174
    %s3176 = scalar_lea.vmem [#allocation2], 63
    %p3178 = scmp.lt.u32.totalorder 1, 8
    %p3179 = pneg %p3178
    // Predicated region
    $region1896: #{tpu_custom_call.1} parent=1 // pred_check
      _
    $region1897: #{tpu_custom_call.1} parent=1 // pred_check_branch
      %3181 = sbr.rel (%p3178) target = $region1899
    $region1898: #{tpu_custom_call.1} parent=1 // pred_region
      %s3197 = sand.u32 1, 7
      %p3198 = scmp.eq.s32.totalorder %s3197, 0
      %p3199 = pneg %p3198
      // Predicated region
      $region1911: #{tpu_custom_call.1} parent=1898 // pred_check
        _
      $region1912: #{tpu_custom_call.1} parent=1898 // pred_check_branch
        %3201 = sbr.rel (%p3198) target = $region1914
      $region1913: #{tpu_custom_call.1} parent=1898 // pred_region
        %s3202 = sand.u32 1, 7
        %s3203 = ssub.s32 1, %s3202
        %s3204 = scalar_lea.vmem %s3175, %s3203
        %s3205 = ssub.s32 1, %s3202
        %s3206 = scalar_lea.vmem %s3176, %s3205 [#allocation2]
        %s3207 = sshll.u32 1, %s3202
        %s3208 = ssub.s32 %s3207, 1
        loop: start=0, step=1, limit=1
        $region1915: #{tpu_custom_call.1} parent=1913 // loop_pre_header
          _
        $region1916: #{tpu_custom_call.1} parent=1913 // loop_header
          %s3210 = sphi 0, %s3214
          %p3211 = scmp.ge.s32.totalorder %s3210, 1
          %s3215 = sphi %s3204, %s3204
          %s3216 = sphi %s3206, %s3206
        $region1917: #{tpu_custom_call.1} parent=1913 // loop_header_branch
          %3213 = sbr.rel (%p3211) target = $region1921
        $region1918: #{tpu_custom_call.1} parent=1913 // loop_body
          %v3217 = vld [vmem:[%s3215] sm:%s3208]
          %3218 = vst [vmem:[%s3216] sm:%s3208] %v3217
        $region1919: #{tpu_custom_call.1} parent=1913 // loop_footer
          %s3214 = sadd.s32 1, %s3210
        $region1920: #{tpu_custom_call.1} parent=1913 // loop_footer_branch
          %3209 = sbr.rel target = $region1916
        $region1921: #{tpu_custom_call.1} parent=1913 // loop_exit
          _
      $region1914: #{tpu_custom_call.1} parent=1898 // pred_fallthru
        _
    $region1899: #{tpu_custom_call.1} parent=1 // pred_fallthru
      _
    // Predicated region
    $region1900: #{tpu_custom_call.1} parent=1 // pred_check
      %p3182 = pneg %p3178
    $region1901: #{tpu_custom_call.1} parent=1 // pred_check_branch
      %3184 = sbr.rel (%p3182) target = $region1903
    $region1902: #{tpu_custom_call.1} parent=1 // pred_region
      %s3185 = sshll.u32 1, 1
      %s3186 = ssub.s32 %s3185, 1
      loop: start=0, step=1, limit=1
      $region1904: #{tpu_custom_call.1} parent=1902 // loop_pre_header
        _
      $region1905: #{tpu_custom_call.1} parent=1902 // loop_header
        %s3188 = sphi 0, %s3192
        %p3189 = scmp.ge.s32.totalorder %s3188, 1
        %s3193 = sphi %s3175, %s3175
        %s3194 = sphi %s3176, %s3176
      $region1906: #{tpu_custom_call.1} parent=1902 // loop_header_branch
        %3191 = sbr.rel (%p3189) target = $region1910
      $region1907: #{tpu_custom_call.1} parent=1902 // loop_body
        %v3195 = vld [vmem:[%s3193] sm:%s3186]
        %3196 = vst [vmem:[%s3194] sm:%s3186] %v3195
      $region1908: #{tpu_custom_call.1} parent=1902 // loop_footer
        %s3192 = sadd.s32 1, %s3188
      $region1909: #{tpu_custom_call.1} parent=1902 // loop_footer_branch
        %3187 = sbr.rel target = $region1905
      $region1910: #{tpu_custom_call.1} parent=1902 // loop_exit
        _
    $region1903: #{tpu_custom_call.1} parent=1 // pred_fallthru
      _
    // Predicated region
    $region1922: #{tpu_custom_call.1} parent=1 // pred_check
      _
    $region1923: #{tpu_custom_call.1} parent=1 // pred_check_branch
      %3221 = sbr.rel (0) target = $region1925
    $region1924: #{tpu_custom_call.1} parent=1 // pred_region
      %3222 = vsyncadd %s2826, 16
    $region1925: #{tpu_custom_call.1} parent=1 // pred_fallthru
      _
    %v3223 = vld [vmem:[%s1] sm:$0xff]
    %s3224 = smul.u32 1, 1
    %s3225 = sshll.u32 %s3224, 4
    %3226 = dma.done [#allocation3], %s3225
    %s3227 = sshll.u32 %s3224, 4
    %3228 = dma.done [#allocation3], %s3227
    %s3229 = sshll.u32 %s3224, 4
    %3230 = dma.done [#allocation3], %s3229
    %s3231 = sshll.u32 %s3224, 4
    %3232 = dma.done [#allocation3], %s3231
    %s3233 = sshll.u32 %s3224, 4
    %3234 = dma.done [#allocation3], %s3233
    %s3235 = sshll.u32 %s3224, 4
    %3236 = dma.done [#allocation3], %s3235
    %s3237 = sshll.u32 %s3224, 4
    %3238 = dma.done [#allocation3], %s3237
    %s3239 = sshll.u32 %s3224, 4
    %3240 = dma.done [#allocation3], %s3239
    %v3241 = vld [vmem:[#allocation2] sm:$0xff]
    %3243 = vset.pattern.permute.xlu0 0
    %3244 = vperm.xlu0 %3243, %v3223
    %v3245 = vpop.permute.xlu0 %3244
    %v3247 = vmul.f32 %v3241, %v3245
    %v3248 = vadd.f32 %v3247, 0.0
    %s3249 = sshll.u32 %s3224, 4
    %3250 = dma.done %s420, %s3249
    %s3251 = sshll.u32 %s3224, 4
    %3252 = dma.done %s420, %s3251
    %s3253 = sshll.u32 %s3224, 4
    %3254 = dma.done %s420, %s3253
    %s3255 = sshll.u32 %s3224, 4
    %3256 = dma.done %s420, %s3255
    %s3257 = sshll.u32 %s3224, 4
    %3258 = dma.done %s420, %s3257
    %s3259 = sshll.u32 %s3224, 4
    %3260 = dma.done %s420, %s3259
    %s3261 = sshll.u32 %s3224, 4
    %3262 = dma.done %s420, %s3261
    %s3263 = sshll.u32 %s3224, 4
    %3264 = dma.done %s420, %s3263
    %v3265 = vld [vmem:[#allocation2 + $0x8] sm:$0xff]
    %3266 = vset.pattern.permute.xlu0 1
    %3267 = vperm.xlu0 %3266, %v3223
    %v3268 = vpop.permute.xlu0 %3267
    %v3270 = vmul.f32 %v3265, %v3268
    %v3271 = vadd.f32 %v3248, %v3270
    %s3272 = sshll.u32 %s3224, 4
    %3273 = dma.done %s821, %s3272
    %s3274 = sshll.u32 %s3224, 4
    %3275 = dma.done %s821, %s3274
    %s3276 = sshll.u32 %s3224, 4
    %3277 = dma.done %s821, %s3276
    %s3278 = sshll.u32 %s3224, 4
    %3279 = dma.done %s821, %s3278
    %s3280 = sshll.u32 %s3224, 4
    %3281 = dma.done %s821, %s3280
    %s3282 = sshll.u32 %s3224, 4
    %3283 = dma.done %s821, %s3282
    %s3284 = sshll.u32 %s3224, 4
    %3285 = dma.done %s821, %s3284
    %s3286 = sshll.u32 %s3224, 4
    %3287 = dma.done %s821, %s3286
    %v3288 = vld [vmem:[#allocation2 + $0x10] sm:$0xff]
    %3289 = vset.pattern.permute.xlu0 2
    %3290 = vperm.xlu0 %3289, %v3223
    %v3291 = vpop.permute.xlu0 %3290
    %v3293 = vmul.f32 %v3288, %v3291
    %v3294 = vadd.f32 %v3271, %v3293
    %s3295 = sshll.u32 %s3224, 4
    %3296 = dma.done %s1222, %s3295
    %s3297 = sshll.u32 %s3224, 4
    %3298 = dma.done %s1222, %s3297
    %s3299 = sshll.u32 %s3224, 4
    %3300 = dma.done %s1222, %s3299
    %s3301 = sshll.u32 %s3224, 4
    %3302 = dma.done %s1222, %s3301
    %s3303 = sshll.u32 %s3224, 4
    %3304 = dma.done %s1222, %s3303
    %s3305 = sshll.u32 %s3224, 4
    %3306 = dma.done %s1222, %s3305
    %s3307 = sshll.u32 %s3224, 4
    %3308 = dma.done %s1222, %s3307
    %s3309 = sshll.u32 %s3224, 4
    %3310 = dma.done %s1222, %s3309
    %v3311 = vld [vmem:[#allocation2 + $0x18] sm:$0xff]
    %3312 = vset.pattern.permute.xlu0 3
    %3313 = vperm.xlu0 %3312, %v3223
    %v3314 = vpop.permute.xlu0 %3313
    %v3316 = vmul.f32 %v3311, %v3314
    %v3317 = vadd.f32 %v3294, %v3316
    %s3318 = sshll.u32 %s3224, 4
    %3319 = dma.done %s1623, %s3318
    %s3320 = sshll.u32 %s3224, 4
    %3321 = dma.done %s1623, %s3320
    %s3322 = sshll.u32 %s3224, 4
    %3323 = dma.done %s1623, %s3322
    %s3324 = sshll.u32 %s3224, 4
    %3325 = dma.done %s1623, %s3324
    %s3326 = sshll.u32 %s3224, 4
    %3327 = dma.done %s1623, %s3326
    %s3328 = sshll.u32 %s3224, 4
    %3329 = dma.done %s1623, %s3328
    %s3330 = sshll.u32 %s3224, 4
    %3331 = dma.done %s1623, %s3330
    %s3332 = sshll.u32 %s3224, 4
    %3333 = dma.done %s1623, %s3332
    %v3334 = vld [vmem:[#allocation2 + $0x20] sm:$0xff]
    %3335 = vset.pattern.permute.xlu0 4
    %3336 = vperm.xlu0 %3335, %v3223
    %v3337 = vpop.permute.xlu0 %3336
    %v3339 = vmul.f32 %v3334, %v3337
    %v3340 = vadd.f32 %v3317, %v3339
    %s3341 = sshll.u32 %s3224, 4
    %3342 = dma.done %s2024, %s3341
    %s3343 = sshll.u32 %s3224, 4
    %3344 = dma.done %s2024, %s3343
    %s3345 = sshll.u32 %s3224, 4
    %3346 = dma.done %s2024, %s3345
    %s3347 = sshll.u32 %s3224, 4
    %3348 = dma.done %s2024, %s3347
    %s3349 = sshll.u32 %s3224, 4
    %3350 = dma.done %s2024, %s3349
    %s3351 = sshll.u32 %s3224, 4
    %3352 = dma.done %s2024, %s3351
    %s3353 = sshll.u32 %s3224, 4
    %3354 = dma.done %s2024, %s3353
    %s3355 = sshll.u32 %s3224, 4
    %3356 = dma.done %s2024, %s3355
    %v3357 = vld [vmem:[#allocation2 + $0x28] sm:$0xff]
    %3358 = vset.pattern.permute.xlu0 5
    %3359 = vperm.xlu0 %3358, %v3223
    %v3360 = vpop.permute.xlu0 %3359
    %v3362 = vmul.f32 %v3357, %v3360
    %v3363 = vadd.f32 %v3340, %v3362
    %s3364 = sshll.u32 %s3224, 4
    %3365 = dma.done %s2425, %s3364
    %s3366 = sshll.u32 %s3224, 4
    %3367 = dma.done %s2425, %s3366
    %s3368 = sshll.u32 %s3224, 4
    %3369 = dma.done %s2425, %s3368
    %s3370 = sshll.u32 %s3224, 4
    %3371 = dma.done %s2425, %s3370
    %s3372 = sshll.u32 %s3224, 4
    %3373 = dma.done %s2425, %s3372
    %s3374 = sshll.u32 %s3224, 4
    %3375 = dma.done %s2425, %s3374
    %s3376 = sshll.u32 %s3224, 4
    %3377 = dma.done %s2425, %s3376
    %s3378 = sshll.u32 %s3224, 4
    %3379 = dma.done %s2425, %s3378
    %v3380 = vld [vmem:[#allocation2 + $0x30] sm:$0xff]
    %3381 = vset.pattern.permute.xlu0 6
    %3382 = vperm.xlu0 %3381, %v3223
    %v3383 = vpop.permute.xlu0 %3382
    %v3385 = vmul.f32 %v3380, %v3383
    %v3386 = vadd.f32 %v3363, %v3385
    %s3387 = sshll.u32 %s3224, 4
    %3388 = dma.done %s2826, %s3387
    %s3389 = sshll.u32 %s3224, 4
    %3390 = dma.done %s2826, %s3389
    %s3391 = sshll.u32 %s3224, 4
    %3392 = dma.done %s2826, %s3391
    %s3393 = sshll.u32 %s3224, 4
    %3394 = dma.done %s2826, %s3393
    %s3395 = sshll.u32 %s3224, 4
    %3396 = dma.done %s2826, %s3395
    %s3397 = sshll.u32 %s3224, 4
    %3398 = dma.done %s2826, %s3397
    %s3399 = sshll.u32 %s3224, 4
    %3400 = dma.done %s2826, %s3399
    %s3401 = sshll.u32 %s3224, 4
    %3402 = dma.done %s2826, %s3401
    %v3403 = vld [vmem:[#allocation2 + $0x38] sm:$0xff]
    %3404 = vset.pattern.permute.xlu0 7
    %3405 = vperm.xlu0 %3404, %v3223
    %v3406 = vpop.permute.xlu0 %3405
    %v3408 = vmul.f32 %v3403, %v3406
    %v3409 = vadd.f32 %v3386, %v3408
    %vm3410 = vcmask 261120
    %3411 = vst.msk [vmem:[#allocation6] sm:$0xff] %vm3410, %v3409
    // Predicated region
    $region1926: #{tpu_custom_call.1} parent=1 // pred_check
      _
    $region1927: #{tpu_custom_call.1} parent=1 // pred_check_branch
      %3413 = sbr.rel (0) target = $region1929
    $region1928: #{tpu_custom_call.1} parent=1 // pred_region
      %s3415 = ssub.s32 128, 128
      %3416 = vsyncadd [#allocation7], %s3415
      %s3418 = sshll.u32 [#allocation6], 4
      %s3419 = int_to_ptr.vmem [resolvable:$true] %s3418
      %3421 = dma.vmem_to_hbm [thread:$0]  %s3419, 128, %s3, [#allocation7]
    $region1929: #{tpu_custom_call.1} parent=1 // pred_fallthru
      _
    // Predicated region
    $region1930: #{tpu_custom_call.1} parent=1 // pred_check
      _
    $region1931: #{tpu_custom_call.1} parent=1 // pred_check_branch
      %3423 = sbr.rel (0) target = $region1933
    $region1932: #{tpu_custom_call.1} parent=1 // pred_region
      %3424 = dma.done [#allocation7], 128
    $region1933: #{tpu_custom_call.1} parent=1 // pred_fallthru
      _
    %3425 = vsyncpa [#allocation7], 1
  %3426 = vsyncmov [#allocation3]
  %s3427 = vpop.sfrf %3426
  %p3428 = scmp.eq.s32.totalorder %s3427, 0
  %p3429 = pneg %p3428
  %3431 = shalt.err (%p3429)
  %s3432 = scalar_lea.sflag [#allocation3], 1
  %3433 = vsyncmov %s3432
  %s3434 = vpop.sfrf %3433
  %p3435 = scmp.eq.s32.totalorder %s3434, 0
  %p3436 = pneg %p3435
  %3438 = shalt.err (%p3436)
  %s3439 = scalar_lea.sflag [#allocation3], 2
  %3440 = vsyncmov %s3439
  %s3441 = vpop.sfrf %3440
  %p3442 = scmp.eq.s32.totalorder %s3441, 0
  %p3443 = pneg %p3442
  %3445 = shalt.err (%p3443)
  %s3446 = scalar_lea.sflag [#allocation3], 3
  %3447 = vsyncmov %s3446
  %s3448 = vpop.sfrf %3447
  %p3449 = scmp.eq.s32.totalorder %s3448, 0
  %p3450 = pneg %p3449
  %3452 = shalt.err (%p3450)
  %s3453 = scalar_lea.sflag [#allocation3], 4
  %3454 = vsyncmov %s3453
  %s3455 = vpop.sfrf %3454
  %p3456 = scmp.eq.s32.totalorder %s3455, 0
  %p3457 = pneg %p3456
  %3459 = shalt.err (%p3457)
  %s3460 = scalar_lea.sflag [#allocation3], 5
  %3461 = vsyncmov %s3460
  %s3462 = vpop.sfrf %3461
  %p3463 = scmp.eq.s32.totalorder %s3462, 0
  %p3464 = pneg %p3463
  %3466 = shalt.err (%p3464)
  %s3467 = scalar_lea.sflag [#allocation3], 6
  %3468 = vsyncmov %s3467
  %s3469 = vpop.sfrf %3468
  %p3470 = scmp.eq.s32.totalorder %s3469, 0
  %p3471 = pneg %p3470
  %3473 = shalt.err (%p3471)
  %s3474 = scalar_lea.sflag [#allocation3], 7
  %3475 = vsyncmov %s3474
  %s3476 = vpop.sfrf %3475
  %p3477 = scmp.eq.s32.totalorder %s3476, 0
  %p3478 = pneg %p3477
  %3480 = shalt.err (%p3478)

</llo_original>
